<compile_context>
chip_gen: v7x
topology: tpu7x:2x2x1
jax: 0.10.0
libtpu: 0.0.40
codegen_flags: <defaults>
</compile_context>

<pallas_src>
import functools

import numpy as np
import jax
import jax.numpy as jnp
from jax.experimental import pallas as pl
from jax.experimental.pallas import tpu as pltpu


# ------------------------- constant tap border masks -------------------------

def _tap_masks(B, H, W, ks):
    """[ks*ks, 1, B*H*W] f32: 1 where the shifted tap stays inside the image.

    Assumes the exact (b, h, w) row-major flattening used by the frames
    transpose in rnn_forward; changing that layout requires changing this.
    """
    M = B * H * W
    r = ks // 2
    m = np.arange(M)
    hh = (m % (H * W)) // W
    ww = m % W
    out = np.zeros((ks * ks, 1, M), np.float32)
    for k in range(ks * ks):
        oy = k // ks - r
        ox = k % ks - r
        valid = (hh + oy >= 0) & (hh + oy < H) & (ww + ox >= 0) & (ww + ox < W)
        out[k, 0, :] = valid.astype(np.float32)
    return jnp.asarray(out)


# ------------------------------- fused kernel --------------------------------

def _make_kernel(num_layers, nh, fc, H, W, M, ks, threshold, mem_row0,
                 forget_bias=1.0):
    n_taps = ks * ks
    r = ks // 2
    ctr = n_taps // 2
    cins = [fc] + [nh] * (num_layers - 1)

    def kernel(*refs):
        f_cur = refs[0]                 # (fc, M)   frames[:, t]
        f_last = refs[1]                # (fc, M)   frames[:, T-1] (final target, resident)
        msk = refs[2]                   # (fc, M)   scheduled-sampling mask
        tap_ref = refs[3]               # (ks*ks, 1, M)
        wrefs = refs[4:4 + 4 * num_layers]
        conv_last_ref = refs[4 + 4 * num_layers]
        gen_ref = refs[5 + 4 * num_layers]      # (fc, M)  output
        loss_ref = refs[6 + 4 * num_layers]     # (1, 1)   output
        (h_scr, c_scr, m_scr, xg_scr, imcol, loss_scr) = refs[7 + 4 * num_layers:]

        t = pl.program_id(0)
        last_t = pl.num_programs(0) - 1

        @pl.when(t == 0)
        def _init():
            h_scr[...] = jnp.zeros_like(h_scr)
            c_scr[...] = jnp.zeros_like(c_scr)
            m_scr[...] = jnp.zeros_like(m_scr)
            xg_scr[...] = jnp.zeros_like(xg_scr)
            loss_scr[...] = jnp.zeros_like(loss_scr)
            loss_ref[...] = jnp.zeros_like(loss_ref)

        frame = f_cur[...]

        # Loss for the previous step's prediction (x_gen at t-1 vs frames[:, t]).
        @pl.when(t > 0)
        def _acc_loss():
            d = xg_scr[...] - frame
            loss_scr[...] = loss_scr[...] + d * d

        taps = [tap_ref[k] for k in range(n_taps)]     # each (1, M) f32 0/1

        def fill(dst0, parts):
            """Write the kxk im2col of the channel-concat of `parts` at row dst0.

            parts: list of ((C, M) f32 value, C).  Layout is tap-major,
            channel-minor (matches the [Cout, KH*KW*Cin] weight reshape);
            rolled+masked taps are cast to bf16 on store (no concat temp).
            """
            ctot = sum(c for _, c in parts)
            for k in range(n_taps):
                oy = k // ks - r
                ox = k % ks - r
                base = dst0 + k * ctot
                o = 0
                for src, c in parts:
                    if oy == 0 and ox == 0:
                        imcol[base + o:base + o + c, :] = src.astype(jnp.bfloat16)
                    else:
                        off = oy * W + ox
                        xs = pltpu.roll(src, shift=(-off) % M, axis=1)
                        imcol[base + o:base + o + c, :] = (xs * taps[k]).astype(jnp.bfloat16)
                    o += c

        # Scheduled-sampling mix (xg_scr is zero at t == 0, so the blend is
        # exact on the "use real frame" branch).
        mask = msk[...]
        sel = (t < threshold).astype(jnp.float32)
        mixed = mask * frame + (1.0 - mask) * xg_scr[...]
        x_f32 = sel * frame + (1.0 - sel) * mixed      # layer-0 input, f32

        m_f32 = m_scr[...].astype(jnp.float32)

        for i in range(num_layers):
            cin = cins[i]
            wa, wb, wo, wl = wrefs[4 * i:4 * i + 4]
            h_prev = h_scr[i].astype(jnp.float32)
            c_prev = c_scr[i]

            # Shared im2col, source-major: [m | x | h] -> contiguous K-slices
            # for both fused matmuls (no zero-padded weight blocks).
            fill(0, [(m_f32, nh)])
            fill(n_taps * nh, [(x_f32, cin)])
            fill(n_taps * (nh + cin), [(h_prev, nh)])

            ka = n_taps * (cin + nh)
            kb = n_taps * (nh + cin)
            # a: fused conv_x+conv_h -> gates [i, f, g, o]   (4*nh, M)
            a = jnp.dot(wa[...], imcol[n_taps * nh:n_taps * nh + ka, :],
                        preferred_element_type=jnp.float32)
            # b: fused conv_m+conv_x -> gates [i', f', g']   (3*nh, M)
            b = jnp.dot(wb[...], imcol[0:kb, :],
                        preferred_element_type=jnp.float32)

            i_t = jax.nn.sigmoid(a[0:nh])
            f_t = jax.nn.sigmoid(a[nh:2 * nh] + forget_bias)
            g_t = jnp.tanh(a[2 * nh:3 * nh])
            c_new = f_t * c_prev + i_t * g_t

            ip_t = jax.nn.sigmoid(b[0:nh])
            fp_t = jax.nn.sigmoid(b[nh:2 * nh] + forget_bias)
            gp_t = jnp.tanh(b[2 * nh:3 * nh])
            m_new = fp_t * m_f32 + ip_t * gp_t

            # Output-gate conv over mem = [c_new ; m_new] (disjoint scratch rows).
            fill(mem_row0, [(c_new, nh), (m_new, nh)])
            o_conv = jnp.dot(wo[...], imcol[mem_row0:mem_row0 + n_taps * 2 * nh, :],
                             preferred_element_type=jnp.float32)
            o_t = jax.nn.sigmoid(a[3 * nh:4 * nh] + o_conv)
            # 1x1 cell conv == matmul against the centre-tap rows of mem's im2col.
            c0 = mem_row0 + ctr * 2 * nh
            h_lin = jnp.dot(wl[...], imcol[c0:c0 + 2 * nh, :],
                            preferred_element_type=jnp.float32)
            h_new = o_t * jnp.tanh(h_lin)

            h_scr[i] = h_new.astype(jnp.bfloat16)
            c_scr[i] = c_new
            x_f32 = h_new
            m_f32 = m_new

        m_scr[...] = m_f32.astype(jnp.bfloat16)

        x_gen = jnp.dot(conv_last_ref[...], x_f32.astype(jnp.bfloat16),
                        preferred_element_type=jnp.float32)      # (fc, M)
        gen_ref[...] = x_gen
        xg_scr[...] = x_gen

        # Final step: add the last prediction's error and do the single
        # cross-lane reduction into the (1,1) output block.
        @pl.when(t == last_t)
        def _final_loss():
            d = x_gen - f_last[...]
            loss_ref[...] = jnp.sum(loss_scr[...] + d * d, keepdims=True)

    return kernel


# ------------------------------- RNN forward ---------------------------------

def rnn_forward(params, frames_tensor, mask_true, *, configs, num_layers, num_hidden):
    # frames_tensor: [B, T, H, W, C] channels-last (same as the PyTorch input)
    B, T, H, W, C = frames_tensor.shape
    assert all(n == num_hidden[0] for n in num_hidden), \
        "spatiotemporal memory requires uniform num_hidden (standard PredRNN config)"
    assert configs['stride'] == 1
    ks = configs['filter_size']
    assert ks % 2 == 1  # TODO(synk): even filter_size padding differs from PyTorch
    nh = num_hidden[0]
    fc = C
    M = B * H * W
    assert M % 128 == 0, "B*H*W must be a multiple of 128 (lane-dense layout)"
    steps = configs['total_length'] - 1
    reverse = configs['reverse_scheduled_sampling'] == 1
    threshold = 1 if reverse else configs['input_length']
    shift = threshold

    # [T, C, B*H*W]: channels on sublanes, B*H*W on the lane axis (lane-dense).
    frames_k = jnp.transpose(frames_tensor.astype(jnp.float32),
                             (1, 4, 0, 2, 3)).reshape(T, fc, M)
    frames_last = frames_k[steps]                       # final MSE target, resident
    if mask_true.shape[1] == 0:
        mask_k = jnp.zeros((1, fc, M), jnp.float32)
    else:
        mask_k = jnp.transpose(mask_true.astype(jnp.float32),
                               (1, 4, 0, 2, 3)).reshape(mask_true.shape[1], fc, M)

    taps = _tap_masks(B, H, W, ks)

    # ---- fused, matmul-ready weights (bf16 operands, f32 accumulation) ----
    def prep_k(w):  # [KH, KW, Cin, Cout] -> [Cout, KH*KW*Cin] (tap-major, ch-minor)
        KH, KW, Cin, Cout = w.shape
        return jnp.transpose(w, (3, 0, 1, 2)).reshape(Cout, KH * KW * Cin)

    weights = []
    for li, cell in enumerate(params['cells']):
        wxk = prep_k(cell['wx'])       # (7nh, 9*cin)
        whk = prep_k(cell['wh'])       # (4nh, 9*nh)
        wmk = prep_k(cell['wm'])       # (3nh, 9*nh)
        # fused conv_x+conv_h for gates [i, f, g, o]; K cols = [x-block | h-block]
        wa = jnp.concatenate(
            [jnp.concatenate([wxk[0:3 * nh], wxk[6 * nh:7 * nh]], axis=0), whk], axis=1)
        # fused conv_m+conv_x for gates [i', f', g']; K cols = [m-block | x-block]
        wb = jnp.concatenate([wmk, wxk[3 * nh:6 * nh]], axis=1)
        wo = prep_k(cell['wo'])                                   # (nh, 9*2nh)
        wl = jnp.transpose(cell['wlast'][0, 0], (1, 0))           # (nh, 2nh)
        weights += [wa.astype(jnp.bfloat16), wb.astype(jnp.bfloat16),
                    wo.astype(jnp.bfloat16), wl.astype(jnp.bfloat16)]
    weights.append(jnp.transpose(params['conv_last'][0, 0], (1, 0)).astype(jnp.bfloat16))

    cins = [fc] + [num_hidden[i - 1] for i in range(1, num_layers)]
    mem_row0 = ks * ks * (2 * nh + max(cins))      # start of the mem im2col region
    imcol_rows = mem_row0 + ks * ks * 2 * nh

    kern = _make_kernel(num_layers, nh, fc, H, W, M, ks, threshold, mem_row0)

    in_specs = [
        pl.BlockSpec((None, fc, M), lambda t: (t, 0, 0)),                          # frames[:, t]
        pl.BlockSpec((fc, M), lambda t: (0, 0)),                                   # final target (resident)
        pl.BlockSpec((None, fc, M), lambda t: (jnp.maximum(t - shift, 0), 0, 0)),  # mask
        pl.BlockSpec(taps.shape, lambda t: (0, 0, 0)),                             # tap masks
    ]
    for w in weights:   # constant block index -> DMA'd once, VMEM resident
        in_specs.append(pl.BlockSpec(w.shape, lambda t: (0, 0)))

    out_shape = (jax.ShapeDtypeStruct((steps, fc, M), jnp.float32),
                 jax.ShapeDtypeStruct((1, 1), jnp.float32))
    out_specs = (pl.BlockSpec((None, fc, M), lambda t: (t, 0, 0)),
                 pl.BlockSpec((1, 1), lambda t: (0, 0)))

    scratch_shapes = [
        pltpu.VMEM((num_layers, nh, M), jnp.bfloat16),   # h_t per layer (bf16 state)
        pltpu.VMEM((num_layers, nh, M), jnp.float32),    # c_t per layer (f32 accum)
        pltpu.VMEM((nh, M), jnp.bfloat16),               # spatiotemporal memory
        pltpu.VMEM((fc, M), jnp.float32),                # previous x_gen (f32 for loss/mix)
        pltpu.VMEM((imcol_rows, M), jnp.bfloat16),       # shared im2col scratch
        pltpu.VMEM((fc, M), jnp.float32),                # squared-error partials
    ]

    gen, loss_sum = pl.pallas_call(
        kern,
        out_shape=out_shape,
        grid=(steps,),
        in_specs=in_specs,
        out_specs=out_specs,
        scratch_shapes=scratch_shapes,
        compiler_params=pltpu.CompilerParams(
            dimension_semantics=("arbitrary",)),         # time steps carry state
    )(frames_k, frames_last, mask_k, taps, *weights)

    next_frames = jnp.transpose(gen.reshape(steps, fc, B, H, W), (2, 0, 3, 4, 1))
    loss = loss_sum[0, 0] / (steps * B * H * W * fc)
    return next_frames, loss


# -------------------------------- param init ---------------------------------

def init_params(key, configs, num_layers, num_hidden):
    fc = configs['patch_size'] ** 2 * configs['img_channel']
    ks = configs['filter_size']
    keys = list(jax.random.split(key, num_layers * 5 + 1))
    it = iter(keys)

    def conv_w(kh, kw, cin, cout):
        scale = 1.0 / jnp.sqrt(float(kh * kw * cin))
        return (scale * jax.random.normal(next(it), (kh, kw, cin, cout))).astype(jnp.float32)

    cells = []
    for i in range(num_layers):
        cin = fc if i == 0 else num_hidden[i - 1]
        nh = num_hidden[i]
        cells.append({
            'wx': conv_w(ks, ks, cin, 7 * nh),
            'wh': conv_w(ks, ks, nh, 4 * nh),
            'wm': conv_w(ks, ks, nh, 3 * nh),
            'wo': conv_w(ks, ks, 2 * nh, nh),
            'wlast': conv_w(1, 1, 2 * nh, nh),
        })
    return {'cells': cells, 'conv_last': conv_w(1, 1, num_hidden[-1], fc)}


# ----------------------------------- main -------------------------------------

if __name__ == "__main__":
    configs = dict(
        patch_size=4, img_channel=1, img_width=32,
        filter_size=3, stride=1, layer_norm=0,
        total_length=6, input_length=3, reverse_scheduled_sampling=0,
    )
    num_layers = 2
    num_hidden = [32, 32]

    key = jax.random.PRNGKey(0)
    kp, kf, km = jax.random.split(key, 3)
    params = init_params(kp, configs, num_layers, num_hidden)

    B = 4                                                        # B*H*W = 256 lanes
    hw = configs['img_width'] // configs['patch_size']           # 8
    fc = configs['patch_size'] ** 2 * configs['img_channel']     # 16
    frames = jax.random.normal(kf, (B, configs['total_length'], hw, hw, fc), jnp.float32)
    mask_len = configs['total_length'] - configs['input_length'] - 1
    mask_true = (jax.random.uniform(km, (B, mask_len, hw, hw, fc)) > 0.5).astype(jnp.float32)

    fwd = jax.jit(functools.partial(rnn_forward, configs=configs,
                                    num_layers=num_layers, num_hidden=num_hidden))
    next_frames, loss = fwd(params, frames, mask_true)
    jax.block_until_ready((next_frames, loss))

    assert next_frames.shape == (B, configs['total_length'] - 1, hw, hw, fc)
    assert loss.shape == ()
    assert bool(jnp.isfinite(loss))
    assert bool(jnp.all(jnp.isfinite(next_frames)))
    print("KERNEL_OK")
</pallas_src>

<mosaic_0001>
module attributes {stable_mosaic.version = 11 : i64} {
  func.func @kernel(%arg0: i32, %arg1: memref<1x16x256xf32, #tpu.memory_space<vmem>>, %arg2: memref<16x256xf32, #tpu.memory_space<vmem>>, %arg3: memref<1x16x256xf32, #tpu.memory_space<vmem>>, %arg4: memref<9x1x256xf32, #tpu.memory_space<vmem>>, %arg5: memref<128x432xbf16, #tpu.memory_space<vmem>>, %arg6: memref<96x432xbf16, #tpu.memory_space<vmem>>, %arg7: memref<32x576xbf16, #tpu.memory_space<vmem>>, %arg8: memref<32x64xbf16, #tpu.memory_space<vmem>>, %arg9: memref<128x576xbf16, #tpu.memory_space<vmem>>, %arg10: memref<96x576xbf16, #tpu.memory_space<vmem>>, %arg11: memref<32x576xbf16, #tpu.memory_space<vmem>>, %arg12: memref<32x64xbf16, #tpu.memory_space<vmem>>, %arg13: memref<16x32xbf16, #tpu.memory_space<vmem>>, %arg14: memref<1x16x256xf32, #tpu.memory_space<vmem>>, %arg15: memref<1x1xf32, #tpu.memory_space<vmem>>, %arg16: memref<2x32x256xbf16, #tpu.memory_space<vmem>>, %arg17: memref<2x32x256xf32, #tpu.memory_space<vmem>>, %arg18: memref<32x256xbf16, #tpu.memory_space<vmem>>, %arg19: memref<16x256xf32, #tpu.memory_space<vmem>>, %arg20: memref<1440x256xbf16, #tpu.memory_space<vmem>>, %arg21: memref<16x256xf32, #tpu.memory_space<vmem>>) attributes {dimension_semantics = [#tpu.dimension_semantics<arbitrary>], iteration_bounds = array<i64: 5>, scalar_prefetch = 0 : i64, scratch_operands = 6 : i64, tpu.core_type = #tpu.core_type<tc>, window_params = [{transform_indices = @transform_0, window_bounds = array<i64: 1, 16, 256>}, {pipeline_mode = #tpu.pipeline_mode<synchronous>, transform_indices = @transform_1, window_bounds = array<i64: 16, 256>}, {transform_indices = @transform_2, window_bounds = array<i64: 1, 16, 256>}, {pipeline_mode = #tpu.pipeline_mode<synchronous>, transform_indices = @transform_3, window_bounds = array<i64: 9, 1, 256>}, {pipeline_mode = #tpu.pipeline_mode<synchronous>, transform_indices = @transform_4, window_bounds = array<i64: 128, 432>}, {pipeline_mode = #tpu.pipeline_mode<synchronous>, transform_indices = @transform_5, window_bounds = array<i64: 96, 432>}, {pipeline_mode = #tpu.pipeline_mode<synchronous>, transform_indices = @transform_6, window_bounds = array<i64: 32, 576>}, {pipeline_mode = #tpu.pipeline_mode<synchronous>, transform_indices = @transform_7, window_bounds = array<i64: 32, 64>}, {pipeline_mode = #tpu.pipeline_mode<synchronous>, transform_indices = @transform_8, window_bounds = array<i64: 128, 576>}, {pipeline_mode = #tpu.pipeline_mode<synchronous>, transform_indices = @transform_9, window_bounds = array<i64: 96, 576>}, {pipeline_mode = #tpu.pipeline_mode<synchronous>, transform_indices = @transform_10, window_bounds = array<i64: 32, 576>}, {pipeline_mode = #tpu.pipeline_mode<synchronous>, transform_indices = @transform_11, window_bounds = array<i64: 32, 64>}, {pipeline_mode = #tpu.pipeline_mode<synchronous>, transform_indices = @transform_12, window_bounds = array<i64: 16, 32>}, {transform_indices = @transform_13, window_bounds = array<i64: 1, 16, 256>}, {pipeline_mode = #tpu.pipeline_mode<synchronous>, transform_indices = @transform_14, window_bounds = array<i64: 1, 1>}]} {
    %c0_i32 = arith.constant 0 : i32
    %0 = arith.cmpi eq, %arg0, %c0_i32 : i32
    %1 = arith.extui %0 : i1 to i32
    %c0_i32_0 = arith.constant 0 : i32
    %2 = arith.cmpi ne, %1, %c0_i32_0 : i32
    scf.if %2 {
      %cst_314 = arith.constant 0.000000e+00 : bf16
      %617 = vector.broadcast %cst_314 : bf16 to vector<2x32x256xbf16>
      %c0_315 = arith.constant 0 : index
      %c0_316 = arith.constant 0 : index
      %c0_317 = arith.constant 0 : index
      %618 = vector.load %arg16[%c0_315, %c0_316, %c0_317] : memref<2x32x256xbf16, #tpu.memory_space<vmem>>, vector<2x32x256xbf16>
      tpu.vector_store %arg16[%c0_315, %c0_316, %c0_317], %617 {strides = array<i32>} : memref<2x32x256xbf16, #tpu.memory_space<vmem>>, vector<2x32x256xbf16>,
      %cst_318 = arith.constant 0.000000e+00 : f32
      %619 = vector.broadcast %cst_318 : f32 to vector<2x32x256xf32>
      %c0_319 = arith.constant 0 : index
      %c0_320 = arith.constant 0 : index
      %c0_321 = arith.constant 0 : index
      %620 = vector.load %arg17[%c0_319, %c0_320, %c0_321] : memref<2x32x256xf32, #tpu.memory_space<vmem>>, vector<2x32x256xf32>
      tpu.vector_store %arg17[%c0_319, %c0_320, %c0_321], %619 {strides = array<i32>} : memref<2x32x256xf32, #tpu.memory_space<vmem>>, vector<2x32x256xf32>,
      %cst_322 = arith.constant 0.000000e+00 : bf16
      %621 = vector.broadcast %cst_322 : bf16 to vector<32x256xbf16>
      %c0_323 = arith.constant 0 : index
      %c0_324 = arith.constant 0 : index
      %622 = vector.load %arg18[%c0_323, %c0_324] : memref<32x256xbf16, #tpu.memory_space<vmem>>, vector<32x256xbf16>
      tpu.vector_store %arg18[%c0_323, %c0_324], %621 {strides = array<i32>} : memref<32x256xbf16, #tpu.memory_space<vmem>>, vector<32x256xbf16>,
      %cst_325 = arith.constant 0.000000e+00 : f32
      %623 = vector.broadcast %cst_325 : f32 to vector<16x256xf32>
      %c0_326 = arith.constant 0 : index
      %c0_327 = arith.constant 0 : index
      %624 = vector.load %arg19[%c0_326, %c0_327] : memref<16x256xf32, #tpu.memory_space<vmem>>, vector<16x256xf32>
      tpu.vector_store %arg19[%c0_326, %c0_327], %623 {strides = array<i32>} : memref<16x256xf32, #tpu.memory_space<vmem>>, vector<16x256xf32>,
      %cst_328 = arith.constant 0.000000e+00 : f32
      %625 = vector.broadcast %cst_328 : f32 to vector<16x256xf32>
      %c0_329 = arith.constant 0 : index
      %c0_330 = arith.constant 0 : index
      %626 = vector.load %arg21[%c0_329, %c0_330] : memref<16x256xf32, #tpu.memory_space<vmem>>, vector<16x256xf32>
      tpu.vector_store %arg21[%c0_329, %c0_330], %625 {strides = array<i32>} : memref<16x256xf32, #tpu.memory_space<vmem>>, vector<16x256xf32>,
      %cst_331 = arith.constant 0.000000e+00 : f32
      %627 = vector.broadcast %cst_331 : f32 to vector<1x1xf32>
      %c0_332 = arith.constant 0 : index
      %c0_333 = arith.constant 0 : index
      %628 = vector.load %arg15[%c0_332, %c0_333] : memref<1x1xf32, #tpu.memory_space<vmem>>, vector<1x1xf32>
      tpu.vector_store %arg15[%c0_332, %c0_333], %627 {strides = array<i32>} : memref<1x1xf32, #tpu.memory_space<vmem>>, vector<1x1xf32>,
    } else {
    }
    %c0 = arith.constant 0 : index
    %c0_1 = arith.constant 0 : index
    %c0_2 = arith.constant 0 : index
    %3 = vector.load %arg1[%c0, %c0_1, %c0_2] : memref<1x16x256xf32, #tpu.memory_space<vmem>>, vector<1x16x256xf32>
    %4 = vector.shape_cast %3 : vector<1x16x256xf32> to vector<16x256xf32>
    %c0_i32_3 = arith.constant 0 : i32
    %5 = arith.cmpi sgt, %arg0, %c0_i32_3 : i32
    %6 = arith.extui %5 : i1 to i32
    %c0_i32_4 = arith.constant 0 : i32
    %7 = arith.cmpi ne, %6, %c0_i32_4 : i32
    scf.if %7 {
      %c0_314 = arith.constant 0 : index
      %c0_315 = arith.constant 0 : index
      %617 = vector.load %arg19[%c0_314, %c0_315] : memref<16x256xf32, #tpu.memory_space<vmem>>, vector<16x256xf32>
      %618 = arith.subf %617, %4 : vector<16x256xf32>
      %c0_316 = arith.constant 0 : index
      %c0_317 = arith.constant 0 : index
      %619 = vector.load %arg21[%c0_316, %c0_317] : memref<16x256xf32, #tpu.memory_space<vmem>>, vector<16x256xf32>
      %620 = arith.mulf %618, %618 : vector<16x256xf32>
      %621 = arith.addf %619, %620 : vector<16x256xf32>
      %c0_318 = arith.constant 0 : index
      %c0_319 = arith.constant 0 : index
      %622 = vector.load %arg21[%c0_318, %c0_319] : memref<16x256xf32, #tpu.memory_space<vmem>>, vector<16x256xf32>
      tpu.vector_store %arg21[%c0_318, %c0_319], %621 {strides = array<i32>} : memref<16x256xf32, #tpu.memory_space<vmem>>, vector<16x256xf32>,
    } else {
    }
    %c0_5 = arith.constant 0 : index
    %c0_6 = arith.constant 0 : index
    %c0_7 = arith.constant 0 : index
    %8 = vector.load %arg4[%c0_5, %c0_6, %c0_7] : memref<9x1x256xf32, #tpu.memory_space<vmem>>, vector<1x1x256xf32>
    %9 = vector.shape_cast %8 : vector<1x1x256xf32> to vector<1x256xf32>
    %c1 = arith.constant 1 : index
    %c0_8 = arith.constant 0 : index
    %c0_9 = arith.constant 0 : index
    %10 = vector.load %arg4[%c1, %c0_8, %c0_9] : memref<9x1x256xf32, #tpu.memory_space<vmem>>, vector<1x1x256xf32>
    %11 = vector.shape_cast %10 : vector<1x1x256xf32> to vector<1x256xf32>
    %c2 = arith.constant 2 : index
    %c0_10 = arith.constant 0 : index
    %c0_11 = arith.constant 0 : index
    %12 = vector.load %arg4[%c2, %c0_10, %c0_11] : memref<9x1x256xf32, #tpu.memory_space<vmem>>, vector<1x1x256xf32>
    %13 = vector.shape_cast %12 : vector<1x1x256xf32> to vector<1x256xf32>
    %c3 = arith.constant 3 : index
    %c0_12 = arith.constant 0 : index
    %c0_13 = arith.constant 0 : index
    %14 = vector.load %arg4[%c3, %c0_12, %c0_13] : memref<9x1x256xf32, #tpu.memory_space<vmem>>, vector<1x1x256xf32>
    %15 = vector.shape_cast %14 : vector<1x1x256xf32> to vector<1x256xf32>
    %c5 = arith.constant 5 : index
    %c0_14 = arith.constant 0 : index
    %c0_15 = arith.constant 0 : index
    %16 = vector.load %arg4[%c5, %c0_14, %c0_15] : memref<9x1x256xf32, #tpu.memory_space<vmem>>, vector<1x1x256xf32>
    %17 = vector.shape_cast %16 : vector<1x1x256xf32> to vector<1x256xf32>
    %c6 = arith.constant 6 : index
    %c0_16 = arith.constant 0 : index
    %c0_17 = arith.constant 0 : index
    %18 = vector.load %arg4[%c6, %c0_16, %c0_17] : memref<9x1x256xf32, #tpu.memory_space<vmem>>, vector<1x1x256xf32>
    %19 = vector.shape_cast %18 : vector<1x1x256xf32> to vector<1x256xf32>
    %c7 = arith.constant 7 : index
    %c0_18 = arith.constant 0 : index
    %c0_19 = arith.constant 0 : index
    %20 = vector.load %arg4[%c7, %c0_18, %c0_19] : memref<9x1x256xf32, #tpu.memory_space<vmem>>, vector<1x1x256xf32>
    %21 = vector.shape_cast %20 : vector<1x1x256xf32> to vector<1x256xf32>
    %c8 = arith.constant 8 : index
    %c0_20 = arith.constant 0 : index
    %c0_21 = arith.constant 0 : index
    %22 = vector.load %arg4[%c8, %c0_20, %c0_21] : memref<9x1x256xf32, #tpu.memory_space<vmem>>, vector<1x1x256xf32>
    %23 = vector.shape_cast %22 : vector<1x1x256xf32> to vector<1x256xf32>
    %c0_22 = arith.constant 0 : index
    %c0_23 = arith.constant 0 : index
    %c0_24 = arith.constant 0 : index
    %24 = vector.load %arg3[%c0_22, %c0_23, %c0_24] : memref<1x16x256xf32, #tpu.memory_space<vmem>>, vector<1x16x256xf32>
    %25 = vector.shape_cast %24 : vector<1x16x256xf32> to vector<16x256xf32>
    %c3_i32 = arith.constant 3 : i32
    %26 = arith.cmpi slt, %arg0, %c3_i32 : i32
    %27 = arith.extui %26 : i1 to i32
    %28 = arith.sitofp %27 : i32 to f32
    %29 = arith.mulf %25, %4 : vector<16x256xf32>
    %cst = arith.constant 1.000000e+00 : f32
    %30 = vector.broadcast %cst : f32 to vector<16x256xf32>
    %31 = arith.subf %30, %25 : vector<16x256xf32>
    %c0_25 = arith.constant 0 : index
    %c0_26 = arith.constant 0 : index
    %32 = vector.load %arg19[%c0_25, %c0_26] : memref<16x256xf32, #tpu.memory_space<vmem>>, vector<16x256xf32>
    %33 = arith.mulf %31, %32 : vector<16x256xf32>
    %34 = arith.addf %29, %33 : vector<16x256xf32>
    %35 = vector.broadcast %28 : f32 to vector<16x256xf32>
    %36 = arith.mulf %35, %4 : vector<16x256xf32>
    %cst_27 = arith.constant 1.000000e+00 : f32
    %37 = arith.subf %cst_27, %28 : f32
    %38 = vector.broadcast %37 : f32 to vector<16x256xf32>
    %39 = arith.mulf %38, %34 : vector<16x256xf32>
    %40 = arith.addf %36, %39 : vector<16x256xf32>
    %c0_28 = arith.constant 0 : index
    %c0_29 = arith.constant 0 : index
    %41 = vector.load %arg18[%c0_28, %c0_29] : memref<32x256xbf16, #tpu.memory_space<vmem>>, vector<32x256xbf16>
    %42 = arith.extf %41 : vector<32x256xbf16> to vector<32x256xf32>
    %c0_30 = arith.constant 0 : index
    %c0_31 = arith.constant 0 : index
    %c0_32 = arith.constant 0 : index
    %43 = vector.load %arg16[%c0_30, %c0_31, %c0_32] : memref<2x32x256xbf16, #tpu.memory_space<vmem>>, vector<1x32x256xbf16>
    %44 = vector.shape_cast %43 : vector<1x32x256xbf16> to vector<32x256xbf16>
    %45 = arith.extf %44 : vector<32x256xbf16> to vector<32x256xf32>
    %c0_33 = arith.constant 0 : index
    %c0_34 = arith.constant 0 : index
    %c0_35 = arith.constant 0 : index
    %46 = vector.load %arg17[%c0_33, %c0_34, %c0_35] : memref<2x32x256xf32, #tpu.memory_space<vmem>>, vector<1x32x256xf32>
    %47 = vector.shape_cast %46 : vector<1x32x256xf32> to vector<32x256xf32>
    %c9_i32 = arith.constant 9 : i32
    %48 = tpu.dynamic_rotate %42 by %c9_i32 dim 1 : vector<32x256xf32>, i32 -> vector<32x256xf32>
    %49 = vector.broadcast %9 : vector<1x256xf32> to vector<32x256xf32>
    %50 = arith.mulf %48, %49 : vector<32x256xf32>
    %51 = arith.truncf %50 : vector<32x256xf32> to vector<32x256xbf16>
    %c0_36 = arith.constant 0 : index
    %c0_37 = arith.constant 0 : index
    %52 = vector.load %arg20[%c0_36, %c0_37] : memref<1440x256xbf16, #tpu.memory_space<vmem>>, vector<32x256xbf16>
    tpu.vector_store %arg20[%c0_36, %c0_37], %51 {strides = array<i32>} : memref<1440x256xbf16, #tpu.memory_space<vmem>>, vector<32x256xbf16>,
    %c8_i32 = arith.constant 8 : i32
    %53 = tpu.dynamic_rotate %42 by %c8_i32 dim 1 : vector<32x256xf32>, i32 -> vector<32x256xf32>
    %54 = vector.broadcast %11 : vector<1x256xf32> to vector<32x256xf32>
    %55 = arith.mulf %53, %54 : vector<32x256xf32>
    %56 = arith.truncf %55 : vector<32x256xf32> to vector<32x256xbf16>
    %c32 = arith.constant 32 : index
    %c0_38 = arith.constant 0 : index
    %57 = vector.load %arg20[%c32, %c0_38] : memref<1440x256xbf16, #tpu.memory_space<vmem>>, vector<32x256xbf16>
    tpu.vector_store %arg20[%c32, %c0_38], %56 {strides = array<i32>} : memref<1440x256xbf16, #tpu.memory_space<vmem>>, vector<32x256xbf16>,
    %c7_i32 = arith.constant 7 : i32
    %58 = tpu.dynamic_rotate %42 by %c7_i32 dim 1 : vector<32x256xf32>, i32 -> vector<32x256xf32>
    %59 = vector.broadcast %13 : vector<1x256xf32> to vector<32x256xf32>
    %60 = arith.mulf %58, %59 : vector<32x256xf32>
    %61 = arith.truncf %60 : vector<32x256xf32> to vector<32x256xbf16>
    %c64 = arith.constant 64 : index
    %c0_39 = arith.constant 0 : index
    %62 = vector.load %arg20[%c64, %c0_39] : memref<1440x256xbf16, #tpu.memory_space<vmem>>, vector<32x256xbf16>
    tpu.vector_store %arg20[%c64, %c0_39], %61 {strides = array<i32>} : memref<1440x256xbf16, #tpu.memory_space<vmem>>, vector<32x256xbf16>,
    %c1_i32 = arith.constant 1 : i32
    %63 = tpu.dynamic_rotate %42 by %c1_i32 dim 1 : vector<32x256xf32>, i32 -> vector<32x256xf32>
    %64 = vector.broadcast %15 : vector<1x256xf32> to vector<32x256xf32>
    %65 = arith.mulf %63, %64 : vector<32x256xf32>
    %66 = arith.truncf %65 : vector<32x256xf32> to vector<32x256xbf16>
    %c96 = arith.constant 96 : index
    %c0_40 = arith.constant 0 : index
    %67 = vector.load %arg20[%c96, %c0_40] : memref<1440x256xbf16, #tpu.memory_space<vmem>>, vector<32x256xbf16>
    tpu.vector_store %arg20[%c96, %c0_40], %66 {strides = array<i32>} : memref<1440x256xbf16, #tpu.memory_space<vmem>>, vector<32x256xbf16>,
    %68 = arith.truncf %42 : vector<32x256xf32> to vector<32x256xbf16>
    %c128 = arith.constant 128 : index
    %c0_41 = arith.constant 0 : index
    %69 = vector.load %arg20[%c128, %c0_41] : memref<1440x256xbf16, #tpu.memory_space<vmem>>, vector<32x256xbf16>
    tpu.vector_store %arg20[%c128, %c0_41], %68 {strides = array<i32>} : memref<1440x256xbf16, #tpu.memory_space<vmem>>, vector<32x256xbf16>,
    %c255_i32 = arith.constant 255 : i32
    %70 = tpu.dynamic_rotate %42 by %c255_i32 dim 1 : vector<32x256xf32>, i32 -> vector<32x256xf32>
    %71 = vector.broadcast %17 : vector<1x256xf32> to vector<32x256xf32>
    %72 = arith.mulf %70, %71 : vector<32x256xf32>
    %73 = arith.truncf %72 : vector<32x256xf32> to vector<32x256xbf16>
    %c160 = arith.constant 160 : index
    %c0_42 = arith.constant 0 : index
    %74 = vector.load %arg20[%c160, %c0_42] : memref<1440x256xbf16, #tpu.memory_space<vmem>>, vector<32x256xbf16>
    tpu.vector_store %arg20[%c160, %c0_42], %73 {strides = array<i32>} : memref<1440x256xbf16, #tpu.memory_space<vmem>>, vector<32x256xbf16>,
    %c249_i32 = arith.constant 249 : i32
    %75 = tpu.dynamic_rotate %42 by %c249_i32 dim 1 : vector<32x256xf32>, i32 -> vector<32x256xf32>
    %76 = vector.broadcast %19 : vector<1x256xf32> to vector<32x256xf32>
    %77 = arith.mulf %75, %76 : vector<32x256xf32>
    %78 = arith.truncf %77 : vector<32x256xf32> to vector<32x256xbf16>
    %c192 = arith.constant 192 : index
    %c0_43 = arith.constant 0 : index
    %79 = vector.load %arg20[%c192, %c0_43] : memref<1440x256xbf16, #tpu.memory_space<vmem>>, vector<32x256xbf16>
    tpu.vector_store %arg20[%c192, %c0_43], %78 {strides = array<i32>} : memref<1440x256xbf16, #tpu.memory_space<vmem>>, vector<32x256xbf16>,
    %c248_i32 = arith.constant 248 : i32
    %80 = tpu.dynamic_rotate %42 by %c248_i32 dim 1 : vector<32x256xf32>, i32 -> vector<32x256xf32>
    %81 = vector.broadcast %21 : vector<1x256xf32> to vector<32x256xf32>
    %82 = arith.mulf %80, %81 : vector<32x256xf32>
    %83 = arith.truncf %82 : vector<32x256xf32> to vector<32x256xbf16>
    %c224 = arith.constant 224 : index
    %c0_44 = arith.constant 0 : index
    %84 = vector.load %arg20[%c224, %c0_44] : memref<1440x256xbf16, #tpu.memory_space<vmem>>, vector<32x256xbf16>
    tpu.vector_store %arg20[%c224, %c0_44], %83 {strides = array<i32>} : memref<1440x256xbf16, #tpu.memory_space<vmem>>, vector<32x256xbf16>,
    %c247_i32 = arith.constant 247 : i32
    %85 = tpu.dynamic_rotate %42 by %c247_i32 dim 1 : vector<32x256xf32>, i32 -> vector<32x256xf32>
    %86 = vector.broadcast %23 : vector<1x256xf32> to vector<32x256xf32>
    %87 = arith.mulf %85, %86 : vector<32x256xf32>
    %88 = arith.truncf %87 : vector<32x256xf32> to vector<32x256xbf16>
    %c256 = arith.constant 256 : index
    %c0_45 = arith.constant 0 : index
    %89 = vector.load %arg20[%c256, %c0_45] : memref<1440x256xbf16, #tpu.memory_space<vmem>>, vector<32x256xbf16>
    tpu.vector_store %arg20[%c256, %c0_45], %88 {strides = array<i32>} : memref<1440x256xbf16, #tpu.memory_space<vmem>>, vector<32x256xbf16>,
    %c9_i32_46 = arith.constant 9 : i32
    %90 = tpu.dynamic_rotate %40 by %c9_i32_46 dim 1 : vector<16x256xf32>, i32 -> vector<16x256xf32>
    %91 = vector.broadcast %9 : vector<1x256xf32> to vector<16x256xf32>
    %92 = arith.mulf %90, %91 : vector<16x256xf32>
    %93 = arith.truncf %92 : vector<16x256xf32> to vector<16x256xbf16>
    %c288 = arith.constant 288 : index
    %c0_47 = arith.constant 0 : index
    %94 = vector.load %arg20[%c288, %c0_47] : memref<1440x256xbf16, #tpu.memory_space<vmem>>, vector<16x256xbf16>
    tpu.vector_store %arg20[%c288, %c0_47], %93 {strides = array<i32>} : memref<1440x256xbf16, #tpu.memory_space<vmem>>, vector<16x256xbf16>,
    %c8_i32_48 = arith.constant 8 : i32
    %95 = tpu.dynamic_rotate %40 by %c8_i32_48 dim 1 : vector<16x256xf32>, i32 -> vector<16x256xf32>
    %96 = vector.broadcast %11 : vector<1x256xf32> to vector<16x256xf32>
    %97 = arith.mulf %95, %96 : vector<16x256xf32>
    %98 = arith.truncf %97 : vector<16x256xf32> to vector<16x256xbf16>
    %c304 = arith.constant 304 : index
    %c0_49 = arith.constant 0 : index
    %99 = vector.load %arg20[%c304, %c0_49] : memref<1440x256xbf16, #tpu.memory_space<vmem>>, vector<16x256xbf16>
    tpu.vector_store %arg20[%c304, %c0_49], %98 {strides = array<i32>} : memref<1440x256xbf16, #tpu.memory_space<vmem>>, vector<16x256xbf16>,
    %c7_i32_50 = arith.constant 7 : i32
    %100 = tpu.dynamic_rotate %40 by %c7_i32_50 dim 1 : vector<16x256xf32>, i32 -> vector<16x256xf32>
    %101 = vector.broadcast %13 : vector<1x256xf32> to vector<16x256xf32>
    %102 = arith.mulf %100, %101 : vector<16x256xf32>
    %103 = arith.truncf %102 : vector<16x256xf32> to vector<16x256xbf16>
    %c320 = arith.constant 320 : index
    %c0_51 = arith.constant 0 : index
    %104 = vector.load %arg20[%c320, %c0_51] : memref<1440x256xbf16, #tpu.memory_space<vmem>>, vector<16x256xbf16>
    tpu.vector_store %arg20[%c320, %c0_51], %103 {strides = array<i32>} : memref<1440x256xbf16, #tpu.memory_space<vmem>>, vector<16x256xbf16>,
    %c1_i32_52 = arith.constant 1 : i32
    %105 = tpu.dynamic_rotate %40 by %c1_i32_52 dim 1 : vector<16x256xf32>, i32 -> vector<16x256xf32>
    %106 = vector.broadcast %15 : vector<1x256xf32> to vector<16x256xf32>
    %107 = arith.mulf %105, %106 : vector<16x256xf32>
    %108 = arith.truncf %107 : vector<16x256xf32> to vector<16x256xbf16>
    %c336 = arith.constant 336 : index
    %c0_53 = arith.constant 0 : index
    %109 = vector.load %arg20[%c336, %c0_53] : memref<1440x256xbf16, #tpu.memory_space<vmem>>, vector<16x256xbf16>
    tpu.vector_store %arg20[%c336, %c0_53], %108 {strides = array<i32>} : memref<1440x256xbf16, #tpu.memory_space<vmem>>, vector<16x256xbf16>,
    %110 = arith.truncf %40 : vector<16x256xf32> to vector<16x256xbf16>
    %c352 = arith.constant 352 : index
    %c0_54 = arith.constant 0 : index
    %111 = vector.load %arg20[%c352, %c0_54] : memref<1440x256xbf16, #tpu.memory_space<vmem>>, vector<16x256xbf16>
    tpu.vector_store %arg20[%c352, %c0_54], %110 {strides = array<i32>} : memref<1440x256xbf16, #tpu.memory_space<vmem>>, vector<16x256xbf16>,
    %c255_i32_55 = arith.constant 255 : i32
    %112 = tpu.dynamic_rotate %40 by %c255_i32_55 dim 1 : vector<16x256xf32>, i32 -> vector<16x256xf32>
    %113 = vector.broadcast %17 : vector<1x256xf32> to vector<16x256xf32>
    %114 = arith.mulf %112, %113 : vector<16x256xf32>
    %115 = arith.truncf %114 : vector<16x256xf32> to vector<16x256xbf16>
    %c368 = arith.constant 368 : index
    %c0_56 = arith.constant 0 : index
    %116 = vector.load %arg20[%c368, %c0_56] : memref<1440x256xbf16, #tpu.memory_space<vmem>>, vector<16x256xbf16>
    tpu.vector_store %arg20[%c368, %c0_56], %115 {strides = array<i32>} : memref<1440x256xbf16, #tpu.memory_space<vmem>>, vector<16x256xbf16>,
    %c249_i32_57 = arith.constant 249 : i32
    %117 = tpu.dynamic_rotate %40 by %c249_i32_57 dim 1 : vector<16x256xf32>, i32 -> vector<16x256xf32>
    %118 = vector.broadcast %19 : vector<1x256xf32> to vector<16x256xf32>
    %119 = arith.mulf %117, %118 : vector<16x256xf32>
    %120 = arith.truncf %119 : vector<16x256xf32> to vector<16x256xbf16>
    %c384 = arith.constant 384 : index
    %c0_58 = arith.constant 0 : index
    %121 = vector.load %arg20[%c384, %c0_58] : memref<1440x256xbf16, #tpu.memory_space<vmem>>, vector<16x256xbf16>
    tpu.vector_store %arg20[%c384, %c0_58], %120 {strides = array<i32>} : memref<1440x256xbf16, #tpu.memory_space<vmem>>, vector<16x256xbf16>,
    %c248_i32_59 = arith.constant 248 : i32
    %122 = tpu.dynamic_rotate %40 by %c248_i32_59 dim 1 : vector<16x256xf32>, i32 -> vector<16x256xf32>
    %123 = vector.broadcast %21 : vector<1x256xf32> to vector<16x256xf32>
    %124 = arith.mulf %122, %123 : vector<16x256xf32>
    %125 = arith.truncf %124 : vector<16x256xf32> to vector<16x256xbf16>
    %c400 = arith.constant 400 : index
    %c0_60 = arith.constant 0 : index
    %126 = vector.load %arg20[%c400, %c0_60] : memref<1440x256xbf16, #tpu.memory_space<vmem>>, vector<16x256xbf16>
    tpu.vector_store %arg20[%c400, %c0_60], %125 {strides = array<i32>} : memref<1440x256xbf16, #tpu.memory_space<vmem>>, vector<16x256xbf16>,
    %c247_i32_61 = arith.constant 247 : i32
    %127 = tpu.dynamic_rotate %40 by %c247_i32_61 dim 1 : vector<16x256xf32>, i32 -> vector<16x256xf32>
    %128 = vector.broadcast %23 : vector<1x256xf32> to vector<16x256xf32>
    %129 = arith.mulf %127, %128 : vector<16x256xf32>
    %130 = arith.truncf %129 : vector<16x256xf32> to vector<16x256xbf16>
    %c416 = arith.constant 416 : index
    %c0_62 = arith.constant 0 : index
    %131 = vector.load %arg20[%c416, %c0_62] : memref<1440x256xbf16, #tpu.memory_space<vmem>>, vector<16x256xbf16>
    tpu.vector_store %arg20[%c416, %c0_62], %130 {strides = array<i32>} : memref<1440x256xbf16, #tpu.memory_space<vmem>>, vector<16x256xbf16>,
    %c9_i32_63 = arith.constant 9 : i32
    %132 = tpu.dynamic_rotate %45 by %c9_i32_63 dim 1 : vector<32x256xf32>, i32 -> vector<32x256xf32>
    %133 = vector.broadcast %9 : vector<1x256xf32> to vector<32x256xf32>
    %134 = arith.mulf %132, %133 : vector<32x256xf32>
    %135 = arith.truncf %134 : vector<32x256xf32> to vector<32x256xbf16>
    %c432 = arith.constant 432 : index
    %c0_64 = arith.constant 0 : index
    %136 = vector.load %arg20[%c432, %c0_64] : memref<1440x256xbf16, #tpu.memory_space<vmem>>, vector<32x256xbf16>
    tpu.vector_store %arg20[%c432, %c0_64], %135 {strides = array<i32>} : memref<1440x256xbf16, #tpu.memory_space<vmem>>, vector<32x256xbf16>,
    %c8_i32_65 = arith.constant 8 : i32
    %137 = tpu.dynamic_rotate %45 by %c8_i32_65 dim 1 : vector<32x256xf32>, i32 -> vector<32x256xf32>
    %138 = vector.broadcast %11 : vector<1x256xf32> to vector<32x256xf32>
    %139 = arith.mulf %137, %138 : vector<32x256xf32>
    %140 = arith.truncf %139 : vector<32x256xf32> to vector<32x256xbf16>
    %c464 = arith.constant 464 : index
    %c0_66 = arith.constant 0 : index
    %141 = vector.load %arg20[%c464, %c0_66] : memref<1440x256xbf16, #tpu.memory_space<vmem>>, vector<32x256xbf16>
    tpu.vector_store %arg20[%c464, %c0_66], %140 {strides = array<i32>} : memref<1440x256xbf16, #tpu.memory_space<vmem>>, vector<32x256xbf16>,
    %c7_i32_67 = arith.constant 7 : i32
    %142 = tpu.dynamic_rotate %45 by %c7_i32_67 dim 1 : vector<32x256xf32>, i32 -> vector<32x256xf32>
    %143 = vector.broadcast %13 : vector<1x256xf32> to vector<32x256xf32>
    %144 = arith.mulf %142, %143 : vector<32x256xf32>
    %145 = arith.truncf %144 : vector<32x256xf32> to vector<32x256xbf16>
    %c496 = arith.constant 496 : index
    %c0_68 = arith.constant 0 : index
    %146 = vector.load %arg20[%c496, %c0_68] : memref<1440x256xbf16, #tpu.memory_space<vmem>>, vector<32x256xbf16>
    tpu.vector_store %arg20[%c496, %c0_68], %145 {strides = array<i32>} : memref<1440x256xbf16, #tpu.memory_space<vmem>>, vector<32x256xbf16>,
    %c1_i32_69 = arith.constant 1 : i32
    %147 = tpu.dynamic_rotate %45 by %c1_i32_69 dim 1 : vector<32x256xf32>, i32 -> vector<32x256xf32>
    %148 = vector.broadcast %15 : vector<1x256xf32> to vector<32x256xf32>
    %149 = arith.mulf %147, %148 : vector<32x256xf32>
    %150 = arith.truncf %149 : vector<32x256xf32> to vector<32x256xbf16>
    %c528 = arith.constant 528 : index
    %c0_70 = arith.constant 0 : index
    %151 = vector.load %arg20[%c528, %c0_70] : memref<1440x256xbf16, #tpu.memory_space<vmem>>, vector<32x256xbf16>
    tpu.vector_store %arg20[%c528, %c0_70], %150 {strides = array<i32>} : memref<1440x256xbf16, #tpu.memory_space<vmem>>, vector<32x256xbf16>,
    %152 = arith.truncf %45 : vector<32x256xf32> to vector<32x256xbf16>
    %c560 = arith.constant 560 : index
    %c0_71 = arith.constant 0 : index
    %153 = vector.load %arg20[%c560, %c0_71] : memref<1440x256xbf16, #tpu.memory_space<vmem>>, vector<32x256xbf16>
    tpu.vector_store %arg20[%c560, %c0_71], %152 {strides = array<i32>} : memref<1440x256xbf16, #tpu.memory_space<vmem>>, vector<32x256xbf16>,
    %c255_i32_72 = arith.constant 255 : i32
    %154 = tpu.dynamic_rotate %45 by %c255_i32_72 dim 1 : vector<32x256xf32>, i32 -> vector<32x256xf32>
    %155 = vector.broadcast %17 : vector<1x256xf32> to vector<32x256xf32>
    %156 = arith.mulf %154, %155 : vector<32x256xf32>
    %157 = arith.truncf %156 : vector<32x256xf32> to vector<32x256xbf16>
    %c592 = arith.constant 592 : index
    %c0_73 = arith.constant 0 : index
    %158 = vector.load %arg20[%c592, %c0_73] : memref<1440x256xbf16, #tpu.memory_space<vmem>>, vector<32x256xbf16>
    tpu.vector_store %arg20[%c592, %c0_73], %157 {strides = array<i32>} : memref<1440x256xbf16, #tpu.memory_space<vmem>>, vector<32x256xbf16>,
    %c249_i32_74 = arith.constant 249 : i32
    %159 = tpu.dynamic_rotate %45 by %c249_i32_74 dim 1 : vector<32x256xf32>, i32 -> vector<32x256xf32>
    %160 = vector.broadcast %19 : vector<1x256xf32> to vector<32x256xf32>
    %161 = arith.mulf %159, %160 : vector<32x256xf32>
    %162 = arith.truncf %161 : vector<32x256xf32> to vector<32x256xbf16>
    %c624 = arith.constant 624 : index
    %c0_75 = arith.constant 0 : index
    %163 = vector.load %arg20[%c624, %c0_75] : memref<1440x256xbf16, #tpu.memory_space<vmem>>, vector<32x256xbf16>
    tpu.vector_store %arg20[%c624, %c0_75], %162 {strides = array<i32>} : memref<1440x256xbf16, #tpu.memory_space<vmem>>, vector<32x256xbf16>,
    %c248_i32_76 = arith.constant 248 : i32
    %164 = tpu.dynamic_rotate %45 by %c248_i32_76 dim 1 : vector<32x256xf32>, i32 -> vector<32x256xf32>
    %165 = vector.broadcast %21 : vector<1x256xf32> to vector<32x256xf32>
    %166 = arith.mulf %164, %165 : vector<32x256xf32>
    %167 = arith.truncf %166 : vector<32x256xf32> to vector<32x256xbf16>
    %c656 = arith.constant 656 : index
    %c0_77 = arith.constant 0 : index
    %168 = vector.load %arg20[%c656, %c0_77] : memref<1440x256xbf16, #tpu.memory_space<vmem>>, vector<32x256xbf16>
    tpu.vector_store %arg20[%c656, %c0_77], %167 {strides = array<i32>} : memref<1440x256xbf16, #tpu.memory_space<vmem>>, vector<32x256xbf16>,
    %c247_i32_78 = arith.constant 247 : i32
    %169 = tpu.dynamic_rotate %45 by %c247_i32_78 dim 1 : vector<32x256xf32>, i32 -> vector<32x256xf32>
    %170 = vector.broadcast %23 : vector<1x256xf32> to vector<32x256xf32>
    %171 = arith.mulf %169, %170 : vector<32x256xf32>
    %172 = arith.truncf %171 : vector<32x256xf32> to vector<32x256xbf16>
    %c688 = arith.constant 688 : index
    %c0_79 = arith.constant 0 : index
    %173 = vector.load %arg20[%c688, %c0_79] : memref<1440x256xbf16, #tpu.memory_space<vmem>>, vector<32x256xbf16>
    tpu.vector_store %arg20[%c688, %c0_79], %172 {strides = array<i32>} : memref<1440x256xbf16, #tpu.memory_space<vmem>>, vector<32x256xbf16>,
    %c0_80 = arith.constant 0 : index
    %c0_81 = arith.constant 0 : index
    %174 = vector.load %arg5[%c0_80, %c0_81] : memref<128x432xbf16, #tpu.memory_space<vmem>>, vector<128x432xbf16>
    %c288_82 = arith.constant 288 : index
    %c0_83 = arith.constant 0 : index
    %175 = vector.load %arg20[%c288_82, %c0_83] : memref<1440x256xbf16, #tpu.memory_space<vmem>>, vector<432x256xbf16>
    %cst_84 = arith.constant dense<0.000000e+00> : vector<128x256xf32>
    %176 = tpu.matmul %174, %175, %cst_84 {dimension_numbers = #tpu.dot_dimension_numbers<[1], [0], [0], [1], [0, 0, 1, 1], [], []>} : vector<128x432xbf16>, vector<432x256xbf16>, vector<128x256xf32> -> vector<128x256xf32>
    %c0_85 = arith.constant 0 : index
    %c0_86 = arith.constant 0 : index
    %177 = vector.load %arg6[%c0_85, %c0_86] : memref<96x432xbf16, #tpu.memory_space<vmem>>, vector<96x432xbf16>
    %c0_87 = arith.constant 0 : index
    %c0_88 = arith.constant 0 : index
    %178 = vector.load %arg20[%c0_87, %c0_88] : memref<1440x256xbf16, #tpu.memory_space<vmem>>, vector<432x256xbf16>
    %cst_89 = arith.constant dense<0.000000e+00> : vector<96x256xf32>
    %179 = tpu.matmul %177, %178, %cst_89 {dimension_numbers = #tpu.dot_dimension_numbers<[1], [0], [0], [1], [0, 0, 1, 1], [], []>} : vector<96x432xbf16>, vector<432x256xbf16>, vector<96x256xf32> -> vector<96x256xf32>
    %180 = vector.extract_strided_slice %176 {offsets = [0, 0], sizes = [32, 256], strides = [1, 1]} : vector<128x256xf32> to vector<32x256xf32>
    %181 = arith.negf %180 : vector<32x256xf32>
    %182 = math.exp %181 : vector<32x256xf32>
    %cst_90 = arith.constant 1.000000e+00 : f32
    %183 = vector.broadcast %cst_90 : f32 to vector<32x256xf32>
    %184 = arith.addf %183, %182 : vector<32x256xf32>
    %185 = arith.divf %183, %184 : vector<32x256xf32>
    %186 = vector.extract_strided_slice %176 {offsets = [32, 0], sizes = [32, 256], strides = [1, 1]} : vector<128x256xf32> to vector<32x256xf32>
    %cst_91 = arith.constant 1.000000e+00 : f32
    %187 = vector.broadcast %cst_91 : f32 to vector<32x256xf32>
    %188 = arith.addf %186, %187 : vector<32x256xf32>
    %189 = arith.negf %188 : vector<32x256xf32>
    %190 = math.exp %189 : vector<32x256xf32>
    %cst_92 = arith.constant 1.000000e+00 : f32
    %191 = vector.broadcast %cst_92 : f32 to vector<32x256xf32>
    %192 = arith.addf %191, %190 : vector<32x256xf32>
    %193 = arith.divf %191, %192 : vector<32x256xf32>
    %194 = vector.extract_strided_slice %176 {offsets = [64, 0], sizes = [32, 256], strides = [1, 1]} : vector<128x256xf32> to vector<32x256xf32>
    %195 = math.tanh %194 : vector<32x256xf32>
    %196 = arith.mulf %193, %47 : vector<32x256xf32>
    %197 = arith.mulf %185, %195 : vector<32x256xf32>
    %198 = arith.addf %196, %197 : vector<32x256xf32>
    %199 = vector.extract_strided_slice %179 {offsets = [0, 0], sizes = [32, 256], strides = [1, 1]} : vector<96x256xf32> to vector<32x256xf32>
    %200 = arith.negf %199 : vector<32x256xf32>
    %201 = math.exp %200 : vector<32x256xf32>
    %cst_93 = arith.constant 1.000000e+00 : f32
    %202 = vector.broadcast %cst_93 : f32 to vector<32x256xf32>
    %203 = arith.addf %202, %201 : vector<32x256xf32>
    %204 = arith.divf %202, %203 : vector<32x256xf32>
    %205 = vector.extract_strided_slice %179 {offsets = [32, 0], sizes = [32, 256], strides = [1, 1]} : vector<96x256xf32> to vector<32x256xf32>
    %cst_94 = arith.constant 1.000000e+00 : f32
    %206 = vector.broadcast %cst_94 : f32 to vector<32x256xf32>
    %207 = arith.addf %205, %206 : vector<32x256xf32>
    %208 = arith.negf %207 : vector<32x256xf32>
    %209 = math.exp %208 : vector<32x256xf32>
    %cst_95 = arith.constant 1.000000e+00 : f32
    %210 = vector.broadcast %cst_95 : f32 to vector<32x256xf32>
    %211 = arith.addf %210, %209 : vector<32x256xf32>
    %212 = arith.divf %210, %211 : vector<32x256xf32>
    %213 = vector.extract_strided_slice %179 {offsets = [64, 0], sizes = [32, 256], strides = [1, 1]} : vector<96x256xf32> to vector<32x256xf32>
    %214 = math.tanh %213 : vector<32x256xf32>
    %215 = arith.mulf %212, %42 : vector<32x256xf32>
    %216 = arith.mulf %204, %214 : vector<32x256xf32>
    %217 = arith.addf %215, %216 : vector<32x256xf32>
    %c9_i32_96 = arith.constant 9 : i32
    %218 = tpu.dynamic_rotate %198 by %c9_i32_96 dim 1 : vector<32x256xf32>, i32 -> vector<32x256xf32>
    %219 = vector.broadcast %9 : vector<1x256xf32> to vector<32x256xf32>
    %220 = arith.mulf %218, %219 : vector<32x256xf32>
    %221 = arith.truncf %220 : vector<32x256xf32> to vector<32x256xbf16>
    %c864 = arith.constant 864 : index
    %c0_97 = arith.constant 0 : index
    %222 = vector.load %arg20[%c864, %c0_97] : memref<1440x256xbf16, #tpu.memory_space<vmem>>, vector<32x256xbf16>
    tpu.vector_store %arg20[%c864, %c0_97], %221 {strides = array<i32>} : memref<1440x256xbf16, #tpu.memory_space<vmem>>, vector<32x256xbf16>,
    %c9_i32_98 = arith.constant 9 : i32
    %223 = tpu.dynamic_rotate %217 by %c9_i32_98 dim 1 : vector<32x256xf32>, i32 -> vector<32x256xf32>
    %224 = vector.broadcast %9 : vector<1x256xf32> to vector<32x256xf32>
    %225 = arith.mulf %223, %224 : vector<32x256xf32>
    %226 = arith.truncf %225 : vector<32x256xf32> to vector<32x256xbf16>
    %c896 = arith.constant 896 : index
    %c0_99 = arith.constant 0 : index
    %227 = vector.load %arg20[%c896, %c0_99] : memref<1440x256xbf16, #tpu.memory_space<vmem>>, vector<32x256xbf16>
    tpu.vector_store %arg20[%c896, %c0_99], %226 {strides = array<i32>} : memref<1440x256xbf16, #tpu.memory_space<vmem>>, vector<32x256xbf16>,
    %c8_i32_100 = arith.constant 8 : i32
    %228 = tpu.dynamic_rotate %198 by %c8_i32_100 dim 1 : vector<32x256xf32>, i32 -> vector<32x256xf32>
    %229 = vector.broadcast %11 : vector<1x256xf32> to vector<32x256xf32>
    %230 = arith.mulf %228, %229 : vector<32x256xf32>
    %231 = arith.truncf %230 : vector<32x256xf32> to vector<32x256xbf16>
    %c928 = arith.constant 928 : index
    %c0_101 = arith.constant 0 : index
    %232 = vector.load %arg20[%c928, %c0_101] : memref<1440x256xbf16, #tpu.memory_space<vmem>>, vector<32x256xbf16>
    tpu.vector_store %arg20[%c928, %c0_101], %231 {strides = array<i32>} : memref<1440x256xbf16, #tpu.memory_space<vmem>>, vector<32x256xbf16>,
    %c8_i32_102 = arith.constant 8 : i32
    %233 = tpu.dynamic_rotate %217 by %c8_i32_102 dim 1 : vector<32x256xf32>, i32 -> vector<32x256xf32>
    %234 = vector.broadcast %11 : vector<1x256xf32> to vector<32x256xf32>
    %235 = arith.mulf %233, %234 : vector<32x256xf32>
    %236 = arith.truncf %235 : vector<32x256xf32> to vector<32x256xbf16>
    %c960 = arith.constant 960 : index
    %c0_103 = arith.constant 0 : index
    %237 = vector.load %arg20[%c960, %c0_103] : memref<1440x256xbf16, #tpu.memory_space<vmem>>, vector<32x256xbf16>
    tpu.vector_store %arg20[%c960, %c0_103], %236 {strides = array<i32>} : memref<1440x256xbf16, #tpu.memory_space<vmem>>, vector<32x256xbf16>,
    %c7_i32_104 = arith.constant 7 : i32
    %238 = tpu.dynamic_rotate %198 by %c7_i32_104 dim 1 : vector<32x256xf32>, i32 -> vector<32x256xf32>
    %239 = vector.broadcast %13 : vector<1x256xf32> to vector<32x256xf32>
    %240 = arith.mulf %238, %239 : vector<32x256xf32>
    %241 = arith.truncf %240 : vector<32x256xf32> to vector<32x256xbf16>
    %c992 = arith.constant 992 : index
    %c0_105 = arith.constant 0 : index
    %242 = vector.load %arg20[%c992, %c0_105] : memref<1440x256xbf16, #tpu.memory_space<vmem>>, vector<32x256xbf16>
    tpu.vector_store %arg20[%c992, %c0_105], %241 {strides = array<i32>} : memref<1440x256xbf16, #tpu.memory_space<vmem>>, vector<32x256xbf16>,
    %c7_i32_106 = arith.constant 7 : i32
    %243 = tpu.dynamic_rotate %217 by %c7_i32_106 dim 1 : vector<32x256xf32>, i32 -> vector<32x256xf32>
    %244 = vector.broadcast %13 : vector<1x256xf32> to vector<32x256xf32>
    %245 = arith.mulf %243, %244 : vector<32x256xf32>
    %246 = arith.truncf %245 : vector<32x256xf32> to vector<32x256xbf16>
    %c1024 = arith.constant 1024 : index
    %c0_107 = arith.constant 0 : index
    %247 = vector.load %arg20[%c1024, %c0_107] : memref<1440x256xbf16, #tpu.memory_space<vmem>>, vector<32x256xbf16>
    tpu.vector_store %arg20[%c1024, %c0_107], %246 {strides = array<i32>} : memref<1440x256xbf16, #tpu.memory_space<vmem>>, vector<32x256xbf16>,
    %c1_i32_108 = arith.constant 1 : i32
    %248 = tpu.dynamic_rotate %198 by %c1_i32_108 dim 1 : vector<32x256xf32>, i32 -> vector<32x256xf32>
    %249 = vector.broadcast %15 : vector<1x256xf32> to vector<32x256xf32>
    %250 = arith.mulf %248, %249 : vector<32x256xf32>
    %251 = arith.truncf %250 : vector<32x256xf32> to vector<32x256xbf16>
    %c1056 = arith.constant 1056 : index
    %c0_109 = arith.constant 0 : index
    %252 = vector.load %arg20[%c1056, %c0_109] : memref<1440x256xbf16, #tpu.memory_space<vmem>>, vector<32x256xbf16>
    tpu.vector_store %arg20[%c1056, %c0_109], %251 {strides = array<i32>} : memref<1440x256xbf16, #tpu.memory_space<vmem>>, vector<32x256xbf16>,
    %c1_i32_110 = arith.constant 1 : i32
    %253 = tpu.dynamic_rotate %217 by %c1_i32_110 dim 1 : vector<32x256xf32>, i32 -> vector<32x256xf32>
    %254 = vector.broadcast %15 : vector<1x256xf32> to vector<32x256xf32>
    %255 = arith.mulf %253, %254 : vector<32x256xf32>
    %256 = arith.truncf %255 : vector<32x256xf32> to vector<32x256xbf16>
    %c1088 = arith.constant 1088 : index
    %c0_111 = arith.constant 0 : index
    %257 = vector.load %arg20[%c1088, %c0_111] : memref<1440x256xbf16, #tpu.memory_space<vmem>>, vector<32x256xbf16>
    tpu.vector_store %arg20[%c1088, %c0_111], %256 {strides = array<i32>} : memref<1440x256xbf16, #tpu.memory_space<vmem>>, vector<32x256xbf16>,
    %258 = arith.truncf %198 : vector<32x256xf32> to vector<32x256xbf16>
    %c1120 = arith.constant 1120 : index
    %c0_112 = arith.constant 0 : index
    %259 = vector.load %arg20[%c1120, %c0_112] : memref<1440x256xbf16, #tpu.memory_space<vmem>>, vector<32x256xbf16>
    tpu.vector_store %arg20[%c1120, %c0_112], %258 {strides = array<i32>} : memref<1440x256xbf16, #tpu.memory_space<vmem>>, vector<32x256xbf16>,
    %260 = arith.truncf %217 : vector<32x256xf32> to vector<32x256xbf16>
    %c1152 = arith.constant 1152 : index
    %c0_113 = arith.constant 0 : index
    %261 = vector.load %arg20[%c1152, %c0_113] : memref<1440x256xbf16, #tpu.memory_space<vmem>>, vector<32x256xbf16>
    tpu.vector_store %arg20[%c1152, %c0_113], %260 {strides = array<i32>} : memref<1440x256xbf16, #tpu.memory_space<vmem>>, vector<32x256xbf16>,
    %c255_i32_114 = arith.constant 255 : i32
    %262 = tpu.dynamic_rotate %198 by %c255_i32_114 dim 1 : vector<32x256xf32>, i32 -> vector<32x256xf32>
    %263 = vector.broadcast %17 : vector<1x256xf32> to vector<32x256xf32>
    %264 = arith.mulf %262, %263 : vector<32x256xf32>
    %265 = arith.truncf %264 : vector<32x256xf32> to vector<32x256xbf16>
    %c1184 = arith.constant 1184 : index
    %c0_115 = arith.constant 0 : index
    %266 = vector.load %arg20[%c1184, %c0_115] : memref<1440x256xbf16, #tpu.memory_space<vmem>>, vector<32x256xbf16>
    tpu.vector_store %arg20[%c1184, %c0_115], %265 {strides = array<i32>} : memref<1440x256xbf16, #tpu.memory_space<vmem>>, vector<32x256xbf16>,
    %c255_i32_116 = arith.constant 255 : i32
    %267 = tpu.dynamic_rotate %217 by %c255_i32_116 dim 1 : vector<32x256xf32>, i32 -> vector<32x256xf32>
    %268 = vector.broadcast %17 : vector<1x256xf32> to vector<32x256xf32>
    %269 = arith.mulf %267, %268 : vector<32x256xf32>
    %270 = arith.truncf %269 : vector<32x256xf32> to vector<32x256xbf16>
    %c1216 = arith.constant 1216 : index
    %c0_117 = arith.constant 0 : index
    %271 = vector.load %arg20[%c1216, %c0_117] : memref<1440x256xbf16, #tpu.memory_space<vmem>>, vector<32x256xbf16>
    tpu.vector_store %arg20[%c1216, %c0_117], %270 {strides = array<i32>} : memref<1440x256xbf16, #tpu.memory_space<vmem>>, vector<32x256xbf16>,
    %c249_i32_118 = arith.constant 249 : i32
    %272 = tpu.dynamic_rotate %198 by %c249_i32_118 dim 1 : vector<32x256xf32>, i32 -> vector<32x256xf32>
    %273 = vector.broadcast %19 : vector<1x256xf32> to vector<32x256xf32>
    %274 = arith.mulf %272, %273 : vector<32x256xf32>
    %275 = arith.truncf %274 : vector<32x256xf32> to vector<32x256xbf16>
    %c1248 = arith.constant 1248 : index
    %c0_119 = arith.constant 0 : index
    %276 = vector.load %arg20[%c1248, %c0_119] : memref<1440x256xbf16, #tpu.memory_space<vmem>>, vector<32x256xbf16>
    tpu.vector_store %arg20[%c1248, %c0_119], %275 {strides = array<i32>} : memref<1440x256xbf16, #tpu.memory_space<vmem>>, vector<32x256xbf16>,
    %c249_i32_120 = arith.constant 249 : i32
    %277 = tpu.dynamic_rotate %217 by %c249_i32_120 dim 1 : vector<32x256xf32>, i32 -> vector<32x256xf32>
    %278 = vector.broadcast %19 : vector<1x256xf32> to vector<32x256xf32>
    %279 = arith.mulf %277, %278 : vector<32x256xf32>
    %280 = arith.truncf %279 : vector<32x256xf32> to vector<32x256xbf16>
    %c1280 = arith.constant 1280 : index
    %c0_121 = arith.constant 0 : index
    %281 = vector.load %arg20[%c1280, %c0_121] : memref<1440x256xbf16, #tpu.memory_space<vmem>>, vector<32x256xbf16>
    tpu.vector_store %arg20[%c1280, %c0_121], %280 {strides = array<i32>} : memref<1440x256xbf16, #tpu.memory_space<vmem>>, vector<32x256xbf16>,
    %c248_i32_122 = arith.constant 248 : i32
    %282 = tpu.dynamic_rotate %198 by %c248_i32_122 dim 1 : vector<32x256xf32>, i32 -> vector<32x256xf32>
    %283 = vector.broadcast %21 : vector<1x256xf32> to vector<32x256xf32>
    %284 = arith.mulf %282, %283 : vector<32x256xf32>
    %285 = arith.truncf %284 : vector<32x256xf32> to vector<32x256xbf16>
    %c1312 = arith.constant 1312 : index
    %c0_123 = arith.constant 0 : index
    %286 = vector.load %arg20[%c1312, %c0_123] : memref<1440x256xbf16, #tpu.memory_space<vmem>>, vector<32x256xbf16>
    tpu.vector_store %arg20[%c1312, %c0_123], %285 {strides = array<i32>} : memref<1440x256xbf16, #tpu.memory_space<vmem>>, vector<32x256xbf16>,
    %c248_i32_124 = arith.constant 248 : i32
    %287 = tpu.dynamic_rotate %217 by %c248_i32_124 dim 1 : vector<32x256xf32>, i32 -> vector<32x256xf32>
    %288 = vector.broadcast %21 : vector<1x256xf32> to vector<32x256xf32>
    %289 = arith.mulf %287, %288 : vector<32x256xf32>
    %290 = arith.truncf %289 : vector<32x256xf32> to vector<32x256xbf16>
    %c1344 = arith.constant 1344 : index
    %c0_125 = arith.constant 0 : index
    %291 = vector.load %arg20[%c1344, %c0_125] : memref<1440x256xbf16, #tpu.memory_space<vmem>>, vector<32x256xbf16>
    tpu.vector_store %arg20[%c1344, %c0_125], %290 {strides = array<i32>} : memref<1440x256xbf16, #tpu.memory_space<vmem>>, vector<32x256xbf16>,
    %c247_i32_126 = arith.constant 247 : i32
    %292 = tpu.dynamic_rotate %198 by %c247_i32_126 dim 1 : vector<32x256xf32>, i32 -> vector<32x256xf32>
    %293 = vector.broadcast %23 : vector<1x256xf32> to vector<32x256xf32>
    %294 = arith.mulf %292, %293 : vector<32x256xf32>
    %295 = arith.truncf %294 : vector<32x256xf32> to vector<32x256xbf16>
    %c1376 = arith.constant 1376 : index
    %c0_127 = arith.constant 0 : index
    %296 = vector.load %arg20[%c1376, %c0_127] : memref<1440x256xbf16, #tpu.memory_space<vmem>>, vector<32x256xbf16>
    tpu.vector_store %arg20[%c1376, %c0_127], %295 {strides = array<i32>} : memref<1440x256xbf16, #tpu.memory_space<vmem>>, vector<32x256xbf16>,
    %c247_i32_128 = arith.constant 247 : i32
    %297 = tpu.dynamic_rotate %217 by %c247_i32_128 dim 1 : vector<32x256xf32>, i32 -> vector<32x256xf32>
    %298 = vector.broadcast %23 : vector<1x256xf32> to vector<32x256xf32>
    %299 = arith.mulf %297, %298 : vector<32x256xf32>
    %300 = arith.truncf %299 : vector<32x256xf32> to vector<32x256xbf16>
    %c1408 = arith.constant 1408 : index
    %c0_129 = arith.constant 0 : index
    %301 = vector.load %arg20[%c1408, %c0_129] : memref<1440x256xbf16, #tpu.memory_space<vmem>>, vector<32x256xbf16>
    tpu.vector_store %arg20[%c1408, %c0_129], %300 {strides = array<i32>} : memref<1440x256xbf16, #tpu.memory_space<vmem>>, vector<32x256xbf16>,
    %c0_130 = arith.constant 0 : index
    %c0_131 = arith.constant 0 : index
    %302 = vector.load %arg7[%c0_130, %c0_131] : memref<32x576xbf16, #tpu.memory_space<vmem>>, vector<32x576xbf16>
    %c864_132 = arith.constant 864 : index
    %c0_133 = arith.constant 0 : index
    %303 = vector.load %arg20[%c864_132, %c0_133] : memref<1440x256xbf16, #tpu.memory_space<vmem>>, vector<576x256xbf16>
    %cst_134 = arith.constant dense<0.000000e+00> : vector<32x256xf32>
    %304 = tpu.matmul %302, %303, %cst_134 {dimension_numbers = #tpu.dot_dimension_numbers<[1], [0], [0], [1], [0, 0, 1, 1], [], []>} : vector<32x576xbf16>, vector<576x256xbf16>, vector<32x256xf32> -> vector<32x256xf32>
    %305 = vector.extract_strided_slice %176 {offsets = [96, 0], sizes = [32, 256], strides = [1, 1]} : vector<128x256xf32> to vector<32x256xf32>
    %306 = arith.addf %305, %304 : vector<32x256xf32>
    %307 = arith.negf %306 : vector<32x256xf32>
    %308 = math.exp %307 : vector<32x256xf32>
    %cst_135 = arith.constant 1.000000e+00 : f32
    %309 = vector.broadcast %cst_135 : f32 to vector<32x256xf32>
    %310 = arith.addf %309, %308 : vector<32x256xf32>
    %311 = arith.divf %309, %310 : vector<32x256xf32>
    %c0_136 = arith.constant 0 : index
    %c0_137 = arith.constant 0 : index
    %312 = vector.load %arg8[%c0_136, %c0_137] : memref<32x64xbf16, #tpu.memory_space<vmem>>, vector<32x64xbf16>
    %c1120_138 = arith.constant 1120 : index
    %c0_139 = arith.constant 0 : index
    %313 = vector.load %arg20[%c1120_138, %c0_139] : memref<1440x256xbf16, #tpu.memory_space<vmem>>, vector<64x256xbf16>
    %cst_140 = arith.constant dense<0.000000e+00> : vector<32x256xf32>
    %314 = tpu.matmul %312, %313, %cst_140 {dimension_numbers = #tpu.dot_dimension_numbers<[1], [0], [0], [1], [0, 0, 1, 1], [], []>} : vector<32x64xbf16>, vector<64x256xbf16>, vector<32x256xf32> -> vector<32x256xf32>
    %315 = math.tanh %314 : vector<32x256xf32>
    %316 = arith.mulf %311, %315 : vector<32x256xf32>
    %317 = arith.truncf %316 : vector<32x256xf32> to vector<32x256xbf16>
    %c0_141 = arith.constant 0 : index
    %c0_142 = arith.constant 0 : index
    %c0_143 = arith.constant 0 : index
    %318 = vector.load %arg16[%c0_141, %c0_142, %c0_143] : memref<2x32x256xbf16, #tpu.memory_space<vmem>>, vector<1x32x256xbf16>
    %319 = vector.shape_cast %318 : vector<1x32x256xbf16> to vector<32x256xbf16>
    %320 = vector.shape_cast %317 : vector<32x256xbf16> to vector<1x32x256xbf16>
    tpu.vector_store %arg16[%c0_141, %c0_142, %c0_143], %320 {strides = array<i32>} : memref<2x32x256xbf16, #tpu.memory_space<vmem>>, vector<1x32x256xbf16>,
    %c0_144 = arith.constant 0 : index
    %c0_145 = arith.constant 0 : index
    %c0_146 = arith.constant 0 : index
    %321 = vector.load %arg17[%c0_144, %c0_145, %c0_146] : memref<2x32x256xf32, #tpu.memory_space<vmem>>, vector<1x32x256xf32>
    %322 = vector.shape_cast %321 : vector<1x32x256xf32> to vector<32x256xf32>
    %323 = vector.shape_cast %198 : vector<32x256xf32> to vector<1x32x256xf32>
    tpu.vector_store %arg17[%c0_144, %c0_145, %c0_146], %323 {strides = array<i32>} : memref<2x32x256xf32, #tpu.memory_space<vmem>>, vector<1x32x256xf32>,
    %c1_147 = arith.constant 1 : index
    %c0_148 = arith.constant 0 : index
    %c0_149 = arith.constant 0 : index
    %324 = vector.load %arg16[%c1_147, %c0_148, %c0_149] : memref<2x32x256xbf16, #tpu.memory_space<vmem>>, vector<1x32x256xbf16>
    %325 = vector.shape_cast %324 : vector<1x32x256xbf16> to vector<32x256xbf16>
    %326 = arith.extf %325 : vector<32x256xbf16> to vector<32x256xf32>
    %c1_150 = arith.constant 1 : index
    %c0_151 = arith.constant 0 : index
    %c0_152 = arith.constant 0 : index
    %327 = vector.load %arg17[%c1_150, %c0_151, %c0_152] : memref<2x32x256xf32, #tpu.memory_space<vmem>>, vector<1x32x256xf32>
    %328 = vector.shape_cast %327 : vector<1x32x256xf32> to vector<32x256xf32>
    %c9_i32_153 = arith.constant 9 : i32
    %329 = tpu.dynamic_rotate %217 by %c9_i32_153 dim 1 : vector<32x256xf32>, i32 -> vector<32x256xf32>
    %330 = vector.broadcast %9 : vector<1x256xf32> to vector<32x256xf32>
    %331 = arith.mulf %329, %330 : vector<32x256xf32>
    %332 = arith.truncf %331 : vector<32x256xf32> to vector<32x256xbf16>
    %c0_154 = arith.constant 0 : index
    %c0_155 = arith.constant 0 : index
    %333 = vector.load %arg20[%c0_154, %c0_155] : memref<1440x256xbf16, #tpu.memory_space<vmem>>, vector<32x256xbf16>
    tpu.vector_store %arg20[%c0_154, %c0_155], %332 {strides = array<i32>} : memref<1440x256xbf16, #tpu.memory_space<vmem>>, vector<32x256xbf16>,
    %c8_i32_156 = arith.constant 8 : i32
    %334 = tpu.dynamic_rotate %217 by %c8_i32_156 dim 1 : vector<32x256xf32>, i32 -> vector<32x256xf32>
    %335 = vector.broadcast %11 : vector<1x256xf32> to vector<32x256xf32>
    %336 = arith.mulf %334, %335 : vector<32x256xf32>
    %337 = arith.truncf %336 : vector<32x256xf32> to vector<32x256xbf16>
    %c32_157 = arith.constant 32 : index
    %c0_158 = arith.constant 0 : index
    %338 = vector.load %arg20[%c32_157, %c0_158] : memref<1440x256xbf16, #tpu.memory_space<vmem>>, vector<32x256xbf16>
    tpu.vector_store %arg20[%c32_157, %c0_158], %337 {strides = array<i32>} : memref<1440x256xbf16, #tpu.memory_space<vmem>>, vector<32x256xbf16>,
    %c7_i32_159 = arith.constant 7 : i32
    %339 = tpu.dynamic_rotate %217 by %c7_i32_159 dim 1 : vector<32x256xf32>, i32 -> vector<32x256xf32>
    %340 = vector.broadcast %13 : vector<1x256xf32> to vector<32x256xf32>
    %341 = arith.mulf %339, %340 : vector<32x256xf32>
    %342 = arith.truncf %341 : vector<32x256xf32> to vector<32x256xbf16>
    %c64_160 = arith.constant 64 : index
    %c0_161 = arith.constant 0 : index
    %343 = vector.load %arg20[%c64_160, %c0_161] : memref<1440x256xbf16, #tpu.memory_space<vmem>>, vector<32x256xbf16>
    tpu.vector_store %arg20[%c64_160, %c0_161], %342 {strides = array<i32>} : memref<1440x256xbf16, #tpu.memory_space<vmem>>, vector<32x256xbf16>,
    %c1_i32_162 = arith.constant 1 : i32
    %344 = tpu.dynamic_rotate %217 by %c1_i32_162 dim 1 : vector<32x256xf32>, i32 -> vector<32x256xf32>
    %345 = vector.broadcast %15 : vector<1x256xf32> to vector<32x256xf32>
    %346 = arith.mulf %344, %345 : vector<32x256xf32>
    %347 = arith.truncf %346 : vector<32x256xf32> to vector<32x256xbf16>
    %c96_163 = arith.constant 96 : index
    %c0_164 = arith.constant 0 : index
    %348 = vector.load %arg20[%c96_163, %c0_164] : memref<1440x256xbf16, #tpu.memory_space<vmem>>, vector<32x256xbf16>
    tpu.vector_store %arg20[%c96_163, %c0_164], %347 {strides = array<i32>} : memref<1440x256xbf16, #tpu.memory_space<vmem>>, vector<32x256xbf16>,
    %349 = arith.truncf %217 : vector<32x256xf32> to vector<32x256xbf16>
    %c128_165 = arith.constant 128 : index
    %c0_166 = arith.constant 0 : index
    %350 = vector.load %arg20[%c128_165, %c0_166] : memref<1440x256xbf16, #tpu.memory_space<vmem>>, vector<32x256xbf16>
    tpu.vector_store %arg20[%c128_165, %c0_166], %349 {strides = array<i32>} : memref<1440x256xbf16, #tpu.memory_space<vmem>>, vector<32x256xbf16>,
    %c255_i32_167 = arith.constant 255 : i32
    %351 = tpu.dynamic_rotate %217 by %c255_i32_167 dim 1 : vector<32x256xf32>, i32 -> vector<32x256xf32>
    %352 = vector.broadcast %17 : vector<1x256xf32> to vector<32x256xf32>
    %353 = arith.mulf %351, %352 : vector<32x256xf32>
    %354 = arith.truncf %353 : vector<32x256xf32> to vector<32x256xbf16>
    %c160_168 = arith.constant 160 : index
    %c0_169 = arith.constant 0 : index
    %355 = vector.load %arg20[%c160_168, %c0_169] : memref<1440x256xbf16, #tpu.memory_space<vmem>>, vector<32x256xbf16>
    tpu.vector_store %arg20[%c160_168, %c0_169], %354 {strides = array<i32>} : memref<1440x256xbf16, #tpu.memory_space<vmem>>, vector<32x256xbf16>,
    %c249_i32_170 = arith.constant 249 : i32
    %356 = tpu.dynamic_rotate %217 by %c249_i32_170 dim 1 : vector<32x256xf32>, i32 -> vector<32x256xf32>
    %357 = vector.broadcast %19 : vector<1x256xf32> to vector<32x256xf32>
    %358 = arith.mulf %356, %357 : vector<32x256xf32>
    %359 = arith.truncf %358 : vector<32x256xf32> to vector<32x256xbf16>
    %c192_171 = arith.constant 192 : index
    %c0_172 = arith.constant 0 : index
    %360 = vector.load %arg20[%c192_171, %c0_172] : memref<1440x256xbf16, #tpu.memory_space<vmem>>, vector<32x256xbf16>
    tpu.vector_store %arg20[%c192_171, %c0_172], %359 {strides = array<i32>} : memref<1440x256xbf16, #tpu.memory_space<vmem>>, vector<32x256xbf16>,
    %c248_i32_173 = arith.constant 248 : i32
    %361 = tpu.dynamic_rotate %217 by %c248_i32_173 dim 1 : vector<32x256xf32>, i32 -> vector<32x256xf32>
    %362 = vector.broadcast %21 : vector<1x256xf32> to vector<32x256xf32>
    %363 = arith.mulf %361, %362 : vector<32x256xf32>
    %364 = arith.truncf %363 : vector<32x256xf32> to vector<32x256xbf16>
    %c224_174 = arith.constant 224 : index
    %c0_175 = arith.constant 0 : index
    %365 = vector.load %arg20[%c224_174, %c0_175] : memref<1440x256xbf16, #tpu.memory_space<vmem>>, vector<32x256xbf16>
    tpu.vector_store %arg20[%c224_174, %c0_175], %364 {strides = array<i32>} : memref<1440x256xbf16, #tpu.memory_space<vmem>>, vector<32x256xbf16>,
    %c247_i32_176 = arith.constant 247 : i32
    %366 = tpu.dynamic_rotate %217 by %c247_i32_176 dim 1 : vector<32x256xf32>, i32 -> vector<32x256xf32>
    %367 = vector.broadcast %23 : vector<1x256xf32> to vector<32x256xf32>
    %368 = arith.mulf %366, %367 : vector<32x256xf32>
    %369 = arith.truncf %368 : vector<32x256xf32> to vector<32x256xbf16>
    %c256_177 = arith.constant 256 : index
    %c0_178 = arith.constant 0 : index
    %370 = vector.load %arg20[%c256_177, %c0_178] : memref<1440x256xbf16, #tpu.memory_space<vmem>>, vector<32x256xbf16>
    tpu.vector_store %arg20[%c256_177, %c0_178], %369 {strides = array<i32>} : memref<1440x256xbf16, #tpu.memory_space<vmem>>, vector<32x256xbf16>,
    %c9_i32_179 = arith.constant 9 : i32
    %371 = tpu.dynamic_rotate %316 by %c9_i32_179 dim 1 : vector<32x256xf32>, i32 -> vector<32x256xf32>
    %372 = vector.broadcast %9 : vector<1x256xf32> to vector<32x256xf32>
    %373 = arith.mulf %371, %372 : vector<32x256xf32>
    %374 = arith.truncf %373 : vector<32x256xf32> to vector<32x256xbf16>
    %c288_180 = arith.constant 288 : index
    %c0_181 = arith.constant 0 : index
    %375 = vector.load %arg20[%c288_180, %c0_181] : memref<1440x256xbf16, #tpu.memory_space<vmem>>, vector<32x256xbf16>
    tpu.vector_store %arg20[%c288_180, %c0_181], %374 {strides = array<i32>} : memref<1440x256xbf16, #tpu.memory_space<vmem>>, vector<32x256xbf16>,
    %c8_i32_182 = arith.constant 8 : i32
    %376 = tpu.dynamic_rotate %316 by %c8_i32_182 dim 1 : vector<32x256xf32>, i32 -> vector<32x256xf32>
    %377 = vector.broadcast %11 : vector<1x256xf32> to vector<32x256xf32>
    %378 = arith.mulf %376, %377 : vector<32x256xf32>
    %379 = arith.truncf %378 : vector<32x256xf32> to vector<32x256xbf16>
    %c320_183 = arith.constant 320 : index
    %c0_184 = arith.constant 0 : index
    %380 = vector.load %arg20[%c320_183, %c0_184] : memref<1440x256xbf16, #tpu.memory_space<vmem>>, vector<32x256xbf16>
    tpu.vector_store %arg20[%c320_183, %c0_184], %379 {strides = array<i32>} : memref<1440x256xbf16, #tpu.memory_space<vmem>>, vector<32x256xbf16>,
    %c7_i32_185 = arith.constant 7 : i32
    %381 = tpu.dynamic_rotate %316 by %c7_i32_185 dim 1 : vector<32x256xf32>, i32 -> vector<32x256xf32>
    %382 = vector.broadcast %13 : vector<1x256xf32> to vector<32x256xf32>
    %383 = arith.mulf %381, %382 : vector<32x256xf32>
    %384 = arith.truncf %383 : vector<32x256xf32> to vector<32x256xbf16>
    %c352_186 = arith.constant 352 : index
    %c0_187 = arith.constant 0 : index
    %385 = vector.load %arg20[%c352_186, %c0_187] : memref<1440x256xbf16, #tpu.memory_space<vmem>>, vector<32x256xbf16>
    tpu.vector_store %arg20[%c352_186, %c0_187], %384 {strides = array<i32>} : memref<1440x256xbf16, #tpu.memory_space<vmem>>, vector<32x256xbf16>,
    %c1_i32_188 = arith.constant 1 : i32
    %386 = tpu.dynamic_rotate %316 by %c1_i32_188 dim 1 : vector<32x256xf32>, i32 -> vector<32x256xf32>
    %387 = vector.broadcast %15 : vector<1x256xf32> to vector<32x256xf32>
    %388 = arith.mulf %386, %387 : vector<32x256xf32>
    %389 = arith.truncf %388 : vector<32x256xf32> to vector<32x256xbf16>
    %c384_189 = arith.constant 384 : index
    %c0_190 = arith.constant 0 : index
    %390 = vector.load %arg20[%c384_189, %c0_190] : memref<1440x256xbf16, #tpu.memory_space<vmem>>, vector<32x256xbf16>
    tpu.vector_store %arg20[%c384_189, %c0_190], %389 {strides = array<i32>} : memref<1440x256xbf16, #tpu.memory_space<vmem>>, vector<32x256xbf16>,
    %391 = arith.truncf %316 : vector<32x256xf32> to vector<32x256xbf16>
    %c416_191 = arith.constant 416 : index
    %c0_192 = arith.constant 0 : index
    %392 = vector.load %arg20[%c416_191, %c0_192] : memref<1440x256xbf16, #tpu.memory_space<vmem>>, vector<32x256xbf16>
    tpu.vector_store %arg20[%c416_191, %c0_192], %391 {strides = array<i32>} : memref<1440x256xbf16, #tpu.memory_space<vmem>>, vector<32x256xbf16>,
    %c255_i32_193 = arith.constant 255 : i32
    %393 = tpu.dynamic_rotate %316 by %c255_i32_193 dim 1 : vector<32x256xf32>, i32 -> vector<32x256xf32>
    %394 = vector.broadcast %17 : vector<1x256xf32> to vector<32x256xf32>
    %395 = arith.mulf %393, %394 : vector<32x256xf32>
    %396 = arith.truncf %395 : vector<32x256xf32> to vector<32x256xbf16>
    %c448 = arith.constant 448 : index
    %c0_194 = arith.constant 0 : index
    %397 = vector.load %arg20[%c448, %c0_194] : memref<1440x256xbf16, #tpu.memory_space<vmem>>, vector<32x256xbf16>
    tpu.vector_store %arg20[%c448, %c0_194], %396 {strides = array<i32>} : memref<1440x256xbf16, #tpu.memory_space<vmem>>, vector<32x256xbf16>,
    %c249_i32_195 = arith.constant 249 : i32
    %398 = tpu.dynamic_rotate %316 by %c249_i32_195 dim 1 : vector<32x256xf32>, i32 -> vector<32x256xf32>
    %399 = vector.broadcast %19 : vector<1x256xf32> to vector<32x256xf32>
    %400 = arith.mulf %398, %399 : vector<32x256xf32>
    %401 = arith.truncf %400 : vector<32x256xf32> to vector<32x256xbf16>
    %c480 = arith.constant 480 : index
    %c0_196 = arith.constant 0 : index
    %402 = vector.load %arg20[%c480, %c0_196] : memref<1440x256xbf16, #tpu.memory_space<vmem>>, vector<32x256xbf16>
    tpu.vector_store %arg20[%c480, %c0_196], %401 {strides = array<i32>} : memref<1440x256xbf16, #tpu.memory_space<vmem>>, vector<32x256xbf16>,
    %c248_i32_197 = arith.constant 248 : i32
    %403 = tpu.dynamic_rotate %316 by %c248_i32_197 dim 1 : vector<32x256xf32>, i32 -> vector<32x256xf32>
    %404 = vector.broadcast %21 : vector<1x256xf32> to vector<32x256xf32>
    %405 = arith.mulf %403, %404 : vector<32x256xf32>
    %406 = arith.truncf %405 : vector<32x256xf32> to vector<32x256xbf16>
    %c512 = arith.constant 512 : index
    %c0_198 = arith.constant 0 : index
    %407 = vector.load %arg20[%c512, %c0_198] : memref<1440x256xbf16, #tpu.memory_space<vmem>>, vector<32x256xbf16>
    tpu.vector_store %arg20[%c512, %c0_198], %406 {strides = array<i32>} : memref<1440x256xbf16, #tpu.memory_space<vmem>>, vector<32x256xbf16>,
    %c247_i32_199 = arith.constant 247 : i32
    %408 = tpu.dynamic_rotate %316 by %c247_i32_199 dim 1 : vector<32x256xf32>, i32 -> vector<32x256xf32>
    %409 = vector.broadcast %23 : vector<1x256xf32> to vector<32x256xf32>
    %410 = arith.mulf %408, %409 : vector<32x256xf32>
    %411 = arith.truncf %410 : vector<32x256xf32> to vector<32x256xbf16>
    %c544 = arith.constant 544 : index
    %c0_200 = arith.constant 0 : index
    %412 = vector.load %arg20[%c544, %c0_200] : memref<1440x256xbf16, #tpu.memory_space<vmem>>, vector<32x256xbf16>
    tpu.vector_store %arg20[%c544, %c0_200], %411 {strides = array<i32>} : memref<1440x256xbf16, #tpu.memory_space<vmem>>, vector<32x256xbf16>,
    %c9_i32_201 = arith.constant 9 : i32
    %413 = tpu.dynamic_rotate %326 by %c9_i32_201 dim 1 : vector<32x256xf32>, i32 -> vector<32x256xf32>
    %414 = vector.broadcast %9 : vector<1x256xf32> to vector<32x256xf32>
    %415 = arith.mulf %413, %414 : vector<32x256xf32>
    %416 = arith.truncf %415 : vector<32x256xf32> to vector<32x256xbf16>
    %c576 = arith.constant 576 : index
    %c0_202 = arith.constant 0 : index
    %417 = vector.load %arg20[%c576, %c0_202] : memref<1440x256xbf16, #tpu.memory_space<vmem>>, vector<32x256xbf16>
    tpu.vector_store %arg20[%c576, %c0_202], %416 {strides = array<i32>} : memref<1440x256xbf16, #tpu.memory_space<vmem>>, vector<32x256xbf16>,
    %c8_i32_203 = arith.constant 8 : i32
    %418 = tpu.dynamic_rotate %326 by %c8_i32_203 dim 1 : vector<32x256xf32>, i32 -> vector<32x256xf32>
    %419 = vector.broadcast %11 : vector<1x256xf32> to vector<32x256xf32>
    %420 = arith.mulf %418, %419 : vector<32x256xf32>
    %421 = arith.truncf %420 : vector<32x256xf32> to vector<32x256xbf16>
    %c608 = arith.constant 608 : index
    %c0_204 = arith.constant 0 : index
    %422 = vector.load %arg20[%c608, %c0_204] : memref<1440x256xbf16, #tpu.memory_space<vmem>>, vector<32x256xbf16>
    tpu.vector_store %arg20[%c608, %c0_204], %421 {strides = array<i32>} : memref<1440x256xbf16, #tpu.memory_space<vmem>>, vector<32x256xbf16>,
    %c7_i32_205 = arith.constant 7 : i32
    %423 = tpu.dynamic_rotate %326 by %c7_i32_205 dim 1 : vector<32x256xf32>, i32 -> vector<32x256xf32>
    %424 = vector.broadcast %13 : vector<1x256xf32> to vector<32x256xf32>
    %425 = arith.mulf %423, %424 : vector<32x256xf32>
    %426 = arith.truncf %425 : vector<32x256xf32> to vector<32x256xbf16>
    %c640 = arith.constant 640 : index
    %c0_206 = arith.constant 0 : index
    %427 = vector.load %arg20[%c640, %c0_206] : memref<1440x256xbf16, #tpu.memory_space<vmem>>, vector<32x256xbf16>
    tpu.vector_store %arg20[%c640, %c0_206], %426 {strides = array<i32>} : memref<1440x256xbf16, #tpu.memory_space<vmem>>, vector<32x256xbf16>,
    %c1_i32_207 = arith.constant 1 : i32
    %428 = tpu.dynamic_rotate %326 by %c1_i32_207 dim 1 : vector<32x256xf32>, i32 -> vector<32x256xf32>
    %429 = vector.broadcast %15 : vector<1x256xf32> to vector<32x256xf32>
    %430 = arith.mulf %428, %429 : vector<32x256xf32>
    %431 = arith.truncf %430 : vector<32x256xf32> to vector<32x256xbf16>
    %c672 = arith.constant 672 : index
    %c0_208 = arith.constant 0 : index
    %432 = vector.load %arg20[%c672, %c0_208] : memref<1440x256xbf16, #tpu.memory_space<vmem>>, vector<32x256xbf16>
    tpu.vector_store %arg20[%c672, %c0_208], %431 {strides = array<i32>} : memref<1440x256xbf16, #tpu.memory_space<vmem>>, vector<32x256xbf16>,
    %433 = arith.truncf %326 : vector<32x256xf32> to vector<32x256xbf16>
    %c704 = arith.constant 704 : index
    %c0_209 = arith.constant 0 : index
    %434 = vector.load %arg20[%c704, %c0_209] : memref<1440x256xbf16, #tpu.memory_space<vmem>>, vector<32x256xbf16>
    tpu.vector_store %arg20[%c704, %c0_209], %433 {strides = array<i32>} : memref<1440x256xbf16, #tpu.memory_space<vmem>>, vector<32x256xbf16>,
    %c255_i32_210 = arith.constant 255 : i32
    %435 = tpu.dynamic_rotate %326 by %c255_i32_210 dim 1 : vector<32x256xf32>, i32 -> vector<32x256xf32>
    %436 = vector.broadcast %17 : vector<1x256xf32> to vector<32x256xf32>
    %437 = arith.mulf %435, %436 : vector<32x256xf32>
    %438 = arith.truncf %437 : vector<32x256xf32> to vector<32x256xbf16>
    %c736 = arith.constant 736 : index
    %c0_211 = arith.constant 0 : index
    %439 = vector.load %arg20[%c736, %c0_211] : memref<1440x256xbf16, #tpu.memory_space<vmem>>, vector<32x256xbf16>
    tpu.vector_store %arg20[%c736, %c0_211], %438 {strides = array<i32>} : memref<1440x256xbf16, #tpu.memory_space<vmem>>, vector<32x256xbf16>,
    %c249_i32_212 = arith.constant 249 : i32
    %440 = tpu.dynamic_rotate %326 by %c249_i32_212 dim 1 : vector<32x256xf32>, i32 -> vector<32x256xf32>
    %441 = vector.broadcast %19 : vector<1x256xf32> to vector<32x256xf32>
    %442 = arith.mulf %440, %441 : vector<32x256xf32>
    %443 = arith.truncf %442 : vector<32x256xf32> to vector<32x256xbf16>
    %c768 = arith.constant 768 : index
    %c0_213 = arith.constant 0 : index
    %444 = vector.load %arg20[%c768, %c0_213] : memref<1440x256xbf16, #tpu.memory_space<vmem>>, vector<32x256xbf16>
    tpu.vector_store %arg20[%c768, %c0_213], %443 {strides = array<i32>} : memref<1440x256xbf16, #tpu.memory_space<vmem>>, vector<32x256xbf16>,
    %c248_i32_214 = arith.constant 248 : i32
    %445 = tpu.dynamic_rotate %326 by %c248_i32_214 dim 1 : vector<32x256xf32>, i32 -> vector<32x256xf32>
    %446 = vector.broadcast %21 : vector<1x256xf32> to vector<32x256xf32>
    %447 = arith.mulf %445, %446 : vector<32x256xf32>
    %448 = arith.truncf %447 : vector<32x256xf32> to vector<32x256xbf16>
    %c800 = arith.constant 800 : index
    %c0_215 = arith.constant 0 : index
    %449 = vector.load %arg20[%c800, %c0_215] : memref<1440x256xbf16, #tpu.memory_space<vmem>>, vector<32x256xbf16>
    tpu.vector_store %arg20[%c800, %c0_215], %448 {strides = array<i32>} : memref<1440x256xbf16, #tpu.memory_space<vmem>>, vector<32x256xbf16>,
    %c247_i32_216 = arith.constant 247 : i32
    %450 = tpu.dynamic_rotate %326 by %c247_i32_216 dim 1 : vector<32x256xf32>, i32 -> vector<32x256xf32>
    %451 = vector.broadcast %23 : vector<1x256xf32> to vector<32x256xf32>
    %452 = arith.mulf %450, %451 : vector<32x256xf32>
    %453 = arith.truncf %452 : vector<32x256xf32> to vector<32x256xbf16>
    %c832 = arith.constant 832 : index
    %c0_217 = arith.constant 0 : index
    %454 = vector.load %arg20[%c832, %c0_217] : memref<1440x256xbf16, #tpu.memory_space<vmem>>, vector<32x256xbf16>
    tpu.vector_store %arg20[%c832, %c0_217], %453 {strides = array<i32>} : memref<1440x256xbf16, #tpu.memory_space<vmem>>, vector<32x256xbf16>,
    %c0_218 = arith.constant 0 : index
    %c0_219 = arith.constant 0 : index
    %455 = vector.load %arg9[%c0_218, %c0_219] : memref<128x576xbf16, #tpu.memory_space<vmem>>, vector<128x576xbf16>
    %c288_220 = arith.constant 288 : index
    %c0_221 = arith.constant 0 : index
    %456 = vector.load %arg20[%c288_220, %c0_221] : memref<1440x256xbf16, #tpu.memory_space<vmem>>, vector<576x256xbf16>
    %cst_222 = arith.constant dense<0.000000e+00> : vector<128x256xf32>
    %457 = tpu.matmul %455, %456, %cst_222 {dimension_numbers = #tpu.dot_dimension_numbers<[1], [0], [0], [1], [0, 0, 1, 1], [], []>} : vector<128x576xbf16>, vector<576x256xbf16>, vector<128x256xf32> -> vector<128x256xf32>
    %c0_223 = arith.constant 0 : index
    %c0_224 = arith.constant 0 : index
    %458 = vector.load %arg10[%c0_223, %c0_224] : memref<96x576xbf16, #tpu.memory_space<vmem>>, vector<96x576xbf16>
    %c0_225 = arith.constant 0 : index
    %c0_226 = arith.constant 0 : index
    %459 = vector.load %arg20[%c0_225, %c0_226] : memref<1440x256xbf16, #tpu.memory_space<vmem>>, vector<576x256xbf16>
    %cst_227 = arith.constant dense<0.000000e+00> : vector<96x256xf32>
    %460 = tpu.matmul %458, %459, %cst_227 {dimension_numbers = #tpu.dot_dimension_numbers<[1], [0], [0], [1], [0, 0, 1, 1], [], []>} : vector<96x576xbf16>, vector<576x256xbf16>, vector<96x256xf32> -> vector<96x256xf32>
    %461 = vector.extract_strided_slice %457 {offsets = [0, 0], sizes = [32, 256], strides = [1, 1]} : vector<128x256xf32> to vector<32x256xf32>
    %462 = arith.negf %461 : vector<32x256xf32>
    %463 = math.exp %462 : vector<32x256xf32>
    %cst_228 = arith.constant 1.000000e+00 : f32
    %464 = vector.broadcast %cst_228 : f32 to vector<32x256xf32>
    %465 = arith.addf %464, %463 : vector<32x256xf32>
    %466 = arith.divf %464, %465 : vector<32x256xf32>
    %467 = vector.extract_strided_slice %457 {offsets = [32, 0], sizes = [32, 256], strides = [1, 1]} : vector<128x256xf32> to vector<32x256xf32>
    %cst_229 = arith.constant 1.000000e+00 : f32
    %468 = vector.broadcast %cst_229 : f32 to vector<32x256xf32>
    %469 = arith.addf %467, %468 : vector<32x256xf32>
    %470 = arith.negf %469 : vector<32x256xf32>
    %471 = math.exp %470 : vector<32x256xf32>
    %cst_230 = arith.constant 1.000000e+00 : f32
    %472 = vector.broadcast %cst_230 : f32 to vector<32x256xf32>
    %473 = arith.addf %472, %471 : vector<32x256xf32>
    %474 = arith.divf %472, %473 : vector<32x256xf32>
    %475 = vector.extract_strided_slice %457 {offsets = [64, 0], sizes = [32, 256], strides = [1, 1]} : vector<128x256xf32> to vector<32x256xf32>
    %476 = math.tanh %475 : vector<32x256xf32>
    %477 = arith.mulf %474, %328 : vector<32x256xf32>
    %478 = arith.mulf %466, %476 : vector<32x256xf32>
    %479 = arith.addf %477, %478 : vector<32x256xf32>
    %480 = vector.extract_strided_slice %460 {offsets = [0, 0], sizes = [32, 256], strides = [1, 1]} : vector<96x256xf32> to vector<32x256xf32>
    %481 = arith.negf %480 : vector<32x256xf32>
    %482 = math.exp %481 : vector<32x256xf32>
    %cst_231 = arith.constant 1.000000e+00 : f32
    %483 = vector.broadcast %cst_231 : f32 to vector<32x256xf32>
    %484 = arith.addf %483, %482 : vector<32x256xf32>
    %485 = arith.divf %483, %484 : vector<32x256xf32>
    %486 = vector.extract_strided_slice %460 {offsets = [32, 0], sizes = [32, 256], strides = [1, 1]} : vector<96x256xf32> to vector<32x256xf32>
    %cst_232 = arith.constant 1.000000e+00 : f32
    %487 = vector.broadcast %cst_232 : f32 to vector<32x256xf32>
    %488 = arith.addf %486, %487 : vector<32x256xf32>
    %489 = arith.negf %488 : vector<32x256xf32>
    %490 = math.exp %489 : vector<32x256xf32>
    %cst_233 = arith.constant 1.000000e+00 : f32
    %491 = vector.broadcast %cst_233 : f32 to vector<32x256xf32>
    %492 = arith.addf %491, %490 : vector<32x256xf32>
    %493 = arith.divf %491, %492 : vector<32x256xf32>
    %494 = vector.extract_strided_slice %460 {offsets = [64, 0], sizes = [32, 256], strides = [1, 1]} : vector<96x256xf32> to vector<32x256xf32>
    %495 = math.tanh %494 : vector<32x256xf32>
    %496 = arith.mulf %493, %217 : vector<32x256xf32>
    %497 = arith.mulf %485, %495 : vector<32x256xf32>
    %498 = arith.addf %496, %497 : vector<32x256xf32>
    %c9_i32_234 = arith.constant 9 : i32
    %499 = tpu.dynamic_rotate %479 by %c9_i32_234 dim 1 : vector<32x256xf32>, i32 -> vector<32x256xf32>
    %500 = vector.broadcast %9 : vector<1x256xf32> to vector<32x256xf32>
    %501 = arith.mulf %499, %500 : vector<32x256xf32>
    %502 = arith.truncf %501 : vector<32x256xf32> to vector<32x256xbf16>
    %c864_235 = arith.constant 864 : index
    %c0_236 = arith.constant 0 : index
    %503 = vector.load %arg20[%c864_235, %c0_236] : memref<1440x256xbf16, #tpu.memory_space<vmem>>, vector<32x256xbf16>
    tpu.vector_store %arg20[%c864_235, %c0_236], %502 {strides = array<i32>} : memref<1440x256xbf16, #tpu.memory_space<vmem>>, vector<32x256xbf16>,
    %c9_i32_237 = arith.constant 9 : i32
    %504 = tpu.dynamic_rotate %498 by %c9_i32_237 dim 1 : vector<32x256xf32>, i32 -> vector<32x256xf32>
    %505 = vector.broadcast %9 : vector<1x256xf32> to vector<32x256xf32>
    %506 = arith.mulf %504, %505 : vector<32x256xf32>
    %507 = arith.truncf %506 : vector<32x256xf32> to vector<32x256xbf16>
    %c896_238 = arith.constant 896 : index
    %c0_239 = arith.constant 0 : index
    %508 = vector.load %arg20[%c896_238, %c0_239] : memref<1440x256xbf16, #tpu.memory_space<vmem>>, vector<32x256xbf16>
    tpu.vector_store %arg20[%c896_238, %c0_239], %507 {strides = array<i32>} : memref<1440x256xbf16, #tpu.memory_space<vmem>>, vector<32x256xbf16>,
    %c8_i32_240 = arith.constant 8 : i32
    %509 = tpu.dynamic_rotate %479 by %c8_i32_240 dim 1 : vector<32x256xf32>, i32 -> vector<32x256xf32>
    %510 = vector.broadcast %11 : vector<1x256xf32> to vector<32x256xf32>
    %511 = arith.mulf %509, %510 : vector<32x256xf32>
    %512 = arith.truncf %511 : vector<32x256xf32> to vector<32x256xbf16>
    %c928_241 = arith.constant 928 : index
    %c0_242 = arith.constant 0 : index
    %513 = vector.load %arg20[%c928_241, %c0_242] : memref<1440x256xbf16, #tpu.memory_space<vmem>>, vector<32x256xbf16>
    tpu.vector_store %arg20[%c928_241, %c0_242], %512 {strides = array<i32>} : memref<1440x256xbf16, #tpu.memory_space<vmem>>, vector<32x256xbf16>,
    %c8_i32_243 = arith.constant 8 : i32
    %514 = tpu.dynamic_rotate %498 by %c8_i32_243 dim 1 : vector<32x256xf32>, i32 -> vector<32x256xf32>
    %515 = vector.broadcast %11 : vector<1x256xf32> to vector<32x256xf32>
    %516 = arith.mulf %514, %515 : vector<32x256xf32>
    %517 = arith.truncf %516 : vector<32x256xf32> to vector<32x256xbf16>
    %c960_244 = arith.constant 960 : index
    %c0_245 = arith.constant 0 : index
    %518 = vector.load %arg20[%c960_244, %c0_245] : memref<1440x256xbf16, #tpu.memory_space<vmem>>, vector<32x256xbf16>
    tpu.vector_store %arg20[%c960_244, %c0_245], %517 {strides = array<i32>} : memref<1440x256xbf16, #tpu.memory_space<vmem>>, vector<32x256xbf16>,
    %c7_i32_246 = arith.constant 7 : i32
    %519 = tpu.dynamic_rotate %479 by %c7_i32_246 dim 1 : vector<32x256xf32>, i32 -> vector<32x256xf32>
    %520 = vector.broadcast %13 : vector<1x256xf32> to vector<32x256xf32>
    %521 = arith.mulf %519, %520 : vector<32x256xf32>
    %522 = arith.truncf %521 : vector<32x256xf32> to vector<32x256xbf16>
    %c992_247 = arith.constant 992 : index
    %c0_248 = arith.constant 0 : index
    %523 = vector.load %arg20[%c992_247, %c0_248] : memref<1440x256xbf16, #tpu.memory_space<vmem>>, vector<32x256xbf16>
    tpu.vector_store %arg20[%c992_247, %c0_248], %522 {strides = array<i32>} : memref<1440x256xbf16, #tpu.memory_space<vmem>>, vector<32x256xbf16>,
    %c7_i32_249 = arith.constant 7 : i32
    %524 = tpu.dynamic_rotate %498 by %c7_i32_249 dim 1 : vector<32x256xf32>, i32 -> vector<32x256xf32>
    %525 = vector.broadcast %13 : vector<1x256xf32> to vector<32x256xf32>
    %526 = arith.mulf %524, %525 : vector<32x256xf32>
    %527 = arith.truncf %526 : vector<32x256xf32> to vector<32x256xbf16>
    %c1024_250 = arith.constant 1024 : index
    %c0_251 = arith.constant 0 : index
    %528 = vector.load %arg20[%c1024_250, %c0_251] : memref<1440x256xbf16, #tpu.memory_space<vmem>>, vector<32x256xbf16>
    tpu.vector_store %arg20[%c1024_250, %c0_251], %527 {strides = array<i32>} : memref<1440x256xbf16, #tpu.memory_space<vmem>>, vector<32x256xbf16>,
    %c1_i32_252 = arith.constant 1 : i32
    %529 = tpu.dynamic_rotate %479 by %c1_i32_252 dim 1 : vector<32x256xf32>, i32 -> vector<32x256xf32>
    %530 = vector.broadcast %15 : vector<1x256xf32> to vector<32x256xf32>
    %531 = arith.mulf %529, %530 : vector<32x256xf32>
    %532 = arith.truncf %531 : vector<32x256xf32> to vector<32x256xbf16>
    %c1056_253 = arith.constant 1056 : index
    %c0_254 = arith.constant 0 : index
    %533 = vector.load %arg20[%c1056_253, %c0_254] : memref<1440x256xbf16, #tpu.memory_space<vmem>>, vector<32x256xbf16>
    tpu.vector_store %arg20[%c1056_253, %c0_254], %532 {strides = array<i32>} : memref<1440x256xbf16, #tpu.memory_space<vmem>>, vector<32x256xbf16>,
    %c1_i32_255 = arith.constant 1 : i32
    %534 = tpu.dynamic_rotate %498 by %c1_i32_255 dim 1 : vector<32x256xf32>, i32 -> vector<32x256xf32>
    %535 = vector.broadcast %15 : vector<1x256xf32> to vector<32x256xf32>
    %536 = arith.mulf %534, %535 : vector<32x256xf32>
    %537 = arith.truncf %536 : vector<32x256xf32> to vector<32x256xbf16>
    %c1088_256 = arith.constant 1088 : index
    %c0_257 = arith.constant 0 : index
    %538 = vector.load %arg20[%c1088_256, %c0_257] : memref<1440x256xbf16, #tpu.memory_space<vmem>>, vector<32x256xbf16>
    tpu.vector_store %arg20[%c1088_256, %c0_257], %537 {strides = array<i32>} : memref<1440x256xbf16, #tpu.memory_space<vmem>>, vector<32x256xbf16>,
    %539 = arith.truncf %479 : vector<32x256xf32> to vector<32x256xbf16>
    %c1120_258 = arith.constant 1120 : index
    %c0_259 = arith.constant 0 : index
    %540 = vector.load %arg20[%c1120_258, %c0_259] : memref<1440x256xbf16, #tpu.memory_space<vmem>>, vector<32x256xbf16>
    tpu.vector_store %arg20[%c1120_258, %c0_259], %539 {strides = array<i32>} : memref<1440x256xbf16, #tpu.memory_space<vmem>>, vector<32x256xbf16>,
    %541 = arith.truncf %498 : vector<32x256xf32> to vector<32x256xbf16>
    %c1152_260 = arith.constant 1152 : index
    %c0_261 = arith.constant 0 : index
    %542 = vector.load %arg20[%c1152_260, %c0_261] : memref<1440x256xbf16, #tpu.memory_space<vmem>>, vector<32x256xbf16>
    tpu.vector_store %arg20[%c1152_260, %c0_261], %541 {strides = array<i32>} : memref<1440x256xbf16, #tpu.memory_space<vmem>>, vector<32x256xbf16>,
    %c255_i32_262 = arith.constant 255 : i32
    %543 = tpu.dynamic_rotate %479 by %c255_i32_262 dim 1 : vector<32x256xf32>, i32 -> vector<32x256xf32>
    %544 = vector.broadcast %17 : vector<1x256xf32> to vector<32x256xf32>
    %545 = arith.mulf %543, %544 : vector<32x256xf32>
    %546 = arith.truncf %545 : vector<32x256xf32> to vector<32x256xbf16>
    %c1184_263 = arith.constant 1184 : index
    %c0_264 = arith.constant 0 : index
    %547 = vector.load %arg20[%c1184_263, %c0_264] : memref<1440x256xbf16, #tpu.memory_space<vmem>>, vector<32x256xbf16>
    tpu.vector_store %arg20[%c1184_263, %c0_264], %546 {strides = array<i32>} : memref<1440x256xbf16, #tpu.memory_space<vmem>>, vector<32x256xbf16>,
    %c255_i32_265 = arith.constant 255 : i32
    %548 = tpu.dynamic_rotate %498 by %c255_i32_265 dim 1 : vector<32x256xf32>, i32 -> vector<32x256xf32>
    %549 = vector.broadcast %17 : vector<1x256xf32> to vector<32x256xf32>
    %550 = arith.mulf %548, %549 : vector<32x256xf32>
    %551 = arith.truncf %550 : vector<32x256xf32> to vector<32x256xbf16>
    %c1216_266 = arith.constant 1216 : index
    %c0_267 = arith.constant 0 : index
    %552 = vector.load %arg20[%c1216_266, %c0_267] : memref<1440x256xbf16, #tpu.memory_space<vmem>>, vector<32x256xbf16>
    tpu.vector_store %arg20[%c1216_266, %c0_267], %551 {strides = array<i32>} : memref<1440x256xbf16, #tpu.memory_space<vmem>>, vector<32x256xbf16>,
    %c249_i32_268 = arith.constant 249 : i32
    %553 = tpu.dynamic_rotate %479 by %c249_i32_268 dim 1 : vector<32x256xf32>, i32 -> vector<32x256xf32>
    %554 = vector.broadcast %19 : vector<1x256xf32> to vector<32x256xf32>
    %555 = arith.mulf %553, %554 : vector<32x256xf32>
    %556 = arith.truncf %555 : vector<32x256xf32> to vector<32x256xbf16>
    %c1248_269 = arith.constant 1248 : index
    %c0_270 = arith.constant 0 : index
    %557 = vector.load %arg20[%c1248_269, %c0_270] : memref<1440x256xbf16, #tpu.memory_space<vmem>>, vector<32x256xbf16>
    tpu.vector_store %arg20[%c1248_269, %c0_270], %556 {strides = array<i32>} : memref<1440x256xbf16, #tpu.memory_space<vmem>>, vector<32x256xbf16>,
    %c249_i32_271 = arith.constant 249 : i32
    %558 = tpu.dynamic_rotate %498 by %c249_i32_271 dim 1 : vector<32x256xf32>, i32 -> vector<32x256xf32>
    %559 = vector.broadcast %19 : vector<1x256xf32> to vector<32x256xf32>
    %560 = arith.mulf %558, %559 : vector<32x256xf32>
    %561 = arith.truncf %560 : vector<32x256xf32> to vector<32x256xbf16>
    %c1280_272 = arith.constant 1280 : index
    %c0_273 = arith.constant 0 : index
    %562 = vector.load %arg20[%c1280_272, %c0_273] : memref<1440x256xbf16, #tpu.memory_space<vmem>>, vector<32x256xbf16>
    tpu.vector_store %arg20[%c1280_272, %c0_273], %561 {strides = array<i32>} : memref<1440x256xbf16, #tpu.memory_space<vmem>>, vector<32x256xbf16>,
    %c248_i32_274 = arith.constant 248 : i32
    %563 = tpu.dynamic_rotate %479 by %c248_i32_274 dim 1 : vector<32x256xf32>, i32 -> vector<32x256xf32>
    %564 = vector.broadcast %21 : vector<1x256xf32> to vector<32x256xf32>
    %565 = arith.mulf %563, %564 : vector<32x256xf32>
    %566 = arith.truncf %565 : vector<32x256xf32> to vector<32x256xbf16>
    %c1312_275 = arith.constant 1312 : index
    %c0_276 = arith.constant 0 : index
    %567 = vector.load %arg20[%c1312_275, %c0_276] : memref<1440x256xbf16, #tpu.memory_space<vmem>>, vector<32x256xbf16>
    tpu.vector_store %arg20[%c1312_275, %c0_276], %566 {strides = array<i32>} : memref<1440x256xbf16, #tpu.memory_space<vmem>>, vector<32x256xbf16>,
    %c248_i32_277 = arith.constant 248 : i32
    %568 = tpu.dynamic_rotate %498 by %c248_i32_277 dim 1 : vector<32x256xf32>, i32 -> vector<32x256xf32>
    %569 = vector.broadcast %21 : vector<1x256xf32> to vector<32x256xf32>
    %570 = arith.mulf %568, %569 : vector<32x256xf32>
    %571 = arith.truncf %570 : vector<32x256xf32> to vector<32x256xbf16>
    %c1344_278 = arith.constant 1344 : index
    %c0_279 = arith.constant 0 : index
    %572 = vector.load %arg20[%c1344_278, %c0_279] : memref<1440x256xbf16, #tpu.memory_space<vmem>>, vector<32x256xbf16>
    tpu.vector_store %arg20[%c1344_278, %c0_279], %571 {strides = array<i32>} : memref<1440x256xbf16, #tpu.memory_space<vmem>>, vector<32x256xbf16>,
    %c247_i32_280 = arith.constant 247 : i32
    %573 = tpu.dynamic_rotate %479 by %c247_i32_280 dim 1 : vector<32x256xf32>, i32 -> vector<32x256xf32>
    %574 = vector.broadcast %23 : vector<1x256xf32> to vector<32x256xf32>
    %575 = arith.mulf %573, %574 : vector<32x256xf32>
    %576 = arith.truncf %575 : vector<32x256xf32> to vector<32x256xbf16>
    %c1376_281 = arith.constant 1376 : index
    %c0_282 = arith.constant 0 : index
    %577 = vector.load %arg20[%c1376_281, %c0_282] : memref<1440x256xbf16, #tpu.memory_space<vmem>>, vector<32x256xbf16>
    tpu.vector_store %arg20[%c1376_281, %c0_282], %576 {strides = array<i32>} : memref<1440x256xbf16, #tpu.memory_space<vmem>>, vector<32x256xbf16>,
    %c247_i32_283 = arith.constant 247 : i32
    %578 = tpu.dynamic_rotate %498 by %c247_i32_283 dim 1 : vector<32x256xf32>, i32 -> vector<32x256xf32>
    %579 = vector.broadcast %23 : vector<1x256xf32> to vector<32x256xf32>
    %580 = arith.mulf %578, %579 : vector<32x256xf32>
    %581 = arith.truncf %580 : vector<32x256xf32> to vector<32x256xbf16>
    %c1408_284 = arith.constant 1408 : index
    %c0_285 = arith.constant 0 : index
    %582 = vector.load %arg20[%c1408_284, %c0_285] : memref<1440x256xbf16, #tpu.memory_space<vmem>>, vector<32x256xbf16>
    tpu.vector_store %arg20[%c1408_284, %c0_285], %581 {strides = array<i32>} : memref<1440x256xbf16, #tpu.memory_space<vmem>>, vector<32x256xbf16>,
    %c0_286 = arith.constant 0 : index
    %c0_287 = arith.constant 0 : index
    %583 = vector.load %arg11[%c0_286, %c0_287] : memref<32x576xbf16, #tpu.memory_space<vmem>>, vector<32x576xbf16>
    %c864_288 = arith.constant 864 : index
    %c0_289 = arith.constant 0 : index
    %584 = vector.load %arg20[%c864_288, %c0_289] : memref<1440x256xbf16, #tpu.memory_space<vmem>>, vector<576x256xbf16>
    %cst_290 = arith.constant dense<0.000000e+00> : vector<32x256xf32>
    %585 = tpu.matmul %583, %584, %cst_290 {dimension_numbers = #tpu.dot_dimension_numbers<[1], [0], [0], [1], [0, 0, 1, 1], [], []>} : vector<32x576xbf16>, vector<576x256xbf16>, vector<32x256xf32> -> vector<32x256xf32>
    %586 = vector.extract_strided_slice %457 {offsets = [96, 0], sizes = [32, 256], strides = [1, 1]} : vector<128x256xf32> to vector<32x256xf32>
    %587 = arith.addf %586, %585 : vector<32x256xf32>
    %588 = arith.negf %587 : vector<32x256xf32>
    %589 = math.exp %588 : vector<32x256xf32>
    %cst_291 = arith.constant 1.000000e+00 : f32
    %590 = vector.broadcast %cst_291 : f32 to vector<32x256xf32>
    %591 = arith.addf %590, %589 : vector<32x256xf32>
    %592 = arith.divf %590, %591 : vector<32x256xf32>
    %c0_292 = arith.constant 0 : index
    %c0_293 = arith.constant 0 : index
    %593 = vector.load %arg12[%c0_292, %c0_293] : memref<32x64xbf16, #tpu.memory_space<vmem>>, vector<32x64xbf16>
    %c1120_294 = arith.constant 1120 : index
    %c0_295 = arith.constant 0 : index
    %594 = vector.load %arg20[%c1120_294, %c0_295] : memref<1440x256xbf16, #tpu.memory_space<vmem>>, vector<64x256xbf16>
    %cst_296 = arith.constant dense<0.000000e+00> : vector<32x256xf32>
    %595 = tpu.matmul %593, %594, %cst_296 {dimension_numbers = #tpu.dot_dimension_numbers<[1], [0], [0], [1], [0, 0, 1, 1], [], []>} : vector<32x64xbf16>, vector<64x256xbf16>, vector<32x256xf32> -> vector<32x256xf32>
    %596 = math.tanh %595 : vector<32x256xf32>
    %597 = arith.mulf %592, %596 : vector<32x256xf32>
    %598 = arith.truncf %597 : vector<32x256xf32> to vector<32x256xbf16>
    %c1_297 = arith.constant 1 : index
    %c0_298 = arith.constant 0 : index
    %c0_299 = arith.constant 0 : index
    %599 = vector.load %arg16[%c1_297, %c0_298, %c0_299] : memref<2x32x256xbf16, #tpu.memory_space<vmem>>, vector<1x32x256xbf16>
    %600 = vector.shape_cast %599 : vector<1x32x256xbf16> to vector<32x256xbf16>
    %601 = vector.shape_cast %598 : vector<32x256xbf16> to vector<1x32x256xbf16>
    tpu.vector_store %arg16[%c1_297, %c0_298, %c0_299], %601 {strides = array<i32>} : memref<2x32x256xbf16, #tpu.memory_space<vmem>>, vector<1x32x256xbf16>,
    %c1_300 = arith.constant 1 : index
    %c0_301 = arith.constant 0 : index
    %c0_302 = arith.constant 0 : index
    %602 = vector.load %arg17[%c1_300, %c0_301, %c0_302] : memref<2x32x256xf32, #tpu.memory_space<vmem>>, vector<1x32x256xf32>
    %603 = vector.shape_cast %602 : vector<1x32x256xf32> to vector<32x256xf32>
    %604 = vector.shape_cast %479 : vector<32x256xf32> to vector<1x32x256xf32>
    tpu.vector_store %arg17[%c1_300, %c0_301, %c0_302], %604 {strides = array<i32>} : memref<2x32x256xf32, #tpu.memory_space<vmem>>, vector<1x32x256xf32>,
    %605 = arith.truncf %498 : vector<32x256xf32> to vector<32x256xbf16>
    %c0_303 = arith.constant 0 : index
    %c0_304 = arith.constant 0 : index
    %606 = vector.load %arg18[%c0_303, %c0_304] : memref<32x256xbf16, #tpu.memory_space<vmem>>, vector<32x256xbf16>
    tpu.vector_store %arg18[%c0_303, %c0_304], %605 {strides = array<i32>} : memref<32x256xbf16, #tpu.memory_space<vmem>>, vector<32x256xbf16>,
    %c0_305 = arith.constant 0 : index
    %c0_306 = arith.constant 0 : index
    %607 = vector.load %arg13[%c0_305, %c0_306] : memref<16x32xbf16, #tpu.memory_space<vmem>>, vector<16x32xbf16>
    %608 = arith.truncf %597 : vector<32x256xf32> to vector<32x256xbf16>
    %cst_307 = arith.constant dense<0.000000e+00> : vector<16x256xf32>
    %609 = tpu.matmul %607, %608, %cst_307 {dimension_numbers = #tpu.dot_dimension_numbers<[1], [0], [0], [1], [0, 0, 1, 1], [], []>} : vector<16x32xbf16>, vector<32x256xbf16>, vector<16x256xf32> -> vector<16x256xf32>
    %c0_308 = arith.constant 0 : index
    %c0_309 = arith.constant 0 : index
    %c0_310 = arith.constant 0 : index
    %610 = vector.load %arg14[%c0_308, %c0_309, %c0_310] : memref<1x16x256xf32, #tpu.memory_space<vmem>>, vector<1x16x256xf32>
    %611 = vector.shape_cast %610 : vector<1x16x256xf32> to vector<16x256xf32>
    %612 = vector.shape_cast %609 : vector<16x256xf32> to vector<1x16x256xf32>
    tpu.vector_store %arg14[%c0_308, %c0_309, %c0_310], %612 {strides = array<i32>} : memref<1x16x256xf32, #tpu.memory_space<vmem>>, vector<1x16x256xf32>,
    %c0_311 = arith.constant 0 : index
    %c0_312 = arith.constant 0 : index
    %613 = vector.load %arg19[%c0_311, %c0_312] : memref<16x256xf32, #tpu.memory_space<vmem>>, vector<16x256xf32>
    tpu.vector_store %arg19[%c0_311, %c0_312], %609 {strides = array<i32>} : memref<16x256xf32, #tpu.memory_space<vmem>>, vector<16x256xf32>,
    %c4_i32 = arith.constant 4 : i32
    %614 = arith.cmpi eq, %arg0, %c4_i32 : i32
    %615 = arith.extui %614 : i1 to i32
    %c0_i32_313 = arith.constant 0 : i32
    %616 = arith.cmpi ne, %615, %c0_i32_313 : i32
    scf.if %616 {
      %c0_314 = arith.constant 0 : index
      %c0_315 = arith.constant 0 : index
      %617 = vector.load %arg2[%c0_314, %c0_315] : memref<16x256xf32, #tpu.memory_space<vmem>>, vector<16x256xf32>
      %618 = arith.subf %609, %617 : vector<16x256xf32>
      %c0_316 = arith.constant 0 : index
      %c0_317 = arith.constant 0 : index
      %619 = vector.load %arg21[%c0_316, %c0_317] : memref<16x256xf32, #tpu.memory_space<vmem>>, vector<16x256xf32>
      %620 = arith.mulf %618, %618 : vector<16x256xf32>
      %621 = arith.addf %619, %620 : vector<16x256xf32>
      %622 = vector.shape_cast %621 : vector<16x256xf32> to vector<1x16x256xf32>
      %cst_318 = arith.constant dense<0.000000e+00> : vector<1xf32>
      %623 = vector.multi_reduction <add>, %622, %cst_318 [1, 2] : vector<1x16x256xf32> to vector<1xf32>
      %624 = vector.shape_cast %623 : vector<1xf32> to vector<1x1x1xf32>
      %625 = vector.extract %624[0, 0, 0] : f32 from vector<1x1x1xf32>
      %626 = vector.broadcast %625 : f32 to vector<1x1xf32>
      %c0_319 = arith.constant 0 : index
      %c0_320 = arith.constant 0 : index
      %627 = vector.load %arg15[%c0_319, %c0_320] : memref<1x1xf32, #tpu.memory_space<vmem>>, vector<1x1xf32>
      tpu.vector_store %arg15[%c0_319, %c0_320], %626 {strides = array<i32>} : memref<1x1xf32, #tpu.memory_space<vmem>>, vector<1x1xf32>,
    } else {
    }
    return
  }
  func.func @transform_0(%arg0: i32) -> (i32, i32, i32) {
    %c0_i32 = arith.constant 0 : i32
    %c0_i32_0 = arith.constant 0 : i32
    %c0_i32_1 = arith.constant 0 : i32
    return %arg0, %c0_i32, %c0_i32_0 : i32, i32, i32
  }
  func.func @transform_1(%arg0: i32) -> (i32, i32) {
    %c0_i32 = arith.constant 0 : i32
    %c0_i32_0 = arith.constant 0 : i32
    %c0_i32_1 = arith.constant 0 : i32
    return %c0_i32, %c0_i32_0 : i32, i32
  }
  func.func @transform_2(%arg0: i32) -> (i32, i32, i32) {
    %c3_i32 = arith.constant 3 : i32
    %0 = arith.subi %arg0, %c3_i32 : i32
    %c0_i32 = arith.constant 0 : i32
    %1 = arith.maxsi %0, %c0_i32 : i32
    %c0_i32_0 = arith.constant 0 : i32
    %c0_i32_1 = arith.constant 0 : i32
    %c0_i32_2 = arith.constant 0 : i32
    return %1, %c0_i32_0, %c0_i32_1 : i32, i32, i32
  }
  func.func @transform_3(%arg0: i32) -> (i32, i32, i32) {
    %c0_i32 = arith.constant 0 : i32
    %c0_i32_0 = arith.constant 0 : i32
    %c0_i32_1 = arith.constant 0 : i32
    %c0_i32_2 = arith.constant 0 : i32
    return %c0_i32, %c0_i32_0, %c0_i32_1 : i32, i32, i32
  }
  func.func @transform_4(%arg0: i32) -> (i32, i32) {
    %c0_i32 = arith.constant 0 : i32
    %c0_i32_0 = arith.constant 0 : i32
    %c0_i32_1 = arith.constant 0 : i32
    return %c0_i32, %c0_i32_0 : i32, i32
  }
  func.func @transform_5(%arg0: i32) -> (i32, i32) {
    %c0_i32 = arith.constant 0 : i32
    %c0_i32_0 = arith.constant 0 : i32
    %c0_i32_1 = arith.constant 0 : i32
    return %c0_i32, %c0_i32_0 : i32, i32
  }
  func.func @transform_6(%arg0: i32) -> (i32, i32) {
    %c0_i32 = arith.constant 0 : i32
    %c0_i32_0 = arith.constant 0 : i32
    %c0_i32_1 = arith.constant 0 : i32
    return %c0_i32, %c0_i32_0 : i32, i32
  }
  func.func @transform_7(%arg0: i32) -> (i32, i32) {
    %c0_i32 = arith.constant 0 : i32
    %c0_i32_0 = arith.constant 0 : i32
    %c0_i32_1 = arith.constant 0 : i32
    return %c0_i32, %c0_i32_0 : i32, i32
  }
  func.func @transform_8(%arg0: i32) -> (i32, i32) {
    %c0_i32 = arith.constant 0 : i32
    %c0_i32_0 = arith.constant 0 : i32
    %c0_i32_1 = arith.constant 0 : i32
    return %c0_i32, %c0_i32_0 : i32, i32
  }
  func.func @transform_9(%arg0: i32) -> (i32, i32) {
    %c0_i32 = arith.constant 0 : i32
    %c0_i32_0 = arith.constant 0 : i32
    %c0_i32_1 = arith.constant 0 : i32
    return %c0_i32, %c0_i32_0 : i32, i32
  }
  func.func @transform_10(%arg0: i32) -> (i32, i32) {
    %c0_i32 = arith.constant 0 : i32
    %c0_i32_0 = arith.constant 0 : i32
    %c0_i32_1 = arith.constant 0 : i32
    return %c0_i32, %c0_i32_0 : i32, i32
  }
  func.func @transform_11(%arg0: i32) -> (i32, i32) {
    %c0_i32 = arith.constant 0 : i32
    %c0_i32_0 = arith.constant 0 : i32
    %c0_i32_1 = arith.constant 0 : i32
    return %c0_i32, %c0_i32_0 : i32, i32
  }
  func.func @transform_12(%arg0: i32) -> (i32, i32) {
    %c0_i32 = arith.constant 0 : i32
    %c0_i32_0 = arith.constant 0 : i32
    %c0_i32_1 = arith.constant 0 : i32
    return %c0_i32, %c0_i32_0 : i32, i32
  }
  func.func @transform_13(%arg0: i32) -> (i32, i32, i32) {
    %c0_i32 = arith.constant 0 : i32
    %c0_i32_0 = arith.constant 0 : i32
    %c0_i32_1 = arith.constant 0 : i32
    return %arg0, %c0_i32, %c0_i32_0 : i32, i32, i32
  }
  func.func @transform_14(%arg0: i32) -> (i32, i32) {
    %c0_i32 = arith.constant 0 : i32
    %c0_i32_0 = arith.constant 0 : i32
    %c0_i32_1 = arith.constant 0 : i32
    return %c0_i32, %c0_i32_0 : i32, i32
  }
}

</mosaic_0001>

<llo_original>
// kernel: rnn_forward.1
$region0: #{rnn_forward.1}
  #allocation0 [shape = 'u32[]', space=smem, size = 0x4, offset = 0x4, fixed_abs, tag = 'smem constant byte address 0x4 - core index']
  #allocation1 [shape = 'u32[144,128]{1,0:T(1,128)}', space=vmem, size = 0x12000, scoped, tag = 'internal scratch']
  #allocation2 [shape = 'bf16[2,32,256]{2,1,0:T(16,128)(2,1)}', space=vmem, size = 0x8000, scoped, tag = 'scratch operand']
  #allocation3 [shape = 'f32[2,32,256]{2,1,0:T(8,128)}', space=vmem, size = 0x10000, scoped, tag = 'scratch operand']
  #allocation4 [shape = 'bf16[32,256]{1,0:T(16,128)(2,1)}', space=vmem, size = 0x4000, scoped, tag = 'scratch operand']
  #allocation5 [shape = 'f32[16,256]{1,0:T(8,128)}', space=vmem, size = 0x4000, scoped, tag = 'scratch operand']
  #allocation6 [shape = 'bf16[1440,256]{1,0:T(16,128)(2,1)}', space=vmem, size = 0xb4000, scoped, tag = 'scratch operand']
  #allocation7 [shape = 'f32[16,256]{1,0:T(8,128)}', space=vmem, size = 0x4000, scoped, tag = 'scratch operand']
  %s0 = inlined_call_operand.vmem [shape: f32[6,16,256], index: 0, kind: input, shape index: {}]
  %s1 = inlined_call_operand.vmem [shape: f32[16,256], index: 1, kind: input, shape index: {}]
  %s2 = inlined_call_operand.vmem [shape: f32[2,16,256], index: 2, kind: input, shape index: {}]
  %s3 = inlined_call_operand.vmem [shape: f32[9,1,256], index: 3, kind: input, shape index: {}]
  %s4 = inlined_call_operand.vmem [shape: bf16[128,432], index: 4, kind: input, shape index: {}]
  %s5 = inlined_call_operand.vmem [shape: bf16[96,432], index: 5, kind: input, shape index: {}]
  %s6 = inlined_call_operand.vmem [shape: bf16[32,576], index: 6, kind: input, shape index: {}]
  %s7 = inlined_call_operand.vmem [shape: bf16[32,64], index: 7, kind: input, shape index: {}]
  %s8 = inlined_call_operand.vmem [shape: bf16[128,576], index: 8, kind: input, shape index: {}]
  %s9 = inlined_call_operand.vmem [shape: bf16[96,576], index: 9, kind: input, shape index: {}]
  %s10 = inlined_call_operand.vmem [shape: bf16[32,576], index: 10, kind: input, shape index: {}]
  %s11 = inlined_call_operand.vmem [shape: bf16[32,64], index: 11, kind: input, shape index: {}]
  %s12 = inlined_call_operand.vmem [shape: bf16[16,32], index: 12, kind: input, shape index: {}]
  %s13 = inlined_call_operand.vmem [shape: f32[5,16,256], index: 13, kind: output, shape index: {0}]
  %s14 = inlined_call_operand.hbm [shape: f32[1,1], index: 14, kind: output, shape index: {1}]
  %15 = xla_tuple %s13, %s14
  %s16 = sld [smem:[#allocation0]]
  $region105: #{rnn_forward.1} parent=0
    _
  %s18 = ssub.s32 1, %s16
  %s19 = scalar_select 0, %s18, %s16
  $region1: #{rnn_forward.1} parent=0
    #allocation8 [shape = 'u8[512]{0}', space=vmem, size = 0x400, scoped, tag = 'output window, operand 1, single buffered']
    #allocation9 [shape = 's32[2]{0}', space=sflag, size = 0x8, scoped, tag = 'scoped memory for rnn_forward.1']
    %20 = vsyncpa [#allocation9], 0
    loop: start=0, step=1, limit=7
    $region2: #{rnn_forward.1} parent=1 // loop_pre_header
      _
    $region3: #{rnn_forward.1} parent=1 // loop_header
      %s22 = sphi 0, %s26
      %p23 = scmp.ge.s32.totalorder %s22, 7
      %s32 = sphi 0, %s34
      %s35 = sphi 0, %s32
      %s36 = sphi 0, %s35
      %s52 = sphi 0, %s36
      %s56 = sphi 0, %s56
      %s58 = sphi 0, %s56
      %s59 = sphi 0, %s58
      %s73 = sphi 0, %s59
      %s85 = sphi 0, %s87
      %s88 = sphi 0, %s85
      %s89 = sphi 0, %s88
      %s105 = sphi 0, %s89
      %s109 = sphi 0, %s109
      %s111 = sphi 0, %s109
      %s112 = sphi 0, %s111
      %s126 = sphi 0, %s112
      %s130 = sphi 0, %s130
      %s132 = sphi 0, %s130
      %s133 = sphi 0, %s132
      %s147 = sphi 0, %s133
      %s151 = sphi 0, %s151
      %s153 = sphi 0, %s151
      %s154 = sphi 0, %s153
      %s168 = sphi 0, %s154
      %s172 = sphi 0, %s172
      %s174 = sphi 0, %s172
      %s175 = sphi 0, %s174
      %s189 = sphi 0, %s175
      %s193 = sphi 0, %s193
      %s195 = sphi 0, %s193
      %s196 = sphi 0, %s195
      %s210 = sphi 0, %s196
      %s214 = sphi 0, %s214
      %s216 = sphi 0, %s214
      %s217 = sphi 0, %s216
      %s231 = sphi 0, %s217
      %s235 = sphi 0, %s235
      %s237 = sphi 0, %s235
      %s238 = sphi 0, %s237
      %s252 = sphi 0, %s238
      %s256 = sphi 0, %s256
      %s258 = sphi 0, %s256
      %s259 = sphi 0, %s258
      %s273 = sphi 0, %s259
      %s277 = sphi 0, %s277
      %s279 = sphi 0, %s277
      %s280 = sphi 0, %s279
      %s294 = sphi 0, %s280
      %s298 = sphi 0, %s298
      %s300 = sphi 0, %s298
      %s301 = sphi 0, %s300
      %s315 = sphi 0, %s301
      %s321 = sphi 0, %s323
      %s324 = sphi 0, %s321
      %s325 = sphi 0, %s324
      %s341 = sphi 0, %s325
      %s345 = sphi 0, %s345
      %s347 = sphi 0, %s345
      %s348 = sphi 0, %s347
      %s362 = sphi 0, %s348
    $region4: #{rnn_forward.1} parent=1 // loop_header_branch
      %25 = sbr.rel (%p23) target = $region8
    $region5: #{rnn_forward.1} parent=1 // loop_body
      %s27 = ssub.s32 %s22, 1
      %s28 = ssub.s32 %s22, 2
      %s29 = sadd.s32 %s22, 1
      %s30 = ssub.s32 %s22, %s29
      %p31 = scmp.eq.s32.totalorder %s30, 0
      %s33 = sadd.s32 %s32, 1
      %s34 = scalar_select %p31, %s32, %s33
      %p37 = pneg %p31
      %p38 = scmp.eq.s32.totalorder %s22, 4
      %p39 = por %p37, %p38
      %p40 = scmp.ne.s32.totalorder %s32, %s35
      %p41 = scmp.eq.s32.totalorder %s22, 0
      %p42 = por %p40, %p41
      %p43 = scmp.ne.s32.totalorder %s32, %s35
      %p44 = scmp.eq.s32.totalorder %s27, 4
      %p45 = por %p43, %p44
      %p46 = scmp.ne.s32.totalorder %s35, %s36
      %p47 = scmp.eq.s32.totalorder %s27, 0
      %p48 = por %p46, %p47
      %p49 = scmp.ne.s32.totalorder %s35, %s36
      %p50 = scmp.eq.s32.totalorder %s28, 4
      %p51 = por %p49, %p50
      %p53 = scmp.ne.s32.totalorder %s36, %s52
      %p54 = scmp.eq.s32.totalorder %s28, 0
      %p55 = por %p53, %p54
      %s57 = sadd.s32 %s56, 1
      %p60 = scmp.eq.s32.totalorder %s22, 4
      %p61 = scmp.ne.s32.totalorder %s56, %s58
      %p62 = scmp.eq.s32.totalorder %s22, 0
      %p63 = por %p61, %p62
      %p64 = scmp.ne.s32.totalorder %s56, %s58
      %p65 = scmp.eq.s32.totalorder %s27, 4
      %p66 = por %p64, %p65
      %p67 = scmp.ne.s32.totalorder %s58, %s59
      %p68 = scmp.eq.s32.totalorder %s27, 0
      %p69 = por %p67, %p68
      %p70 = scmp.ne.s32.totalorder %s58, %s59
      %p71 = scmp.eq.s32.totalorder %s28, 4
      %p72 = por %p70, %p71
      %p74 = scmp.ne.s32.totalorder %s59, %s73
      %p75 = scmp.eq.s32.totalorder %s28, 0
      %p76 = por %p74, %p75
      %s77 = ssub.s32 %s22, 3
      %p78 = scmp.gt.s32.totalorder %s77, 0
      %s79 = scalar_select %p78, %s77, 0
      %s80 = ssub.s32 %s29, 3
      %p81 = scmp.gt.s32.totalorder %s80, 0
      %s82 = scalar_select %p81, %s80, 0
      %s83 = ssub.s32 %s79, %s82
      %p84 = scmp.eq.s32.totalorder %s83, 0
      %s86 = sadd.s32 %s85, 1
      %s87 = scalar_select %p84, %s85, %s86
      %p90 = pneg %p84
      %p91 = scmp.eq.s32.totalorder %s22, 4
      %p92 = por %p90, %p91
      %p93 = scmp.ne.s32.totalorder %s85, %s88
      %p94 = scmp.eq.s32.totalorder %s22, 0
      %p95 = por %p93, %p94
      %p96 = scmp.ne.s32.totalorder %s85, %s88
      %p97 = scmp.eq.s32.totalorder %s27, 4
      %p98 = por %p96, %p97
      %p99 = scmp.ne.s32.totalorder %s88, %s89
      %p100 = scmp.eq.s32.totalorder %s27, 0
      %p101 = por %p99, %p100
      %p102 = scmp.ne.s32.totalorder %s88, %s89
      %p103 = scmp.eq.s32.totalorder %s28, 4
      %p104 = por %p102, %p103
      %p106 = scmp.ne.s32.totalorder %s89, %s105
      %p107 = scmp.eq.s32.totalorder %s28, 0
      %p108 = por %p106, %p107
      %s110 = sadd.s32 %s109, 1
      %p113 = scmp.eq.s32.totalorder %s22, 4
      %p114 = scmp.ne.s32.totalorder %s109, %s111
      %p115 = scmp.eq.s32.totalorder %s22, 0
      %p116 = por %p114, %p115
      %p117 = scmp.ne.s32.totalorder %s109, %s111
      %p118 = scmp.eq.s32.totalorder %s27, 4
      %p119 = por %p117, %p118
      %p120 = scmp.ne.s32.totalorder %s111, %s112
      %p121 = scmp.eq.s32.totalorder %s27, 0
      %p122 = por %p120, %p121
      %p123 = scmp.ne.s32.totalorder %s111, %s112
      %p124 = scmp.eq.s32.totalorder %s28, 4
      %p125 = por %p123, %p124
      %p127 = scmp.ne.s32.totalorder %s112, %s126
      %p128 = scmp.eq.s32.totalorder %s28, 0
      %p129 = por %p127, %p128
      %s131 = sadd.s32 %s130, 1
      %p134 = scmp.eq.s32.totalorder %s22, 4
      %p135 = scmp.ne.s32.totalorder %s130, %s132
      %p136 = scmp.eq.s32.totalorder %s22, 0
      %p137 = por %p135, %p136
      %p138 = scmp.ne.s32.totalorder %s130, %s132
      %p139 = scmp.eq.s32.totalorder %s27, 4
      %p140 = por %p138, %p139
      %p141 = scmp.ne.s32.totalorder %s132, %s133
      %p142 = scmp.eq.s32.totalorder %s27, 0
      %p143 = por %p141, %p142
      %p144 = scmp.ne.s32.totalorder %s132, %s133
      %p145 = scmp.eq.s32.totalorder %s28, 4
      %p146 = por %p144, %p145
      %p148 = scmp.ne.s32.totalorder %s133, %s147
      %p149 = scmp.eq.s32.totalorder %s28, 0
      %p150 = por %p148, %p149
      %s152 = sadd.s32 %s151, 1
      %p155 = scmp.eq.s32.totalorder %s22, 4
      %p156 = scmp.ne.s32.totalorder %s151, %s153
      %p157 = scmp.eq.s32.totalorder %s22, 0
      %p158 = por %p156, %p157
      %p159 = scmp.ne.s32.totalorder %s151, %s153
      %p160 = scmp.eq.s32.totalorder %s27, 4
      %p161 = por %p159, %p160
      %p162 = scmp.ne.s32.totalorder %s153, %s154
      %p163 = scmp.eq.s32.totalorder %s27, 0
      %p164 = por %p162, %p163
      %p165 = scmp.ne.s32.totalorder %s153, %s154
      %p166 = scmp.eq.s32.totalorder %s28, 4
      %p167 = por %p165, %p166
      %p169 = scmp.ne.s32.totalorder %s154, %s168
      %p170 = scmp.eq.s32.totalorder %s28, 0
      %p171 = por %p169, %p170
      %s173 = sadd.s32 %s172, 1
      %p176 = scmp.eq.s32.totalorder %s22, 4
      %p177 = scmp.ne.s32.totalorder %s172, %s174
      %p178 = scmp.eq.s32.totalorder %s22, 0
      %p179 = por %p177, %p178
      %p180 = scmp.ne.s32.totalorder %s172, %s174
      %p181 = scmp.eq.s32.totalorder %s27, 4
      %p182 = por %p180, %p181
      %p183 = scmp.ne.s32.totalorder %s174, %s175
      %p184 = scmp.eq.s32.totalorder %s27, 0
      %p185 = por %p183, %p184
      %p186 = scmp.ne.s32.totalorder %s174, %s175
      %p187 = scmp.eq.s32.totalorder %s28, 4
      %p188 = por %p186, %p187
      %p190 = scmp.ne.s32.totalorder %s175, %s189
      %p191 = scmp.eq.s32.totalorder %s28, 0
      %p192 = por %p190, %p191
      %s194 = sadd.s32 %s193, 1
      %p197 = scmp.eq.s32.totalorder %s22, 4
      %p198 = scmp.ne.s32.totalorder %s193, %s195
      %p199 = scmp.eq.s32.totalorder %s22, 0
      %p200 = por %p198, %p199
      %p201 = scmp.ne.s32.totalorder %s193, %s195
      %p202 = scmp.eq.s32.totalorder %s27, 4
      %p203 = por %p201, %p202
      %p204 = scmp.ne.s32.totalorder %s195, %s196
      %p205 = scmp.eq.s32.totalorder %s27, 0
      %p206 = por %p204, %p205
      %p207 = scmp.ne.s32.totalorder %s195, %s196
      %p208 = scmp.eq.s32.totalorder %s28, 4
      %p209 = por %p207, %p208
      %p211 = scmp.ne.s32.totalorder %s196, %s210
      %p212 = scmp.eq.s32.totalorder %s28, 0
      %p213 = por %p211, %p212
      %s215 = sadd.s32 %s214, 1
      %p218 = scmp.eq.s32.totalorder %s22, 4
      %p219 = scmp.ne.s32.totalorder %s214, %s216
      %p220 = scmp.eq.s32.totalorder %s22, 0
      %p221 = por %p219, %p220
      %p222 = scmp.ne.s32.totalorder %s214, %s216
      %p223 = scmp.eq.s32.totalorder %s27, 4
      %p224 = por %p222, %p223
      %p225 = scmp.ne.s32.totalorder %s216, %s217
      %p226 = scmp.eq.s32.totalorder %s27, 0
      %p227 = por %p225, %p226
      %p228 = scmp.ne.s32.totalorder %s216, %s217
      %p229 = scmp.eq.s32.totalorder %s28, 4
      %p230 = por %p228, %p229
      %p232 = scmp.ne.s32.totalorder %s217, %s231
      %p233 = scmp.eq.s32.totalorder %s28, 0
      %p234 = por %p232, %p233
      %s236 = sadd.s32 %s235, 1
      %p239 = scmp.eq.s32.totalorder %s22, 4
      %p240 = scmp.ne.s32.totalorder %s235, %s237
      %p241 = scmp.eq.s32.totalorder %s22, 0
      %p242 = por %p240, %p241
      %p243 = scmp.ne.s32.totalorder %s235, %s237
      %p244 = scmp.eq.s32.totalorder %s27, 4
      %p245 = por %p243, %p244
      %p246 = scmp.ne.s32.totalorder %s237, %s238
      %p247 = scmp.eq.s32.totalorder %s27, 0
      %p248 = por %p246, %p247
      %p249 = scmp.ne.s32.totalorder %s237, %s238
      %p250 = scmp.eq.s32.totalorder %s28, 4
      %p251 = por %p249, %p250
      %p253 = scmp.ne.s32.totalorder %s238, %s252
      %p254 = scmp.eq.s32.totalorder %s28, 0
      %p255 = por %p253, %p254
      %s257 = sadd.s32 %s256, 1
      %p260 = scmp.eq.s32.totalorder %s22, 4
      %p261 = scmp.ne.s32.totalorder %s256, %s258
      %p262 = scmp.eq.s32.totalorder %s22, 0
      %p263 = por %p261, %p262
      %p264 = scmp.ne.s32.totalorder %s256, %s258
      %p265 = scmp.eq.s32.totalorder %s27, 4
      %p266 = por %p264, %p265
      %p267 = scmp.ne.s32.totalorder %s258, %s259
      %p268 = scmp.eq.s32.totalorder %s27, 0
      %p269 = por %p267, %p268
      %p270 = scmp.ne.s32.totalorder %s258, %s259
      %p271 = scmp.eq.s32.totalorder %s28, 4
      %p272 = por %p270, %p271
      %p274 = scmp.ne.s32.totalorder %s259, %s273
      %p275 = scmp.eq.s32.totalorder %s28, 0
      %p276 = por %p274, %p275
      %s278 = sadd.s32 %s277, 1
      %p281 = scmp.eq.s32.totalorder %s22, 4
      %p282 = scmp.ne.s32.totalorder %s277, %s279
      %p283 = scmp.eq.s32.totalorder %s22, 0
      %p284 = por %p282, %p283
      %p285 = scmp.ne.s32.totalorder %s277, %s279
      %p286 = scmp.eq.s32.totalorder %s27, 4
      %p287 = por %p285, %p286
      %p288 = scmp.ne.s32.totalorder %s279, %s280
      %p289 = scmp.eq.s32.totalorder %s27, 0
      %p290 = por %p288, %p289
      %p291 = scmp.ne.s32.totalorder %s279, %s280
      %p292 = scmp.eq.s32.totalorder %s28, 4
      %p293 = por %p291, %p292
      %p295 = scmp.ne.s32.totalorder %s280, %s294
      %p296 = scmp.eq.s32.totalorder %s28, 0
      %p297 = por %p295, %p296
      %s299 = sadd.s32 %s298, 1
      %p302 = scmp.eq.s32.totalorder %s22, 4
      %p303 = scmp.ne.s32.totalorder %s298, %s300
      %p304 = scmp.eq.s32.totalorder %s22, 0
      %p305 = por %p303, %p304
      %p306 = scmp.ne.s32.totalorder %s298, %s300
      %p307 = scmp.eq.s32.totalorder %s27, 4
      %p308 = por %p306, %p307
      %p309 = scmp.ne.s32.totalorder %s300, %s301
      %p310 = scmp.eq.s32.totalorder %s27, 0
      %p311 = por %p309, %p310
      %p312 = scmp.ne.s32.totalorder %s300, %s301
      %p313 = scmp.eq.s32.totalorder %s28, 4
      %p314 = por %p312, %p313
      %p316 = scmp.ne.s32.totalorder %s301, %s315
      %p317 = scmp.eq.s32.totalorder %s28, 0
      %p318 = por %p316, %p317
      %s319 = ssub.s32 %s22, %s29
      %p320 = scmp.eq.s32.totalorder %s319, 0
      %s322 = sadd.s32 %s321, 1
      %s323 = scalar_select %p320, %s321, %s322
      %p326 = pneg %p320
      %p327 = scmp.eq.s32.totalorder %s22, 4
      %p328 = por %p326, %p327
      %p329 = scmp.ne.s32.totalorder %s321, %s324
      %p330 = scmp.eq.s32.totalorder %s22, 0
      %p331 = por %p329, %p330
      %p332 = scmp.ne.s32.totalorder %s321, %s324
      %p333 = scmp.eq.s32.totalorder %s27, 4
      %p334 = por %p332, %p333
      %p335 = scmp.ne.s32.totalorder %s324, %s325
      %p336 = scmp.eq.s32.totalorder %s27, 0
      %p337 = por %p335, %p336
      %p338 = scmp.ne.s32.totalorder %s324, %s325
      %p339 = scmp.eq.s32.totalorder %s28, 4
      %p340 = por %p338, %p339
      %p342 = scmp.ne.s32.totalorder %s325, %s341
      %p343 = scmp.eq.s32.totalorder %s28, 0
      %p344 = por %p342, %p343
      %s346 = sadd.s32 %s345, 1
      %p349 = scmp.eq.s32.totalorder %s22, 4
      %p350 = scmp.ne.s32.totalorder %s345, %s347
      %p351 = scmp.eq.s32.totalorder %s22, 0
      %p352 = por %p350, %p351
      %p353 = scmp.ne.s32.totalorder %s345, %s347
      %p354 = scmp.eq.s32.totalorder %s27, 4
      %p355 = por %p353, %p354
      %p356 = scmp.ne.s32.totalorder %s347, %s348
      %p357 = scmp.eq.s32.totalorder %s27, 0
      %p358 = por %p356, %p357
      %p359 = scmp.ne.s32.totalorder %s347, %s348
      %p360 = scmp.eq.s32.totalorder %s28, 4
      %p361 = por %p359, %p360
      %p363 = scmp.ne.s32.totalorder %s348, %s362
      %p364 = scmp.eq.s32.totalorder %s28, 0
      %p365 = por %p363, %p364
      %p366 = scmp.le.s32.totalorder 1, %s22
      %p367 = scmp.lt.s32.totalorder %s22, 6
      %p368 = pnand %p366, %p367
      %p369 = pneg %p368
      // Predicated region
      $region9: #{rnn_forward.1} parent=5 // pred_check
        _
      $region10: #{rnn_forward.1} parent=5 // pred_check_branch
        %371 = sbr.rel (%p368) target = $region12
      $region11: #{rnn_forward.1} parent=5 // pred_region
        %s372 = ssub.s32 %s22, 1
        // Predicated region
        $region13: #{rnn_forward.1} parent=11 // pred_check
          %p373 = pneg %p69
        $region14: #{rnn_forward.1} parent=11 // pred_check_branch
          %375 = sbr.rel (%p373) target = $region16
        $region15: #{rnn_forward.1} parent=11 // pred_region
          _
        $region16: #{rnn_forward.1} parent=11 // pred_fallthru
          _
        // Predicated region
        $region17: #{rnn_forward.1} parent=11 // pred_check
          %p376 = pneg %p122
        $region18: #{rnn_forward.1} parent=11 // pred_check_branch
          %378 = sbr.rel (%p376) target = $region20
        $region19: #{rnn_forward.1} parent=11 // pred_region
          _
        $region20: #{rnn_forward.1} parent=11 // pred_fallthru
          _
        // Predicated region
        $region21: #{rnn_forward.1} parent=11 // pred_check
          %p379 = pneg %p143
        $region22: #{rnn_forward.1} parent=11 // pred_check_branch
          %381 = sbr.rel (%p379) target = $region24
        $region23: #{rnn_forward.1} parent=11 // pred_region
          _
        $region24: #{rnn_forward.1} parent=11 // pred_fallthru
          _
        // Predicated region
        $region25: #{rnn_forward.1} parent=11 // pred_check
          %p382 = pneg %p164
        $region26: #{rnn_forward.1} parent=11 // pred_check_branch
          %384 = sbr.rel (%p382) target = $region28
        $region27: #{rnn_forward.1} parent=11 // pred_region
          _
        $region28: #{rnn_forward.1} parent=11 // pred_fallthru
          _
        // Predicated region
        $region29: #{rnn_forward.1} parent=11 // pred_check
          %p385 = pneg %p185
        $region30: #{rnn_forward.1} parent=11 // pred_check_branch
          %387 = sbr.rel (%p385) target = $region32
        $region31: #{rnn_forward.1} parent=11 // pred_region
          _
        $region32: #{rnn_forward.1} parent=11 // pred_fallthru
          _
        // Predicated region
        $region33: #{rnn_forward.1} parent=11 // pred_check
          %p388 = pneg %p206
        $region34: #{rnn_forward.1} parent=11 // pred_check_branch
          %390 = sbr.rel (%p388) target = $region36
        $region35: #{rnn_forward.1} parent=11 // pred_region
          _
        $region36: #{rnn_forward.1} parent=11 // pred_fallthru
          _
        // Predicated region
        $region37: #{rnn_forward.1} parent=11 // pred_check
          %p391 = pneg %p227
        $region38: #{rnn_forward.1} parent=11 // pred_check_branch
          %393 = sbr.rel (%p391) target = $region40
        $region39: #{rnn_forward.1} parent=11 // pred_region
          _
        $region40: #{rnn_forward.1} parent=11 // pred_fallthru
          _
        // Predicated region
        $region41: #{rnn_forward.1} parent=11 // pred_check
          %p394 = pneg %p248
        $region42: #{rnn_forward.1} parent=11 // pred_check_branch
          %396 = sbr.rel (%p394) target = $region44
        $region43: #{rnn_forward.1} parent=11 // pred_region
          _
        $region44: #{rnn_forward.1} parent=11 // pred_fallthru
          _
        // Predicated region
        $region45: #{rnn_forward.1} parent=11 // pred_check
          %p397 = pneg %p269
        $region46: #{rnn_forward.1} parent=11 // pred_check_branch
          %399 = sbr.rel (%p397) target = $region48
        $region47: #{rnn_forward.1} parent=11 // pred_region
          _
        $region48: #{rnn_forward.1} parent=11 // pred_fallthru
          _
        // Predicated region
        $region49: #{rnn_forward.1} parent=11 // pred_check
          %p400 = pneg %p290
        $region50: #{rnn_forward.1} parent=11 // pred_check_branch
          %402 = sbr.rel (%p400) target = $region52
        $region51: #{rnn_forward.1} parent=11 // pred_region
          _
        $region52: #{rnn_forward.1} parent=11 // pred_fallthru
          _
        // Predicated region
        $region53: #{rnn_forward.1} parent=11 // pred_check
          %p403 = pneg %p311
        $region54: #{rnn_forward.1} parent=11 // pred_check_branch
          %405 = sbr.rel (%p403) target = $region56
        $region55: #{rnn_forward.1} parent=11 // pred_region
          _
        $region56: #{rnn_forward.1} parent=11 // pred_fallthru
          _
      $region12: #{rnn_forward.1} parent=5 // pred_fallthru
        _
      %p406 = scmp.lt.s32.totalorder %s22, 5
      // Predicated region
      $region57: #{rnn_forward.1} parent=5 // pred_check
        %p407 = pneg %p406
      $region58: #{rnn_forward.1} parent=5 // pred_check_branch
        %409 = sbr.rel (%p407) target = $region60
      $region59: #{rnn_forward.1} parent=5 // pred_region
        // Predicated region
        $region61: #{rnn_forward.1} parent=59 // pred_check
          %p410 = pneg %p42
        $region62: #{rnn_forward.1} parent=59 // pred_check_branch
          %412 = sbr.rel (%p410) target = $region64
        $region63: #{rnn_forward.1} parent=59 // pred_region
          %p413 = scmp.lt.s32.totalorder %s22, 5
          %s414 = scalar_select %p413, %s22, 5
          %s415 = smul.addr %s414, 4
          %s416 = smul.addr %s415, 8
          %s417 = scalar_lea.vmem %s0, %s416
        $region64: #{rnn_forward.1} parent=59 // pred_fallthru
          _
        // Predicated region
        $region65: #{rnn_forward.1} parent=59 // pred_check
          %p418 = pneg %p95
        $region66: #{rnn_forward.1} parent=59 // pred_check_branch
          %420 = sbr.rel (%p418) target = $region68
        $region67: #{rnn_forward.1} parent=59 // pred_region
          %s421 = ssub.s32 %s22, 3
          %p422 = scmp.gt.s32.totalorder %s421, 0
          %s423 = scalar_select %p422, %s421, 0
          %p424 = scmp.lt.s32.totalorder %s423, 1
          %s425 = scalar_select %p424, %s423, 1
          %s426 = smul.addr %s425, 4
          %s427 = smul.addr %s426, 8
          %s428 = scalar_lea.vmem %s2, %s427
          %s429 = ssub.s32 %s22, 3
          %p430 = scmp.gt.s32.totalorder %s429, 0
          %s431 = scalar_select %p430, %s429, 0
        $region68: #{rnn_forward.1} parent=59 // pred_fallthru
          _
      $region60: #{rnn_forward.1} parent=5 // pred_fallthru
        _
      %p432 = scmp.le.s32.totalorder 1, %s22
      %p433 = scmp.lt.s32.totalorder %s22, 6
      %p434 = pnand %p432, %p433
      %p435 = pneg %p434
      // Predicated region
      $region69: #{rnn_forward.1} parent=5 // pred_check
        _
      $region70: #{rnn_forward.1} parent=5 // pred_check_branch
        %437 = sbr.rel (%p434) target = $region72
      $region71: #{rnn_forward.1} parent=5 // pred_region
        %s438 = ssub.s32 %s22, 1
        %p439 = scmp.lt.s32.totalorder %s27, 5
        %s440 = scalar_select %p439, %s27, 5
        %s441 = smul.addr %s440, 4
        %s442 = smul.addr %s441, 8
        %s443 = scalar_lea.vmem %s0, %s442
        %p444 = pneg %p48
        %p445 = pneg %p45
        %p446 = pneg %p69
        %p447 = pneg %p66
        %s448 = ssub.s32 %s27, 3
        %p449 = scmp.gt.s32.totalorder %s448, 0
        %s450 = scalar_select %p449, %s448, 0
        %p451 = scmp.lt.s32.totalorder %s450, 1
        %s452 = scalar_select %p451, %s450, 1
        %s453 = smul.addr %s452, 4
        %s454 = smul.addr %s453, 8
        %s455 = scalar_lea.vmem %s2, %s454
        %p456 = pneg %p101
        %p457 = pneg %p98
        %p458 = pneg %p122
        %p459 = pneg %p119
        %p460 = pneg %p143
        %p461 = pneg %p140
        %p462 = pneg %p164
        %p463 = pneg %p161
        %p464 = pneg %p185
        %p465 = pneg %p182
        %p466 = pneg %p206
        %p467 = pneg %p203
        %p468 = pneg %p227
        %p469 = pneg %p224
        %p470 = pneg %p248
        %p471 = pneg %p245
        %p472 = pneg %p269
        %p473 = pneg %p266
        %p474 = pneg %p290
        %p475 = pneg %p287
        %p476 = pneg %p311
        %p477 = pneg %p308
        %p478 = pneg %p337
        %p479 = pneg %p334
        %p480 = scmp.lt.s32.totalorder %s27, 4
        %s481 = scalar_select %p480, %s27, 4
        %s482 = smul.addr %s481, 4
        %s483 = smul.addr %s482, 8
        %s484 = scalar_lea.vmem %s13, %s483
        %p485 = pneg %p358
        %p486 = pneg %p355
        %p487 = scmp.lt.s32.totalorder %s27, 5
        %s488 = scalar_select %p487, %s27, 5
        %s489 = smul.addr %s488, 4
        %s490 = smul.addr %s489, 8
        %s491 = scalar_lea.vmem %s0, %s490
        %s492 = ssub.s32 %s27, 3
        %p493 = scmp.gt.s32.totalorder %s492, 0
        %s494 = scalar_select %p493, %s492, 0
        %p495 = scmp.lt.s32.totalorder %s494, 1
        %s496 = scalar_select %p495, %s494, 1
        %s497 = smul.addr %s496, 4
        %s498 = smul.addr %s497, 8
        %s499 = scalar_lea.vmem %s2, %s498
        %s500 = ssub.s32 %s27, 3
        %p501 = scmp.gt.s32.totalorder %s500, 0
        %s502 = scalar_select %p501, %s500, 0
        %p503 = scmp.lt.s32.totalorder %s27, 4
        %s504 = scalar_select %p503, %s27, 4
        %s505 = smul.addr %s504, 4
        %s506 = smul.addr %s505, 8
        %s507 = scalar_lea.vmem %s13, %s506
        %p509 = scmp.eq.s32.totalorder %s27, 0
        // Predicated region
        $region73: #{rnn_forward.1} parent=71 // pred_check
          %p510 = pneg %p509
        $region74: #{rnn_forward.1} parent=71 // pred_check_branch
          %512 = sbr.rel (%p510) target = $region76
        $region75: #{rnn_forward.1} parent=71 // pred_region
          %513 = vst [vmem:[#allocation2] sm:$0xff] 0
          %514 = vst [vmem:[#allocation2 + $0x8] sm:$0xff] 0
          %515 = vst [vmem:[#allocation2 + $0x10] sm:$0xff] 0
          %516 = vst [vmem:[#allocation2 + $0x18] sm:$0xff] 0
          %517 = vst [vmem:[#allocation2 + $0x20] sm:$0xff] 0
          %518 = vst [vmem:[#allocation2 + $0x28] sm:$0xff] 0
          %519 = vst [vmem:[#allocation2 + $0x30] sm:$0xff] 0
          %520 = vst [vmem:[#allocation2 + $0x38] sm:$0xff] 0
          %521 = vst [vmem:[#allocation3] sm:$0xff] 0.0
          %522 = vst [vmem:[#allocation3 + $0x8] sm:$0xff] 0.0
          %523 = vst [vmem:[#allocation3 + $0x10] sm:$0xff] 0.0
          %524 = vst [vmem:[#allocation3 + $0x18] sm:$0xff] 0.0
          %525 = vst [vmem:[#allocation3 + $0x20] sm:$0xff] 0.0
          %526 = vst [vmem:[#allocation3 + $0x28] sm:$0xff] 0.0
          %527 = vst [vmem:[#allocation3 + $0x30] sm:$0xff] 0.0
          %528 = vst [vmem:[#allocation3 + $0x38] sm:$0xff] 0.0
          %529 = vst [vmem:[#allocation3 + $0x40] sm:$0xff] 0.0
          %530 = vst [vmem:[#allocation3 + $0x48] sm:$0xff] 0.0
          %531 = vst [vmem:[#allocation3 + $0x50] sm:$0xff] 0.0
          %532 = vst [vmem:[#allocation3 + $0x58] sm:$0xff] 0.0
          %533 = vst [vmem:[#allocation3 + $0x60] sm:$0xff] 0.0
          %534 = vst [vmem:[#allocation3 + $0x68] sm:$0xff] 0.0
          %535 = vst [vmem:[#allocation3 + $0x70] sm:$0xff] 0.0
          %536 = vst [vmem:[#allocation3 + $0x78] sm:$0xff] 0.0
          %537 = vst [vmem:[#allocation4] sm:$0xff] 0
          %538 = vst [vmem:[#allocation4 + $0x8] sm:$0xff] 0
          %539 = vst [vmem:[#allocation4 + $0x10] sm:$0xff] 0
          %540 = vst [vmem:[#allocation4 + $0x18] sm:$0xff] 0
          %541 = vst [vmem:[#allocation5] sm:$0xff] 0.0
          %542 = vst [vmem:[#allocation5 + $0x8] sm:$0xff] 0.0
          %543 = vst [vmem:[#allocation5 + $0x10] sm:$0xff] 0.0
          %544 = vst [vmem:[#allocation5 + $0x18] sm:$0xff] 0.0
          %545 = vst [vmem:[#allocation7] sm:$0xff] 0.0
          %546 = vst [vmem:[#allocation7 + $0x8] sm:$0xff] 0.0
          %547 = vst [vmem:[#allocation7 + $0x10] sm:$0xff] 0.0
          %548 = vst [vmem:[#allocation7 + $0x18] sm:$0xff] 0.0
          %vm549 = vcmask 0
          %550 = vst.msk [vmem:[#allocation8] sm:$0x1] %vm549, 0.0
        $region76: #{rnn_forward.1} parent=71 // pred_fallthru
          _
        %v551 = vld [vmem:[%s491] sm:$0xff]
        %v552 = vld [vmem:[%s491 + $0x8] sm:$0xff]
        %v553 = vld [vmem:[%s491 + $0x10] sm:$0xff]
        %v554 = vld [vmem:[%s491 + $0x18] sm:$0xff]
        %p555 = scmp.gt.s32.totalorder %s27, 0
        // Predicated region
        $region77: #{rnn_forward.1} parent=71 // pred_check
          %p556 = pneg %p555
        $region78: #{rnn_forward.1} parent=71 // pred_check_branch
          %558 = sbr.rel (%p556) target = $region80
        $region79: #{rnn_forward.1} parent=71 // pred_region
          %v559 = vld [vmem:[#allocation5] sm:$0xff]
          %v560 = vld [vmem:[#allocation5 + $0x8] sm:$0xff]
          %v561 = vld [vmem:[#allocation5 + $0x10] sm:$0xff]
          %v562 = vld [vmem:[#allocation5 + $0x18] sm:$0xff]
          %v563 = vsub.f32 %v559, %v551
          %v564 = vsub.f32 %v560, %v552
          %v565 = vsub.f32 %v561, %v553
          %v566 = vsub.f32 %v562, %v554
          %v567 = vld [vmem:[#allocation7] sm:$0xff]
          %v568 = vld [vmem:[#allocation7 + $0x8] sm:$0xff]
          %v569 = vld [vmem:[#allocation7 + $0x10] sm:$0xff]
          %v570 = vld [vmem:[#allocation7 + $0x18] sm:$0xff]
          %v571 = vmul.f32 %v563, %v563
          %v572 = vmul.f32 %v564, %v564
          %v573 = vmul.f32 %v565, %v565
          %v574 = vmul.f32 %v566, %v566
          %v575 = vadd.f32 %v567, %v571
          %v576 = vadd.f32 %v568, %v572
          %v577 = vadd.f32 %v569, %v573
          %v578 = vadd.f32 %v570, %v574
          %579 = vst [vmem:[#allocation7] sm:$0xff] %v575
          %580 = vst [vmem:[#allocation7 + $0x8] sm:$0xff] %v576
          %581 = vst [vmem:[#allocation7 + $0x10] sm:$0xff] %v577
          %582 = vst [vmem:[#allocation7 + $0x18] sm:$0xff] %v578
        $region80: #{rnn_forward.1} parent=71 // pred_fallthru
          _
        %v583 = vld [vmem:[%s3] sm:$0x3]
        %s584 = scalar_lea.vmem %s3, 2
        %v585 = vld [vmem:[%s584] sm:$0x3]
        %s586 = scalar_lea.vmem %s3, 4
        %v587 = vld [vmem:[%s586] sm:$0x3]
        %s588 = scalar_lea.vmem %s3, 6
        %v589 = vld [vmem:[%s588] sm:$0x3]
        %s590 = scalar_lea.vmem %s3, 10
        %v591 = vld [vmem:[%s590] sm:$0x3]
        %s592 = scalar_lea.vmem %s3, 12
        %v593 = vld [vmem:[%s592] sm:$0x3]
        %s594 = scalar_lea.vmem %s3, 14
        %v595 = vld [vmem:[%s594] sm:$0x3]
        %s596 = scalar_lea.vmem %s3, 16
        %v597 = vld [vmem:[%s596] sm:$0x3]
        %v598 = vld [vmem:[%s499] sm:$0xff]
        %v599 = vld [vmem:[%s499 + $0x8] sm:$0xff]
        %v600 = vld [vmem:[%s499 + $0x10] sm:$0xff]
        %v601 = vld [vmem:[%s499 + $0x18] sm:$0xff]
        %p602 = scmp.lt.s32.totalorder %s27, 3
        %s603 = scalar_select %p602, 1, 0
        %s604 = scvt.s32.f32 %s603
        %v605 = vmul.f32 %v598, %v551
        %v606 = vmul.f32 %v599, %v552
        %v607 = vmul.f32 %v600, %v553
        %v608 = vmul.f32 %v601, %v554
        %v609 = vsub.f32 1.0, %v598
        %v610 = vsub.f32 1.0, %v599
        %v611 = vsub.f32 1.0, %v600
        %v612 = vsub.f32 1.0, %v601
        %v613 = vld [vmem:[#allocation5] sm:$0xff]
        %v614 = vld [vmem:[#allocation5 + $0x8] sm:$0xff]
        %v615 = vld [vmem:[#allocation5 + $0x10] sm:$0xff]
        %v616 = vld [vmem:[#allocation5 + $0x18] sm:$0xff]
        %v617 = vmul.f32 %v609, %v613
        %v618 = vmul.f32 %v610, %v614
        %v619 = vmul.f32 %v611, %v615
        %v620 = vmul.f32 %v612, %v616
        %v621 = vadd.f32 %v605, %v617
        %v622 = vadd.f32 %v606, %v618
        %v623 = vadd.f32 %v607, %v619
        %v624 = vadd.f32 %v608, %v620
        %v625 = vstv %s604
        %v626 = vmul.f32 %v625, %v551
        %v627 = vmul.f32 %v625, %v552
        %v628 = vmul.f32 %v625, %v553
        %v629 = vmul.f32 %v625, %v554
        %s630 = ssub.f32 1.0, %s604
        %v631 = vstv %s630
        %v632 = vmul.f32 %v631, %v621
        %v633 = vmul.f32 %v631, %v622
        %v634 = vmul.f32 %v631, %v623
        %v635 = vmul.f32 %v631, %v624
        %v636 = vadd.f32 %v626, %v632
        %v637 = vadd.f32 %v627, %v633
        %v638 = vadd.f32 %v628, %v634
        %v639 = vadd.f32 %v629, %v635
        %v640 = vld [vmem:[#allocation4] sm:$0xff]
        %v641 = vld [vmem:[#allocation4 + $0x8] sm:$0xff]
        %v642 = vld [vmem:[#allocation4 + $0x10] sm:$0xff]
        %v643 = vld [vmem:[#allocation4 + $0x18] sm:$0xff]
        %v644 = vunpack.c.l.bf16 %v640
        %v645 = vunpack.c.l.bf16 %v641
        %v646 = vunpack.c.h.bf16 %v640
        %v647 = vunpack.c.h.bf16 %v641
        %v648 = vunpack.c.l.bf16 %v642
        %v649 = vunpack.c.l.bf16 %v643
        %v650 = vunpack.c.h.bf16 %v642
        %v651 = vunpack.c.h.bf16 %v643
        %v652 = vld [vmem:[#allocation2] sm:$0xff]
        %v653 = vld [vmem:[#allocation2 + $0x8] sm:$0xff]
        %v654 = vld [vmem:[#allocation2 + $0x10] sm:$0xff]
        %v655 = vld [vmem:[#allocation2 + $0x18] sm:$0xff]
        %v656 = vunpack.c.l.bf16 %v652
        %v657 = vunpack.c.l.bf16 %v653
        %v658 = vunpack.c.h.bf16 %v652
        %v659 = vunpack.c.h.bf16 %v653
        %v660 = vunpack.c.l.bf16 %v654
        %v661 = vunpack.c.l.bf16 %v655
        %v662 = vunpack.c.h.bf16 %v654
        %v663 = vunpack.c.h.bf16 %v655
        %v664 = vld [vmem:[#allocation3] sm:$0xff]
        %v665 = vld [vmem:[#allocation3 + $0x8] sm:$0xff]
        %v666 = vld [vmem:[#allocation3 + $0x10] sm:$0xff]
        %v667 = vld [vmem:[#allocation3 + $0x18] sm:$0xff]
        %v668 = vld [vmem:[#allocation3 + $0x20] sm:$0xff]
        %v669 = vld [vmem:[#allocation3 + $0x28] sm:$0xff]
        %v670 = vld [vmem:[#allocation3 + $0x30] sm:$0xff]
        %v671 = vld [vmem:[#allocation3 + $0x38] sm:$0xff]
        %672 = vrot.lane.b32.xlu0 %v644, 9
        %v673 = vpop.permute.xlu0 %672
        %674 = vrot.lane.b32.xlu0 %v646, 9
        %v675 = vpop.permute.xlu0 %674
        %676 = vrot.lane.b32.xlu0 %v648, 9
        %v677 = vpop.permute.xlu0 %676
        %678 = vrot.lane.b32.xlu0 %v650, 9
        %v679 = vpop.permute.xlu0 %678
        %680 = vrot.lane.b32.xlu0 %v645, 9
        %v681 = vpop.permute.xlu0 %680
        %682 = vrot.lane.b32.xlu0 %v647, 9
        %v683 = vpop.permute.xlu0 %682
        %684 = vrot.lane.b32.xlu0 %v649, 9
        %v685 = vpop.permute.xlu0 %684
        %686 = vrot.lane.b32.xlu0 %v651, 9
        %v687 = vpop.permute.xlu0 %686
        %v688 = vlaneseq
        %v689 = vand.u32 %v688, 127
        %vm690 = vcmp.lt.s32.totalorder %v689, 9
        %v691 = vsel %vm690, %v673, %v681
        %v692 = vsel %vm690, %v675, %v683
        %v693 = vsel %vm690, %v677, %v685
        %v694 = vsel %vm690, %v679, %v687
        %v695 = vsel %vm690, %v681, %v673
        %v696 = vsel %vm690, %v683, %v675
        %v697 = vsel %vm690, %v685, %v677
        %v698 = vsel %vm690, %v687, %v679
        %v700 = vlaneseq
        %v701 = vshrl.u32 %v700, 7
        %v702 = vsub.s32 0, %v701
        %v703 = vrot.slane %v583, %v702
        %v704 = vlaneseq
        %v705 = vshrl.u32 %v704, 7
        %v706 = vsub.s32 1, %v705
        %v707 = vrot.slane %v583, %v706
        %v710 = vmul.f32 %v695, %v703
        %v711 = vmul.f32 %v691, %v707
        %v712 = vmul.f32 %v696, %v703
        %v713 = vmul.f32 %v692, %v707
        %v714 = vmul.f32 %v697, %v703
        %v715 = vmul.f32 %v693, %v707
        %v716 = vmul.f32 %v698, %v703
        %v717 = vmul.f32 %v694, %v707
        %v718 = vpack.c.bf16 %v712, %v710
        %v719 = vpack.c.bf16 %v713, %v711
        %v720 = vpack.c.bf16 %v716, %v714
        %v721 = vpack.c.bf16 %v717, %v715
        %722 = vst [vmem:[#allocation6] sm:$0xff] %v718
        %723 = vst [vmem:[#allocation6 + $0x8] sm:$0xff] %v719
        %724 = vst [vmem:[#allocation6 + $0x10] sm:$0xff] %v720
        %725 = vst [vmem:[#allocation6 + $0x18] sm:$0xff] %v721
        %726 = vrot.lane.b32.xlu0 %v644, 8
        %v727 = vpop.permute.xlu0 %726
        %728 = vrot.lane.b32.xlu0 %v646, 8
        %v729 = vpop.permute.xlu0 %728
        %730 = vrot.lane.b32.xlu0 %v648, 8
        %v731 = vpop.permute.xlu0 %730
        %732 = vrot.lane.b32.xlu0 %v650, 8
        %v733 = vpop.permute.xlu0 %732
        %734 = vrot.lane.b32.xlu0 %v645, 8
        %v735 = vpop.permute.xlu0 %734
        %736 = vrot.lane.b32.xlu0 %v647, 8
        %v737 = vpop.permute.xlu0 %736
        %738 = vrot.lane.b32.xlu0 %v649, 8
        %v739 = vpop.permute.xlu0 %738
        %740 = vrot.lane.b32.xlu0 %v651, 8
        %v741 = vpop.permute.xlu0 %740
        %vm742 = vcmp.lt.s32.totalorder %v689, 8
        %v743 = vsel %vm742, %v727, %v735
        %v744 = vsel %vm742, %v729, %v737
        %v745 = vsel %vm742, %v731, %v739
        %v746 = vsel %vm742, %v733, %v741
        %v747 = vsel %vm742, %v735, %v727
        %v748 = vsel %vm742, %v737, %v729
        %v749 = vsel %vm742, %v739, %v731
        %v750 = vsel %vm742, %v741, %v733
        %v752 = vlaneseq
        %v753 = vshrl.u32 %v752, 7
        %v754 = vsub.s32 0, %v753
        %v755 = vrot.slane %v585, %v754
        %v756 = vlaneseq
        %v757 = vshrl.u32 %v756, 7
        %v758 = vsub.s32 1, %v757
        %v759 = vrot.slane %v585, %v758
        %v762 = vmul.f32 %v747, %v755
        %v763 = vmul.f32 %v743, %v759
        %v764 = vmul.f32 %v748, %v755
        %v765 = vmul.f32 %v744, %v759
        %v766 = vmul.f32 %v749, %v755
        %v767 = vmul.f32 %v745, %v759
        %v768 = vmul.f32 %v750, %v755
        %v769 = vmul.f32 %v746, %v759
        %v770 = vpack.c.bf16 %v764, %v762
        %v771 = vpack.c.bf16 %v765, %v763
        %v772 = vpack.c.bf16 %v768, %v766
        %v773 = vpack.c.bf16 %v769, %v767
        %774 = vst [vmem:[#allocation6 + $0x20] sm:$0xff] %v770
        %775 = vst [vmem:[#allocation6 + $0x28] sm:$0xff] %v771
        %776 = vst [vmem:[#allocation6 + $0x30] sm:$0xff] %v772
        %777 = vst [vmem:[#allocation6 + $0x38] sm:$0xff] %v773
        %778 = vrot.lane.b32.xlu0 %v644, 7
        %v779 = vpop.permute.xlu0 %778
        %780 = vrot.lane.b32.xlu0 %v646, 7
        %v781 = vpop.permute.xlu0 %780
        %782 = vrot.lane.b32.xlu0 %v648, 7
        %v783 = vpop.permute.xlu0 %782
        %784 = vrot.lane.b32.xlu0 %v650, 7
        %v785 = vpop.permute.xlu0 %784
        %786 = vrot.lane.b32.xlu0 %v645, 7
        %v787 = vpop.permute.xlu0 %786
        %788 = vrot.lane.b32.xlu0 %v647, 7
        %v789 = vpop.permute.xlu0 %788
        %790 = vrot.lane.b32.xlu0 %v649, 7
        %v791 = vpop.permute.xlu0 %790
        %792 = vrot.lane.b32.xlu0 %v651, 7
        %v793 = vpop.permute.xlu0 %792
        %vm794 = vcmp.lt.s32.totalorder %v689, 7
        %v795 = vsel %vm794, %v779, %v787
        %v796 = vsel %vm794, %v781, %v789
        %v797 = vsel %vm794, %v783, %v791
        %v798 = vsel %vm794, %v785, %v793
        %v799 = vsel %vm794, %v787, %v779
        %v800 = vsel %vm794, %v789, %v781
        %v801 = vsel %vm794, %v791, %v783
        %v802 = vsel %vm794, %v793, %v785
        %v804 = vlaneseq
        %v805 = vshrl.u32 %v804, 7
        %v806 = vsub.s32 0, %v805
        %v807 = vrot.slane %v587, %v806
        %v808 = vlaneseq
        %v809 = vshrl.u32 %v808, 7
        %v810 = vsub.s32 1, %v809
        %v811 = vrot.slane %v587, %v810
        %v814 = vmul.f32 %v799, %v807
        %v815 = vmul.f32 %v795, %v811
        %v816 = vmul.f32 %v800, %v807
        %v817 = vmul.f32 %v796, %v811
        %v818 = vmul.f32 %v801, %v807
        %v819 = vmul.f32 %v797, %v811
        %v820 = vmul.f32 %v802, %v807
        %v821 = vmul.f32 %v798, %v811
        %v822 = vpack.c.bf16 %v816, %v814
        %v823 = vpack.c.bf16 %v817, %v815
        %v824 = vpack.c.bf16 %v820, %v818
        %v825 = vpack.c.bf16 %v821, %v819
        %826 = vst [vmem:[#allocation6 + $0x40] sm:$0xff] %v822
        %827 = vst [vmem:[#allocation6 + $0x48] sm:$0xff] %v823
        %828 = vst [vmem:[#allocation6 + $0x50] sm:$0xff] %v824
        %829 = vst [vmem:[#allocation6 + $0x58] sm:$0xff] %v825
        %830 = vrot.lane.b32.xlu0 %v644, 1
        %v831 = vpop.permute.xlu0 %830
        %832 = vrot.lane.b32.xlu0 %v646, 1
        %v833 = vpop.permute.xlu0 %832
        %834 = vrot.lane.b32.xlu0 %v648, 1
        %v835 = vpop.permute.xlu0 %834
        %836 = vrot.lane.b32.xlu0 %v650, 1
        %v837 = vpop.permute.xlu0 %836
        %838 = vrot.lane.b32.xlu0 %v645, 1
        %v839 = vpop.permute.xlu0 %838
        %840 = vrot.lane.b32.xlu0 %v647, 1
        %v841 = vpop.permute.xlu0 %840
        %842 = vrot.lane.b32.xlu0 %v649, 1
        %v843 = vpop.permute.xlu0 %842
        %844 = vrot.lane.b32.xlu0 %v651, 1
        %v845 = vpop.permute.xlu0 %844
        %vm846 = vcmp.lt.s32.totalorder %v689, 1
        %v847 = vsel %vm846, %v831, %v839
        %v848 = vsel %vm846, %v833, %v841
        %v849 = vsel %vm846, %v835, %v843
        %v850 = vsel %vm846, %v837, %v845
        %v851 = vsel %vm846, %v839, %v831
        %v852 = vsel %vm846, %v841, %v833
        %v853 = vsel %vm846, %v843, %v835
        %v854 = vsel %vm846, %v845, %v837
        %v856 = vlaneseq
        %v857 = vshrl.u32 %v856, 7
        %v858 = vsub.s32 0, %v857
        %v859 = vrot.slane %v589, %v858
        %v860 = vlaneseq
        %v861 = vshrl.u32 %v860, 7
        %v862 = vsub.s32 1, %v861
        %v863 = vrot.slane %v589, %v862
        %v866 = vmul.f32 %v851, %v859
        %v867 = vmul.f32 %v847, %v863
        %v868 = vmul.f32 %v852, %v859
        %v869 = vmul.f32 %v848, %v863
        %v870 = vmul.f32 %v853, %v859
        %v871 = vmul.f32 %v849, %v863
        %v872 = vmul.f32 %v854, %v859
        %v873 = vmul.f32 %v850, %v863
        %v874 = vpack.c.bf16 %v868, %v866
        %v875 = vpack.c.bf16 %v869, %v867
        %v876 = vpack.c.bf16 %v872, %v870
        %v877 = vpack.c.bf16 %v873, %v871
        %878 = vst [vmem:[#allocation6 + $0x60] sm:$0xff] %v874
        %879 = vst [vmem:[#allocation6 + $0x68] sm:$0xff] %v875
        %880 = vst [vmem:[#allocation6 + $0x70] sm:$0xff] %v876
        %881 = vst [vmem:[#allocation6 + $0x78] sm:$0xff] %v877
        %882 = vst [vmem:[#allocation6 + $0x80] sm:$0xff] %v640
        %883 = vst [vmem:[#allocation6 + $0x88] sm:$0xff] %v641
        %884 = vst [vmem:[#allocation6 + $0x90] sm:$0xff] %v642
        %885 = vst [vmem:[#allocation6 + $0x98] sm:$0xff] %v643
        %886 = vrot.lane.b32.xlu0 %v644, 127
        %v887 = vpop.permute.xlu0 %886
        %888 = vrot.lane.b32.xlu0 %v646, 127
        %v889 = vpop.permute.xlu0 %888
        %890 = vrot.lane.b32.xlu0 %v648, 127
        %v891 = vpop.permute.xlu0 %890
        %892 = vrot.lane.b32.xlu0 %v650, 127
        %v893 = vpop.permute.xlu0 %892
        %894 = vrot.lane.b32.xlu0 %v645, 127
        %v895 = vpop.permute.xlu0 %894
        %896 = vrot.lane.b32.xlu0 %v647, 127
        %v897 = vpop.permute.xlu0 %896
        %898 = vrot.lane.b32.xlu0 %v649, 127
        %v899 = vpop.permute.xlu0 %898
        %900 = vrot.lane.b32.xlu0 %v651, 127
        %v901 = vpop.permute.xlu0 %900
        %vm902 = vcmp.lt.s32.totalorder %v689, 127
        %v903 = vsel %vm902, %v887, %v895
        %v904 = vsel %vm902, %v889, %v897
        %v905 = vsel %vm902, %v891, %v899
        %v906 = vsel %vm902, %v893, %v901
        %v907 = vsel %vm902, %v895, %v887
        %v908 = vsel %vm902, %v897, %v889
        %v909 = vsel %vm902, %v899, %v891
        %v910 = vsel %vm902, %v901, %v893
        %v912 = vlaneseq
        %v913 = vshrl.u32 %v912, 7
        %v914 = vsub.s32 0, %v913
        %v915 = vrot.slane %v591, %v914
        %v916 = vlaneseq
        %v917 = vshrl.u32 %v916, 7
        %v918 = vsub.s32 1, %v917
        %v919 = vrot.slane %v591, %v918
        %v922 = vmul.f32 %v903, %v915
        %v923 = vmul.f32 %v907, %v919
        %v924 = vmul.f32 %v904, %v915
        %v925 = vmul.f32 %v908, %v919
        %v926 = vmul.f32 %v905, %v915
        %v927 = vmul.f32 %v909, %v919
        %v928 = vmul.f32 %v906, %v915
        %v929 = vmul.f32 %v910, %v919
        %v930 = vpack.c.bf16 %v924, %v922
        %v931 = vpack.c.bf16 %v925, %v923
        %v932 = vpack.c.bf16 %v928, %v926
        %v933 = vpack.c.bf16 %v929, %v927
        %934 = vst [vmem:[#allocation6 + $0xa0] sm:$0xff] %v930
        %935 = vst [vmem:[#allocation6 + $0xa8] sm:$0xff] %v931
        %936 = vst [vmem:[#allocation6 + $0xb0] sm:$0xff] %v932
        %937 = vst [vmem:[#allocation6 + $0xb8] sm:$0xff] %v933
        %938 = vrot.lane.b32.xlu0 %v644, 121
        %v939 = vpop.permute.xlu0 %938
        %940 = vrot.lane.b32.xlu0 %v646, 121
        %v941 = vpop.permute.xlu0 %940
        %942 = vrot.lane.b32.xlu0 %v648, 121
        %v943 = vpop.permute.xlu0 %942
        %944 = vrot.lane.b32.xlu0 %v650, 121
        %v945 = vpop.permute.xlu0 %944
        %946 = vrot.lane.b32.xlu0 %v645, 121
        %v947 = vpop.permute.xlu0 %946
        %948 = vrot.lane.b32.xlu0 %v647, 121
        %v949 = vpop.permute.xlu0 %948
        %950 = vrot.lane.b32.xlu0 %v649, 121
        %v951 = vpop.permute.xlu0 %950
        %952 = vrot.lane.b32.xlu0 %v651, 121
        %v953 = vpop.permute.xlu0 %952
        %vm954 = vcmp.lt.s32.totalorder %v689, 121
        %v955 = vsel %vm954, %v939, %v947
        %v956 = vsel %vm954, %v941, %v949
        %v957 = vsel %vm954, %v943, %v951
        %v958 = vsel %vm954, %v945, %v953
        %v959 = vsel %vm954, %v947, %v939
        %v960 = vsel %vm954, %v949, %v941
        %v961 = vsel %vm954, %v951, %v943
        %v962 = vsel %vm954, %v953, %v945
        %v964 = vlaneseq
        %v965 = vshrl.u32 %v964, 7
        %v966 = vsub.s32 0, %v965
        %v967 = vrot.slane %v593, %v966
        %v968 = vlaneseq
        %v969 = vshrl.u32 %v968, 7
        %v970 = vsub.s32 1, %v969
        %v971 = vrot.slane %v593, %v970
        %v974 = vmul.f32 %v955, %v967
        %v975 = vmul.f32 %v959, %v971
        %v976 = vmul.f32 %v956, %v967
        %v977 = vmul.f32 %v960, %v971
        %v978 = vmul.f32 %v957, %v967
        %v979 = vmul.f32 %v961, %v971
        %v980 = vmul.f32 %v958, %v967
        %v981 = vmul.f32 %v962, %v971
        %v982 = vpack.c.bf16 %v976, %v974
        %v983 = vpack.c.bf16 %v977, %v975
        %v984 = vpack.c.bf16 %v980, %v978
        %v985 = vpack.c.bf16 %v981, %v979
        %986 = vst [vmem:[#allocation6 + $0xc0] sm:$0xff] %v982
        %987 = vst [vmem:[#allocation6 + $0xc8] sm:$0xff] %v983
        %988 = vst [vmem:[#allocation6 + $0xd0] sm:$0xff] %v984
        %989 = vst [vmem:[#allocation6 + $0xd8] sm:$0xff] %v985
        %990 = vrot.lane.b32.xlu0 %v644, 120
        %v991 = vpop.permute.xlu0 %990
        %992 = vrot.lane.b32.xlu0 %v646, 120
        %v993 = vpop.permute.xlu0 %992
        %994 = vrot.lane.b32.xlu0 %v648, 120
        %v995 = vpop.permute.xlu0 %994
        %996 = vrot.lane.b32.xlu0 %v650, 120
        %v997 = vpop.permute.xlu0 %996
        %998 = vrot.lane.b32.xlu0 %v645, 120
        %v999 = vpop.permute.xlu0 %998
        %1000 = vrot.lane.b32.xlu0 %v647, 120
        %v1001 = vpop.permute.xlu0 %1000
        %1002 = vrot.lane.b32.xlu0 %v649, 120
        %v1003 = vpop.permute.xlu0 %1002
        %1004 = vrot.lane.b32.xlu0 %v651, 120
        %v1005 = vpop.permute.xlu0 %1004
        %vm1006 = vcmp.lt.s32.totalorder %v689, 120
        %v1007 = vsel %vm1006, %v991, %v999
        %v1008 = vsel %vm1006, %v993, %v1001
        %v1009 = vsel %vm1006, %v995, %v1003
        %v1010 = vsel %vm1006, %v997, %v1005
        %v1011 = vsel %vm1006, %v999, %v991
        %v1012 = vsel %vm1006, %v1001, %v993
        %v1013 = vsel %vm1006, %v1003, %v995
        %v1014 = vsel %vm1006, %v1005, %v997
        %v1016 = vlaneseq
        %v1017 = vshrl.u32 %v1016, 7
        %v1018 = vsub.s32 0, %v1017
        %v1019 = vrot.slane %v595, %v1018
        %v1020 = vlaneseq
        %v1021 = vshrl.u32 %v1020, 7
        %v1022 = vsub.s32 1, %v1021
        %v1023 = vrot.slane %v595, %v1022
        %v1026 = vmul.f32 %v1007, %v1019
        %v1027 = vmul.f32 %v1011, %v1023
        %v1028 = vmul.f32 %v1008, %v1019
        %v1029 = vmul.f32 %v1012, %v1023
        %v1030 = vmul.f32 %v1009, %v1019
        %v1031 = vmul.f32 %v1013, %v1023
        %v1032 = vmul.f32 %v1010, %v1019
        %v1033 = vmul.f32 %v1014, %v1023
        %v1034 = vpack.c.bf16 %v1028, %v1026
        %v1035 = vpack.c.bf16 %v1029, %v1027
        %v1036 = vpack.c.bf16 %v1032, %v1030
        %v1037 = vpack.c.bf16 %v1033, %v1031
        %1038 = vst [vmem:[#allocation6 + $0xe0] sm:$0xff] %v1034
        %1039 = vst [vmem:[#allocation6 + $0xe8] sm:$0xff] %v1035
        %1040 = vst [vmem:[#allocation6 + $0xf0] sm:$0xff] %v1036
        %1041 = vst [vmem:[#allocation6 + $0xf8] sm:$0xff] %v1037
        %1042 = vrot.lane.b32.xlu0 %v644, 119
        %v1043 = vpop.permute.xlu0 %1042
        %1044 = vrot.lane.b32.xlu0 %v646, 119
        %v1045 = vpop.permute.xlu0 %1044
        %1046 = vrot.lane.b32.xlu0 %v648, 119
        %v1047 = vpop.permute.xlu0 %1046
        %1048 = vrot.lane.b32.xlu0 %v650, 119
        %v1049 = vpop.permute.xlu0 %1048
        %1050 = vrot.lane.b32.xlu0 %v645, 119
        %v1051 = vpop.permute.xlu0 %1050
        %1052 = vrot.lane.b32.xlu0 %v647, 119
        %v1053 = vpop.permute.xlu0 %1052
        %1054 = vrot.lane.b32.xlu0 %v649, 119
        %v1055 = vpop.permute.xlu0 %1054
        %1056 = vrot.lane.b32.xlu0 %v651, 119
        %v1057 = vpop.permute.xlu0 %1056
        %vm1058 = vcmp.lt.s32.totalorder %v689, 119
        %v1059 = vsel %vm1058, %v1043, %v1051
        %v1060 = vsel %vm1058, %v1045, %v1053
        %v1061 = vsel %vm1058, %v1047, %v1055
        %v1062 = vsel %vm1058, %v1049, %v1057
        %v1063 = vsel %vm1058, %v1051, %v1043
        %v1064 = vsel %vm1058, %v1053, %v1045
        %v1065 = vsel %vm1058, %v1055, %v1047
        %v1066 = vsel %vm1058, %v1057, %v1049
        %v1068 = vlaneseq
        %v1069 = vshrl.u32 %v1068, 7
        %v1070 = vsub.s32 0, %v1069
        %v1071 = vrot.slane %v597, %v1070
        %v1072 = vlaneseq
        %v1073 = vshrl.u32 %v1072, 7
        %v1074 = vsub.s32 1, %v1073
        %v1075 = vrot.slane %v597, %v1074
        %v1078 = vmul.f32 %v1059, %v1071
        %v1079 = vmul.f32 %v1063, %v1075
        %v1080 = vmul.f32 %v1060, %v1071
        %v1081 = vmul.f32 %v1064, %v1075
        %v1082 = vmul.f32 %v1061, %v1071
        %v1083 = vmul.f32 %v1065, %v1075
        %v1084 = vmul.f32 %v1062, %v1071
        %v1085 = vmul.f32 %v1066, %v1075
        %v1086 = vpack.c.bf16 %v1080, %v1078
        %v1087 = vpack.c.bf16 %v1081, %v1079
        %v1088 = vpack.c.bf16 %v1084, %v1082
        %v1089 = vpack.c.bf16 %v1085, %v1083
        %1090 = vst [vmem:[#allocation6 + $0x100] sm:$0xff] %v1086
        %1091 = vst [vmem:[#allocation6 + $0x108] sm:$0xff] %v1087
        %1092 = vst [vmem:[#allocation6 + $0x110] sm:$0xff] %v1088
        %1093 = vst [vmem:[#allocation6 + $0x118] sm:$0xff] %v1089
        %1094 = vrot.lane.b32.xlu0 %v636, 9
        %v1095 = vpop.permute.xlu0 %1094
        %1096 = vrot.lane.b32.xlu0 %v638, 9
        %v1097 = vpop.permute.xlu0 %1096
        %1098 = vrot.lane.b32.xlu0 %v637, 9
        %v1099 = vpop.permute.xlu0 %1098
        %1100 = vrot.lane.b32.xlu0 %v639, 9
        %v1101 = vpop.permute.xlu0 %1100
        %v1102 = vsel %vm690, %v1095, %v1099
        %v1103 = vsel %vm690, %v1097, %v1101
        %v1104 = vsel %vm690, %v1099, %v1095
        %v1105 = vsel %vm690, %v1101, %v1097
        %v1106 = vmul.f32 %v1104, %v703
        %v1107 = vmul.f32 %v1102, %v707
        %v1108 = vmul.f32 %v1105, %v703
        %v1109 = vmul.f32 %v1103, %v707
        %v1110 = vpack.c.bf16 %v1108, %v1106
        %v1111 = vpack.c.bf16 %v1109, %v1107
        %1112 = vst [vmem:[#allocation6 + $0x120] sm:$0xff] %v1110
        %1113 = vst [vmem:[#allocation6 + $0x128] sm:$0xff] %v1111
        %1114 = vrot.lane.b32.xlu0 %v636, 8
        %v1115 = vpop.permute.xlu0 %1114
        %1116 = vrot.lane.b32.xlu0 %v638, 8
        %v1117 = vpop.permute.xlu0 %1116
        %1118 = vrot.lane.b32.xlu0 %v637, 8
        %v1119 = vpop.permute.xlu0 %1118
        %1120 = vrot.lane.b32.xlu0 %v639, 8
        %v1121 = vpop.permute.xlu0 %1120
        %v1122 = vsel %vm742, %v1115, %v1119
        %v1123 = vsel %vm742, %v1117, %v1121
        %v1124 = vsel %vm742, %v1119, %v1115
        %v1125 = vsel %vm742, %v1121, %v1117
        %v1126 = vmul.f32 %v1124, %v755
        %v1127 = vmul.f32 %v1122, %v759
        %v1128 = vmul.f32 %v1125, %v755
        %v1129 = vmul.f32 %v1123, %v759
        %v1130 = vpack.c.bf16 %v1128, %v1126
        %v1131 = vpack.c.bf16 %v1129, %v1127
        %1132 = vst [vmem:[#allocation6 + $0x130] sm:$0xff] %v1130
        %1133 = vst [vmem:[#allocation6 + $0x138] sm:$0xff] %v1131
        %1134 = vrot.lane.b32.xlu0 %v636, 7
        %v1135 = vpop.permute.xlu0 %1134
        %1136 = vrot.lane.b32.xlu0 %v638, 7
        %v1137 = vpop.permute.xlu0 %1136
        %1138 = vrot.lane.b32.xlu0 %v637, 7
        %v1139 = vpop.permute.xlu0 %1138
        %1140 = vrot.lane.b32.xlu0 %v639, 7
        %v1141 = vpop.permute.xlu0 %1140
        %v1142 = vsel %vm794, %v1135, %v1139
        %v1143 = vsel %vm794, %v1137, %v1141
        %v1144 = vsel %vm794, %v1139, %v1135
        %v1145 = vsel %vm794, %v1141, %v1137
        %v1146 = vmul.f32 %v1144, %v807
        %v1147 = vmul.f32 %v1142, %v811
        %v1148 = vmul.f32 %v1145, %v807
        %v1149 = vmul.f32 %v1143, %v811
        %v1150 = vpack.c.bf16 %v1148, %v1146
        %v1151 = vpack.c.bf16 %v1149, %v1147
        %1152 = vst [vmem:[#allocation6 + $0x140] sm:$0xff] %v1150
        %1153 = vst [vmem:[#allocation6 + $0x148] sm:$0xff] %v1151
        %1154 = vrot.lane.b32.xlu0 %v636, 1
        %v1155 = vpop.permute.xlu0 %1154
        %1156 = vrot.lane.b32.xlu0 %v638, 1
        %v1157 = vpop.permute.xlu0 %1156
        %1158 = vrot.lane.b32.xlu0 %v637, 1
        %v1159 = vpop.permute.xlu0 %1158
        %1160 = vrot.lane.b32.xlu0 %v639, 1
        %v1161 = vpop.permute.xlu0 %1160
        %v1162 = vsel %vm846, %v1155, %v1159
        %v1163 = vsel %vm846, %v1157, %v1161
        %v1164 = vsel %vm846, %v1159, %v1155
        %v1165 = vsel %vm846, %v1161, %v1157
        %v1166 = vmul.f32 %v1164, %v859
        %v1167 = vmul.f32 %v1162, %v863
        %v1168 = vmul.f32 %v1165, %v859
        %v1169 = vmul.f32 %v1163, %v863
        %v1170 = vpack.c.bf16 %v1168, %v1166
        %v1171 = vpack.c.bf16 %v1169, %v1167
        %1172 = vst [vmem:[#allocation6 + $0x150] sm:$0xff] %v1170
        %1173 = vst [vmem:[#allocation6 + $0x158] sm:$0xff] %v1171
        %v1174 = vpack.c.bf16 %v638, %v636
        %v1175 = vpack.c.bf16 %v639, %v637
        %1176 = vst [vmem:[#allocation6 + $0x160] sm:$0xff] %v1174
        %1177 = vst [vmem:[#allocation6 + $0x168] sm:$0xff] %v1175
        %1178 = vrot.lane.b32.xlu0 %v636, 127
        %v1179 = vpop.permute.xlu0 %1178
        %1180 = vrot.lane.b32.xlu0 %v638, 127
        %v1181 = vpop.permute.xlu0 %1180
        %1182 = vrot.lane.b32.xlu0 %v637, 127
        %v1183 = vpop.permute.xlu0 %1182
        %1184 = vrot.lane.b32.xlu0 %v639, 127
        %v1185 = vpop.permute.xlu0 %1184
        %v1186 = vsel %vm902, %v1179, %v1183
        %v1187 = vsel %vm902, %v1181, %v1185
        %v1188 = vsel %vm902, %v1183, %v1179
        %v1189 = vsel %vm902, %v1185, %v1181
        %v1190 = vmul.f32 %v1186, %v915
        %v1191 = vmul.f32 %v1188, %v919
        %v1192 = vmul.f32 %v1187, %v915
        %v1193 = vmul.f32 %v1189, %v919
        %v1194 = vpack.c.bf16 %v1192, %v1190
        %v1195 = vpack.c.bf16 %v1193, %v1191
        %1196 = vst [vmem:[#allocation6 + $0x170] sm:$0xff] %v1194
        %1197 = vst [vmem:[#allocation6 + $0x178] sm:$0xff] %v1195
        %1198 = vrot.lane.b32.xlu0 %v636, 121
        %v1199 = vpop.permute.xlu0 %1198
        %1200 = vrot.lane.b32.xlu0 %v638, 121
        %v1201 = vpop.permute.xlu0 %1200
        %1202 = vrot.lane.b32.xlu0 %v637, 121
        %v1203 = vpop.permute.xlu0 %1202
        %1204 = vrot.lane.b32.xlu0 %v639, 121
        %v1205 = vpop.permute.xlu0 %1204
        %v1206 = vsel %vm954, %v1199, %v1203
        %v1207 = vsel %vm954, %v1201, %v1205
        %v1208 = vsel %vm954, %v1203, %v1199
        %v1209 = vsel %vm954, %v1205, %v1201
        %v1210 = vmul.f32 %v1206, %v967
        %v1211 = vmul.f32 %v1208, %v971
        %v1212 = vmul.f32 %v1207, %v967
        %v1213 = vmul.f32 %v1209, %v971
        %v1214 = vpack.c.bf16 %v1212, %v1210
        %v1215 = vpack.c.bf16 %v1213, %v1211
        %1216 = vst [vmem:[#allocation6 + $0x180] sm:$0xff] %v1214
        %1217 = vst [vmem:[#allocation6 + $0x188] sm:$0xff] %v1215
        %1218 = vrot.lane.b32.xlu0 %v636, 120
        %v1219 = vpop.permute.xlu0 %1218
        %1220 = vrot.lane.b32.xlu0 %v638, 120
        %v1221 = vpop.permute.xlu0 %1220
        %1222 = vrot.lane.b32.xlu0 %v637, 120
        %v1223 = vpop.permute.xlu0 %1222
        %1224 = vrot.lane.b32.xlu0 %v639, 120
        %v1225 = vpop.permute.xlu0 %1224
        %v1226 = vsel %vm1006, %v1219, %v1223
        %v1227 = vsel %vm1006, %v1221, %v1225
        %v1228 = vsel %vm1006, %v1223, %v1219
        %v1229 = vsel %vm1006, %v1225, %v1221
        %v1230 = vmul.f32 %v1226, %v1019
        %v1231 = vmul.f32 %v1228, %v1023
        %v1232 = vmul.f32 %v1227, %v1019
        %v1233 = vmul.f32 %v1229, %v1023
        %v1234 = vpack.c.bf16 %v1232, %v1230
        %v1235 = vpack.c.bf16 %v1233, %v1231
        %1236 = vst [vmem:[#allocation6 + $0x190] sm:$0xff] %v1234
        %1237 = vst [vmem:[#allocation6 + $0x198] sm:$0xff] %v1235
        %1238 = vrot.lane.b32.xlu0 %v636, 119
        %v1239 = vpop.permute.xlu0 %1238
        %1240 = vrot.lane.b32.xlu0 %v638, 119
        %v1241 = vpop.permute.xlu0 %1240
        %1242 = vrot.lane.b32.xlu0 %v637, 119
        %v1243 = vpop.permute.xlu0 %1242
        %1244 = vrot.lane.b32.xlu0 %v639, 119
        %v1245 = vpop.permute.xlu0 %1244
        %v1246 = vsel %vm1058, %v1239, %v1243
        %v1247 = vsel %vm1058, %v1241, %v1245
        %v1248 = vsel %vm1058, %v1243, %v1239
        %v1249 = vsel %vm1058, %v1245, %v1241
        %v1250 = vmul.f32 %v1246, %v1071
        %v1251 = vmul.f32 %v1248, %v1075
        %v1252 = vmul.f32 %v1247, %v1071
        %v1253 = vmul.f32 %v1249, %v1075
        %v1254 = vpack.c.bf16 %v1252, %v1250
        %v1255 = vpack.c.bf16 %v1253, %v1251
        %1256 = vst [vmem:[#allocation6 + $0x1a0] sm:$0xff] %v1254
        %1257 = vst [vmem:[#allocation6 + $0x1a8] sm:$0xff] %v1255
        %1258 = vrot.lane.b32.xlu0 %v656, 9
        %v1259 = vpop.permute.xlu0 %1258
        %1260 = vrot.lane.b32.xlu0 %v658, 9
        %v1261 = vpop.permute.xlu0 %1260
        %1262 = vrot.lane.b32.xlu0 %v660, 9
        %v1263 = vpop.permute.xlu0 %1262
        %1264 = vrot.lane.b32.xlu0 %v662, 9
        %v1265 = vpop.permute.xlu0 %1264
        %1266 = vrot.lane.b32.xlu0 %v657, 9
        %v1267 = vpop.permute.xlu0 %1266
        %1268 = vrot.lane.b32.xlu0 %v659, 9
        %v1269 = vpop.permute.xlu0 %1268
        %1270 = vrot.lane.b32.xlu0 %v661, 9
        %v1271 = vpop.permute.xlu0 %1270
        %1272 = vrot.lane.b32.xlu0 %v663, 9
        %v1273 = vpop.permute.xlu0 %1272
        %v1274 = vsel %vm690, %v1259, %v1267
        %v1275 = vsel %vm690, %v1261, %v1269
        %v1276 = vsel %vm690, %v1263, %v1271
        %v1277 = vsel %vm690, %v1265, %v1273
        %v1278 = vsel %vm690, %v1267, %v1259
        %v1279 = vsel %vm690, %v1269, %v1261
        %v1280 = vsel %vm690, %v1271, %v1263
        %v1281 = vsel %vm690, %v1273, %v1265
        %v1282 = vmul.f32 %v1278, %v703
        %v1283 = vmul.f32 %v1274, %v707
        %v1284 = vmul.f32 %v1279, %v703
        %v1285 = vmul.f32 %v1275, %v707
        %v1286 = vmul.f32 %v1280, %v703
        %v1287 = vmul.f32 %v1276, %v707
        %v1288 = vmul.f32 %v1281, %v703
        %v1289 = vmul.f32 %v1277, %v707
        %v1290 = vpack.c.bf16 %v1284, %v1282
        %v1291 = vpack.c.bf16 %v1285, %v1283
        %v1292 = vpack.c.bf16 %v1288, %v1286
        %v1293 = vpack.c.bf16 %v1289, %v1287
        %1294 = vst [vmem:[#allocation6 + $0x1b0] sm:$0xff] %v1290
        %1295 = vst [vmem:[#allocation6 + $0x1b8] sm:$0xff] %v1291
        %1296 = vst [vmem:[#allocation6 + $0x1c0] sm:$0xff] %v1292
        %1297 = vst [vmem:[#allocation6 + $0x1c8] sm:$0xff] %v1293
        %1298 = vrot.lane.b32.xlu0 %v656, 8
        %v1299 = vpop.permute.xlu0 %1298
        %1300 = vrot.lane.b32.xlu0 %v658, 8
        %v1301 = vpop.permute.xlu0 %1300
        %1302 = vrot.lane.b32.xlu0 %v660, 8
        %v1303 = vpop.permute.xlu0 %1302
        %1304 = vrot.lane.b32.xlu0 %v662, 8
        %v1305 = vpop.permute.xlu0 %1304
        %1306 = vrot.lane.b32.xlu0 %v657, 8
        %v1307 = vpop.permute.xlu0 %1306
        %1308 = vrot.lane.b32.xlu0 %v659, 8
        %v1309 = vpop.permute.xlu0 %1308
        %1310 = vrot.lane.b32.xlu0 %v661, 8
        %v1311 = vpop.permute.xlu0 %1310
        %1312 = vrot.lane.b32.xlu0 %v663, 8
        %v1313 = vpop.permute.xlu0 %1312
        %v1314 = vsel %vm742, %v1299, %v1307
        %v1315 = vsel %vm742, %v1301, %v1309
        %v1316 = vsel %vm742, %v1303, %v1311
        %v1317 = vsel %vm742, %v1305, %v1313
        %v1318 = vsel %vm742, %v1307, %v1299
        %v1319 = vsel %vm742, %v1309, %v1301
        %v1320 = vsel %vm742, %v1311, %v1303
        %v1321 = vsel %vm742, %v1313, %v1305
        %v1322 = vmul.f32 %v1318, %v755
        %v1323 = vmul.f32 %v1314, %v759
        %v1324 = vmul.f32 %v1319, %v755
        %v1325 = vmul.f32 %v1315, %v759
        %v1326 = vmul.f32 %v1320, %v755
        %v1327 = vmul.f32 %v1316, %v759
        %v1328 = vmul.f32 %v1321, %v755
        %v1329 = vmul.f32 %v1317, %v759
        %v1330 = vpack.c.bf16 %v1324, %v1322
        %v1331 = vpack.c.bf16 %v1325, %v1323
        %v1332 = vpack.c.bf16 %v1328, %v1326
        %v1333 = vpack.c.bf16 %v1329, %v1327
        %1334 = vst [vmem:[#allocation6 + $0x1d0] sm:$0xff] %v1330
        %1335 = vst [vmem:[#allocation6 + $0x1d8] sm:$0xff] %v1331
        %1336 = vst [vmem:[#allocation6 + $0x1e0] sm:$0xff] %v1332
        %1337 = vst [vmem:[#allocation6 + $0x1e8] sm:$0xff] %v1333
        %1338 = vrot.lane.b32.xlu0 %v656, 7
        %v1339 = vpop.permute.xlu0 %1338
        %1340 = vrot.lane.b32.xlu0 %v658, 7
        %v1341 = vpop.permute.xlu0 %1340
        %1342 = vrot.lane.b32.xlu0 %v660, 7
        %v1343 = vpop.permute.xlu0 %1342
        %1344 = vrot.lane.b32.xlu0 %v662, 7
        %v1345 = vpop.permute.xlu0 %1344
        %1346 = vrot.lane.b32.xlu0 %v657, 7
        %v1347 = vpop.permute.xlu0 %1346
        %1348 = vrot.lane.b32.xlu0 %v659, 7
        %v1349 = vpop.permute.xlu0 %1348
        %1350 = vrot.lane.b32.xlu0 %v661, 7
        %v1351 = vpop.permute.xlu0 %1350
        %1352 = vrot.lane.b32.xlu0 %v663, 7
        %v1353 = vpop.permute.xlu0 %1352
        %v1354 = vsel %vm794, %v1339, %v1347
        %v1355 = vsel %vm794, %v1341, %v1349
        %v1356 = vsel %vm794, %v1343, %v1351
        %v1357 = vsel %vm794, %v1345, %v1353
        %v1358 = vsel %vm794, %v1347, %v1339
        %v1359 = vsel %vm794, %v1349, %v1341
        %v1360 = vsel %vm794, %v1351, %v1343
        %v1361 = vsel %vm794, %v1353, %v1345
        %v1362 = vmul.f32 %v1358, %v807
        %v1363 = vmul.f32 %v1354, %v811
        %v1364 = vmul.f32 %v1359, %v807
        %v1365 = vmul.f32 %v1355, %v811
        %v1366 = vmul.f32 %v1360, %v807
        %v1367 = vmul.f32 %v1356, %v811
        %v1368 = vmul.f32 %v1361, %v807
        %v1369 = vmul.f32 %v1357, %v811
        %v1370 = vpack.c.bf16 %v1364, %v1362
        %v1371 = vpack.c.bf16 %v1365, %v1363
        %v1372 = vpack.c.bf16 %v1368, %v1366
        %v1373 = vpack.c.bf16 %v1369, %v1367
        %1374 = vst [vmem:[#allocation6 + $0x1f0] sm:$0xff] %v1370
        %1375 = vst [vmem:[#allocation6 + $0x1f8] sm:$0xff] %v1371
        %1376 = vst [vmem:[#allocation6 + $0x200] sm:$0xff] %v1372
        %1377 = vst [vmem:[#allocation6 + $0x208] sm:$0xff] %v1373
        %1378 = vrot.lane.b32.xlu0 %v656, 1
        %v1379 = vpop.permute.xlu0 %1378
        %1380 = vrot.lane.b32.xlu0 %v658, 1
        %v1381 = vpop.permute.xlu0 %1380
        %1382 = vrot.lane.b32.xlu0 %v660, 1
        %v1383 = vpop.permute.xlu0 %1382
        %1384 = vrot.lane.b32.xlu0 %v662, 1
        %v1385 = vpop.permute.xlu0 %1384
        %1386 = vrot.lane.b32.xlu0 %v657, 1
        %v1387 = vpop.permute.xlu0 %1386
        %1388 = vrot.lane.b32.xlu0 %v659, 1
        %v1389 = vpop.permute.xlu0 %1388
        %1390 = vrot.lane.b32.xlu0 %v661, 1
        %v1391 = vpop.permute.xlu0 %1390
        %1392 = vrot.lane.b32.xlu0 %v663, 1
        %v1393 = vpop.permute.xlu0 %1392
        %v1394 = vsel %vm846, %v1379, %v1387
        %v1395 = vsel %vm846, %v1381, %v1389
        %v1396 = vsel %vm846, %v1383, %v1391
        %v1397 = vsel %vm846, %v1385, %v1393
        %v1398 = vsel %vm846, %v1387, %v1379
        %v1399 = vsel %vm846, %v1389, %v1381
        %v1400 = vsel %vm846, %v1391, %v1383
        %v1401 = vsel %vm846, %v1393, %v1385
        %v1402 = vmul.f32 %v1398, %v859
        %v1403 = vmul.f32 %v1394, %v863
        %v1404 = vmul.f32 %v1399, %v859
        %v1405 = vmul.f32 %v1395, %v863
        %v1406 = vmul.f32 %v1400, %v859
        %v1407 = vmul.f32 %v1396, %v863
        %v1408 = vmul.f32 %v1401, %v859
        %v1409 = vmul.f32 %v1397, %v863
        %v1410 = vpack.c.bf16 %v1404, %v1402
        %v1411 = vpack.c.bf16 %v1405, %v1403
        %v1412 = vpack.c.bf16 %v1408, %v1406
        %v1413 = vpack.c.bf16 %v1409, %v1407
        %1414 = vst [vmem:[#allocation6 + $0x210] sm:$0xff] %v1410
        %1415 = vst [vmem:[#allocation6 + $0x218] sm:$0xff] %v1411
        %1416 = vst [vmem:[#allocation6 + $0x220] sm:$0xff] %v1412
        %1417 = vst [vmem:[#allocation6 + $0x228] sm:$0xff] %v1413
        %1418 = vst [vmem:[#allocation6 + $0x230] sm:$0xff] %v652
        %1419 = vst [vmem:[#allocation6 + $0x238] sm:$0xff] %v653
        %1420 = vst [vmem:[#allocation6 + $0x240] sm:$0xff] %v654
        %1421 = vst [vmem:[#allocation6 + $0x248] sm:$0xff] %v655
        %1422 = vrot.lane.b32.xlu0 %v656, 127
        %v1423 = vpop.permute.xlu0 %1422
        %1424 = vrot.lane.b32.xlu0 %v658, 127
        %v1425 = vpop.permute.xlu0 %1424
        %1426 = vrot.lane.b32.xlu0 %v660, 127
        %v1427 = vpop.permute.xlu0 %1426
        %1428 = vrot.lane.b32.xlu0 %v662, 127
        %v1429 = vpop.permute.xlu0 %1428
        %1430 = vrot.lane.b32.xlu0 %v657, 127
        %v1431 = vpop.permute.xlu0 %1430
        %1432 = vrot.lane.b32.xlu0 %v659, 127
        %v1433 = vpop.permute.xlu0 %1432
        %1434 = vrot.lane.b32.xlu0 %v661, 127
        %v1435 = vpop.permute.xlu0 %1434
        %1436 = vrot.lane.b32.xlu0 %v663, 127
        %v1437 = vpop.permute.xlu0 %1436
        %v1438 = vsel %vm902, %v1423, %v1431
        %v1439 = vsel %vm902, %v1425, %v1433
        %v1440 = vsel %vm902, %v1427, %v1435
        %v1441 = vsel %vm902, %v1429, %v1437
        %v1442 = vsel %vm902, %v1431, %v1423
        %v1443 = vsel %vm902, %v1433, %v1425
        %v1444 = vsel %vm902, %v1435, %v1427
        %v1445 = vsel %vm902, %v1437, %v1429
        %v1446 = vmul.f32 %v1438, %v915
        %v1447 = vmul.f32 %v1442, %v919
        %v1448 = vmul.f32 %v1439, %v915
        %v1449 = vmul.f32 %v1443, %v919
        %v1450 = vmul.f32 %v1440, %v915
        %v1451 = vmul.f32 %v1444, %v919
        %v1452 = vmul.f32 %v1441, %v915
        %v1453 = vmul.f32 %v1445, %v919
        %v1454 = vpack.c.bf16 %v1448, %v1446
        %v1455 = vpack.c.bf16 %v1449, %v1447
        %v1456 = vpack.c.bf16 %v1452, %v1450
        %v1457 = vpack.c.bf16 %v1453, %v1451
        %1458 = vst [vmem:[#allocation6 + $0x250] sm:$0xff] %v1454
        %1459 = vst [vmem:[#allocation6 + $0x258] sm:$0xff] %v1455
        %1460 = vst [vmem:[#allocation6 + $0x260] sm:$0xff] %v1456
        %1461 = vst [vmem:[#allocation6 + $0x268] sm:$0xff] %v1457
        %1462 = vrot.lane.b32.xlu0 %v656, 121
        %v1463 = vpop.permute.xlu0 %1462
        %1464 = vrot.lane.b32.xlu0 %v658, 121
        %v1465 = vpop.permute.xlu0 %1464
        %1466 = vrot.lane.b32.xlu0 %v660, 121
        %v1467 = vpop.permute.xlu0 %1466
        %1468 = vrot.lane.b32.xlu0 %v662, 121
        %v1469 = vpop.permute.xlu0 %1468
        %1470 = vrot.lane.b32.xlu0 %v657, 121
        %v1471 = vpop.permute.xlu0 %1470
        %1472 = vrot.lane.b32.xlu0 %v659, 121
        %v1473 = vpop.permute.xlu0 %1472
        %1474 = vrot.lane.b32.xlu0 %v661, 121
        %v1475 = vpop.permute.xlu0 %1474
        %1476 = vrot.lane.b32.xlu0 %v663, 121
        %v1477 = vpop.permute.xlu0 %1476
        %v1478 = vsel %vm954, %v1463, %v1471
        %v1479 = vsel %vm954, %v1465, %v1473
        %v1480 = vsel %vm954, %v1467, %v1475
        %v1481 = vsel %vm954, %v1469, %v1477
        %v1482 = vsel %vm954, %v1471, %v1463
        %v1483 = vsel %vm954, %v1473, %v1465
        %v1484 = vsel %vm954, %v1475, %v1467
        %v1485 = vsel %vm954, %v1477, %v1469
        %v1486 = vmul.f32 %v1478, %v967
        %v1487 = vmul.f32 %v1482, %v971
        %v1488 = vmul.f32 %v1479, %v967
        %v1489 = vmul.f32 %v1483, %v971
        %v1490 = vmul.f32 %v1480, %v967
        %v1491 = vmul.f32 %v1484, %v971
        %v1492 = vmul.f32 %v1481, %v967
        %v1493 = vmul.f32 %v1485, %v971
        %v1494 = vpack.c.bf16 %v1488, %v1486
        %v1495 = vpack.c.bf16 %v1489, %v1487
        %v1496 = vpack.c.bf16 %v1492, %v1490
        %v1497 = vpack.c.bf16 %v1493, %v1491
        %1498 = vst [vmem:[#allocation6 + $0x270] sm:$0xff] %v1494
        %1499 = vst [vmem:[#allocation6 + $0x278] sm:$0xff] %v1495
        %1500 = vst [vmem:[#allocation6 + $0x280] sm:$0xff] %v1496
        %1501 = vst [vmem:[#allocation6 + $0x288] sm:$0xff] %v1497
        %1502 = vrot.lane.b32.xlu0 %v656, 120
        %v1503 = vpop.permute.xlu0 %1502
        %1504 = vrot.lane.b32.xlu0 %v658, 120
        %v1505 = vpop.permute.xlu0 %1504
        %1506 = vrot.lane.b32.xlu0 %v660, 120
        %v1507 = vpop.permute.xlu0 %1506
        %1508 = vrot.lane.b32.xlu0 %v662, 120
        %v1509 = vpop.permute.xlu0 %1508
        %1510 = vrot.lane.b32.xlu0 %v657, 120
        %v1511 = vpop.permute.xlu0 %1510
        %1512 = vrot.lane.b32.xlu0 %v659, 120
        %v1513 = vpop.permute.xlu0 %1512
        %1514 = vrot.lane.b32.xlu0 %v661, 120
        %v1515 = vpop.permute.xlu0 %1514
        %1516 = vrot.lane.b32.xlu0 %v663, 120
        %v1517 = vpop.permute.xlu0 %1516
        %v1518 = vsel %vm1006, %v1503, %v1511
        %v1519 = vsel %vm1006, %v1505, %v1513
        %v1520 = vsel %vm1006, %v1507, %v1515
        %v1521 = vsel %vm1006, %v1509, %v1517
        %v1522 = vsel %vm1006, %v1511, %v1503
        %v1523 = vsel %vm1006, %v1513, %v1505
        %v1524 = vsel %vm1006, %v1515, %v1507
        %v1525 = vsel %vm1006, %v1517, %v1509
        %v1526 = vmul.f32 %v1518, %v1019
        %v1527 = vmul.f32 %v1522, %v1023
        %v1528 = vmul.f32 %v1519, %v1019
        %v1529 = vmul.f32 %v1523, %v1023
        %v1530 = vmul.f32 %v1520, %v1019
        %v1531 = vmul.f32 %v1524, %v1023
        %v1532 = vmul.f32 %v1521, %v1019
        %v1533 = vmul.f32 %v1525, %v1023
        %v1534 = vpack.c.bf16 %v1528, %v1526
        %v1535 = vpack.c.bf16 %v1529, %v1527
        %v1536 = vpack.c.bf16 %v1532, %v1530
        %v1537 = vpack.c.bf16 %v1533, %v1531
        %1538 = vst [vmem:[#allocation6 + $0x290] sm:$0xff] %v1534
        %1539 = vst [vmem:[#allocation6 + $0x298] sm:$0xff] %v1535
        %1540 = vst [vmem:[#allocation6 + $0x2a0] sm:$0xff] %v1536
        %1541 = vst [vmem:[#allocation6 + $0x2a8] sm:$0xff] %v1537
        %1542 = vrot.lane.b32.xlu0 %v656, 119
        %v1543 = vpop.permute.xlu0 %1542
        %1544 = vrot.lane.b32.xlu0 %v658, 119
        %v1545 = vpop.permute.xlu0 %1544
        %1546 = vrot.lane.b32.xlu0 %v660, 119
        %v1547 = vpop.permute.xlu0 %1546
        %1548 = vrot.lane.b32.xlu0 %v662, 119
        %v1549 = vpop.permute.xlu0 %1548
        %1550 = vrot.lane.b32.xlu0 %v657, 119
        %v1551 = vpop.permute.xlu0 %1550
        %1552 = vrot.lane.b32.xlu0 %v659, 119
        %v1553 = vpop.permute.xlu0 %1552
        %1554 = vrot.lane.b32.xlu0 %v661, 119
        %v1555 = vpop.permute.xlu0 %1554
        %1556 = vrot.lane.b32.xlu0 %v663, 119
        %v1557 = vpop.permute.xlu0 %1556
        %v1558 = vsel %vm1058, %v1543, %v1551
        %v1559 = vsel %vm1058, %v1545, %v1553
        %v1560 = vsel %vm1058, %v1547, %v1555
        %v1561 = vsel %vm1058, %v1549, %v1557
        %v1562 = vsel %vm1058, %v1551, %v1543
        %v1563 = vsel %vm1058, %v1553, %v1545
        %v1564 = vsel %vm1058, %v1555, %v1547
        %v1565 = vsel %vm1058, %v1557, %v1549
        %v1566 = vmul.f32 %v1558, %v1071
        %v1567 = vmul.f32 %v1562, %v1075
        %v1568 = vmul.f32 %v1559, %v1071
        %v1569 = vmul.f32 %v1563, %v1075
        %v1570 = vmul.f32 %v1560, %v1071
        %v1571 = vmul.f32 %v1564, %v1075
        %v1572 = vmul.f32 %v1561, %v1071
        %v1573 = vmul.f32 %v1565, %v1075
        %v1574 = vpack.c.bf16 %v1568, %v1566
        %v1575 = vpack.c.bf16 %v1569, %v1567
        %v1576 = vpack.c.bf16 %v1572, %v1570
        %v1577 = vpack.c.bf16 %v1573, %v1571
        %1578 = vst [vmem:[#allocation6 + $0x2b0] sm:$0xff] %v1574
        %1579 = vst [vmem:[#allocation6 + $0x2b8] sm:$0xff] %v1575
        %1580 = vst [vmem:[#allocation6 + $0x2c0] sm:$0xff] %v1576
        %1581 = vst [vmem:[#allocation6 + $0x2c8] sm:$0xff] %v1577
        %v1582 = vld [vmem:[%s4] sm:$0xff]
        %v1583 = vld [vmem:[%s4 + $0x8] sm:$0xff]
        %v1584 = vld [vmem:[%s4 + $0x10] sm:$0xff]
        %v1585 = vld [vmem:[%s4 + $0x18] sm:$0xff]
        %v1586 = vld [vmem:[%s4 + $0x20] sm:$0xff]
        %v1587 = vld [vmem:[%s4 + $0x28] sm:$0xff]
        %v1588 = vld [vmem:[%s4 + $0x30] sm:$0xff]
        %v1589 = vld [vmem:[%s4 + $0x38] sm:$0xff]
        %v1590 = vld [vmem:[%s4 + $0x40] sm:$0xff]
        %v1591 = vld [vmem:[%s4 + $0x48] sm:$0xff]
        %v1592 = vld [vmem:[%s4 + $0x50] sm:$0xff]
        %v1593 = vld [vmem:[%s4 + $0x58] sm:$0xff]
        %v1594 = vld [vmem:[%s4 + $0x60] sm:$0xff]
        %v1595 = vld [vmem:[%s4 + $0x68] sm:$0xff]
        %v1596 = vld [vmem:[%s4 + $0x70] sm:$0xff]
        %v1597 = vld [vmem:[%s4 + $0x78] sm:$0xff]
        %v1598 = vld [vmem:[%s4 + $0x80] sm:$0xff]
        %v1599 = vld [vmem:[%s4 + $0x88] sm:$0xff]
        %v1600 = vld [vmem:[%s4 + $0x90] sm:$0xff]
        %v1601 = vld [vmem:[%s4 + $0x98] sm:$0xff]
        %v1602 = vld [vmem:[%s4 + $0xa0] sm:$0xff]
        %v1603 = vld [vmem:[%s4 + $0xa8] sm:$0xff]
        %v1604 = vld [vmem:[%s4 + $0xb0] sm:$0xff]
        %v1605 = vld [vmem:[%s4 + $0xb8] sm:$0xff]
        %v1606 = vld [vmem:[%s4 + $0xc0] sm:$0xff]
        %v1607 = vld [vmem:[%s4 + $0xc8] sm:$0xff]
        %v1608 = vld [vmem:[%s4 + $0xd0] sm:$0xff]
        %v1609 = vld [vmem:[%s4 + $0xd8] sm:$0xff]
        %v1610 = vld [vmem:[%s4 + $0xe0] sm:$0xff]
        %v1611 = vld [vmem:[%s4 + $0xe8] sm:$0xff]
        %v1612 = vld [vmem:[%s4 + $0xf0] sm:$0xff]
        %v1613 = vld [vmem:[%s4 + $0xf8] sm:$0xff]
        %v1614 = vld [vmem:[#allocation6 + $0x120] sm:$0xff]
        %v1615 = vld [vmem:[#allocation6 + $0x128] sm:$0xff]
        %v1616 = vld [vmem:[#allocation6 + $0x130] sm:$0xff]
        %v1617 = vld [vmem:[#allocation6 + $0x138] sm:$0xff]
        %v1618 = vld [vmem:[#allocation6 + $0x140] sm:$0xff]
        %v1619 = vld [vmem:[#allocation6 + $0x148] sm:$0xff]
        %v1620 = vld [vmem:[#allocation6 + $0x150] sm:$0xff]
        %v1621 = vld [vmem:[#allocation6 + $0x158] sm:$0xff]
        %v1622 = vld [vmem:[#allocation6 + $0x160] sm:$0xff]
        %v1623 = vld [vmem:[#allocation6 + $0x168] sm:$0xff]
        %v1624 = vld [vmem:[#allocation6 + $0x170] sm:$0xff]
        %v1625 = vld [vmem:[#allocation6 + $0x178] sm:$0xff]
        %v1626 = vld [vmem:[#allocation6 + $0x180] sm:$0xff]
        %v1627 = vld [vmem:[#allocation6 + $0x188] sm:$0xff]
        %v1628 = vld [vmem:[#allocation6 + $0x190] sm:$0xff]
        %v1629 = vld [vmem:[#allocation6 + $0x198] sm:$0xff]
        %v1630 = vld [vmem:[#allocation6 + $0x1a0] sm:$0xff]
        %v1631 = vld [vmem:[#allocation6 + $0x1a8] sm:$0xff]
        %v1632 = vld [vmem:[#allocation6 + $0x1b0] sm:$0xff]
        %v1633 = vld [vmem:[#allocation6 + $0x1b8] sm:$0xff]
        %v1634 = vld [vmem:[#allocation6 + $0x1c0] sm:$0xff]
        %v1635 = vld [vmem:[#allocation6 + $0x1c8] sm:$0xff]
        %v1636 = vld [vmem:[#allocation6 + $0x1d0] sm:$0xff]
        %v1637 = vld [vmem:[#allocation6 + $0x1d8] sm:$0xff]
        %v1638 = vld [vmem:[#allocation6 + $0x1e0] sm:$0xff]
        %v1639 = vld [vmem:[#allocation6 + $0x1e8] sm:$0xff]
        %v1640 = vld [vmem:[#allocation6 + $0x1f0] sm:$0xff]
        %v1641 = vld [vmem:[#allocation6 + $0x1f8] sm:$0xff]
        %v1642 = vld [vmem:[#allocation6 + $0x200] sm:$0xff]
        %v1643 = vld [vmem:[#allocation6 + $0x208] sm:$0xff]
        %v1644 = vld [vmem:[#allocation6 + $0x210] sm:$0xff]
        %v1645 = vld [vmem:[#allocation6 + $0x218] sm:$0xff]
        %v1646 = vld [vmem:[#allocation6 + $0x220] sm:$0xff]
        %v1647 = vld [vmem:[#allocation6 + $0x228] sm:$0xff]
        %v1648 = vld [vmem:[#allocation6 + $0x230] sm:$0xff]
        %v1649 = vld [vmem:[#allocation6 + $0x238] sm:$0xff]
        %v1650 = vld [vmem:[#allocation6 + $0x240] sm:$0xff]
        %v1651 = vld [vmem:[#allocation6 + $0x248] sm:$0xff]
        %v1652 = vld [vmem:[#allocation6 + $0x250] sm:$0xff]
        %v1653 = vld [vmem:[#allocation6 + $0x258] sm:$0xff]
        %v1654 = vld [vmem:[#allocation6 + $0x260] sm:$0xff]
        %v1655 = vld [vmem:[#allocation6 + $0x268] sm:$0xff]
        %v1656 = vld [vmem:[#allocation6 + $0x270] sm:$0xff]
        %v1657 = vld [vmem:[#allocation6 + $0x278] sm:$0xff]
        %v1658 = vld [vmem:[#allocation6 + $0x280] sm:$0xff]
        %v1659 = vld [vmem:[#allocation6 + $0x288] sm:$0xff]
        %v1660 = vld [vmem:[#allocation6 + $0x290] sm:$0xff]
        %v1661 = vld [vmem:[#allocation6 + $0x298] sm:$0xff]
        %v1662 = vld [vmem:[#allocation6 + $0x2a0] sm:$0xff]
        %v1663 = vld [vmem:[#allocation6 + $0x2a8] sm:$0xff]
        %v1664 = vld [vmem:[#allocation6 + $0x2b0] sm:$0xff]
        %v1665 = vld [vmem:[#allocation6 + $0x2b8] sm:$0xff]
        %v1666 = vld [vmem:[#allocation6 + $0x2c0] sm:$0xff]
        %v1667 = vld [vmem:[#allocation6 + $0x2c8] sm:$0xff]
        %v1700 = vunpack.c.l.b16 %v1582
        %v1701 = vunpack.c.h.b16 %v1582
        %v1702 = vunpack.c.l.b16 %v1583
        %v1703 = vunpack.c.h.b16 %v1583
        %v1704 = vunpack.c.l.b16 %v1584
        %v1705 = vunpack.c.h.b16 %v1584
        %v1706 = vunpack.c.l.b16 %v1585
        %v1707 = vunpack.c.h.b16 %v1585
        %v1708 = vunpack.c.l.b16 %v1586
        %v1709 = vunpack.c.h.b16 %v1586
        %v1710 = vunpack.c.l.b16 %v1587
        %v1711 = vunpack.c.h.b16 %v1587
        %v1712 = vunpack.c.l.b16 %v1588
        %v1713 = vunpack.c.h.b16 %v1588
        %v1714 = vunpack.c.l.b16 %v1589
        %v1715 = vunpack.c.h.b16 %v1589
        %v1716 = vunpack.c.l.b16 %v1590
        %v1717 = vunpack.c.h.b16 %v1590
        %v1718 = vunpack.c.l.b16 %v1591
        %v1719 = vunpack.c.h.b16 %v1591
        %v1720 = vunpack.c.l.b16 %v1592
        %v1721 = vunpack.c.h.b16 %v1592
        %v1722 = vunpack.c.l.b16 %v1593
        %v1723 = vunpack.c.h.b16 %v1593
        %v1724 = vunpack.c.l.b16 %v1594
        %v1725 = vunpack.c.h.b16 %v1594
        %v1726 = vunpack.c.l.b16 %v1595
        %v1727 = vunpack.c.h.b16 %v1595
        %v1728 = vunpack.c.l.b16 %v1596
        %v1729 = vunpack.c.h.b16 %v1596
        %v1730 = vunpack.c.l.b16 %v1597
        %v1731 = vunpack.c.h.b16 %v1597
        %v1732 = vunpack.c.l.b16 %v1598
        %v1733 = vunpack.c.h.b16 %v1598
        %v1734 = vunpack.c.l.b16 %v1599
        %v1735 = vunpack.c.h.b16 %v1599
        %v1736 = vunpack.c.l.b16 %v1600
        %v1737 = vunpack.c.h.b16 %v1600
        %v1738 = vunpack.c.l.b16 %v1601
        %v1739 = vunpack.c.h.b16 %v1601
        %v1740 = vunpack.c.l.b16 %v1602
        %v1741 = vunpack.c.h.b16 %v1602
        %v1742 = vunpack.c.l.b16 %v1603
        %v1743 = vunpack.c.h.b16 %v1603
        %v1744 = vunpack.c.l.b16 %v1604
        %v1745 = vunpack.c.h.b16 %v1604
        %v1746 = vunpack.c.l.b16 %v1605
        %v1747 = vunpack.c.h.b16 %v1605
        %v1748 = vunpack.c.l.b16 %v1606
        %v1749 = vunpack.c.h.b16 %v1606
        %v1750 = vunpack.c.l.b16 %v1607
        %v1751 = vunpack.c.h.b16 %v1607
        %v1752 = vunpack.c.l.b16 %v1608
        %v1753 = vunpack.c.h.b16 %v1608
        %v1754 = vunpack.c.l.b16 %v1609
        %v1755 = vunpack.c.h.b16 %v1609
        %v1756 = vunpack.c.l.b16 %v1610
        %v1757 = vunpack.c.h.b16 %v1610
        %v1758 = vunpack.c.l.b16 %v1611
        %v1759 = vunpack.c.h.b16 %v1611
        %v1760 = vunpack.c.l.b16 %v1612
        %v1761 = vunpack.c.h.b16 %v1612
        %v1762 = vunpack.c.l.b16 %v1613
        %v1763 = vunpack.c.h.b16 %v1613
        %v1764 = vpack.c.b16 %v1704, %v1700
        %v1765 = vpack.c.b16 %v1705, %v1701
        %v1766 = vpack.c.b16 %v1706, %v1702
        %v1767 = vpack.c.b16 %v1707, %v1703
        %v1768 = vpack.c.b16 %v1712, %v1708
        %v1769 = vpack.c.b16 %v1713, %v1709
        %v1770 = vpack.c.b16 %v1714, %v1710
        %v1771 = vpack.c.b16 %v1715, %v1711
        %v1772 = vpack.c.b16 %v1720, %v1716
        %v1773 = vpack.c.b16 %v1721, %v1717
        %v1774 = vpack.c.b16 %v1722, %v1718
        %v1775 = vpack.c.b16 %v1723, %v1719
        %v1776 = vpack.c.b16 %v1728, %v1724
        %v1777 = vpack.c.b16 %v1729, %v1725
        %v1778 = vpack.c.b16 %v1730, %v1726
        %v1779 = vpack.c.b16 %v1731, %v1727
        %v1780 = vpack.c.b16 %v1736, %v1732
        %v1781 = vpack.c.b16 %v1737, %v1733
        %v1782 = vpack.c.b16 %v1738, %v1734
        %v1783 = vpack.c.b16 %v1739, %v1735
        %v1784 = vpack.c.b16 %v1744, %v1740
        %v1785 = vpack.c.b16 %v1745, %v1741
        %v1786 = vpack.c.b16 %v1746, %v1742
        %v1787 = vpack.c.b16 %v1747, %v1743
        %v1788 = vpack.c.b16 %v1752, %v1748
        %v1789 = vpack.c.b16 %v1753, %v1749
        %v1790 = vpack.c.b16 %v1754, %v1750
        %v1791 = vpack.c.b16 %v1755, %v1751
        %v1792 = vpack.c.b16 %v1760, %v1756
        %v1793 = vpack.c.b16 %v1761, %v1757
        %v1794 = vpack.c.b16 %v1762, %v1758
        %v1795 = vpack.c.b16 %v1763, %v1759
        %vm1820 = vcmask 392192
        %v1822 = vsel %vm1820, %v1767, 0
        %v1825 = vsel %vm1820, %v1771, 0
        %v1828 = vsel %vm1820, %v1775, 0
        %v1831 = vsel %vm1820, %v1779, 0
        %v1834 = vsel %vm1820, %v1783, 0
        %v1837 = vsel %vm1820, %v1787, 0
        %v1840 = vsel %vm1820, %v1791, 0
        %v1843 = vsel %vm1820, %v1795, 0
        %1845 = vmatprep.subr.bf16.mxu0 %v1615
        %1846 = vmatpush1.bf16.msra.mxu0 %v1614
        %1847 = vmatprep.subr.bf16.mxu0 %v1617
        %1848 = vmatpush1.bf16.msra.mxu0 %v1616
        %1849 = vmatprep.subr.bf16.mxu0 %v1619
        %1850 = vmatpush1.bf16.msra.mxu0 %v1618
        %1851 = vmatprep.subr.bf16.mxu0 %v1621
        %1852 = vmatpush1.bf16.msra.mxu0 %v1620
        %1853 = vmatprep.subr.bf16.mxu0 %v1623
        %1854 = vmatpush1.bf16.msra.mxu0 %v1622
        %1855 = vmatprep.subr.bf16.mxu0 %v1625
        %1856 = vmatpush1.bf16.msra.mxu0 %v1624
        %1857 = vmatprep.subr.bf16.mxu0 %v1627
        %1858 = vmatpush1.bf16.msra.mxu0 %v1626
        %1859 = vmatprep.subr.bf16.mxu0 %v1629
        %1860 = vmatpush1.bf16.msra.mxu0 %v1628
        %1861 = vmatprep.subr.bf16.mxu0 %v1631
        %1862 = vmatpush1.bf16.msra.mxu0 %v1630
        %1863 = vmatprep.subr.bf16.mxu0 %v1633
        %1864 = vmatpush1.bf16.msra.mxu0 %v1632
        %1865 = vmatprep.subr.bf16.mxu0 %v1635
        %1866 = vmatpush1.bf16.msra.mxu0 %v1634
        %1867 = vmatprep.subr.bf16.mxu0 %v1637
        %1868 = vmatpush1.bf16.msra.mxu0 %v1636
        %1869 = vmatprep.subr.bf16.mxu0 %v1639
        %1870 = vmatpush1.bf16.msra.mxu0 %v1638
        %1871 = vmatprep.subr.bf16.mxu0 %v1641
        %1872 = vmatpush1.bf16.msra.mxu0 %v1640
        %1873 = vmatprep.subr.bf16.mxu0 %v1643
        %1874 = vmatpush1.bf16.msra.mxu0 %v1642
        %1875 = vmatprep.subr.bf16.mxu0 %v1645
        %1876 = vmatpush1.bf16.msra.mxu0 %v1644
        %1877 = vmatprep.mubr.bf16.mxu0 %v1765
        %1878 = vmatmul.mubr.bf16.gmra.mrb[0].mxu0 %v1764
        %v1879 = vpop.f32.mrb[0].mxu0
        %v1880 = vadd.f32 0.0, %v1879
        %v1881 = vpop.f32.mrb[0].mxu0
        %v1882 = vadd.f32 0.0, %v1881
        %v1883 = vpop.f32.mrb[0].mxu0
        %v1884 = vadd.f32 0.0, %v1883
        %v1885 = vpop.f32.mrb[0].mxu0
        %v1886 = vadd.f32 0.0, %v1885
        %1887 = vmatprep.mubr.bf16.mxu0 %v1769
        %1888 = vmatmul.mubr.bf16.gmra.mrb[0].mxu0 %v1768
        %v1889 = vpop.f32.mrb[0].mxu0
        %v1890 = vadd.f32 0.0, %v1889
        %v1891 = vpop.f32.mrb[0].mxu0
        %v1892 = vadd.f32 0.0, %v1891
        %v1893 = vpop.f32.mrb[0].mxu0
        %v1894 = vadd.f32 0.0, %v1893
        %v1895 = vpop.f32.mrb[0].mxu0
        %v1896 = vadd.f32 0.0, %v1895
        %1897 = vmatprep.mubr.bf16.mxu0 %v1773
        %1898 = vmatmul.mubr.bf16.gmra.mrb[0].mxu0 %v1772
        %v1899 = vpop.f32.mrb[0].mxu0
        %v1900 = vadd.f32 0.0, %v1899
        %v1901 = vpop.f32.mrb[0].mxu0
        %v1902 = vadd.f32 0.0, %v1901
        %v1903 = vpop.f32.mrb[0].mxu0
        %v1904 = vadd.f32 0.0, %v1903
        %v1905 = vpop.f32.mrb[0].mxu0
        %v1906 = vadd.f32 0.0, %v1905
        %1907 = vmatprep.mubr.bf16.mxu0 %v1777
        %1908 = vmatmul.mubr.bf16.gmra.mrb[0].mxu0 %v1776
        %v1909 = vpop.f32.mrb[0].mxu0
        %v1910 = vadd.f32 0.0, %v1909
        %v1911 = vpop.f32.mrb[0].mxu0
        %v1912 = vadd.f32 0.0, %v1911
        %v1913 = vpop.f32.mrb[0].mxu0
        %v1914 = vadd.f32 0.0, %v1913
        %v1915 = vpop.f32.mrb[0].mxu0
        %v1916 = vadd.f32 0.0, %v1915
        %1917 = vmatprep.mubr.bf16.mxu0 %v1781
        %1918 = vmatmul.mubr.bf16.gmra.mrb[0].mxu0 %v1780
        %v1919 = vpop.f32.mrb[0].mxu0
        %v1920 = vadd.f32 0.0, %v1919
        %v1921 = vpop.f32.mrb[0].mxu0
        %v1922 = vadd.f32 0.0, %v1921
        %v1923 = vpop.f32.mrb[0].mxu0
        %v1924 = vadd.f32 0.0, %v1923
        %v1925 = vpop.f32.mrb[0].mxu0
        %v1926 = vadd.f32 0.0, %v1925
        %1927 = vmatprep.mubr.bf16.mxu0 %v1785
        %1928 = vmatmul.mubr.bf16.gmra.mrb[0].mxu0 %v1784
        %v1929 = vpop.f32.mrb[0].mxu0
        %v1930 = vadd.f32 0.0, %v1929
        %v1931 = vpop.f32.mrb[0].mxu0
        %v1932 = vadd.f32 0.0, %v1931
        %v1933 = vpop.f32.mrb[0].mxu0
        %v1934 = vadd.f32 0.0, %v1933
        %v1935 = vpop.f32.mrb[0].mxu0
        %v1936 = vadd.f32 0.0, %v1935
        %1937 = vmatprep.mubr.bf16.mxu0 %v1789
        %1938 = vmatmul.mubr.bf16.gmra.mrb[0].mxu0 %v1788
        %v1939 = vpop.f32.mrb[0].mxu0
        %v1940 = vadd.f32 0.0, %v1939
        %v1941 = vpop.f32.mrb[0].mxu0
        %v1942 = vadd.f32 0.0, %v1941
        %v1943 = vpop.f32.mrb[0].mxu0
        %v1944 = vadd.f32 0.0, %v1943
        %v1945 = vpop.f32.mrb[0].mxu0
        %v1946 = vadd.f32 0.0, %v1945
        %1947 = vmatprep.mubr.bf16.mxu0 %v1793
        %1948 = vmatmul.mubr.bf16.gmra.mrb[0].mxu0 %v1792
        %v1949 = vpop.f32.mrb[0].mxu0
        %v1950 = vadd.f32 0.0, %v1949
        %v1951 = vpop.f32.mrb[0].mxu0
        %v1952 = vadd.f32 0.0, %v1951
        %v1953 = vpop.f32.mrb[0].mxu0
        %v1954 = vadd.f32 0.0, %v1953
        %v1955 = vpop.f32.mrb[0].mxu0
        %v1956 = vadd.f32 0.0, %v1955
        %1957 = vdwg.mxu0
        %1958 = vmatprep.subr.bf16.mxu0 %v1647
        %1959 = vmatpush1.bf16.msra.mxu0 %v1646
        %1960 = vmatprep.subr.bf16.mxu0 %v1649
        %1961 = vmatpush1.bf16.msra.mxu0 %v1648
        %1962 = vmatprep.subr.bf16.mxu0 %v1651
        %1963 = vmatpush1.bf16.msra.mxu0 %v1650
        %1964 = vmatprep.subr.bf16.mxu0 %v1653
        %1965 = vmatpush1.bf16.msra.mxu0 %v1652
        %1966 = vmatprep.subr.bf16.mxu0 %v1655
        %1967 = vmatpush1.bf16.msra.mxu0 %v1654
        %1968 = vmatprep.subr.bf16.mxu0 %v1657
        %1969 = vmatpush1.bf16.msra.mxu0 %v1656
        %1970 = vmatprep.subr.bf16.mxu0 %v1659
        %1971 = vmatpush1.bf16.msra.mxu0 %v1658
        %1972 = vmatprep.subr.bf16.mxu0 %v1661
        %1973 = vmatpush1.bf16.msra.mxu0 %v1660
        %1974 = vmatprep.subr.bf16.mxu0 %v1663
        %1975 = vmatpush1.bf16.msra.mxu0 %v1662
        %1976 = vmatprep.subr.bf16.mxu0 %v1665
        %1977 = vmatpush1.bf16.msra.mxu0 %v1664
        %1978 = vmatprep.subr.bf16.mxu0 %v1667
        %1979 = vmatpush1.bf16.msra.mxu0 %v1666
        %1980 = vmatprep.subr.bf16.mxu0 0
        %1981 = vmatpush1.bf16.msra.mxu0 0
        %1982 = vmatprep.subr.bf16.mxu0 0
        %1983 = vmatpush1.bf16.msra.mxu0 0
        %1984 = vmatprep.subr.bf16.mxu0 0
        %1985 = vmatpush1.bf16.msra.mxu0 0
        %1986 = vmatprep.subr.bf16.mxu0 0
        %1987 = vmatpush1.bf16.msra.mxu0 0
        %1988 = vmatprep.subr.bf16.mxu0 0
        %1989 = vmatpush1.bf16.msra.mxu0 0
        %1990 = vmatprep.mubr.bf16.mxu0 %v1822
        %1991 = vmatmul.mubr.bf16.gmra.mrb[0].mxu0 %v1766
        %v1992 = vpop.f32.mrb[0].mxu0
        %v1993 = vadd.f32 %v1880, %v1992
        %v1994 = vpop.f32.mrb[0].mxu0
        %v1995 = vadd.f32 %v1882, %v1994
        %v1996 = vpop.f32.mrb[0].mxu0
        %v1997 = vadd.f32 %v1884, %v1996
        %v1998 = vpop.f32.mrb[0].mxu0
        %v1999 = vadd.f32 %v1886, %v1998
        %2000 = vmatprep.mubr.bf16.mxu0 %v1825
        %2001 = vmatmul.mubr.bf16.gmra.mrb[0].mxu0 %v1770
        %v2002 = vpop.f32.mrb[0].mxu0
        %v2003 = vadd.f32 %v1890, %v2002
        %v2004 = vpop.f32.mrb[0].mxu0
        %v2005 = vadd.f32 %v1892, %v2004
        %v2006 = vpop.f32.mrb[0].mxu0
        %v2007 = vadd.f32 %v1894, %v2006
        %v2008 = vpop.f32.mrb[0].mxu0
        %v2009 = vadd.f32 %v1896, %v2008
        %2010 = vmatprep.mubr.bf16.mxu0 %v1828
        %2011 = vmatmul.mubr.bf16.gmra.mrb[0].mxu0 %v1774
        %v2012 = vpop.f32.mrb[0].mxu0
        %v2013 = vadd.f32 %v1900, %v2012
        %v2014 = vpop.f32.mrb[0].mxu0
        %v2015 = vadd.f32 %v1902, %v2014
        %v2016 = vpop.f32.mrb[0].mxu0
        %v2017 = vadd.f32 %v1904, %v2016
        %v2018 = vpop.f32.mrb[0].mxu0
        %v2019 = vadd.f32 %v1906, %v2018
        %2020 = vmatprep.mubr.bf16.mxu0 %v1831
        %2021 = vmatmul.mubr.bf16.gmra.mrb[0].mxu0 %v1778
        %v2022 = vpop.f32.mrb[0].mxu0
        %v2023 = vadd.f32 %v1910, %v2022
        %v2024 = vpop.f32.mrb[0].mxu0
        %v2025 = vadd.f32 %v1912, %v2024
        %v2026 = vpop.f32.mrb[0].mxu0
        %v2027 = vadd.f32 %v1914, %v2026
        %v2028 = vpop.f32.mrb[0].mxu0
        %v2029 = vadd.f32 %v1916, %v2028
        %2030 = vmatprep.mubr.bf16.mxu0 %v1834
        %2031 = vmatmul.mubr.bf16.gmra.mrb[0].mxu0 %v1782
        %v2032 = vpop.f32.mrb[0].mxu0
        %v2033 = vadd.f32 %v1920, %v2032
        %v2034 = vpop.f32.mrb[0].mxu0
        %v2035 = vadd.f32 %v1922, %v2034
        %v2036 = vpop.f32.mrb[0].mxu0
        %v2037 = vadd.f32 %v1924, %v2036
        %v2038 = vpop.f32.mrb[0].mxu0
        %v2039 = vadd.f32 %v1926, %v2038
        %2040 = vmatprep.mubr.bf16.mxu0 %v1837
        %2041 = vmatmul.mubr.bf16.gmra.mrb[0].mxu0 %v1786
        %v2042 = vpop.f32.mrb[0].mxu0
        %v2043 = vadd.f32 %v1930, %v2042
        %v2044 = vpop.f32.mrb[0].mxu0
        %v2045 = vadd.f32 %v1932, %v2044
        %v2046 = vpop.f32.mrb[0].mxu0
        %v2047 = vadd.f32 %v1934, %v2046
        %v2048 = vpop.f32.mrb[0].mxu0
        %v2049 = vadd.f32 %v1936, %v2048
        %2050 = vmatprep.mubr.bf16.mxu0 %v1840
        %2051 = vmatmul.mubr.bf16.gmra.mrb[0].mxu0 %v1790
        %v2052 = vpop.f32.mrb[0].mxu0
        %v2053 = vadd.f32 %v1940, %v2052
        %v2054 = vpop.f32.mrb[0].mxu0
        %v2055 = vadd.f32 %v1942, %v2054
        %v2056 = vpop.f32.mrb[0].mxu0
        %v2057 = vadd.f32 %v1944, %v2056
        %v2058 = vpop.f32.mrb[0].mxu0
        %v2059 = vadd.f32 %v1946, %v2058
        %2060 = vmatprep.mubr.bf16.mxu0 %v1843
        %2061 = vmatmul.mubr.bf16.gmra.mrb[0].mxu0 %v1794
        %v2062 = vpop.f32.mrb[0].mxu0
        %v2063 = vadd.f32 %v1950, %v2062
        %v2064 = vpop.f32.mrb[0].mxu0
        %v2065 = vadd.f32 %v1952, %v2064
        %v2066 = vpop.f32.mrb[0].mxu0
        %v2067 = vadd.f32 %v1954, %v2066
        %v2068 = vpop.f32.mrb[0].mxu0
        %v2069 = vadd.f32 %v1956, %v2068
        %2070 = vdwg.mxu0
        %v2071 = vld [vmem:[%s5] sm:$0xff]
        %v2072 = vld [vmem:[%s5 + $0x8] sm:$0xff]
        %v2073 = vld [vmem:[%s5 + $0x10] sm:$0xff]
        %v2074 = vld [vmem:[%s5 + $0x18] sm:$0xff]
        %v2075 = vld [vmem:[%s5 + $0x20] sm:$0xff]
        %v2076 = vld [vmem:[%s5 + $0x28] sm:$0xff]
        %v2077 = vld [vmem:[%s5 + $0x30] sm:$0xff]
        %v2078 = vld [vmem:[%s5 + $0x38] sm:$0xff]
        %v2079 = vld [vmem:[%s5 + $0x40] sm:$0xff]
        %v2080 = vld [vmem:[%s5 + $0x48] sm:$0xff]
        %v2081 = vld [vmem:[%s5 + $0x50] sm:$0xff]
        %v2082 = vld [vmem:[%s5 + $0x58] sm:$0xff]
        %v2083 = vld [vmem:[%s5 + $0x60] sm:$0xff]
        %v2084 = vld [vmem:[%s5 + $0x68] sm:$0xff]
        %v2085 = vld [vmem:[%s5 + $0x70] sm:$0xff]
        %v2086 = vld [vmem:[%s5 + $0x78] sm:$0xff]
        %v2087 = vld [vmem:[%s5 + $0x80] sm:$0xff]
        %v2088 = vld [vmem:[%s5 + $0x88] sm:$0xff]
        %v2089 = vld [vmem:[%s5 + $0x90] sm:$0xff]
        %v2090 = vld [vmem:[%s5 + $0x98] sm:$0xff]
        %v2091 = vld [vmem:[%s5 + $0xa0] sm:$0xff]
        %v2092 = vld [vmem:[%s5 + $0xa8] sm:$0xff]
        %v2093 = vld [vmem:[%s5 + $0xb0] sm:$0xff]
        %v2094 = vld [vmem:[%s5 + $0xb8] sm:$0xff]
        %v2095 = vld [vmem:[#allocation6] sm:$0xff]
        %v2096 = vld [vmem:[#allocation6 + $0x8] sm:$0xff]
        %v2097 = vld [vmem:[#allocation6 + $0x10] sm:$0xff]
        %v2098 = vld [vmem:[#allocation6 + $0x18] sm:$0xff]
        %v2099 = vld [vmem:[#allocation6 + $0x20] sm:$0xff]
        %v2100 = vld [vmem:[#allocation6 + $0x28] sm:$0xff]
        %v2101 = vld [vmem:[#allocation6 + $0x30] sm:$0xff]
        %v2102 = vld [vmem:[#allocation6 + $0x38] sm:$0xff]
        %v2103 = vld [vmem:[#allocation6 + $0x40] sm:$0xff]
        %v2104 = vld [vmem:[#allocation6 + $0x48] sm:$0xff]
        %v2105 = vld [vmem:[#allocation6 + $0x50] sm:$0xff]
        %v2106 = vld [vmem:[#allocation6 + $0x58] sm:$0xff]
        %v2107 = vld [vmem:[#allocation6 + $0x60] sm:$0xff]
        %v2108 = vld [vmem:[#allocation6 + $0x68] sm:$0xff]
        %v2109 = vld [vmem:[#allocation6 + $0x70] sm:$0xff]
        %v2110 = vld [vmem:[#allocation6 + $0x78] sm:$0xff]
        %v2111 = vld [vmem:[#allocation6 + $0x80] sm:$0xff]
        %v2112 = vld [vmem:[#allocation6 + $0x88] sm:$0xff]
        %v2113 = vld [vmem:[#allocation6 + $0x90] sm:$0xff]
        %v2114 = vld [vmem:[#allocation6 + $0x98] sm:$0xff]
        %v2115 = vld [vmem:[#allocation6 + $0xa0] sm:$0xff]
        %v2116 = vld [vmem:[#allocation6 + $0xa8] sm:$0xff]
        %v2117 = vld [vmem:[#allocation6 + $0xb0] sm:$0xff]
        %v2118 = vld [vmem:[#allocation6 + $0xb8] sm:$0xff]
        %v2119 = vld [vmem:[#allocation6 + $0xc0] sm:$0xff]
        %v2120 = vld [vmem:[#allocation6 + $0xc8] sm:$0xff]
        %v2121 = vld [vmem:[#allocation6 + $0xd0] sm:$0xff]
        %v2122 = vld [vmem:[#allocation6 + $0xd8] sm:$0xff]
        %v2123 = vld [vmem:[#allocation6 + $0xe0] sm:$0xff]
        %v2124 = vld [vmem:[#allocation6 + $0xe8] sm:$0xff]
        %v2125 = vld [vmem:[#allocation6 + $0xf0] sm:$0xff]
        %v2126 = vld [vmem:[#allocation6 + $0xf8] sm:$0xff]
        %v2127 = vld [vmem:[#allocation6 + $0x100] sm:$0xff]
        %v2128 = vld [vmem:[#allocation6 + $0x108] sm:$0xff]
        %v2129 = vld [vmem:[#allocation6 + $0x110] sm:$0xff]
        %v2130 = vld [vmem:[#allocation6 + $0x118] sm:$0xff]
        %v2131 = vld [vmem:[#allocation6 + $0x120] sm:$0xff]
        %v2132 = vld [vmem:[#allocation6 + $0x128] sm:$0xff]
        %v2133 = vld [vmem:[#allocation6 + $0x130] sm:$0xff]
        %v2134 = vld [vmem:[#allocation6 + $0x138] sm:$0xff]
        %v2135 = vld [vmem:[#allocation6 + $0x140] sm:$0xff]
        %v2136 = vld [vmem:[#allocation6 + $0x148] sm:$0xff]
        %v2137 = vld [vmem:[#allocation6 + $0x150] sm:$0xff]
        %v2138 = vld [vmem:[#allocation6 + $0x158] sm:$0xff]
        %v2139 = vld [vmem:[#allocation6 + $0x160] sm:$0xff]
        %v2140 = vld [vmem:[#allocation6 + $0x168] sm:$0xff]
        %v2141 = vld [vmem:[#allocation6 + $0x170] sm:$0xff]
        %v2142 = vld [vmem:[#allocation6 + $0x178] sm:$0xff]
        %v2143 = vld [vmem:[#allocation6 + $0x180] sm:$0xff]
        %v2144 = vld [vmem:[#allocation6 + $0x188] sm:$0xff]
        %v2145 = vld [vmem:[#allocation6 + $0x190] sm:$0xff]
        %v2146 = vld [vmem:[#allocation6 + $0x198] sm:$0xff]
        %v2147 = vld [vmem:[#allocation6 + $0x1a0] sm:$0xff]
        %v2148 = vld [vmem:[#allocation6 + $0x1a8] sm:$0xff]
        %v2173 = vunpack.c.l.b16 %v2071
        %v2174 = vunpack.c.h.b16 %v2071
        %v2175 = vunpack.c.l.b16 %v2072
        %v2176 = vunpack.c.h.b16 %v2072
        %v2177 = vunpack.c.l.b16 %v2073
        %v2178 = vunpack.c.h.b16 %v2073
        %v2179 = vunpack.c.l.b16 %v2074
        %v2180 = vunpack.c.h.b16 %v2074
        %v2181 = vunpack.c.l.b16 %v2075
        %v2182 = vunpack.c.h.b16 %v2075
        %v2183 = vunpack.c.l.b16 %v2076
        %v2184 = vunpack.c.h.b16 %v2076
        %v2185 = vunpack.c.l.b16 %v2077
        %v2186 = vunpack.c.h.b16 %v2077
        %v2187 = vunpack.c.l.b16 %v2078
        %v2188 = vunpack.c.h.b16 %v2078
        %v2189 = vunpack.c.l.b16 %v2079
        %v2190 = vunpack.c.h.b16 %v2079
        %v2191 = vunpack.c.l.b16 %v2080
        %v2192 = vunpack.c.h.b16 %v2080
        %v2193 = vunpack.c.l.b16 %v2081
        %v2194 = vunpack.c.h.b16 %v2081
        %v2195 = vunpack.c.l.b16 %v2082
        %v2196 = vunpack.c.h.b16 %v2082
        %v2197 = vunpack.c.l.b16 %v2083
        %v2198 = vunpack.c.h.b16 %v2083
        %v2199 = vunpack.c.l.b16 %v2084
        %v2200 = vunpack.c.h.b16 %v2084
        %v2201 = vunpack.c.l.b16 %v2085
        %v2202 = vunpack.c.h.b16 %v2085
        %v2203 = vunpack.c.l.b16 %v2086
        %v2204 = vunpack.c.h.b16 %v2086
        %v2205 = vunpack.c.l.b16 %v2087
        %v2206 = vunpack.c.h.b16 %v2087
        %v2207 = vunpack.c.l.b16 %v2088
        %v2208 = vunpack.c.h.b16 %v2088
        %v2209 = vunpack.c.l.b16 %v2089
        %v2210 = vunpack.c.h.b16 %v2089
        %v2211 = vunpack.c.l.b16 %v2090
        %v2212 = vunpack.c.h.b16 %v2090
        %v2213 = vunpack.c.l.b16 %v2091
        %v2214 = vunpack.c.h.b16 %v2091
        %v2215 = vunpack.c.l.b16 %v2092
        %v2216 = vunpack.c.h.b16 %v2092
        %v2217 = vunpack.c.l.b16 %v2093
        %v2218 = vunpack.c.h.b16 %v2093
        %v2219 = vunpack.c.l.b16 %v2094
        %v2220 = vunpack.c.h.b16 %v2094
        %v2221 = vpack.c.b16 %v2177, %v2173
        %v2222 = vpack.c.b16 %v2178, %v2174
        %v2223 = vpack.c.b16 %v2179, %v2175
        %v2224 = vpack.c.b16 %v2180, %v2176
        %v2225 = vpack.c.b16 %v2185, %v2181
        %v2226 = vpack.c.b16 %v2186, %v2182
        %v2227 = vpack.c.b16 %v2187, %v2183
        %v2228 = vpack.c.b16 %v2188, %v2184
        %v2229 = vpack.c.b16 %v2193, %v2189
        %v2230 = vpack.c.b16 %v2194, %v2190
        %v2231 = vpack.c.b16 %v2195, %v2191
        %v2232 = vpack.c.b16 %v2196, %v2192
        %v2233 = vpack.c.b16 %v2201, %v2197
        %v2234 = vpack.c.b16 %v2202, %v2198
        %v2235 = vpack.c.b16 %v2203, %v2199
        %v2236 = vpack.c.b16 %v2204, %v2200
        %v2237 = vpack.c.b16 %v2209, %v2205
        %v2238 = vpack.c.b16 %v2210, %v2206
        %v2239 = vpack.c.b16 %v2211, %v2207
        %v2240 = vpack.c.b16 %v2212, %v2208
        %v2241 = vpack.c.b16 %v2217, %v2213
        %v2242 = vpack.c.b16 %v2218, %v2214
        %v2243 = vpack.c.b16 %v2219, %v2215
        %v2244 = vpack.c.b16 %v2220, %v2216
        %v2264 = vsel %vm1820, %v2224, 0
        %v2267 = vsel %vm1820, %v2228, 0
        %v2270 = vsel %vm1820, %v2232, 0
        %v2273 = vsel %vm1820, %v2236, 0
        %v2276 = vsel %vm1820, %v2240, 0
        %v2279 = vsel %vm1820, %v2244, 0
        %2281 = vmatprep.subr.bf16.mxu0 %v2096
        %2282 = vmatpush1.bf16.msra.mxu0 %v2095
        %2283 = vmatprep.subr.bf16.mxu0 %v2098
        %2284 = vmatpush1.bf16.msra.mxu0 %v2097
        %2285 = vmatprep.subr.bf16.mxu0 %v2100
        %2286 = vmatpush1.bf16.msra.mxu0 %v2099
        %2287 = vmatprep.subr.bf16.mxu0 %v2102
        %2288 = vmatpush1.bf16.msra.mxu0 %v2101
        %2289 = vmatprep.subr.bf16.mxu0 %v2104
        %2290 = vmatpush1.bf16.msra.mxu0 %v2103
        %2291 = vmatprep.subr.bf16.mxu0 %v2106
        %2292 = vmatpush1.bf16.msra.mxu0 %v2105
        %2293 = vmatprep.subr.bf16.mxu0 %v2108
        %2294 = vmatpush1.bf16.msra.mxu0 %v2107
        %2295 = vmatprep.subr.bf16.mxu0 %v2110
        %2296 = vmatpush1.bf16.msra.mxu0 %v2109
        %2297 = vmatprep.subr.bf16.mxu0 %v2112
        %2298 = vmatpush1.bf16.msra.mxu0 %v2111
        %2299 = vmatprep.subr.bf16.mxu0 %v2114
        %2300 = vmatpush1.bf16.msra.mxu0 %v2113
        %2301 = vmatprep.subr.bf16.mxu0 %v2116
        %2302 = vmatpush1.bf16.msra.mxu0 %v2115
        %2303 = vmatprep.subr.bf16.mxu0 %v2118
        %2304 = vmatpush1.bf16.msra.mxu0 %v2117
        %2305 = vmatprep.subr.bf16.mxu0 %v2120
        %2306 = vmatpush1.bf16.msra.mxu0 %v2119
        %2307 = vmatprep.subr.bf16.mxu0 %v2122
        %2308 = vmatpush1.bf16.msra.mxu0 %v2121
        %2309 = vmatprep.subr.bf16.mxu0 %v2124
        %2310 = vmatpush1.bf16.msra.mxu0 %v2123
        %2311 = vmatprep.subr.bf16.mxu0 %v2126
        %2312 = vmatpush1.bf16.msra.mxu0 %v2125
        %2313 = vmatprep.mubr.bf16.mxu0 %v2222
        %2314 = vmatmul.mubr.bf16.gmra.mrb[0].mxu0 %v2221
        %v2315 = vpop.f32.mrb[0].mxu0
        %v2316 = vadd.f32 0.0, %v2315
        %v2317 = vpop.f32.mrb[0].mxu0
        %v2318 = vadd.f32 0.0, %v2317
        %v2319 = vpop.f32.mrb[0].mxu0
        %v2320 = vadd.f32 0.0, %v2319
        %v2321 = vpop.f32.mrb[0].mxu0
        %v2322 = vadd.f32 0.0, %v2321
        %2323 = vmatprep.mubr.bf16.mxu0 %v2226
        %2324 = vmatmul.mubr.bf16.gmra.mrb[0].mxu0 %v2225
        %v2325 = vpop.f32.mrb[0].mxu0
        %v2326 = vadd.f32 0.0, %v2325
        %v2327 = vpop.f32.mrb[0].mxu0
        %v2328 = vadd.f32 0.0, %v2327
        %v2329 = vpop.f32.mrb[0].mxu0
        %v2330 = vadd.f32 0.0, %v2329
        %v2331 = vpop.f32.mrb[0].mxu0
        %v2332 = vadd.f32 0.0, %v2331
        %2333 = vmatprep.mubr.bf16.mxu0 %v2230
        %2334 = vmatmul.mubr.bf16.gmra.mrb[0].mxu0 %v2229
        %v2335 = vpop.f32.mrb[0].mxu0
        %v2336 = vadd.f32 0.0, %v2335
        %v2337 = vpop.f32.mrb[0].mxu0
        %v2338 = vadd.f32 0.0, %v2337
        %v2339 = vpop.f32.mrb[0].mxu0
        %v2340 = vadd.f32 0.0, %v2339
        %v2341 = vpop.f32.mrb[0].mxu0
        %v2342 = vadd.f32 0.0, %v2341
        %2343 = vmatprep.mubr.bf16.mxu0 %v2234
        %2344 = vmatmul.mubr.bf16.gmra.mrb[0].mxu0 %v2233
        %v2345 = vpop.f32.mrb[0].mxu0
        %v2346 = vadd.f32 0.0, %v2345
        %v2347 = vpop.f32.mrb[0].mxu0
        %v2348 = vadd.f32 0.0, %v2347
        %v2349 = vpop.f32.mrb[0].mxu0
        %v2350 = vadd.f32 0.0, %v2349
        %v2351 = vpop.f32.mrb[0].mxu0
        %v2352 = vadd.f32 0.0, %v2351
        %2353 = vmatprep.mubr.bf16.mxu0 %v2238
        %2354 = vmatmul.mubr.bf16.gmra.mrb[0].mxu0 %v2237
        %v2355 = vpop.f32.mrb[0].mxu0
        %v2356 = vadd.f32 0.0, %v2355
        %v2357 = vpop.f32.mrb[0].mxu0
        %v2358 = vadd.f32 0.0, %v2357
        %v2359 = vpop.f32.mrb[0].mxu0
        %v2360 = vadd.f32 0.0, %v2359
        %v2361 = vpop.f32.mrb[0].mxu0
        %v2362 = vadd.f32 0.0, %v2361
        %2363 = vmatprep.mubr.bf16.mxu0 %v2242
        %2364 = vmatmul.mubr.bf16.gmra.mrb[0].mxu0 %v2241
        %v2365 = vpop.f32.mrb[0].mxu0
        %v2366 = vadd.f32 0.0, %v2365
        %v2367 = vpop.f32.mrb[0].mxu0
        %v2368 = vadd.f32 0.0, %v2367
        %v2369 = vpop.f32.mrb[0].mxu0
        %v2370 = vadd.f32 0.0, %v2369
        %v2371 = vpop.f32.mrb[0].mxu0
        %v2372 = vadd.f32 0.0, %v2371
        %2373 = vdwg.mxu0
        %2374 = vmatprep.subr.bf16.mxu0 %v2128
        %2375 = vmatpush1.bf16.msra.mxu0 %v2127
        %2376 = vmatprep.subr.bf16.mxu0 %v2130
        %2377 = vmatpush1.bf16.msra.mxu0 %v2129
        %2378 = vmatprep.subr.bf16.mxu0 %v2132
        %2379 = vmatpush1.bf16.msra.mxu0 %v2131
        %2380 = vmatprep.subr.bf16.mxu0 %v2134
        %2381 = vmatpush1.bf16.msra.mxu0 %v2133
        %2382 = vmatprep.subr.bf16.mxu0 %v2136
        %2383 = vmatpush1.bf16.msra.mxu0 %v2135
        %2384 = vmatprep.subr.bf16.mxu0 %v2138
        %2385 = vmatpush1.bf16.msra.mxu0 %v2137
        %2386 = vmatprep.subr.bf16.mxu0 %v2140
        %2387 = vmatpush1.bf16.msra.mxu0 %v2139
        %2388 = vmatprep.subr.bf16.mxu0 %v2142
        %2389 = vmatpush1.bf16.msra.mxu0 %v2141
        %2390 = vmatprep.subr.bf16.mxu0 %v2144
        %2391 = vmatpush1.bf16.msra.mxu0 %v2143
        %2392 = vmatprep.subr.bf16.mxu0 %v2146
        %2393 = vmatpush1.bf16.msra.mxu0 %v2145
        %2394 = vmatprep.subr.bf16.mxu0 %v2148
        %2395 = vmatpush1.bf16.msra.mxu0 %v2147
        %2396 = vmatprep.subr.bf16.mxu0 0
        %2397 = vmatpush1.bf16.msra.mxu0 0
        %2398 = vmatprep.subr.bf16.mxu0 0
        %2399 = vmatpush1.bf16.msra.mxu0 0
        %2400 = vmatprep.subr.bf16.mxu0 0
        %2401 = vmatpush1.bf16.msra.mxu0 0
        %2402 = vmatprep.subr.bf16.mxu0 0
        %2403 = vmatpush1.bf16.msra.mxu0 0
        %2404 = vmatprep.subr.bf16.mxu0 0
        %2405 = vmatpush1.bf16.msra.mxu0 0
        %2406 = vmatprep.mubr.bf16.mxu0 %v2264
        %2407 = vmatmul.mubr.bf16.gmra.mrb[0].mxu0 %v2223
        %v2408 = vpop.f32.mrb[0].mxu0
        %v2409 = vadd.f32 %v2316, %v2408
        %v2410 = vpop.f32.mrb[0].mxu0
        %v2411 = vadd.f32 %v2318, %v2410
        %v2412 = vpop.f32.mrb[0].mxu0
        %v2413 = vadd.f32 %v2320, %v2412
        %v2414 = vpop.f32.mrb[0].mxu0
        %v2415 = vadd.f32 %v2322, %v2414
        %2416 = vmatprep.mubr.bf16.mxu0 %v2267
        %2417 = vmatmul.mubr.bf16.gmra.mrb[0].mxu0 %v2227
        %v2418 = vpop.f32.mrb[0].mxu0
        %v2419 = vadd.f32 %v2326, %v2418
        %v2420 = vpop.f32.mrb[0].mxu0
        %v2421 = vadd.f32 %v2328, %v2420
        %v2422 = vpop.f32.mrb[0].mxu0
        %v2423 = vadd.f32 %v2330, %v2422
        %v2424 = vpop.f32.mrb[0].mxu0
        %v2425 = vadd.f32 %v2332, %v2424
        %2426 = vmatprep.mubr.bf16.mxu0 %v2270
        %2427 = vmatmul.mubr.bf16.gmra.mrb[0].mxu0 %v2231
        %v2428 = vpop.f32.mrb[0].mxu0
        %v2429 = vadd.f32 %v2336, %v2428
        %v2430 = vpop.f32.mrb[0].mxu0
        %v2431 = vadd.f32 %v2338, %v2430
        %v2432 = vpop.f32.mrb[0].mxu0
        %v2433 = vadd.f32 %v2340, %v2432
        %v2434 = vpop.f32.mrb[0].mxu0
        %v2435 = vadd.f32 %v2342, %v2434
        %2436 = vmatprep.mubr.bf16.mxu0 %v2273
        %2437 = vmatmul.mubr.bf16.gmra.mrb[0].mxu0 %v2235
        %v2438 = vpop.f32.mrb[0].mxu0
        %v2439 = vadd.f32 %v2346, %v2438
        %v2440 = vpop.f32.mrb[0].mxu0
        %v2441 = vadd.f32 %v2348, %v2440
        %v2442 = vpop.f32.mrb[0].mxu0
        %v2443 = vadd.f32 %v2350, %v2442
        %v2444 = vpop.f32.mrb[0].mxu0
        %v2445 = vadd.f32 %v2352, %v2444
        %2446 = vmatprep.mubr.bf16.mxu0 %v2276
        %2447 = vmatmul.mubr.bf16.gmra.mrb[0].mxu0 %v2239
        %v2448 = vpop.f32.mrb[0].mxu0
        %v2449 = vadd.f32 %v2356, %v2448
        %v2450 = vpop.f32.mrb[0].mxu0
        %v2451 = vadd.f32 %v2358, %v2450
        %v2452 = vpop.f32.mrb[0].mxu0
        %v2453 = vadd.f32 %v2360, %v2452
        %v2454 = vpop.f32.mrb[0].mxu0
        %v2455 = vadd.f32 %v2362, %v2454
        %2456 = vmatprep.mubr.bf16.mxu0 %v2279
        %2457 = vmatmul.mubr.bf16.gmra.mrb[0].mxu0 %v2243
        %v2458 = vpop.f32.mrb[0].mxu0
        %v2459 = vadd.f32 %v2366, %v2458
        %v2460 = vpop.f32.mrb[0].mxu0
        %v2461 = vadd.f32 %v2368, %v2460
        %v2462 = vpop.f32.mrb[0].mxu0
        %v2463 = vadd.f32 %v2370, %v2462
        %v2464 = vpop.f32.mrb[0].mxu0
        %v2465 = vadd.f32 %v2372, %v2464
        %2466 = vdwg.mxu0
        %v2467 = vxor.u32 %v1993, 2147483648
        %v2468 = vxor.u32 %v1995, 2147483648
        %v2469 = vxor.u32 %v1997, 2147483648
        %v2470 = vxor.u32 %v1999, 2147483648
        %v2471 = vxor.u32 %v2003, 2147483648
        %v2472 = vxor.u32 %v2005, 2147483648
        %v2473 = vxor.u32 %v2007, 2147483648
        %v2474 = vxor.u32 %v2009, 2147483648
        %v2475 = vmul.f32 %v2467, 1.442695
        %v2476 = vpow.pop %v2475
        %v2477 = vmul.f32 %v2468, 1.442695
        %v2478 = vpow.pop %v2477
        %v2479 = vmul.f32 %v2469, 1.442695
        %v2480 = vpow.pop %v2479
        %v2481 = vmul.f32 %v2470, 1.442695
        %v2482 = vpow.pop %v2481
        %v2483 = vmul.f32 %v2471, 1.442695
        %v2484 = vpow.pop %v2483
        %v2485 = vmul.f32 %v2472, 1.442695
        %v2486 = vpow.pop %v2485
        %v2487 = vmul.f32 %v2473, 1.442695
        %v2488 = vpow.pop %v2487
        %v2489 = vmul.f32 %v2474, 1.442695
        %v2490 = vpow.pop %v2489
        %v2491 = vadd.f32 %v2476, 1.0
        %v2492 = vadd.f32 %v2478, 1.0
        %v2493 = vadd.f32 %v2480, 1.0
        %v2494 = vadd.f32 %v2482, 1.0
        %v2495 = vadd.f32 %v2484, 1.0
        %v2496 = vadd.f32 %v2486, 1.0
        %v2497 = vadd.f32 %v2488, 1.0
        %v2498 = vadd.f32 %v2490, 1.0
        %v2499 = vrcp.pop %v2491
        %v2500 = vmul.f32 1.0, %v2499
        %v2501 = vrcp.pop %v2492
        %v2502 = vmul.f32 1.0, %v2501
        %v2503 = vrcp.pop %v2493
        %v2504 = vmul.f32 1.0, %v2503
        %v2505 = vrcp.pop %v2494
        %v2506 = vmul.f32 1.0, %v2505
        %v2507 = vrcp.pop %v2495
        %v2508 = vmul.f32 1.0, %v2507
        %v2509 = vrcp.pop %v2496
        %v2510 = vmul.f32 1.0, %v2509
        %v2511 = vrcp.pop %v2497
        %v2512 = vmul.f32 1.0, %v2511
        %v2513 = vrcp.pop %v2498
        %v2514 = vmul.f32 1.0, %v2513
        %v2515 = vadd.f32 %v2013, 1.0
        %v2516 = vadd.f32 %v2015, 1.0
        %v2517 = vadd.f32 %v2017, 1.0
        %v2518 = vadd.f32 %v2019, 1.0
        %v2519 = vadd.f32 %v2023, 1.0
        %v2520 = vadd.f32 %v2025, 1.0
        %v2521 = vadd.f32 %v2027, 1.0
        %v2522 = vadd.f32 %v2029, 1.0
        %v2523 = vxor.u32 %v2515, 2147483648
        %v2524 = vxor.u32 %v2516, 2147483648
        %v2525 = vxor.u32 %v2517, 2147483648
        %v2526 = vxor.u32 %v2518, 2147483648
        %v2527 = vxor.u32 %v2519, 2147483648
        %v2528 = vxor.u32 %v2520, 2147483648
        %v2529 = vxor.u32 %v2521, 2147483648
        %v2530 = vxor.u32 %v2522, 2147483648
        %v2531 = vmul.f32 %v2523, 1.442695
        %v2532 = vpow.pop %v2531
        %v2533 = vmul.f32 %v2524, 1.442695
        %v2534 = vpow.pop %v2533
        %v2535 = vmul.f32 %v2525, 1.442695
        %v2536 = vpow.pop %v2535
        %v2537 = vmul.f32 %v2526, 1.442695
        %v2538 = vpow.pop %v2537
        %v2539 = vmul.f32 %v2527, 1.442695
        %v2540 = vpow.pop %v2539
        %v2541 = vmul.f32 %v2528, 1.442695
        %v2542 = vpow.pop %v2541
        %v2543 = vmul.f32 %v2529, 1.442695
        %v2544 = vpow.pop %v2543
        %v2545 = vmul.f32 %v2530, 1.442695
        %v2546 = vpow.pop %v2545
        %v2547 = vadd.f32 %v2532, 1.0
        %v2548 = vadd.f32 %v2534, 1.0
        %v2549 = vadd.f32 %v2536, 1.0
        %v2550 = vadd.f32 %v2538, 1.0
        %v2551 = vadd.f32 %v2540, 1.0
        %v2552 = vadd.f32 %v2542, 1.0
        %v2553 = vadd.f32 %v2544, 1.0
        %v2554 = vadd.f32 %v2546, 1.0
        %v2555 = vrcp.pop %v2547
        %v2556 = vmul.f32 1.0, %v2555
        %v2557 = vrcp.pop %v2548
        %v2558 = vmul.f32 1.0, %v2557
        %v2559 = vrcp.pop %v2549
        %v2560 = vmul.f32 1.0, %v2559
        %v2561 = vrcp.pop %v2550
        %v2562 = vmul.f32 1.0, %v2561
        %v2563 = vrcp.pop %v2551
        %v2564 = vmul.f32 1.0, %v2563
        %v2565 = vrcp.pop %v2552
        %v2566 = vmul.f32 1.0, %v2565
        %v2567 = vrcp.pop %v2553
        %v2568 = vmul.f32 1.0, %v2567
        %v2569 = vrcp.pop %v2554
        %v2570 = vmul.f32 1.0, %v2569
        %v2571 = vtanh.pop %v2033
        %v2572 = vtanh.pop %v2035
        %v2573 = vtanh.pop %v2037
        %v2574 = vtanh.pop %v2039
        %v2575 = vtanh.pop %v2043
        %v2576 = vtanh.pop %v2045
        %v2577 = vtanh.pop %v2047
        %v2578 = vtanh.pop %v2049
        %v2579 = vmul.f32 %v2556, %v664
        %v2580 = vmul.f32 %v2558, %v665
        %v2581 = vmul.f32 %v2560, %v666
        %v2582 = vmul.f32 %v2562, %v667
        %v2583 = vmul.f32 %v2564, %v668
        %v2584 = vmul.f32 %v2566, %v669
        %v2585 = vmul.f32 %v2568, %v670
        %v2586 = vmul.f32 %v2570, %v671
        %v2587 = vmul.f32 %v2500, %v2571
        %v2588 = vmul.f32 %v2502, %v2572
        %v2589 = vmul.f32 %v2504, %v2573
        %v2590 = vmul.f32 %v2506, %v2574
        %v2591 = vmul.f32 %v2508, %v2575
        %v2592 = vmul.f32 %v2510, %v2576
        %v2593 = vmul.f32 %v2512, %v2577
        %v2594 = vmul.f32 %v2514, %v2578
        %v2595 = vadd.f32 %v2579, %v2587
        %v2596 = vadd.f32 %v2580, %v2588
        %v2597 = vadd.f32 %v2581, %v2589
        %v2598 = vadd.f32 %v2582, %v2590
        %v2599 = vadd.f32 %v2583, %v2591
        %v2600 = vadd.f32 %v2584, %v2592
        %v2601 = vadd.f32 %v2585, %v2593
        %v2602 = vadd.f32 %v2586, %v2594
        %v2603 = vxor.u32 %v2409, 2147483648
        %v2604 = vxor.u32 %v2411, 2147483648
        %v2605 = vxor.u32 %v2413, 2147483648
        %v2606 = vxor.u32 %v2415, 2147483648
        %v2607 = vxor.u32 %v2419, 2147483648
        %v2608 = vxor.u32 %v2421, 2147483648
        %v2609 = vxor.u32 %v2423, 2147483648
        %v2610 = vxor.u32 %v2425, 2147483648
        %v2611 = vmul.f32 %v2603, 1.442695
        %v2612 = vpow.pop %v2611
        %v2613 = vmul.f32 %v2604, 1.442695
        %v2614 = vpow.pop %v2613
        %v2615 = vmul.f32 %v2605, 1.442695
        %v2616 = vpow.pop %v2615
        %v2617 = vmul.f32 %v2606, 1.442695
        %v2618 = vpow.pop %v2617
        %v2619 = vmul.f32 %v2607, 1.442695
        %v2620 = vpow.pop %v2619
        %v2621 = vmul.f32 %v2608, 1.442695
        %v2622 = vpow.pop %v2621
        %v2623 = vmul.f32 %v2609, 1.442695
        %v2624 = vpow.pop %v2623
        %v2625 = vmul.f32 %v2610, 1.442695
        %v2626 = vpow.pop %v2625
        %v2627 = vadd.f32 %v2612, 1.0
        %v2628 = vadd.f32 %v2614, 1.0
        %v2629 = vadd.f32 %v2616, 1.0
        %v2630 = vadd.f32 %v2618, 1.0
        %v2631 = vadd.f32 %v2620, 1.0
        %v2632 = vadd.f32 %v2622, 1.0
        %v2633 = vadd.f32 %v2624, 1.0
        %v2634 = vadd.f32 %v2626, 1.0
        %v2635 = vrcp.pop %v2627
        %v2636 = vmul.f32 1.0, %v2635
        %v2637 = vrcp.pop %v2628
        %v2638 = vmul.f32 1.0, %v2637
        %v2639 = vrcp.pop %v2629
        %v2640 = vmul.f32 1.0, %v2639
        %v2641 = vrcp.pop %v2630
        %v2642 = vmul.f32 1.0, %v2641
        %v2643 = vrcp.pop %v2631
        %v2644 = vmul.f32 1.0, %v2643
        %v2645 = vrcp.pop %v2632
        %v2646 = vmul.f32 1.0, %v2645
        %v2647 = vrcp.pop %v2633
        %v2648 = vmul.f32 1.0, %v2647
        %v2649 = vrcp.pop %v2634
        %v2650 = vmul.f32 1.0, %v2649
        %v2651 = vadd.f32 %v2429, 1.0
        %v2652 = vadd.f32 %v2431, 1.0
        %v2653 = vadd.f32 %v2433, 1.0
        %v2654 = vadd.f32 %v2435, 1.0
        %v2655 = vadd.f32 %v2439, 1.0
        %v2656 = vadd.f32 %v2441, 1.0
        %v2657 = vadd.f32 %v2443, 1.0
        %v2658 = vadd.f32 %v2445, 1.0
        %v2659 = vxor.u32 %v2651, 2147483648
        %v2660 = vxor.u32 %v2652, 2147483648
        %v2661 = vxor.u32 %v2653, 2147483648
        %v2662 = vxor.u32 %v2654, 2147483648
        %v2663 = vxor.u32 %v2655, 2147483648
        %v2664 = vxor.u32 %v2656, 2147483648
        %v2665 = vxor.u32 %v2657, 2147483648
        %v2666 = vxor.u32 %v2658, 2147483648
        %v2667 = vmul.f32 %v2659, 1.442695
        %v2668 = vpow.pop %v2667
        %v2669 = vmul.f32 %v2660, 1.442695
        %v2670 = vpow.pop %v2669
        %v2671 = vmul.f32 %v2661, 1.442695
        %v2672 = vpow.pop %v2671
        %v2673 = vmul.f32 %v2662, 1.442695
        %v2674 = vpow.pop %v2673
        %v2675 = vmul.f32 %v2663, 1.442695
        %v2676 = vpow.pop %v2675
        %v2677 = vmul.f32 %v2664, 1.442695
        %v2678 = vpow.pop %v2677
        %v2679 = vmul.f32 %v2665, 1.442695
        %v2680 = vpow.pop %v2679
        %v2681 = vmul.f32 %v2666, 1.442695
        %v2682 = vpow.pop %v2681
        %v2683 = vadd.f32 %v2668, 1.0
        %v2684 = vadd.f32 %v2670, 1.0
        %v2685 = vadd.f32 %v2672, 1.0
        %v2686 = vadd.f32 %v2674, 1.0
        %v2687 = vadd.f32 %v2676, 1.0
        %v2688 = vadd.f32 %v2678, 1.0
        %v2689 = vadd.f32 %v2680, 1.0
        %v2690 = vadd.f32 %v2682, 1.0
        %v2691 = vrcp.pop %v2683
        %v2692 = vmul.f32 1.0, %v2691
        %v2693 = vrcp.pop %v2684
        %v2694 = vmul.f32 1.0, %v2693
        %v2695 = vrcp.pop %v2685
        %v2696 = vmul.f32 1.0, %v2695
        %v2697 = vrcp.pop %v2686
        %v2698 = vmul.f32 1.0, %v2697
        %v2699 = vrcp.pop %v2687
        %v2700 = vmul.f32 1.0, %v2699
        %v2701 = vrcp.pop %v2688
        %v2702 = vmul.f32 1.0, %v2701
        %v2703 = vrcp.pop %v2689
        %v2704 = vmul.f32 1.0, %v2703
        %v2705 = vrcp.pop %v2690
        %v2706 = vmul.f32 1.0, %v2705
        %v2707 = vtanh.pop %v2449
        %v2708 = vtanh.pop %v2451
        %v2709 = vtanh.pop %v2453
        %v2710 = vtanh.pop %v2455
        %v2711 = vtanh.pop %v2459
        %v2712 = vtanh.pop %v2461
        %v2713 = vtanh.pop %v2463
        %v2714 = vtanh.pop %v2465
        %v2715 = vmul.f32 %v2692, %v644
        %v2716 = vmul.f32 %v2694, %v645
        %v2717 = vmul.f32 %v2696, %v646
        %v2718 = vmul.f32 %v2698, %v647
        %v2719 = vmul.f32 %v2700, %v648
        %v2720 = vmul.f32 %v2702, %v649
        %v2721 = vmul.f32 %v2704, %v650
        %v2722 = vmul.f32 %v2706, %v651
        %v2723 = vmul.f32 %v2636, %v2707
        %v2724 = vmul.f32 %v2638, %v2708
        %v2725 = vmul.f32 %v2640, %v2709
        %v2726 = vmul.f32 %v2642, %v2710
        %v2727 = vmul.f32 %v2644, %v2711
        %v2728 = vmul.f32 %v2646, %v2712
        %v2729 = vmul.f32 %v2648, %v2713
        %v2730 = vmul.f32 %v2650, %v2714
        %v2731 = vadd.f32 %v2715, %v2723
        %v2732 = vadd.f32 %v2716, %v2724
        %v2733 = vadd.f32 %v2717, %v2725
        %v2734 = vadd.f32 %v2718, %v2726
        %v2735 = vadd.f32 %v2719, %v2727
        %v2736 = vadd.f32 %v2720, %v2728
        %v2737 = vadd.f32 %v2721, %v2729
        %v2738 = vadd.f32 %v2722, %v2730
        %2739 = vrot.lane.b32.xlu0 %v2595, 9
        %v2740 = vpop.permute.xlu0 %2739
        %2741 = vrot.lane.b32.xlu0 %v2597, 9
        %v2742 = vpop.permute.xlu0 %2741
        %2743 = vrot.lane.b32.xlu0 %v2599, 9
        %v2744 = vpop.permute.xlu0 %2743
        %2745 = vrot.lane.b32.xlu0 %v2601, 9
        %v2746 = vpop.permute.xlu0 %2745
        %2747 = vrot.lane.b32.xlu0 %v2596, 9
        %v2748 = vpop.permute.xlu0 %2747
        %2749 = vrot.lane.b32.xlu0 %v2598, 9
        %v2750 = vpop.permute.xlu0 %2749
        %2751 = vrot.lane.b32.xlu0 %v2600, 9
        %v2752 = vpop.permute.xlu0 %2751
        %2753 = vrot.lane.b32.xlu0 %v2602, 9
        %v2754 = vpop.permute.xlu0 %2753
        %v2755 = vsel %vm690, %v2740, %v2748
        %v2756 = vsel %vm690, %v2742, %v2750
        %v2757 = vsel %vm690, %v2744, %v2752
        %v2758 = vsel %vm690, %v2746, %v2754
        %v2759 = vsel %vm690, %v2748, %v2740
        %v2760 = vsel %vm690, %v2750, %v2742
        %v2761 = vsel %vm690, %v2752, %v2744
        %v2762 = vsel %vm690, %v2754, %v2746
        %v2763 = vmul.f32 %v2759, %v703
        %v2764 = vmul.f32 %v2755, %v707
        %v2765 = vmul.f32 %v2760, %v703
        %v2766 = vmul.f32 %v2756, %v707
        %v2767 = vmul.f32 %v2761, %v703
        %v2768 = vmul.f32 %v2757, %v707
        %v2769 = vmul.f32 %v2762, %v703
        %v2770 = vmul.f32 %v2758, %v707
        %v2771 = vpack.c.bf16 %v2765, %v2763
        %v2772 = vpack.c.bf16 %v2766, %v2764
        %v2773 = vpack.c.bf16 %v2769, %v2767
        %v2774 = vpack.c.bf16 %v2770, %v2768
        %2775 = vst [vmem:[#allocation6 + $0x360] sm:$0xff] %v2771
        %2776 = vst [vmem:[#allocation6 + $0x368] sm:$0xff] %v2772
        %2777 = vst [vmem:[#allocation6 + $0x370] sm:$0xff] %v2773
        %2778 = vst [vmem:[#allocation6 + $0x378] sm:$0xff] %v2774
        %2779 = vrot.lane.b32.xlu0 %v2731, 9
        %v2780 = vpop.permute.xlu0 %2779
        %2781 = vrot.lane.b32.xlu0 %v2733, 9
        %v2782 = vpop.permute.xlu0 %2781
        %2783 = vrot.lane.b32.xlu0 %v2735, 9
        %v2784 = vpop.permute.xlu0 %2783
        %2785 = vrot.lane.b32.xlu0 %v2737, 9
        %v2786 = vpop.permute.xlu0 %2785
        %2787 = vrot.lane.b32.xlu0 %v2732, 9
        %v2788 = vpop.permute.xlu0 %2787
        %2789 = vrot.lane.b32.xlu0 %v2734, 9
        %v2790 = vpop.permute.xlu0 %2789
        %2791 = vrot.lane.b32.xlu0 %v2736, 9
        %v2792 = vpop.permute.xlu0 %2791
        %2793 = vrot.lane.b32.xlu0 %v2738, 9
        %v2794 = vpop.permute.xlu0 %2793
        %v2795 = vsel %vm690, %v2780, %v2788
        %v2796 = vsel %vm690, %v2782, %v2790
        %v2797 = vsel %vm690, %v2784, %v2792
        %v2798 = vsel %vm690, %v2786, %v2794
        %v2799 = vsel %vm690, %v2788, %v2780
        %v2800 = vsel %vm690, %v2790, %v2782
        %v2801 = vsel %vm690, %v2792, %v2784
        %v2802 = vsel %vm690, %v2794, %v2786
        %v2803 = vmul.f32 %v2799, %v703
        %v2804 = vmul.f32 %v2795, %v707
        %v2805 = vmul.f32 %v2800, %v703
        %v2806 = vmul.f32 %v2796, %v707
        %v2807 = vmul.f32 %v2801, %v703
        %v2808 = vmul.f32 %v2797, %v707
        %v2809 = vmul.f32 %v2802, %v703
        %v2810 = vmul.f32 %v2798, %v707
        %v2811 = vpack.c.bf16 %v2805, %v2803
        %v2812 = vpack.c.bf16 %v2806, %v2804
        %v2813 = vpack.c.bf16 %v2809, %v2807
        %v2814 = vpack.c.bf16 %v2810, %v2808
        %2815 = vst [vmem:[#allocation6 + $0x380] sm:$0xff] %v2811
        %2816 = vst [vmem:[#allocation6 + $0x388] sm:$0xff] %v2812
        %2817 = vst [vmem:[#allocation6 + $0x390] sm:$0xff] %v2813
        %2818 = vst [vmem:[#allocation6 + $0x398] sm:$0xff] %v2814
        %2819 = vrot.lane.b32.xlu0 %v2595, 8
        %v2820 = vpop.permute.xlu0 %2819
        %2821 = vrot.lane.b32.xlu0 %v2597, 8
        %v2822 = vpop.permute.xlu0 %2821
        %2823 = vrot.lane.b32.xlu0 %v2599, 8
        %v2824 = vpop.permute.xlu0 %2823
        %2825 = vrot.lane.b32.xlu0 %v2601, 8
        %v2826 = vpop.permute.xlu0 %2825
        %2827 = vrot.lane.b32.xlu0 %v2596, 8
        %v2828 = vpop.permute.xlu0 %2827
        %2829 = vrot.lane.b32.xlu0 %v2598, 8
        %v2830 = vpop.permute.xlu0 %2829
        %2831 = vrot.lane.b32.xlu0 %v2600, 8
        %v2832 = vpop.permute.xlu0 %2831
        %2833 = vrot.lane.b32.xlu0 %v2602, 8
        %v2834 = vpop.permute.xlu0 %2833
        %v2835 = vsel %vm742, %v2820, %v2828
        %v2836 = vsel %vm742, %v2822, %v2830
        %v2837 = vsel %vm742, %v2824, %v2832
        %v2838 = vsel %vm742, %v2826, %v2834
        %v2839 = vsel %vm742, %v2828, %v2820
        %v2840 = vsel %vm742, %v2830, %v2822
        %v2841 = vsel %vm742, %v2832, %v2824
        %v2842 = vsel %vm742, %v2834, %v2826
        %v2843 = vmul.f32 %v2839, %v755
        %v2844 = vmul.f32 %v2835, %v759
        %v2845 = vmul.f32 %v2840, %v755
        %v2846 = vmul.f32 %v2836, %v759
        %v2847 = vmul.f32 %v2841, %v755
        %v2848 = vmul.f32 %v2837, %v759
        %v2849 = vmul.f32 %v2842, %v755
        %v2850 = vmul.f32 %v2838, %v759
        %v2851 = vpack.c.bf16 %v2845, %v2843
        %v2852 = vpack.c.bf16 %v2846, %v2844
        %v2853 = vpack.c.bf16 %v2849, %v2847
        %v2854 = vpack.c.bf16 %v2850, %v2848
        %2855 = vst [vmem:[#allocation6 + $0x3a0] sm:$0xff] %v2851
        %2856 = vst [vmem:[#allocation6 + $0x3a8] sm:$0xff] %v2852
        %2857 = vst [vmem:[#allocation6 + $0x3b0] sm:$0xff] %v2853
        %2858 = vst [vmem:[#allocation6 + $0x3b8] sm:$0xff] %v2854
        %2859 = vrot.lane.b32.xlu0 %v2731, 8
        %v2860 = vpop.permute.xlu0 %2859
        %2861 = vrot.lane.b32.xlu0 %v2733, 8
        %v2862 = vpop.permute.xlu0 %2861
        %2863 = vrot.lane.b32.xlu0 %v2735, 8
        %v2864 = vpop.permute.xlu0 %2863
        %2865 = vrot.lane.b32.xlu0 %v2737, 8
        %v2866 = vpop.permute.xlu0 %2865
        %2867 = vrot.lane.b32.xlu0 %v2732, 8
        %v2868 = vpop.permute.xlu0 %2867
        %2869 = vrot.lane.b32.xlu0 %v2734, 8
        %v2870 = vpop.permute.xlu0 %2869
        %2871 = vrot.lane.b32.xlu0 %v2736, 8
        %v2872 = vpop.permute.xlu0 %2871
        %2873 = vrot.lane.b32.xlu0 %v2738, 8
        %v2874 = vpop.permute.xlu0 %2873
        %v2875 = vsel %vm742, %v2860, %v2868
        %v2876 = vsel %vm742, %v2862, %v2870
        %v2877 = vsel %vm742, %v2864, %v2872
        %v2878 = vsel %vm742, %v2866, %v2874
        %v2879 = vsel %vm742, %v2868, %v2860
        %v2880 = vsel %vm742, %v2870, %v2862
        %v2881 = vsel %vm742, %v2872, %v2864
        %v2882 = vsel %vm742, %v2874, %v2866
        %v2883 = vmul.f32 %v2879, %v755
        %v2884 = vmul.f32 %v2875, %v759
        %v2885 = vmul.f32 %v2880, %v755
        %v2886 = vmul.f32 %v2876, %v759
        %v2887 = vmul.f32 %v2881, %v755
        %v2888 = vmul.f32 %v2877, %v759
        %v2889 = vmul.f32 %v2882, %v755
        %v2890 = vmul.f32 %v2878, %v759
        %v2891 = vpack.c.bf16 %v2885, %v2883
        %v2892 = vpack.c.bf16 %v2886, %v2884
        %v2893 = vpack.c.bf16 %v2889, %v2887
        %v2894 = vpack.c.bf16 %v2890, %v2888
        %2895 = vst [vmem:[#allocation6 + $0x3c0] sm:$0xff] %v2891
        %2896 = vst [vmem:[#allocation6 + $0x3c8] sm:$0xff] %v2892
        %2897 = vst [vmem:[#allocation6 + $0x3d0] sm:$0xff] %v2893
        %2898 = vst [vmem:[#allocation6 + $0x3d8] sm:$0xff] %v2894
        %2899 = vrot.lane.b32.xlu0 %v2595, 7
        %v2900 = vpop.permute.xlu0 %2899
        %2901 = vrot.lane.b32.xlu0 %v2597, 7
        %v2902 = vpop.permute.xlu0 %2901
        %2903 = vrot.lane.b32.xlu0 %v2599, 7
        %v2904 = vpop.permute.xlu0 %2903
        %2905 = vrot.lane.b32.xlu0 %v2601, 7
        %v2906 = vpop.permute.xlu0 %2905
        %2907 = vrot.lane.b32.xlu0 %v2596, 7
        %v2908 = vpop.permute.xlu0 %2907
        %2909 = vrot.lane.b32.xlu0 %v2598, 7
        %v2910 = vpop.permute.xlu0 %2909
        %2911 = vrot.lane.b32.xlu0 %v2600, 7
        %v2912 = vpop.permute.xlu0 %2911
        %2913 = vrot.lane.b32.xlu0 %v2602, 7
        %v2914 = vpop.permute.xlu0 %2913
        %v2915 = vsel %vm794, %v2900, %v2908
        %v2916 = vsel %vm794, %v2902, %v2910
        %v2917 = vsel %vm794, %v2904, %v2912
        %v2918 = vsel %vm794, %v2906, %v2914
        %v2919 = vsel %vm794, %v2908, %v2900
        %v2920 = vsel %vm794, %v2910, %v2902
        %v2921 = vsel %vm794, %v2912, %v2904
        %v2922 = vsel %vm794, %v2914, %v2906
        %v2923 = vmul.f32 %v2919, %v807
        %v2924 = vmul.f32 %v2915, %v811
        %v2925 = vmul.f32 %v2920, %v807
        %v2926 = vmul.f32 %v2916, %v811
        %v2927 = vmul.f32 %v2921, %v807
        %v2928 = vmul.f32 %v2917, %v811
        %v2929 = vmul.f32 %v2922, %v807
        %v2930 = vmul.f32 %v2918, %v811
        %v2931 = vpack.c.bf16 %v2925, %v2923
        %v2932 = vpack.c.bf16 %v2926, %v2924
        %v2933 = vpack.c.bf16 %v2929, %v2927
        %v2934 = vpack.c.bf16 %v2930, %v2928
        %2935 = vst [vmem:[#allocation6 + $0x3e0] sm:$0xff] %v2931
        %2936 = vst [vmem:[#allocation6 + $0x3e8] sm:$0xff] %v2932
        %2937 = vst [vmem:[#allocation6 + $0x3f0] sm:$0xff] %v2933
        %2938 = vst [vmem:[#allocation6 + $0x3f8] sm:$0xff] %v2934
        %2939 = vrot.lane.b32.xlu0 %v2731, 7
        %v2940 = vpop.permute.xlu0 %2939
        %2941 = vrot.lane.b32.xlu0 %v2733, 7
        %v2942 = vpop.permute.xlu0 %2941
        %2943 = vrot.lane.b32.xlu0 %v2735, 7
        %v2944 = vpop.permute.xlu0 %2943
        %2945 = vrot.lane.b32.xlu0 %v2737, 7
        %v2946 = vpop.permute.xlu0 %2945
        %2947 = vrot.lane.b32.xlu0 %v2732, 7
        %v2948 = vpop.permute.xlu0 %2947
        %2949 = vrot.lane.b32.xlu0 %v2734, 7
        %v2950 = vpop.permute.xlu0 %2949
        %2951 = vrot.lane.b32.xlu0 %v2736, 7
        %v2952 = vpop.permute.xlu0 %2951
        %2953 = vrot.lane.b32.xlu0 %v2738, 7
        %v2954 = vpop.permute.xlu0 %2953
        %v2955 = vsel %vm794, %v2940, %v2948
        %v2956 = vsel %vm794, %v2942, %v2950
        %v2957 = vsel %vm794, %v2944, %v2952
        %v2958 = vsel %vm794, %v2946, %v2954
        %v2959 = vsel %vm794, %v2948, %v2940
        %v2960 = vsel %vm794, %v2950, %v2942
        %v2961 = vsel %vm794, %v2952, %v2944
        %v2962 = vsel %vm794, %v2954, %v2946
        %v2963 = vmul.f32 %v2959, %v807
        %v2964 = vmul.f32 %v2955, %v811
        %v2965 = vmul.f32 %v2960, %v807
        %v2966 = vmul.f32 %v2956, %v811
        %v2967 = vmul.f32 %v2961, %v807
        %v2968 = vmul.f32 %v2957, %v811
        %v2969 = vmul.f32 %v2962, %v807
        %v2970 = vmul.f32 %v2958, %v811
        %v2971 = vpack.c.bf16 %v2965, %v2963
        %v2972 = vpack.c.bf16 %v2966, %v2964
        %v2973 = vpack.c.bf16 %v2969, %v2967
        %v2974 = vpack.c.bf16 %v2970, %v2968
        %2975 = vst [vmem:[#allocation6 + $0x400] sm:$0xff] %v2971
        %2976 = vst [vmem:[#allocation6 + $0x408] sm:$0xff] %v2972
        %2977 = vst [vmem:[#allocation6 + $0x410] sm:$0xff] %v2973
        %2978 = vst [vmem:[#allocation6 + $0x418] sm:$0xff] %v2974
        %2979 = vrot.lane.b32.xlu0 %v2595, 1
        %v2980 = vpop.permute.xlu0 %2979
        %2981 = vrot.lane.b32.xlu0 %v2597, 1
        %v2982 = vpop.permute.xlu0 %2981
        %2983 = vrot.lane.b32.xlu0 %v2599, 1
        %v2984 = vpop.permute.xlu0 %2983
        %2985 = vrot.lane.b32.xlu0 %v2601, 1
        %v2986 = vpop.permute.xlu0 %2985
        %2987 = vrot.lane.b32.xlu0 %v2596, 1
        %v2988 = vpop.permute.xlu0 %2987
        %2989 = vrot.lane.b32.xlu0 %v2598, 1
        %v2990 = vpop.permute.xlu0 %2989
        %2991 = vrot.lane.b32.xlu0 %v2600, 1
        %v2992 = vpop.permute.xlu0 %2991
        %2993 = vrot.lane.b32.xlu0 %v2602, 1
        %v2994 = vpop.permute.xlu0 %2993
        %v2995 = vsel %vm846, %v2980, %v2988
        %v2996 = vsel %vm846, %v2982, %v2990
        %v2997 = vsel %vm846, %v2984, %v2992
        %v2998 = vsel %vm846, %v2986, %v2994
        %v2999 = vsel %vm846, %v2988, %v2980
        %v3000 = vsel %vm846, %v2990, %v2982
        %v3001 = vsel %vm846, %v2992, %v2984
        %v3002 = vsel %vm846, %v2994, %v2986
        %v3003 = vmul.f32 %v2999, %v859
        %v3004 = vmul.f32 %v2995, %v863
        %v3005 = vmul.f32 %v3000, %v859
        %v3006 = vmul.f32 %v2996, %v863
        %v3007 = vmul.f32 %v3001, %v859
        %v3008 = vmul.f32 %v2997, %v863
        %v3009 = vmul.f32 %v3002, %v859
        %v3010 = vmul.f32 %v2998, %v863
        %v3011 = vpack.c.bf16 %v3005, %v3003
        %v3012 = vpack.c.bf16 %v3006, %v3004
        %v3013 = vpack.c.bf16 %v3009, %v3007
        %v3014 = vpack.c.bf16 %v3010, %v3008
        %3015 = vst [vmem:[#allocation6 + $0x420] sm:$0xff] %v3011
        %3016 = vst [vmem:[#allocation6 + $0x428] sm:$0xff] %v3012
        %3017 = vst [vmem:[#allocation6 + $0x430] sm:$0xff] %v3013
        %3018 = vst [vmem:[#allocation6 + $0x438] sm:$0xff] %v3014
        %3019 = vrot.lane.b32.xlu0 %v2731, 1
        %v3020 = vpop.permute.xlu0 %3019
        %3021 = vrot.lane.b32.xlu0 %v2733, 1
        %v3022 = vpop.permute.xlu0 %3021
        %3023 = vrot.lane.b32.xlu0 %v2735, 1
        %v3024 = vpop.permute.xlu0 %3023
        %3025 = vrot.lane.b32.xlu0 %v2737, 1
        %v3026 = vpop.permute.xlu0 %3025
        %3027 = vrot.lane.b32.xlu0 %v2732, 1
        %v3028 = vpop.permute.xlu0 %3027
        %3029 = vrot.lane.b32.xlu0 %v2734, 1
        %v3030 = vpop.permute.xlu0 %3029
        %3031 = vrot.lane.b32.xlu0 %v2736, 1
        %v3032 = vpop.permute.xlu0 %3031
        %3033 = vrot.lane.b32.xlu0 %v2738, 1
        %v3034 = vpop.permute.xlu0 %3033
        %v3035 = vsel %vm846, %v3020, %v3028
        %v3036 = vsel %vm846, %v3022, %v3030
        %v3037 = vsel %vm846, %v3024, %v3032
        %v3038 = vsel %vm846, %v3026, %v3034
        %v3039 = vsel %vm846, %v3028, %v3020
        %v3040 = vsel %vm846, %v3030, %v3022
        %v3041 = vsel %vm846, %v3032, %v3024
        %v3042 = vsel %vm846, %v3034, %v3026
        %v3043 = vmul.f32 %v3039, %v859
        %v3044 = vmul.f32 %v3035, %v863
        %v3045 = vmul.f32 %v3040, %v859
        %v3046 = vmul.f32 %v3036, %v863
        %v3047 = vmul.f32 %v3041, %v859
        %v3048 = vmul.f32 %v3037, %v863
        %v3049 = vmul.f32 %v3042, %v859
        %v3050 = vmul.f32 %v3038, %v863
        %v3051 = vpack.c.bf16 %v3045, %v3043
        %v3052 = vpack.c.bf16 %v3046, %v3044
        %v3053 = vpack.c.bf16 %v3049, %v3047
        %v3054 = vpack.c.bf16 %v3050, %v3048
        %3055 = vst [vmem:[#allocation6 + $0x440] sm:$0xff] %v3051
        %3056 = vst [vmem:[#allocation6 + $0x448] sm:$0xff] %v3052
        %3057 = vst [vmem:[#allocation6 + $0x450] sm:$0xff] %v3053
        %3058 = vst [vmem:[#allocation6 + $0x458] sm:$0xff] %v3054
        %v3059 = vpack.c.bf16 %v2597, %v2595
        %v3060 = vpack.c.bf16 %v2598, %v2596
        %v3061 = vpack.c.bf16 %v2601, %v2599
        %v3062 = vpack.c.bf16 %v2602, %v2600
        %3063 = vst [vmem:[#allocation6 + $0x460] sm:$0xff] %v3059
        %3064 = vst [vmem:[#allocation6 + $0x468] sm:$0xff] %v3060
        %3065 = vst [vmem:[#allocation6 + $0x470] sm:$0xff] %v3061
        %3066 = vst [vmem:[#allocation6 + $0x478] sm:$0xff] %v3062
        %v3067 = vpack.c.bf16 %v2733, %v2731
        %v3068 = vpack.c.bf16 %v2734, %v2732
        %v3069 = vpack.c.bf16 %v2737, %v2735
        %v3070 = vpack.c.bf16 %v2738, %v2736
        %3071 = vst [vmem:[#allocation6 + $0x480] sm:$0xff] %v3067
        %3072 = vst [vmem:[#allocation6 + $0x488] sm:$0xff] %v3068
        %3073 = vst [vmem:[#allocation6 + $0x490] sm:$0xff] %v3069
        %3074 = vst [vmem:[#allocation6 + $0x498] sm:$0xff] %v3070
        %3075 = vrot.lane.b32.xlu0 %v2595, 127
        %v3076 = vpop.permute.xlu0 %3075
        %3077 = vrot.lane.b32.xlu0 %v2597, 127
        %v3078 = vpop.permute.xlu0 %3077
        %3079 = vrot.lane.b32.xlu0 %v2599, 127
        %v3080 = vpop.permute.xlu0 %3079
        %3081 = vrot.lane.b32.xlu0 %v2601, 127
        %v3082 = vpop.permute.xlu0 %3081
        %3083 = vrot.lane.b32.xlu0 %v2596, 127
        %v3084 = vpop.permute.xlu0 %3083
        %3085 = vrot.lane.b32.xlu0 %v2598, 127
        %v3086 = vpop.permute.xlu0 %3085
        %3087 = vrot.lane.b32.xlu0 %v2600, 127
        %v3088 = vpop.permute.xlu0 %3087
        %3089 = vrot.lane.b32.xlu0 %v2602, 127
        %v3090 = vpop.permute.xlu0 %3089
        %v3091 = vsel %vm902, %v3076, %v3084
        %v3092 = vsel %vm902, %v3078, %v3086
        %v3093 = vsel %vm902, %v3080, %v3088
        %v3094 = vsel %vm902, %v3082, %v3090
        %v3095 = vsel %vm902, %v3084, %v3076
        %v3096 = vsel %vm902, %v3086, %v3078
        %v3097 = vsel %vm902, %v3088, %v3080
        %v3098 = vsel %vm902, %v3090, %v3082
        %v3099 = vmul.f32 %v3091, %v915
        %v3100 = vmul.f32 %v3095, %v919
        %v3101 = vmul.f32 %v3092, %v915
        %v3102 = vmul.f32 %v3096, %v919
        %v3103 = vmul.f32 %v3093, %v915
        %v3104 = vmul.f32 %v3097, %v919
        %v3105 = vmul.f32 %v3094, %v915
        %v3106 = vmul.f32 %v3098, %v919
        %v3107 = vpack.c.bf16 %v3101, %v3099
        %v3108 = vpack.c.bf16 %v3102, %v3100
        %v3109 = vpack.c.bf16 %v3105, %v3103
        %v3110 = vpack.c.bf16 %v3106, %v3104
        %3111 = vst [vmem:[#allocation6 + $0x4a0] sm:$0xff] %v3107
        %3112 = vst [vmem:[#allocation6 + $0x4a8] sm:$0xff] %v3108
        %3113 = vst [vmem:[#allocation6 + $0x4b0] sm:$0xff] %v3109
        %3114 = vst [vmem:[#allocation6 + $0x4b8] sm:$0xff] %v3110
        %3115 = vrot.lane.b32.xlu0 %v2731, 127
        %v3116 = vpop.permute.xlu0 %3115
        %3117 = vrot.lane.b32.xlu0 %v2733, 127
        %v3118 = vpop.permute.xlu0 %3117
        %3119 = vrot.lane.b32.xlu0 %v2735, 127
        %v3120 = vpop.permute.xlu0 %3119
        %3121 = vrot.lane.b32.xlu0 %v2737, 127
        %v3122 = vpop.permute.xlu0 %3121
        %3123 = vrot.lane.b32.xlu0 %v2732, 127
        %v3124 = vpop.permute.xlu0 %3123
        %3125 = vrot.lane.b32.xlu0 %v2734, 127
        %v3126 = vpop.permute.xlu0 %3125
        %3127 = vrot.lane.b32.xlu0 %v2736, 127
        %v3128 = vpop.permute.xlu0 %3127
        %3129 = vrot.lane.b32.xlu0 %v2738, 127
        %v3130 = vpop.permute.xlu0 %3129
        %v3131 = vsel %vm902, %v3116, %v3124
        %v3132 = vsel %vm902, %v3118, %v3126
        %v3133 = vsel %vm902, %v3120, %v3128
        %v3134 = vsel %vm902, %v3122, %v3130
        %v3135 = vsel %vm902, %v3124, %v3116
        %v3136 = vsel %vm902, %v3126, %v3118
        %v3137 = vsel %vm902, %v3128, %v3120
        %v3138 = vsel %vm902, %v3130, %v3122
        %v3139 = vmul.f32 %v3131, %v915
        %v3140 = vmul.f32 %v3135, %v919
        %v3141 = vmul.f32 %v3132, %v915
        %v3142 = vmul.f32 %v3136, %v919
        %v3143 = vmul.f32 %v3133, %v915
        %v3144 = vmul.f32 %v3137, %v919
        %v3145 = vmul.f32 %v3134, %v915
        %v3146 = vmul.f32 %v3138, %v919
        %v3147 = vpack.c.bf16 %v3141, %v3139
        %v3148 = vpack.c.bf16 %v3142, %v3140
        %v3149 = vpack.c.bf16 %v3145, %v3143
        %v3150 = vpack.c.bf16 %v3146, %v3144
        %3151 = vst [vmem:[#allocation6 + $0x4c0] sm:$0xff] %v3147
        %3152 = vst [vmem:[#allocation6 + $0x4c8] sm:$0xff] %v3148
        %3153 = vst [vmem:[#allocation6 + $0x4d0] sm:$0xff] %v3149
        %3154 = vst [vmem:[#allocation6 + $0x4d8] sm:$0xff] %v3150
        %3155 = vrot.lane.b32.xlu0 %v2595, 121
        %v3156 = vpop.permute.xlu0 %3155
        %3157 = vrot.lane.b32.xlu0 %v2597, 121
        %v3158 = vpop.permute.xlu0 %3157
        %3159 = vrot.lane.b32.xlu0 %v2599, 121
        %v3160 = vpop.permute.xlu0 %3159
        %3161 = vrot.lane.b32.xlu0 %v2601, 121
        %v3162 = vpop.permute.xlu0 %3161
        %3163 = vrot.lane.b32.xlu0 %v2596, 121
        %v3164 = vpop.permute.xlu0 %3163
        %3165 = vrot.lane.b32.xlu0 %v2598, 121
        %v3166 = vpop.permute.xlu0 %3165
        %3167 = vrot.lane.b32.xlu0 %v2600, 121
        %v3168 = vpop.permute.xlu0 %3167
        %3169 = vrot.lane.b32.xlu0 %v2602, 121
        %v3170 = vpop.permute.xlu0 %3169
        %v3171 = vsel %vm954, %v3156, %v3164
        %v3172 = vsel %vm954, %v3158, %v3166
        %v3173 = vsel %vm954, %v3160, %v3168
        %v3174 = vsel %vm954, %v3162, %v3170
        %v3175 = vsel %vm954, %v3164, %v3156
        %v3176 = vsel %vm954, %v3166, %v3158
        %v3177 = vsel %vm954, %v3168, %v3160
        %v3178 = vsel %vm954, %v3170, %v3162
        %v3179 = vmul.f32 %v3171, %v967
        %v3180 = vmul.f32 %v3175, %v971
        %v3181 = vmul.f32 %v3172, %v967
        %v3182 = vmul.f32 %v3176, %v971
        %v3183 = vmul.f32 %v3173, %v967
        %v3184 = vmul.f32 %v3177, %v971
        %v3185 = vmul.f32 %v3174, %v967
        %v3186 = vmul.f32 %v3178, %v971
        %v3187 = vpack.c.bf16 %v3181, %v3179
        %v3188 = vpack.c.bf16 %v3182, %v3180
        %v3189 = vpack.c.bf16 %v3185, %v3183
        %v3190 = vpack.c.bf16 %v3186, %v3184
        %3191 = vst [vmem:[#allocation6 + $0x4e0] sm:$0xff] %v3187
        %3192 = vst [vmem:[#allocation6 + $0x4e8] sm:$0xff] %v3188
        %3193 = vst [vmem:[#allocation6 + $0x4f0] sm:$0xff] %v3189
        %3194 = vst [vmem:[#allocation6 + $0x4f8] sm:$0xff] %v3190
        %3195 = vrot.lane.b32.xlu0 %v2731, 121
        %v3196 = vpop.permute.xlu0 %3195
        %3197 = vrot.lane.b32.xlu0 %v2733, 121
        %v3198 = vpop.permute.xlu0 %3197
        %3199 = vrot.lane.b32.xlu0 %v2735, 121
        %v3200 = vpop.permute.xlu0 %3199
        %3201 = vrot.lane.b32.xlu0 %v2737, 121
        %v3202 = vpop.permute.xlu0 %3201
        %3203 = vrot.lane.b32.xlu0 %v2732, 121
        %v3204 = vpop.permute.xlu0 %3203
        %3205 = vrot.lane.b32.xlu0 %v2734, 121
        %v3206 = vpop.permute.xlu0 %3205
        %3207 = vrot.lane.b32.xlu0 %v2736, 121
        %v3208 = vpop.permute.xlu0 %3207
        %3209 = vrot.lane.b32.xlu0 %v2738, 121
        %v3210 = vpop.permute.xlu0 %3209
        %v3211 = vsel %vm954, %v3196, %v3204
        %v3212 = vsel %vm954, %v3198, %v3206
        %v3213 = vsel %vm954, %v3200, %v3208
        %v3214 = vsel %vm954, %v3202, %v3210
        %v3215 = vsel %vm954, %v3204, %v3196
        %v3216 = vsel %vm954, %v3206, %v3198
        %v3217 = vsel %vm954, %v3208, %v3200
        %v3218 = vsel %vm954, %v3210, %v3202
        %v3219 = vmul.f32 %v3211, %v967
        %v3220 = vmul.f32 %v3215, %v971
        %v3221 = vmul.f32 %v3212, %v967
        %v3222 = vmul.f32 %v3216, %v971
        %v3223 = vmul.f32 %v3213, %v967
        %v3224 = vmul.f32 %v3217, %v971
        %v3225 = vmul.f32 %v3214, %v967
        %v3226 = vmul.f32 %v3218, %v971
        %v3227 = vpack.c.bf16 %v3221, %v3219
        %v3228 = vpack.c.bf16 %v3222, %v3220
        %v3229 = vpack.c.bf16 %v3225, %v3223
        %v3230 = vpack.c.bf16 %v3226, %v3224
        %3231 = vst [vmem:[#allocation6 + $0x500] sm:$0xff] %v3227
        %3232 = vst [vmem:[#allocation6 + $0x508] sm:$0xff] %v3228
        %3233 = vst [vmem:[#allocation6 + $0x510] sm:$0xff] %v3229
        %3234 = vst [vmem:[#allocation6 + $0x518] sm:$0xff] %v3230
        %3235 = vrot.lane.b32.xlu0 %v2595, 120
        %v3236 = vpop.permute.xlu0 %3235
        %3237 = vrot.lane.b32.xlu0 %v2597, 120
        %v3238 = vpop.permute.xlu0 %3237
        %3239 = vrot.lane.b32.xlu0 %v2599, 120
        %v3240 = vpop.permute.xlu0 %3239
        %3241 = vrot.lane.b32.xlu0 %v2601, 120
        %v3242 = vpop.permute.xlu0 %3241
        %3243 = vrot.lane.b32.xlu0 %v2596, 120
        %v3244 = vpop.permute.xlu0 %3243
        %3245 = vrot.lane.b32.xlu0 %v2598, 120
        %v3246 = vpop.permute.xlu0 %3245
        %3247 = vrot.lane.b32.xlu0 %v2600, 120
        %v3248 = vpop.permute.xlu0 %3247
        %3249 = vrot.lane.b32.xlu0 %v2602, 120
        %v3250 = vpop.permute.xlu0 %3249
        %v3251 = vsel %vm1006, %v3236, %v3244
        %v3252 = vsel %vm1006, %v3238, %v3246
        %v3253 = vsel %vm1006, %v3240, %v3248
        %v3254 = vsel %vm1006, %v3242, %v3250
        %v3255 = vsel %vm1006, %v3244, %v3236
        %v3256 = vsel %vm1006, %v3246, %v3238
        %v3257 = vsel %vm1006, %v3248, %v3240
        %v3258 = vsel %vm1006, %v3250, %v3242
        %v3259 = vmul.f32 %v3251, %v1019
        %v3260 = vmul.f32 %v3255, %v1023
        %v3261 = vmul.f32 %v3252, %v1019
        %v3262 = vmul.f32 %v3256, %v1023
        %v3263 = vmul.f32 %v3253, %v1019
        %v3264 = vmul.f32 %v3257, %v1023
        %v3265 = vmul.f32 %v3254, %v1019
        %v3266 = vmul.f32 %v3258, %v1023
        %v3267 = vpack.c.bf16 %v3261, %v3259
        %v3268 = vpack.c.bf16 %v3262, %v3260
        %v3269 = vpack.c.bf16 %v3265, %v3263
        %v3270 = vpack.c.bf16 %v3266, %v3264
        %3271 = vst [vmem:[#allocation6 + $0x520] sm:$0xff] %v3267
        %3272 = vst [vmem:[#allocation6 + $0x528] sm:$0xff] %v3268
        %3273 = vst [vmem:[#allocation6 + $0x530] sm:$0xff] %v3269
        %3274 = vst [vmem:[#allocation6 + $0x538] sm:$0xff] %v3270
        %3275 = vrot.lane.b32.xlu0 %v2731, 120
        %v3276 = vpop.permute.xlu0 %3275
        %3277 = vrot.lane.b32.xlu0 %v2733, 120
        %v3278 = vpop.permute.xlu0 %3277
        %3279 = vrot.lane.b32.xlu0 %v2735, 120
        %v3280 = vpop.permute.xlu0 %3279
        %3281 = vrot.lane.b32.xlu0 %v2737, 120
        %v3282 = vpop.permute.xlu0 %3281
        %3283 = vrot.lane.b32.xlu0 %v2732, 120
        %v3284 = vpop.permute.xlu0 %3283
        %3285 = vrot.lane.b32.xlu0 %v2734, 120
        %v3286 = vpop.permute.xlu0 %3285
        %3287 = vrot.lane.b32.xlu0 %v2736, 120
        %v3288 = vpop.permute.xlu0 %3287
        %3289 = vrot.lane.b32.xlu0 %v2738, 120
        %v3290 = vpop.permute.xlu0 %3289
        %v3291 = vsel %vm1006, %v3276, %v3284
        %v3292 = vsel %vm1006, %v3278, %v3286
        %v3293 = vsel %vm1006, %v3280, %v3288
        %v3294 = vsel %vm1006, %v3282, %v3290
        %v3295 = vsel %vm1006, %v3284, %v3276
        %v3296 = vsel %vm1006, %v3286, %v3278
        %v3297 = vsel %vm1006, %v3288, %v3280
        %v3298 = vsel %vm1006, %v3290, %v3282
        %v3299 = vmul.f32 %v3291, %v1019
        %v3300 = vmul.f32 %v3295, %v1023
        %v3301 = vmul.f32 %v3292, %v1019
        %v3302 = vmul.f32 %v3296, %v1023
        %v3303 = vmul.f32 %v3293, %v1019
        %v3304 = vmul.f32 %v3297, %v1023
        %v3305 = vmul.f32 %v3294, %v1019
        %v3306 = vmul.f32 %v3298, %v1023
        %v3307 = vpack.c.bf16 %v3301, %v3299
        %v3308 = vpack.c.bf16 %v3302, %v3300
        %v3309 = vpack.c.bf16 %v3305, %v3303
        %v3310 = vpack.c.bf16 %v3306, %v3304
        %3311 = vst [vmem:[#allocation6 + $0x540] sm:$0xff] %v3307
        %3312 = vst [vmem:[#allocation6 + $0x548] sm:$0xff] %v3308
        %3313 = vst [vmem:[#allocation6 + $0x550] sm:$0xff] %v3309
        %3314 = vst [vmem:[#allocation6 + $0x558] sm:$0xff] %v3310
        %3315 = vrot.lane.b32.xlu0 %v2595, 119
        %v3316 = vpop.permute.xlu0 %3315
        %3317 = vrot.lane.b32.xlu0 %v2597, 119
        %v3318 = vpop.permute.xlu0 %3317
        %3319 = vrot.lane.b32.xlu0 %v2599, 119
        %v3320 = vpop.permute.xlu0 %3319
        %3321 = vrot.lane.b32.xlu0 %v2601, 119
        %v3322 = vpop.permute.xlu0 %3321
        %3323 = vrot.lane.b32.xlu0 %v2596, 119
        %v3324 = vpop.permute.xlu0 %3323
        %3325 = vrot.lane.b32.xlu0 %v2598, 119
        %v3326 = vpop.permute.xlu0 %3325
        %3327 = vrot.lane.b32.xlu0 %v2600, 119
        %v3328 = vpop.permute.xlu0 %3327
        %3329 = vrot.lane.b32.xlu0 %v2602, 119
        %v3330 = vpop.permute.xlu0 %3329
        %v3331 = vsel %vm1058, %v3316, %v3324
        %v3332 = vsel %vm1058, %v3318, %v3326
        %v3333 = vsel %vm1058, %v3320, %v3328
        %v3334 = vsel %vm1058, %v3322, %v3330
        %v3335 = vsel %vm1058, %v3324, %v3316
        %v3336 = vsel %vm1058, %v3326, %v3318
        %v3337 = vsel %vm1058, %v3328, %v3320
        %v3338 = vsel %vm1058, %v3330, %v3322
        %v3339 = vmul.f32 %v3331, %v1071
        %v3340 = vmul.f32 %v3335, %v1075
        %v3341 = vmul.f32 %v3332, %v1071
        %v3342 = vmul.f32 %v3336, %v1075
        %v3343 = vmul.f32 %v3333, %v1071
        %v3344 = vmul.f32 %v3337, %v1075
        %v3345 = vmul.f32 %v3334, %v1071
        %v3346 = vmul.f32 %v3338, %v1075
        %v3347 = vpack.c.bf16 %v3341, %v3339
        %v3348 = vpack.c.bf16 %v3342, %v3340
        %v3349 = vpack.c.bf16 %v3345, %v3343
        %v3350 = vpack.c.bf16 %v3346, %v3344
        %3351 = vst [vmem:[#allocation6 + $0x560] sm:$0xff] %v3347
        %3352 = vst [vmem:[#allocation6 + $0x568] sm:$0xff] %v3348
        %3353 = vst [vmem:[#allocation6 + $0x570] sm:$0xff] %v3349
        %3354 = vst [vmem:[#allocation6 + $0x578] sm:$0xff] %v3350
        %3355 = vrot.lane.b32.xlu0 %v2731, 119
        %v3356 = vpop.permute.xlu0 %3355
        %3357 = vrot.lane.b32.xlu0 %v2733, 119
        %v3358 = vpop.permute.xlu0 %3357
        %3359 = vrot.lane.b32.xlu0 %v2735, 119
        %v3360 = vpop.permute.xlu0 %3359
        %3361 = vrot.lane.b32.xlu0 %v2737, 119
        %v3362 = vpop.permute.xlu0 %3361
        %3363 = vrot.lane.b32.xlu0 %v2732, 119
        %v3364 = vpop.permute.xlu0 %3363
        %3365 = vrot.lane.b32.xlu0 %v2734, 119
        %v3366 = vpop.permute.xlu0 %3365
        %3367 = vrot.lane.b32.xlu0 %v2736, 119
        %v3368 = vpop.permute.xlu0 %3367
        %3369 = vrot.lane.b32.xlu0 %v2738, 119
        %v3370 = vpop.permute.xlu0 %3369
        %v3371 = vsel %vm1058, %v3356, %v3364
        %v3372 = vsel %vm1058, %v3358, %v3366
        %v3373 = vsel %vm1058, %v3360, %v3368
        %v3374 = vsel %vm1058, %v3362, %v3370
        %v3375 = vsel %vm1058, %v3364, %v3356
        %v3376 = vsel %vm1058, %v3366, %v3358
        %v3377 = vsel %vm1058, %v3368, %v3360
        %v3378 = vsel %vm1058, %v3370, %v3362
        %v3379 = vmul.f32 %v3371, %v1071
        %v3380 = vmul.f32 %v3375, %v1075
        %v3381 = vmul.f32 %v3372, %v1071
        %v3382 = vmul.f32 %v3376, %v1075
        %v3383 = vmul.f32 %v3373, %v1071
        %v3384 = vmul.f32 %v3377, %v1075
        %v3385 = vmul.f32 %v3374, %v1071
        %v3386 = vmul.f32 %v3378, %v1075
        %v3387 = vpack.c.bf16 %v3381, %v3379
        %v3388 = vpack.c.bf16 %v3382, %v3380
        %v3389 = vpack.c.bf16 %v3385, %v3383
        %v3390 = vpack.c.bf16 %v3386, %v3384
        %3391 = vst [vmem:[#allocation6 + $0x580] sm:$0xff] %v3387
        %3392 = vst [vmem:[#allocation6 + $0x588] sm:$0xff] %v3388
        %3393 = vst [vmem:[#allocation6 + $0x590] sm:$0xff] %v3389
        %3394 = vst [vmem:[#allocation6 + $0x598] sm:$0xff] %v3390
        %v3395 = vld [vmem:[%s6] sm:$0xff]
        %v3396 = vld [vmem:[%s6 + $0x8] sm:$0xff]
        %v3397 = vld [vmem:[%s6 + $0x10] sm:$0xf]
        %v3398 = vld [vmem:[%s6 + $0x14] sm:$0xff]
        %v3399 = vld [vmem:[%s6 + $0x1c] sm:$0xff]
        %v3400 = vld [vmem:[%s6 + $0x24] sm:$0xf]
        %v3401 = vld [vmem:[%s6 + $0x28] sm:$0xff]
        %v3402 = vld [vmem:[%s6 + $0x30] sm:$0xff]
        %v3403 = vld [vmem:[%s6 + $0x38] sm:$0xf]
        %v3404 = vld [vmem:[%s6 + $0x3c] sm:$0xff]
        %v3405 = vld [vmem:[%s6 + $0x44] sm:$0xff]
        %v3406 = vld [vmem:[%s6 + $0x4c] sm:$0xf]
        %v3407 = vld [vmem:[#allocation6 + $0x360] sm:$0xff]
        %v3408 = vld [vmem:[#allocation6 + $0x368] sm:$0xff]
        %v3409 = vld [vmem:[#allocation6 + $0x370] sm:$0xff]
        %v3410 = vld [vmem:[#allocation6 + $0x378] sm:$0xff]
        %v3411 = vld [vmem:[#allocation6 + $0x380] sm:$0xff]
        %v3412 = vld [vmem:[#allocation6 + $0x388] sm:$0xff]
        %v3413 = vld [vmem:[#allocation6 + $0x390] sm:$0xff]
        %v3414 = vld [vmem:[#allocation6 + $0x398] sm:$0xff]
        %v3415 = vld [vmem:[#allocation6 + $0x3a0] sm:$0xff]
        %v3416 = vld [vmem:[#allocation6 + $0x3a8] sm:$0xff]
        %v3417 = vld [vmem:[#allocation6 + $0x3b0] sm:$0xff]
        %v3418 = vld [vmem:[#allocation6 + $0x3b8] sm:$0xff]
        %v3419 = vld [vmem:[#allocation6 + $0x3c0] sm:$0xff]
        %v3420 = vld [vmem:[#allocation6 + $0x3c8] sm:$0xff]
        %v3421 = vld [vmem:[#allocation6 + $0x3d0] sm:$0xff]
        %v3422 = vld [vmem:[#allocation6 + $0x3d8] sm:$0xff]
        %v3423 = vld [vmem:[#allocation6 + $0x3e0] sm:$0xff]
        %v3424 = vld [vmem:[#allocation6 + $0x3e8] sm:$0xff]
        %v3425 = vld [vmem:[#allocation6 + $0x3f0] sm:$0xff]
        %v3426 = vld [vmem:[#allocation6 + $0x3f8] sm:$0xff]
        %v3427 = vld [vmem:[#allocation6 + $0x400] sm:$0xff]
        %v3428 = vld [vmem:[#allocation6 + $0x408] sm:$0xff]
        %v3429 = vld [vmem:[#allocation6 + $0x410] sm:$0xff]
        %v3430 = vld [vmem:[#allocation6 + $0x418] sm:$0xff]
        %v3431 = vld [vmem:[#allocation6 + $0x420] sm:$0xff]
        %v3432 = vld [vmem:[#allocation6 + $0x428] sm:$0xff]
        %v3433 = vld [vmem:[#allocation6 + $0x430] sm:$0xff]
        %v3434 = vld [vmem:[#allocation6 + $0x438] sm:$0xff]
        %v3435 = vld [vmem:[#allocation6 + $0x440] sm:$0xff]
        %v3436 = vld [vmem:[#allocation6 + $0x448] sm:$0xff]
        %v3437 = vld [vmem:[#allocation6 + $0x450] sm:$0xff]
        %v3438 = vld [vmem:[#allocation6 + $0x458] sm:$0xff]
        %v3439 = vld [vmem:[#allocation6 + $0x460] sm:$0xff]
        %v3440 = vld [vmem:[#allocation6 + $0x468] sm:$0xff]
        %v3441 = vld [vmem:[#allocation6 + $0x470] sm:$0xff]
        %v3442 = vld [vmem:[#allocation6 + $0x478] sm:$0xff]
        %v3443 = vld [vmem:[#allocation6 + $0x480] sm:$0xff]
        %v3444 = vld [vmem:[#allocation6 + $0x488] sm:$0xff]
        %v3445 = vld [vmem:[#allocation6 + $0x490] sm:$0xff]
        %v3446 = vld [vmem:[#allocation6 + $0x498] sm:$0xff]
        %v3447 = vld [vmem:[#allocation6 + $0x4a0] sm:$0xff]
        %v3448 = vld [vmem:[#allocation6 + $0x4a8] sm:$0xff]
        %v3449 = vld [vmem:[#allocation6 + $0x4b0] sm:$0xff]
        %v3450 = vld [vmem:[#allocation6 + $0x4b8] sm:$0xff]
        %v3451 = vld [vmem:[#allocation6 + $0x4c0] sm:$0xff]
        %v3452 = vld [vmem:[#allocation6 + $0x4c8] sm:$0xff]
        %v3453 = vld [vmem:[#allocation6 + $0x4d0] sm:$0xff]
        %v3454 = vld [vmem:[#allocation6 + $0x4d8] sm:$0xff]
        %v3455 = vld [vmem:[#allocation6 + $0x4e0] sm:$0xff]
        %v3456 = vld [vmem:[#allocation6 + $0x4e8] sm:$0xff]
        %v3457 = vld [vmem:[#allocation6 + $0x4f0] sm:$0xff]
        %v3458 = vld [vmem:[#allocation6 + $0x4f8] sm:$0xff]
        %v3459 = vld [vmem:[#allocation6 + $0x500] sm:$0xff]
        %v3460 = vld [vmem:[#allocation6 + $0x508] sm:$0xff]
        %v3461 = vld [vmem:[#allocation6 + $0x510] sm:$0xff]
        %v3462 = vld [vmem:[#allocation6 + $0x518] sm:$0xff]
        %v3463 = vld [vmem:[#allocation6 + $0x520] sm:$0xff]
        %v3464 = vld [vmem:[#allocation6 + $0x528] sm:$0xff]
        %v3465 = vld [vmem:[#allocation6 + $0x530] sm:$0xff]
        %v3466 = vld [vmem:[#allocation6 + $0x538] sm:$0xff]
        %v3467 = vld [vmem:[#allocation6 + $0x540] sm:$0xff]
        %v3468 = vld [vmem:[#allocation6 + $0x548] sm:$0xff]
        %v3469 = vld [vmem:[#allocation6 + $0x550] sm:$0xff]
        %v3470 = vld [vmem:[#allocation6 + $0x558] sm:$0xff]
        %v3471 = vld [vmem:[#allocation6 + $0x560] sm:$0xff]
        %v3472 = vld [vmem:[#allocation6 + $0x568] sm:$0xff]
        %v3473 = vld [vmem:[#allocation6 + $0x570] sm:$0xff]
        %v3474 = vld [vmem:[#allocation6 + $0x578] sm:$0xff]
        %v3475 = vld [vmem:[#allocation6 + $0x580] sm:$0xff]
        %v3476 = vld [vmem:[#allocation6 + $0x588] sm:$0xff]
        %v3477 = vld [vmem:[#allocation6 + $0x590] sm:$0xff]
        %v3478 = vld [vmem:[#allocation6 + $0x598] sm:$0xff]
        %v3491 = vunpack.c.l.b16 %v3395
        %v3492 = vunpack.c.h.b16 %v3395
        %v3493 = vunpack.c.l.b16 %v3396
        %v3494 = vunpack.c.h.b16 %v3396
        %v3495 = vunpack.c.l.b16 %v3397
        %v3496 = vunpack.c.l.b16 %v3398
        %v3497 = vunpack.c.h.b16 %v3398
        %v3498 = vunpack.c.l.b16 %v3399
        %v3499 = vunpack.c.h.b16 %v3399
        %v3500 = vunpack.c.l.b16 %v3400
        %v3501 = vunpack.c.l.b16 %v3401
        %v3502 = vunpack.c.h.b16 %v3401
        %v3503 = vunpack.c.l.b16 %v3402
        %v3504 = vunpack.c.h.b16 %v3402
        %v3505 = vunpack.c.l.b16 %v3403
        %v3506 = vunpack.c.l.b16 %v3404
        %v3507 = vunpack.c.h.b16 %v3404
        %v3508 = vunpack.c.l.b16 %v3405
        %v3509 = vunpack.c.h.b16 %v3405
        %v3510 = vunpack.c.l.b16 %v3406
        %v3511 = vpack.c.b16 %v3496, %v3491
        %v3512 = vpack.c.b16 %v3497, %v3492
        %v3513 = vpack.c.b16 %v3498, %v3493
        %v3514 = vpack.c.b16 %v3499, %v3494
        %v3515 = vpack.c.b16 %v3500, %v3495
        %v3516 = vpack.c.b16 %v3506, %v3501
        %v3517 = vpack.c.b16 %v3507, %v3502
        %v3518 = vpack.c.b16 %v3508, %v3503
        %v3519 = vpack.c.b16 %v3509, %v3504
        %v3520 = vpack.c.b16 %v3510, %v3505
        %vm3529 = vcmask 523264
        %v3531 = vsel %vm3529, %v3515, 0
        %v3534 = vsel %vm3529, %v3520, 0
        %3536 = vmatprep.subr.bf16.mxu0 %v3408
        %3537 = vmatpush1.bf16.msra.mxu0 %v3407
        %3538 = vmatprep.subr.bf16.mxu0 %v3410
        %3539 = vmatpush1.bf16.msra.mxu0 %v3409
        %3540 = vmatprep.subr.bf16.mxu0 %v3412
        %3541 = vmatpush1.bf16.msra.mxu0 %v3411
        %3542 = vmatprep.subr.bf16.mxu0 %v3414
        %3543 = vmatpush1.bf16.msra.mxu0 %v3413
        %3544 = vmatprep.subr.bf16.mxu0 %v3416
        %3545 = vmatpush1.bf16.msra.mxu0 %v3415
        %3546 = vmatprep.subr.bf16.mxu0 %v3418
        %3547 = vmatpush1.bf16.msra.mxu0 %v3417
        %3548 = vmatprep.subr.bf16.mxu0 %v3420
        %3549 = vmatpush1.bf16.msra.mxu0 %v3419
        %3550 = vmatprep.subr.bf16.mxu0 %v3422
        %3551 = vmatpush1.bf16.msra.mxu0 %v3421
        %3552 = vmatprep.subr.bf16.mxu0 %v3424
        %3553 = vmatpush1.bf16.msra.mxu0 %v3423
        %3554 = vmatprep.subr.bf16.mxu0 %v3426
        %3555 = vmatpush1.bf16.msra.mxu0 %v3425
        %3556 = vmatprep.subr.bf16.mxu0 %v3428
        %3557 = vmatpush1.bf16.msra.mxu0 %v3427
        %3558 = vmatprep.subr.bf16.mxu0 %v3430
        %3559 = vmatpush1.bf16.msra.mxu0 %v3429
        %3560 = vmatprep.subr.bf16.mxu0 %v3432
        %3561 = vmatpush1.bf16.msra.mxu0 %v3431
        %3562 = vmatprep.subr.bf16.mxu0 %v3434
        %3563 = vmatpush1.bf16.msra.mxu0 %v3433
        %3564 = vmatprep.subr.bf16.mxu0 %v3436
        %3565 = vmatpush1.bf16.msra.mxu0 %v3435
        %3566 = vmatprep.subr.bf16.mxu0 %v3438
        %3567 = vmatpush1.bf16.msra.mxu0 %v3437
        %3568 = vmatprep.mubr.bf16.mxu0 %v3512
        %3569 = vmatmul.mubr.bf16.gmra.mrb[0].mxu0 %v3511
        %v3570 = vpop.f32.mrb[0].mxu0
        %v3571 = vadd.f32 0.0, %v3570
        %v3572 = vpop.f32.mrb[0].mxu0
        %v3573 = vadd.f32 0.0, %v3572
        %v3574 = vpop.f32.mrb[0].mxu0
        %v3575 = vadd.f32 0.0, %v3574
        %v3576 = vpop.f32.mrb[0].mxu0
        %v3577 = vadd.f32 0.0, %v3576
        %3578 = vmatprep.mubr.bf16.mxu0 %v3517
        %3579 = vmatmul.mubr.bf16.gmra.mrb[0].mxu0 %v3516
        %v3580 = vpop.f32.mrb[0].mxu0
        %v3581 = vadd.f32 0.0, %v3580
        %v3582 = vpop.f32.mrb[0].mxu0
        %v3583 = vadd.f32 0.0, %v3582
        %v3584 = vpop.f32.mrb[0].mxu0
        %v3585 = vadd.f32 0.0, %v3584
        %v3586 = vpop.f32.mrb[0].mxu0
        %v3587 = vadd.f32 0.0, %v3586
        %3588 = vdwg.mxu0
        %3589 = vmatprep.subr.bf16.mxu0 %v3440
        %3590 = vmatpush1.bf16.msra.mxu0 %v3439
        %3591 = vmatprep.subr.bf16.mxu0 %v3442
        %3592 = vmatpush1.bf16.msra.mxu0 %v3441
        %3593 = vmatprep.subr.bf16.mxu0 %v3444
        %3594 = vmatpush1.bf16.msra.mxu0 %v3443
        %3595 = vmatprep.subr.bf16.mxu0 %v3446
        %3596 = vmatpush1.bf16.msra.mxu0 %v3445
        %3597 = vmatprep.subr.bf16.mxu0 %v3448
        %3598 = vmatpush1.bf16.msra.mxu0 %v3447
        %3599 = vmatprep.subr.bf16.mxu0 %v3450
        %3600 = vmatpush1.bf16.msra.mxu0 %v3449
        %3601 = vmatprep.subr.bf16.mxu0 %v3452
        %3602 = vmatpush1.bf16.msra.mxu0 %v3451
        %3603 = vmatprep.subr.bf16.mxu0 %v3454
        %3604 = vmatpush1.bf16.msra.mxu0 %v3453
        %3605 = vmatprep.subr.bf16.mxu0 %v3456
        %3606 = vmatpush1.bf16.msra.mxu0 %v3455
        %3607 = vmatprep.subr.bf16.mxu0 %v3458
        %3608 = vmatpush1.bf16.msra.mxu0 %v3457
        %3609 = vmatprep.subr.bf16.mxu0 %v3460
        %3610 = vmatpush1.bf16.msra.mxu0 %v3459
        %3611 = vmatprep.subr.bf16.mxu0 %v3462
        %3612 = vmatpush1.bf16.msra.mxu0 %v3461
        %3613 = vmatprep.subr.bf16.mxu0 %v3464
        %3614 = vmatpush1.bf16.msra.mxu0 %v3463
        %3615 = vmatprep.subr.bf16.mxu0 %v3466
        %3616 = vmatpush1.bf16.msra.mxu0 %v3465
        %3617 = vmatprep.subr.bf16.mxu0 %v3468
        %3618 = vmatpush1.bf16.msra.mxu0 %v3467
        %3619 = vmatprep.subr.bf16.mxu0 %v3470
        %3620 = vmatpush1.bf16.msra.mxu0 %v3469
        %3621 = vmatprep.mubr.bf16.mxu0 %v3514
        %3622 = vmatmul.mubr.bf16.gmra.mrb[0].mxu0 %v3513
        %v3623 = vpop.f32.mrb[0].mxu0
        %v3624 = vadd.f32 %v3571, %v3623
        %v3625 = vpop.f32.mrb[0].mxu0
        %v3626 = vadd.f32 %v3573, %v3625
        %v3627 = vpop.f32.mrb[0].mxu0
        %v3628 = vadd.f32 %v3575, %v3627
        %v3629 = vpop.f32.mrb[0].mxu0
        %v3630 = vadd.f32 %v3577, %v3629
        %3631 = vmatprep.mubr.bf16.mxu0 %v3519
        %3632 = vmatmul.mubr.bf16.gmra.mrb[0].mxu0 %v3518
        %v3633 = vpop.f32.mrb[0].mxu0
        %v3634 = vadd.f32 %v3581, %v3633
        %v3635 = vpop.f32.mrb[0].mxu0
        %v3636 = vadd.f32 %v3583, %v3635
        %v3637 = vpop.f32.mrb[0].mxu0
        %v3638 = vadd.f32 %v3585, %v3637
        %v3639 = vpop.f32.mrb[0].mxu0
        %v3640 = vadd.f32 %v3587, %v3639
        %3641 = vdwg.mxu0
        %3642 = vmatprep.subr.bf16.mxu0 %v3472
        %3643 = vmatpush1.bf16.msra.mxu0 %v3471
        %3644 = vmatprep.subr.bf16.mxu0 %v3474
        %3645 = vmatpush1.bf16.msra.mxu0 %v3473
        %3646 = vmatprep.subr.bf16.mxu0 %v3476
        %3647 = vmatpush1.bf16.msra.mxu0 %v3475
        %3648 = vmatprep.subr.bf16.mxu0 %v3478
        %3649 = vmatpush1.bf16.msra.mxu0 %v3477
        %3650 = vmatprep.subr.bf16.mxu0 0
        %3651 = vmatpush1.bf16.msra.mxu0 0
        %3652 = vmatprep.subr.bf16.mxu0 0
        %3653 = vmatpush1.bf16.msra.mxu0 0
        %3654 = vmatprep.subr.bf16.mxu0 0
        %3655 = vmatpush1.bf16.msra.mxu0 0
        %3656 = vmatprep.subr.bf16.mxu0 0
        %3657 = vmatpush1.bf16.msra.mxu0 0
        %3658 = vmatprep.subr.bf16.mxu0 0
        %3659 = vmatpush1.bf16.msra.mxu0 0
        %3660 = vmatprep.subr.bf16.mxu0 0
        %3661 = vmatpush1.bf16.msra.mxu0 0
        %3662 = vmatprep.subr.bf16.mxu0 0
        %3663 = vmatpush1.bf16.msra.mxu0 0
        %3664 = vmatprep.subr.bf16.mxu0 0
        %3665 = vmatpush1.bf16.msra.mxu0 0
        %3666 = vmatprep.subr.bf16.mxu0 0
        %3667 = vmatpush1.bf16.msra.mxu0 0
        %3668 = vmatprep.subr.bf16.mxu0 0
        %3669 = vmatpush1.bf16.msra.mxu0 0
        %3670 = vmatprep.subr.bf16.mxu0 0
        %3671 = vmatpush1.bf16.msra.mxu0 0
        %3672 = vmatprep.subr.bf16.mxu0 0
        %3673 = vmatpush1.bf16.msra.mxu0 0
        %3674 = vmatprep.mubr.bf16.mxu0 0
        %3675 = vmatmul.mubr.bf16.gmra.mrb[0].mxu0 %v3531
        %v3676 = vpop.f32.mrb[0].mxu0
        %v3677 = vadd.f32 %v3624, %v3676
        %v3678 = vpop.f32.mrb[0].mxu0
        %v3679 = vadd.f32 %v3626, %v3678
        %v3680 = vpop.f32.mrb[0].mxu0
        %v3681 = vadd.f32 %v3628, %v3680
        %v3682 = vpop.f32.mrb[0].mxu0
        %v3683 = vadd.f32 %v3630, %v3682
        %3684 = vmatprep.mubr.bf16.mxu0 0
        %3685 = vmatmul.mubr.bf16.gmra.mrb[0].mxu0 %v3534
        %v3686 = vpop.f32.mrb[0].mxu0
        %v3687 = vadd.f32 %v3634, %v3686
        %v3688 = vpop.f32.mrb[0].mxu0
        %v3689 = vadd.f32 %v3636, %v3688
        %v3690 = vpop.f32.mrb[0].mxu0
        %v3691 = vadd.f32 %v3638, %v3690
        %v3692 = vpop.f32.mrb[0].mxu0
        %v3693 = vadd.f32 %v3640, %v3692
        %3694 = vdwg.mxu0
        %v3695 = vadd.f32 %v2053, %v3677
        %v3696 = vadd.f32 %v2055, %v3679
        %v3697 = vadd.f32 %v2057, %v3681
        %v3698 = vadd.f32 %v2059, %v3683
        %v3699 = vadd.f32 %v2063, %v3687
        %v3700 = vadd.f32 %v2065, %v3689
        %v3701 = vadd.f32 %v2067, %v3691
        %v3702 = vadd.f32 %v2069, %v3693
        %v3703 = vxor.u32 %v3695, 2147483648
        %v3704 = vxor.u32 %v3696, 2147483648
        %v3705 = vxor.u32 %v3697, 2147483648
        %v3706 = vxor.u32 %v3698, 2147483648
        %v3707 = vxor.u32 %v3699, 2147483648
        %v3708 = vxor.u32 %v3700, 2147483648
        %v3709 = vxor.u32 %v3701, 2147483648
        %v3710 = vxor.u32 %v3702, 2147483648
        %v3711 = vmul.f32 %v3703, 1.442695
        %v3712 = vpow.pop %v3711
        %v3713 = vmul.f32 %v3704, 1.442695
        %v3714 = vpow.pop %v3713
        %v3715 = vmul.f32 %v3705, 1.442695
        %v3716 = vpow.pop %v3715
        %v3717 = vmul.f32 %v3706, 1.442695
        %v3718 = vpow.pop %v3717
        %v3719 = vmul.f32 %v3707, 1.442695
        %v3720 = vpow.pop %v3719
        %v3721 = vmul.f32 %v3708, 1.442695
        %v3722 = vpow.pop %v3721
        %v3723 = vmul.f32 %v3709, 1.442695
        %v3724 = vpow.pop %v3723
        %v3725 = vmul.f32 %v3710, 1.442695
        %v3726 = vpow.pop %v3725
        %v3727 = vadd.f32 %v3712, 1.0
        %v3728 = vadd.f32 %v3714, 1.0
        %v3729 = vadd.f32 %v3716, 1.0
        %v3730 = vadd.f32 %v3718, 1.0
        %v3731 = vadd.f32 %v3720, 1.0
        %v3732 = vadd.f32 %v3722, 1.0
        %v3733 = vadd.f32 %v3724, 1.0
        %v3734 = vadd.f32 %v3726, 1.0
        %v3735 = vrcp.pop %v3727
        %v3736 = vmul.f32 1.0, %v3735
        %v3737 = vrcp.pop %v3728
        %v3738 = vmul.f32 1.0, %v3737
        %v3739 = vrcp.pop %v3729
        %v3740 = vmul.f32 1.0, %v3739
        %v3741 = vrcp.pop %v3730
        %v3742 = vmul.f32 1.0, %v3741
        %v3743 = vrcp.pop %v3731
        %v3744 = vmul.f32 1.0, %v3743
        %v3745 = vrcp.pop %v3732
        %v3746 = vmul.f32 1.0, %v3745
        %v3747 = vrcp.pop %v3733
        %v3748 = vmul.f32 1.0, %v3747
        %v3749 = vrcp.pop %v3734
        %v3750 = vmul.f32 1.0, %v3749
        %v3751 = vld [vmem:[%s7] sm:$0xf]
        %v3752 = vld [vmem:[%s7 + $0x4] sm:$0xf]
        %v3753 = vld [vmem:[%s7 + $0x8] sm:$0xf]
        %v3754 = vld [vmem:[%s7 + $0xc] sm:$0xf]
        %v3755 = vld [vmem:[#allocation6 + $0x460] sm:$0xff]
        %v3756 = vld [vmem:[#allocation6 + $0x468] sm:$0xff]
        %v3757 = vld [vmem:[#allocation6 + $0x470] sm:$0xff]
        %v3758 = vld [vmem:[#allocation6 + $0x478] sm:$0xff]
        %v3759 = vld [vmem:[#allocation6 + $0x480] sm:$0xff]
        %v3760 = vld [vmem:[#allocation6 + $0x488] sm:$0xff]
        %v3761 = vld [vmem:[#allocation6 + $0x490] sm:$0xff]
        %v3762 = vld [vmem:[#allocation6 + $0x498] sm:$0xff]
        %v3767 = vunpack.c.l.b16 %v3751
        %v3768 = vunpack.c.l.b16 %v3752
        %v3769 = vunpack.c.l.b16 %v3753
        %v3770 = vunpack.c.l.b16 %v3754
        %v3771 = vpack.c.b16 %v3768, %v3767
        %v3772 = vpack.c.b16 %v3770, %v3769
        %v3774 = vsel %vm3529, %v3771, 0
        %v3777 = vsel %vm3529, %v3772, 0
        %3779 = vmatprep.subr.bf16.mxu0 %v3756
        %3780 = vmatpush1.bf16.msra.mxu0 %v3755
        %3781 = vmatprep.subr.bf16.mxu0 %v3758
        %3782 = vmatpush1.bf16.msra.mxu0 %v3757
        %3783 = vmatprep.subr.bf16.mxu0 %v3760
        %3784 = vmatpush1.bf16.msra.mxu0 %v3759
        %3785 = vmatprep.subr.bf16.mxu0 %v3762
        %3786 = vmatpush1.bf16.msra.mxu0 %v3761
        %3787 = vmatprep.subr.bf16.mxu0 0
        %3788 = vmatpush1.bf16.msra.mxu0 0
        %3789 = vmatprep.subr.bf16.mxu0 0
        %3790 = vmatpush1.bf16.msra.mxu0 0
        %3791 = vmatprep.subr.bf16.mxu0 0
        %3792 = vmatpush1.bf16.msra.mxu0 0
        %3793 = vmatprep.subr.bf16.mxu0 0
        %3794 = vmatpush1.bf16.msra.mxu0 0
        %3795 = vmatprep.subr.bf16.mxu0 0
        %3796 = vmatpush1.bf16.msra.mxu0 0
        %3797 = vmatprep.subr.bf16.mxu0 0
        %3798 = vmatpush1.bf16.msra.mxu0 0
        %3799 = vmatprep.subr.bf16.mxu0 0
        %3800 = vmatpush1.bf16.msra.mxu0 0
        %3801 = vmatprep.subr.bf16.mxu0 0
        %3802 = vmatpush1.bf16.msra.mxu0 0
        %3803 = vmatprep.subr.bf16.mxu0 0
        %3804 = vmatpush1.bf16.msra.mxu0 0
        %3805 = vmatprep.subr.bf16.mxu0 0
        %3806 = vmatpush1.bf16.msra.mxu0 0
        %3807 = vmatprep.subr.bf16.mxu0 0
        %3808 = vmatpush1.bf16.msra.mxu0 0
        %3809 = vmatprep.subr.bf16.mxu0 0
        %3810 = vmatpush1.bf16.msra.mxu0 0
        %3811 = vmatprep.mubr.bf16.mxu0 0
        %3812 = vmatmul.mubr.bf16.gmra.mrb[0].mxu0 %v3774
        %v3813 = vpop.f32.mrb[0].mxu0
        %v3814 = vadd.f32 0.0, %v3813
        %v3815 = vpop.f32.mrb[0].mxu0
        %v3816 = vadd.f32 0.0, %v3815
        %v3817 = vpop.f32.mrb[0].mxu0
        %v3818 = vadd.f32 0.0, %v3817
        %v3819 = vpop.f32.mrb[0].mxu0
        %v3820 = vadd.f32 0.0, %v3819
        %3821 = vmatprep.mubr.bf16.mxu0 0
        %3822 = vmatmul.mubr.bf16.gmra.mrb[0].mxu0 %v3777
        %v3823 = vpop.f32.mrb[0].mxu0
        %v3824 = vadd.f32 0.0, %v3823
        %v3825 = vpop.f32.mrb[0].mxu0
        %v3826 = vadd.f32 0.0, %v3825
        %v3827 = vpop.f32.mrb[0].mxu0
        %v3828 = vadd.f32 0.0, %v3827
        %v3829 = vpop.f32.mrb[0].mxu0
        %v3830 = vadd.f32 0.0, %v3829
        %3831 = vdwg.mxu0
        %v3832 = vtanh.pop %v3814
        %v3833 = vtanh.pop %v3816
        %v3834 = vtanh.pop %v3818
        %v3835 = vtanh.pop %v3820
        %v3836 = vtanh.pop %v3824
        %v3837 = vtanh.pop %v3826
        %v3838 = vtanh.pop %v3828
        %v3839 = vtanh.pop %v3830
        %v3840 = vmul.f32 %v3736, %v3832
        %v3841 = vmul.f32 %v3738, %v3833
        %v3842 = vmul.f32 %v3740, %v3834
        %v3843 = vmul.f32 %v3742, %v3835
        %v3844 = vmul.f32 %v3744, %v3836
        %v3845 = vmul.f32 %v3746, %v3837
        %v3846 = vmul.f32 %v3748, %v3838
        %v3847 = vmul.f32 %v3750, %v3839
        %v3848 = vpack.c.bf16 %v3842, %v3840
        %v3849 = vpack.c.bf16 %v3843, %v3841
        %v3850 = vpack.c.bf16 %v3846, %v3844
        %v3851 = vpack.c.bf16 %v3847, %v3845
        %3852 = vst [vmem:[#allocation2] sm:$0xff] %v3848
        %3853 = vst [vmem:[#allocation2 + $0x8] sm:$0xff] %v3849
        %3854 = vst [vmem:[#allocation2 + $0x10] sm:$0xff] %v3850
        %3855 = vst [vmem:[#allocation2 + $0x18] sm:$0xff] %v3851
        %3856 = vst [vmem:[#allocation3] sm:$0xff] %v2595
        %3857 = vst [vmem:[#allocation3 + $0x8] sm:$0xff] %v2596
        %3858 = vst [vmem:[#allocation3 + $0x10] sm:$0xff] %v2597
        %3859 = vst [vmem:[#allocation3 + $0x18] sm:$0xff] %v2598
        %3860 = vst [vmem:[#allocation3 + $0x20] sm:$0xff] %v2599
        %3861 = vst [vmem:[#allocation3 + $0x28] sm:$0xff] %v2600
        %3862 = vst [vmem:[#allocation3 + $0x30] sm:$0xff] %v2601
        %3863 = vst [vmem:[#allocation3 + $0x38] sm:$0xff] %v2602
        %s3864 = scalar_lea.vmem [#allocation2], 32
        %v3865 = vld [vmem:[%s3864] sm:$0xff]
        %v3866 = vld [vmem:[%s3864 + $0x8] sm:$0xff]
        %v3867 = vld [vmem:[%s3864 + $0x10] sm:$0xff]
        %v3868 = vld [vmem:[%s3864 + $0x18] sm:$0xff]
        %v3869 = vunpack.c.l.bf16 %v3865
        %v3870 = vunpack.c.l.bf16 %v3866
        %v3871 = vunpack.c.h.bf16 %v3865
        %v3872 = vunpack.c.h.bf16 %v3866
        %v3873 = vunpack.c.l.bf16 %v3867
        %v3874 = vunpack.c.l.bf16 %v3868
        %v3875 = vunpack.c.h.bf16 %v3867
        %v3876 = vunpack.c.h.bf16 %v3868
        %s3877 = scalar_lea.vmem [#allocation3], 64
        %v3878 = vld [vmem:[%s3877] sm:$0xff]
        %v3879 = vld [vmem:[%s3877 + $0x8] sm:$0xff]
        %v3880 = vld [vmem:[%s3877 + $0x10] sm:$0xff]
        %v3881 = vld [vmem:[%s3877 + $0x18] sm:$0xff]
        %v3882 = vld [vmem:[%s3877 + $0x20] sm:$0xff]
        %v3883 = vld [vmem:[%s3877 + $0x28] sm:$0xff]
        %v3884 = vld [vmem:[%s3877 + $0x30] sm:$0xff]
        %v3885 = vld [vmem:[%s3877 + $0x38] sm:$0xff]
        %3886 = vst [vmem:[#allocation6] sm:$0xff] %v2811
        %3887 = vst [vmem:[#allocation6 + $0x8] sm:$0xff] %v2812
        %3888 = vst [vmem:[#allocation6 + $0x10] sm:$0xff] %v2813
        %3889 = vst [vmem:[#allocation6 + $0x18] sm:$0xff] %v2814
        %3890 = vst [vmem:[#allocation6 + $0x20] sm:$0xff] %v2891
        %3891 = vst [vmem:[#allocation6 + $0x28] sm:$0xff] %v2892
        %3892 = vst [vmem:[#allocation6 + $0x30] sm:$0xff] %v2893
        %3893 = vst [vmem:[#allocation6 + $0x38] sm:$0xff] %v2894
        %3894 = vst [vmem:[#allocation6 + $0x40] sm:$0xff] %v2971
        %3895 = vst [vmem:[#allocation6 + $0x48] sm:$0xff] %v2972
        %3896 = vst [vmem:[#allocation6 + $0x50] sm:$0xff] %v2973
        %3897 = vst [vmem:[#allocation6 + $0x58] sm:$0xff] %v2974
        %3898 = vst [vmem:[#allocation6 + $0x60] sm:$0xff] %v3051
        %3899 = vst [vmem:[#allocation6 + $0x68] sm:$0xff] %v3052
        %3900 = vst [vmem:[#allocation6 + $0x70] sm:$0xff] %v3053
        %3901 = vst [vmem:[#allocation6 + $0x78] sm:$0xff] %v3054
        %3902 = vst [vmem:[#allocation6 + $0x80] sm:$0xff] %v3067
        %3903 = vst [vmem:[#allocation6 + $0x88] sm:$0xff] %v3068
        %3904 = vst [vmem:[#allocation6 + $0x90] sm:$0xff] %v3069
        %3905 = vst [vmem:[#allocation6 + $0x98] sm:$0xff] %v3070
        %3906 = vst [vmem:[#allocation6 + $0xa0] sm:$0xff] %v3147
        %3907 = vst [vmem:[#allocation6 + $0xa8] sm:$0xff] %v3148
        %3908 = vst [vmem:[#allocation6 + $0xb0] sm:$0xff] %v3149
        %3909 = vst [vmem:[#allocation6 + $0xb8] sm:$0xff] %v3150
        %3910 = vst [vmem:[#allocation6 + $0xc0] sm:$0xff] %v3227
        %3911 = vst [vmem:[#allocation6 + $0xc8] sm:$0xff] %v3228
        %3912 = vst [vmem:[#allocation6 + $0xd0] sm:$0xff] %v3229
        %3913 = vst [vmem:[#allocation6 + $0xd8] sm:$0xff] %v3230
        %3914 = vst [vmem:[#allocation6 + $0xe0] sm:$0xff] %v3307
        %3915 = vst [vmem:[#allocation6 + $0xe8] sm:$0xff] %v3308
        %3916 = vst [vmem:[#allocation6 + $0xf0] sm:$0xff] %v3309
        %3917 = vst [vmem:[#allocation6 + $0xf8] sm:$0xff] %v3310
        %3918 = vst [vmem:[#allocation6 + $0x100] sm:$0xff] %v3387
        %3919 = vst [vmem:[#allocation6 + $0x108] sm:$0xff] %v3388
        %3920 = vst [vmem:[#allocation6 + $0x110] sm:$0xff] %v3389
        %3921 = vst [vmem:[#allocation6 + $0x118] sm:$0xff] %v3390
        %3922 = vrot.lane.b32.xlu0 %v3840, 9
        %v3923 = vpop.permute.xlu0 %3922
        %3924 = vrot.lane.b32.xlu0 %v3842, 9
        %v3925 = vpop.permute.xlu0 %3924
        %3926 = vrot.lane.b32.xlu0 %v3844, 9
        %v3927 = vpop.permute.xlu0 %3926
        %3928 = vrot.lane.b32.xlu0 %v3846, 9
        %v3929 = vpop.permute.xlu0 %3928
        %3930 = vrot.lane.b32.xlu0 %v3841, 9
        %v3931 = vpop.permute.xlu0 %3930
        %3932 = vrot.lane.b32.xlu0 %v3843, 9
        %v3933 = vpop.permute.xlu0 %3932
        %3934 = vrot.lane.b32.xlu0 %v3845, 9
        %v3935 = vpop.permute.xlu0 %3934
        %3936 = vrot.lane.b32.xlu0 %v3847, 9
        %v3937 = vpop.permute.xlu0 %3936
        %v3938 = vsel %vm690, %v3923, %v3931
        %v3939 = vsel %vm690, %v3925, %v3933
        %v3940 = vsel %vm690, %v3927, %v3935
        %v3941 = vsel %vm690, %v3929, %v3937
        %v3942 = vsel %vm690, %v3931, %v3923
        %v3943 = vsel %vm690, %v3933, %v3925
        %v3944 = vsel %vm690, %v3935, %v3927
        %v3945 = vsel %vm690, %v3937, %v3929
        %v3946 = vmul.f32 %v3942, %v703
        %v3947 = vmul.f32 %v3938, %v707
        %v3948 = vmul.f32 %v3943, %v703
        %v3949 = vmul.f32 %v3939, %v707
        %v3950 = vmul.f32 %v3944, %v703
        %v3951 = vmul.f32 %v3940, %v707
        %v3952 = vmul.f32 %v3945, %v703
        %v3953 = vmul.f32 %v3941, %v707
        %v3954 = vpack.c.bf16 %v3948, %v3946
        %v3955 = vpack.c.bf16 %v3949, %v3947
        %v3956 = vpack.c.bf16 %v3952, %v3950
        %v3957 = vpack.c.bf16 %v3953, %v3951
        %3958 = vst [vmem:[#allocation6 + $0x120] sm:$0xff] %v3954
        %3959 = vst [vmem:[#allocation6 + $0x128] sm:$0xff] %v3955
        %3960 = vst [vmem:[#allocation6 + $0x130] sm:$0xff] %v3956
        %3961 = vst [vmem:[#allocation6 + $0x138] sm:$0xff] %v3957
        %3962 = vrot.lane.b32.xlu0 %v3840, 8
        %v3963 = vpop.permute.xlu0 %3962
        %3964 = vrot.lane.b32.xlu0 %v3842, 8
        %v3965 = vpop.permute.xlu0 %3964
        %3966 = vrot.lane.b32.xlu0 %v3844, 8
        %v3967 = vpop.permute.xlu0 %3966
        %3968 = vrot.lane.b32.xlu0 %v3846, 8
        %v3969 = vpop.permute.xlu0 %3968
        %3970 = vrot.lane.b32.xlu0 %v3841, 8
        %v3971 = vpop.permute.xlu0 %3970
        %3972 = vrot.lane.b32.xlu0 %v3843, 8
        %v3973 = vpop.permute.xlu0 %3972
        %3974 = vrot.lane.b32.xlu0 %v3845, 8
        %v3975 = vpop.permute.xlu0 %3974
        %3976 = vrot.lane.b32.xlu0 %v3847, 8
        %v3977 = vpop.permute.xlu0 %3976
        %v3978 = vsel %vm742, %v3963, %v3971
        %v3979 = vsel %vm742, %v3965, %v3973
        %v3980 = vsel %vm742, %v3967, %v3975
        %v3981 = vsel %vm742, %v3969, %v3977
        %v3982 = vsel %vm742, %v3971, %v3963
        %v3983 = vsel %vm742, %v3973, %v3965
        %v3984 = vsel %vm742, %v3975, %v3967
        %v3985 = vsel %vm742, %v3977, %v3969
        %v3986 = vmul.f32 %v3982, %v755
        %v3987 = vmul.f32 %v3978, %v759
        %v3988 = vmul.f32 %v3983, %v755
        %v3989 = vmul.f32 %v3979, %v759
        %v3990 = vmul.f32 %v3984, %v755
        %v3991 = vmul.f32 %v3980, %v759
        %v3992 = vmul.f32 %v3985, %v755
        %v3993 = vmul.f32 %v3981, %v759
        %v3994 = vpack.c.bf16 %v3988, %v3986
        %v3995 = vpack.c.bf16 %v3989, %v3987
        %v3996 = vpack.c.bf16 %v3992, %v3990
        %v3997 = vpack.c.bf16 %v3993, %v3991
        %3998 = vst [vmem:[#allocation6 + $0x140] sm:$0xff] %v3994
        %3999 = vst [vmem:[#allocation6 + $0x148] sm:$0xff] %v3995
        %4000 = vst [vmem:[#allocation6 + $0x150] sm:$0xff] %v3996
        %4001 = vst [vmem:[#allocation6 + $0x158] sm:$0xff] %v3997
        %4002 = vrot.lane.b32.xlu0 %v3840, 7
        %v4003 = vpop.permute.xlu0 %4002
        %4004 = vrot.lane.b32.xlu0 %v3842, 7
        %v4005 = vpop.permute.xlu0 %4004
        %4006 = vrot.lane.b32.xlu0 %v3844, 7
        %v4007 = vpop.permute.xlu0 %4006
        %4008 = vrot.lane.b32.xlu0 %v3846, 7
        %v4009 = vpop.permute.xlu0 %4008
        %4010 = vrot.lane.b32.xlu0 %v3841, 7
        %v4011 = vpop.permute.xlu0 %4010
        %4012 = vrot.lane.b32.xlu0 %v3843, 7
        %v4013 = vpop.permute.xlu0 %4012
        %4014 = vrot.lane.b32.xlu0 %v3845, 7
        %v4015 = vpop.permute.xlu0 %4014
        %4016 = vrot.lane.b32.xlu0 %v3847, 7
        %v4017 = vpop.permute.xlu0 %4016
        %v4018 = vsel %vm794, %v4003, %v4011
        %v4019 = vsel %vm794, %v4005, %v4013
        %v4020 = vsel %vm794, %v4007, %v4015
        %v4021 = vsel %vm794, %v4009, %v4017
        %v4022 = vsel %vm794, %v4011, %v4003
        %v4023 = vsel %vm794, %v4013, %v4005
        %v4024 = vsel %vm794, %v4015, %v4007
        %v4025 = vsel %vm794, %v4017, %v4009
        %v4026 = vmul.f32 %v4022, %v807
        %v4027 = vmul.f32 %v4018, %v811
        %v4028 = vmul.f32 %v4023, %v807
        %v4029 = vmul.f32 %v4019, %v811
        %v4030 = vmul.f32 %v4024, %v807
        %v4031 = vmul.f32 %v4020, %v811
        %v4032 = vmul.f32 %v4025, %v807
        %v4033 = vmul.f32 %v4021, %v811
        %v4034 = vpack.c.bf16 %v4028, %v4026
        %v4035 = vpack.c.bf16 %v4029, %v4027
        %v4036 = vpack.c.bf16 %v4032, %v4030
        %v4037 = vpack.c.bf16 %v4033, %v4031
        %4038 = vst [vmem:[#allocation6 + $0x160] sm:$0xff] %v4034
        %4039 = vst [vmem:[#allocation6 + $0x168] sm:$0xff] %v4035
        %4040 = vst [vmem:[#allocation6 + $0x170] sm:$0xff] %v4036
        %4041 = vst [vmem:[#allocation6 + $0x178] sm:$0xff] %v4037
        %4042 = vrot.lane.b32.xlu0 %v3840, 1
        %v4043 = vpop.permute.xlu0 %4042
        %4044 = vrot.lane.b32.xlu0 %v3842, 1
        %v4045 = vpop.permute.xlu0 %4044
        %4046 = vrot.lane.b32.xlu0 %v3844, 1
        %v4047 = vpop.permute.xlu0 %4046
        %4048 = vrot.lane.b32.xlu0 %v3846, 1
        %v4049 = vpop.permute.xlu0 %4048
        %4050 = vrot.lane.b32.xlu0 %v3841, 1
        %v4051 = vpop.permute.xlu0 %4050
        %4052 = vrot.lane.b32.xlu0 %v3843, 1
        %v4053 = vpop.permute.xlu0 %4052
        %4054 = vrot.lane.b32.xlu0 %v3845, 1
        %v4055 = vpop.permute.xlu0 %4054
        %4056 = vrot.lane.b32.xlu0 %v3847, 1
        %v4057 = vpop.permute.xlu0 %4056
        %v4058 = vsel %vm846, %v4043, %v4051
        %v4059 = vsel %vm846, %v4045, %v4053
        %v4060 = vsel %vm846, %v4047, %v4055
        %v4061 = vsel %vm846, %v4049, %v4057
        %v4062 = vsel %vm846, %v4051, %v4043
        %v4063 = vsel %vm846, %v4053, %v4045
        %v4064 = vsel %vm846, %v4055, %v4047
        %v4065 = vsel %vm846, %v4057, %v4049
        %v4066 = vmul.f32 %v4062, %v859
        %v4067 = vmul.f32 %v4058, %v863
        %v4068 = vmul.f32 %v4063, %v859
        %v4069 = vmul.f32 %v4059, %v863
        %v4070 = vmul.f32 %v4064, %v859
        %v4071 = vmul.f32 %v4060, %v863
        %v4072 = vmul.f32 %v4065, %v859
        %v4073 = vmul.f32 %v4061, %v863
        %v4074 = vpack.c.bf16 %v4068, %v4066
        %v4075 = vpack.c.bf16 %v4069, %v4067
        %v4076 = vpack.c.bf16 %v4072, %v4070
        %v4077 = vpack.c.bf16 %v4073, %v4071
        %4078 = vst [vmem:[#allocation6 + $0x180] sm:$0xff] %v4074
        %4079 = vst [vmem:[#allocation6 + $0x188] sm:$0xff] %v4075
        %4080 = vst [vmem:[#allocation6 + $0x190] sm:$0xff] %v4076
        %4081 = vst [vmem:[#allocation6 + $0x198] sm:$0xff] %v4077
        %4082 = vst [vmem:[#allocation6 + $0x1a0] sm:$0xff] %v3848
        %4083 = vst [vmem:[#allocation6 + $0x1a8] sm:$0xff] %v3849
        %4084 = vst [vmem:[#allocation6 + $0x1b0] sm:$0xff] %v3850
        %4085 = vst [vmem:[#allocation6 + $0x1b8] sm:$0xff] %v3851
        %4086 = vrot.lane.b32.xlu0 %v3840, 127
        %v4087 = vpop.permute.xlu0 %4086
        %4088 = vrot.lane.b32.xlu0 %v3842, 127
        %v4089 = vpop.permute.xlu0 %4088
        %4090 = vrot.lane.b32.xlu0 %v3844, 127
        %v4091 = vpop.permute.xlu0 %4090
        %4092 = vrot.lane.b32.xlu0 %v3846, 127
        %v4093 = vpop.permute.xlu0 %4092
        %4094 = vrot.lane.b32.xlu0 %v3841, 127
        %v4095 = vpop.permute.xlu0 %4094
        %4096 = vrot.lane.b32.xlu0 %v3843, 127
        %v4097 = vpop.permute.xlu0 %4096
        %4098 = vrot.lane.b32.xlu0 %v3845, 127
        %v4099 = vpop.permute.xlu0 %4098
        %4100 = vrot.lane.b32.xlu0 %v3847, 127
        %v4101 = vpop.permute.xlu0 %4100
        %v4102 = vsel %vm902, %v4087, %v4095
        %v4103 = vsel %vm902, %v4089, %v4097
        %v4104 = vsel %vm902, %v4091, %v4099
        %v4105 = vsel %vm902, %v4093, %v4101
        %v4106 = vsel %vm902, %v4095, %v4087
        %v4107 = vsel %vm902, %v4097, %v4089
        %v4108 = vsel %vm902, %v4099, %v4091
        %v4109 = vsel %vm902, %v4101, %v4093
        %v4110 = vmul.f32 %v4102, %v915
        %v4111 = vmul.f32 %v4106, %v919
        %v4112 = vmul.f32 %v4103, %v915
        %v4113 = vmul.f32 %v4107, %v919
        %v4114 = vmul.f32 %v4104, %v915
        %v4115 = vmul.f32 %v4108, %v919
        %v4116 = vmul.f32 %v4105, %v915
        %v4117 = vmul.f32 %v4109, %v919
        %v4118 = vpack.c.bf16 %v4112, %v4110
        %v4119 = vpack.c.bf16 %v4113, %v4111
        %v4120 = vpack.c.bf16 %v4116, %v4114
        %v4121 = vpack.c.bf16 %v4117, %v4115
        %4122 = vst [vmem:[#allocation6 + $0x1c0] sm:$0xff] %v4118
        %4123 = vst [vmem:[#allocation6 + $0x1c8] sm:$0xff] %v4119
        %4124 = vst [vmem:[#allocation6 + $0x1d0] sm:$0xff] %v4120
        %4125 = vst [vmem:[#allocation6 + $0x1d8] sm:$0xff] %v4121
        %4126 = vrot.lane.b32.xlu0 %v3840, 121
        %v4127 = vpop.permute.xlu0 %4126
        %4128 = vrot.lane.b32.xlu0 %v3842, 121
        %v4129 = vpop.permute.xlu0 %4128
        %4130 = vrot.lane.b32.xlu0 %v3844, 121
        %v4131 = vpop.permute.xlu0 %4130
        %4132 = vrot.lane.b32.xlu0 %v3846, 121
        %v4133 = vpop.permute.xlu0 %4132
        %4134 = vrot.lane.b32.xlu0 %v3841, 121
        %v4135 = vpop.permute.xlu0 %4134
        %4136 = vrot.lane.b32.xlu0 %v3843, 121
        %v4137 = vpop.permute.xlu0 %4136
        %4138 = vrot.lane.b32.xlu0 %v3845, 121
        %v4139 = vpop.permute.xlu0 %4138
        %4140 = vrot.lane.b32.xlu0 %v3847, 121
        %v4141 = vpop.permute.xlu0 %4140
        %v4142 = vsel %vm954, %v4127, %v4135
        %v4143 = vsel %vm954, %v4129, %v4137
        %v4144 = vsel %vm954, %v4131, %v4139
        %v4145 = vsel %vm954, %v4133, %v4141
        %v4146 = vsel %vm954, %v4135, %v4127
        %v4147 = vsel %vm954, %v4137, %v4129
        %v4148 = vsel %vm954, %v4139, %v4131
        %v4149 = vsel %vm954, %v4141, %v4133
        %v4150 = vmul.f32 %v4142, %v967
        %v4151 = vmul.f32 %v4146, %v971
        %v4152 = vmul.f32 %v4143, %v967
        %v4153 = vmul.f32 %v4147, %v971
        %v4154 = vmul.f32 %v4144, %v967
        %v4155 = vmul.f32 %v4148, %v971
        %v4156 = vmul.f32 %v4145, %v967
        %v4157 = vmul.f32 %v4149, %v971
        %v4158 = vpack.c.bf16 %v4152, %v4150
        %v4159 = vpack.c.bf16 %v4153, %v4151
        %v4160 = vpack.c.bf16 %v4156, %v4154
        %v4161 = vpack.c.bf16 %v4157, %v4155
        %4162 = vst [vmem:[#allocation6 + $0x1e0] sm:$0xff] %v4158
        %4163 = vst [vmem:[#allocation6 + $0x1e8] sm:$0xff] %v4159
        %4164 = vst [vmem:[#allocation6 + $0x1f0] sm:$0xff] %v4160
        %4165 = vst [vmem:[#allocation6 + $0x1f8] sm:$0xff] %v4161
        %4166 = vrot.lane.b32.xlu0 %v3840, 120
        %v4167 = vpop.permute.xlu0 %4166
        %4168 = vrot.lane.b32.xlu0 %v3842, 120
        %v4169 = vpop.permute.xlu0 %4168
        %4170 = vrot.lane.b32.xlu0 %v3844, 120
        %v4171 = vpop.permute.xlu0 %4170
        %4172 = vrot.lane.b32.xlu0 %v3846, 120
        %v4173 = vpop.permute.xlu0 %4172
        %4174 = vrot.lane.b32.xlu0 %v3841, 120
        %v4175 = vpop.permute.xlu0 %4174
        %4176 = vrot.lane.b32.xlu0 %v3843, 120
        %v4177 = vpop.permute.xlu0 %4176
        %4178 = vrot.lane.b32.xlu0 %v3845, 120
        %v4179 = vpop.permute.xlu0 %4178
        %4180 = vrot.lane.b32.xlu0 %v3847, 120
        %v4181 = vpop.permute.xlu0 %4180
        %v4182 = vsel %vm1006, %v4167, %v4175
        %v4183 = vsel %vm1006, %v4169, %v4177
        %v4184 = vsel %vm1006, %v4171, %v4179
        %v4185 = vsel %vm1006, %v4173, %v4181
        %v4186 = vsel %vm1006, %v4175, %v4167
        %v4187 = vsel %vm1006, %v4177, %v4169
        %v4188 = vsel %vm1006, %v4179, %v4171
        %v4189 = vsel %vm1006, %v4181, %v4173
        %v4190 = vmul.f32 %v4182, %v1019
        %v4191 = vmul.f32 %v4186, %v1023
        %v4192 = vmul.f32 %v4183, %v1019
        %v4193 = vmul.f32 %v4187, %v1023
        %v4194 = vmul.f32 %v4184, %v1019
        %v4195 = vmul.f32 %v4188, %v1023
        %v4196 = vmul.f32 %v4185, %v1019
        %v4197 = vmul.f32 %v4189, %v1023
        %v4198 = vpack.c.bf16 %v4192, %v4190
        %v4199 = vpack.c.bf16 %v4193, %v4191
        %v4200 = vpack.c.bf16 %v4196, %v4194
        %v4201 = vpack.c.bf16 %v4197, %v4195
        %4202 = vst [vmem:[#allocation6 + $0x200] sm:$0xff] %v4198
        %4203 = vst [vmem:[#allocation6 + $0x208] sm:$0xff] %v4199
        %4204 = vst [vmem:[#allocation6 + $0x210] sm:$0xff] %v4200
        %4205 = vst [vmem:[#allocation6 + $0x218] sm:$0xff] %v4201
        %4206 = vrot.lane.b32.xlu0 %v3840, 119
        %v4207 = vpop.permute.xlu0 %4206
        %4208 = vrot.lane.b32.xlu0 %v3842, 119
        %v4209 = vpop.permute.xlu0 %4208
        %4210 = vrot.lane.b32.xlu0 %v3844, 119
        %v4211 = vpop.permute.xlu0 %4210
        %4212 = vrot.lane.b32.xlu0 %v3846, 119
        %v4213 = vpop.permute.xlu0 %4212
        %4214 = vrot.lane.b32.xlu0 %v3841, 119
        %v4215 = vpop.permute.xlu0 %4214
        %4216 = vrot.lane.b32.xlu0 %v3843, 119
        %v4217 = vpop.permute.xlu0 %4216
        %4218 = vrot.lane.b32.xlu0 %v3845, 119
        %v4219 = vpop.permute.xlu0 %4218
        %4220 = vrot.lane.b32.xlu0 %v3847, 119
        %v4221 = vpop.permute.xlu0 %4220
        %v4222 = vsel %vm1058, %v4207, %v4215
        %v4223 = vsel %vm1058, %v4209, %v4217
        %v4224 = vsel %vm1058, %v4211, %v4219
        %v4225 = vsel %vm1058, %v4213, %v4221
        %v4226 = vsel %vm1058, %v4215, %v4207
        %v4227 = vsel %vm1058, %v4217, %v4209
        %v4228 = vsel %vm1058, %v4219, %v4211
        %v4229 = vsel %vm1058, %v4221, %v4213
        %v4230 = vmul.f32 %v4222, %v1071
        %v4231 = vmul.f32 %v4226, %v1075
        %v4232 = vmul.f32 %v4223, %v1071
        %v4233 = vmul.f32 %v4227, %v1075
        %v4234 = vmul.f32 %v4224, %v1071
        %v4235 = vmul.f32 %v4228, %v1075
        %v4236 = vmul.f32 %v4225, %v1071
        %v4237 = vmul.f32 %v4229, %v1075
        %v4238 = vpack.c.bf16 %v4232, %v4230
        %v4239 = vpack.c.bf16 %v4233, %v4231
        %v4240 = vpack.c.bf16 %v4236, %v4234
        %v4241 = vpack.c.bf16 %v4237, %v4235
        %4242 = vst [vmem:[#allocation6 + $0x220] sm:$0xff] %v4238
        %4243 = vst [vmem:[#allocation6 + $0x228] sm:$0xff] %v4239
        %4244 = vst [vmem:[#allocation6 + $0x230] sm:$0xff] %v4240
        %4245 = vst [vmem:[#allocation6 + $0x238] sm:$0xff] %v4241
        %4246 = vrot.lane.b32.xlu0 %v3869, 9
        %v4247 = vpop.permute.xlu0 %4246
        %4248 = vrot.lane.b32.xlu0 %v3871, 9
        %v4249 = vpop.permute.xlu0 %4248
        %4250 = vrot.lane.b32.xlu0 %v3873, 9
        %v4251 = vpop.permute.xlu0 %4250
        %4252 = vrot.lane.b32.xlu0 %v3875, 9
        %v4253 = vpop.permute.xlu0 %4252
        %4254 = vrot.lane.b32.xlu0 %v3870, 9
        %v4255 = vpop.permute.xlu0 %4254
        %4256 = vrot.lane.b32.xlu0 %v3872, 9
        %v4257 = vpop.permute.xlu0 %4256
        %4258 = vrot.lane.b32.xlu0 %v3874, 9
        %v4259 = vpop.permute.xlu0 %4258
        %4260 = vrot.lane.b32.xlu0 %v3876, 9
        %v4261 = vpop.permute.xlu0 %4260
        %v4262 = vsel %vm690, %v4247, %v4255
        %v4263 = vsel %vm690, %v4249, %v4257
        %v4264 = vsel %vm690, %v4251, %v4259
        %v4265 = vsel %vm690, %v4253, %v4261
        %v4266 = vsel %vm690, %v4255, %v4247
        %v4267 = vsel %vm690, %v4257, %v4249
        %v4268 = vsel %vm690, %v4259, %v4251
        %v4269 = vsel %vm690, %v4261, %v4253
        %v4270 = vmul.f32 %v4266, %v703
        %v4271 = vmul.f32 %v4262, %v707
        %v4272 = vmul.f32 %v4267, %v703
        %v4273 = vmul.f32 %v4263, %v707
        %v4274 = vmul.f32 %v4268, %v703
        %v4275 = vmul.f32 %v4264, %v707
        %v4276 = vmul.f32 %v4269, %v703
        %v4277 = vmul.f32 %v4265, %v707
        %v4278 = vpack.c.bf16 %v4272, %v4270
        %v4279 = vpack.c.bf16 %v4273, %v4271
        %v4280 = vpack.c.bf16 %v4276, %v4274
        %v4281 = vpack.c.bf16 %v4277, %v4275
        %4282 = vst [vmem:[#allocation6 + $0x240] sm:$0xff] %v4278
        %4283 = vst [vmem:[#allocation6 + $0x248] sm:$0xff] %v4279
        %4284 = vst [vmem:[#allocation6 + $0x250] sm:$0xff] %v4280
        %4285 = vst [vmem:[#allocation6 + $0x258] sm:$0xff] %v4281
        %4286 = vrot.lane.b32.xlu0 %v3869, 8
        %v4287 = vpop.permute.xlu0 %4286
        %4288 = vrot.lane.b32.xlu0 %v3871, 8
        %v4289 = vpop.permute.xlu0 %4288
        %4290 = vrot.lane.b32.xlu0 %v3873, 8
        %v4291 = vpop.permute.xlu0 %4290
        %4292 = vrot.lane.b32.xlu0 %v3875, 8
        %v4293 = vpop.permute.xlu0 %4292
        %4294 = vrot.lane.b32.xlu0 %v3870, 8
        %v4295 = vpop.permute.xlu0 %4294
        %4296 = vrot.lane.b32.xlu0 %v3872, 8
        %v4297 = vpop.permute.xlu0 %4296
        %4298 = vrot.lane.b32.xlu0 %v3874, 8
        %v4299 = vpop.permute.xlu0 %4298
        %4300 = vrot.lane.b32.xlu0 %v3876, 8
        %v4301 = vpop.permute.xlu0 %4300
        %v4302 = vsel %vm742, %v4287, %v4295
        %v4303 = vsel %vm742, %v4289, %v4297
        %v4304 = vsel %vm742, %v4291, %v4299
        %v4305 = vsel %vm742, %v4293, %v4301
        %v4306 = vsel %vm742, %v4295, %v4287
        %v4307 = vsel %vm742, %v4297, %v4289
        %v4308 = vsel %vm742, %v4299, %v4291
        %v4309 = vsel %vm742, %v4301, %v4293
        %v4310 = vmul.f32 %v4306, %v755
        %v4311 = vmul.f32 %v4302, %v759
        %v4312 = vmul.f32 %v4307, %v755
        %v4313 = vmul.f32 %v4303, %v759
        %v4314 = vmul.f32 %v4308, %v755
        %v4315 = vmul.f32 %v4304, %v759
        %v4316 = vmul.f32 %v4309, %v755
        %v4317 = vmul.f32 %v4305, %v759
        %v4318 = vpack.c.bf16 %v4312, %v4310
        %v4319 = vpack.c.bf16 %v4313, %v4311
        %v4320 = vpack.c.bf16 %v4316, %v4314
        %v4321 = vpack.c.bf16 %v4317, %v4315
        %4322 = vst [vmem:[#allocation6 + $0x260] sm:$0xff] %v4318
        %4323 = vst [vmem:[#allocation6 + $0x268] sm:$0xff] %v4319
        %4324 = vst [vmem:[#allocation6 + $0x270] sm:$0xff] %v4320
        %4325 = vst [vmem:[#allocation6 + $0x278] sm:$0xff] %v4321
        %4326 = vrot.lane.b32.xlu0 %v3869, 7
        %v4327 = vpop.permute.xlu0 %4326
        %4328 = vrot.lane.b32.xlu0 %v3871, 7
        %v4329 = vpop.permute.xlu0 %4328
        %4330 = vrot.lane.b32.xlu0 %v3873, 7
        %v4331 = vpop.permute.xlu0 %4330
        %4332 = vrot.lane.b32.xlu0 %v3875, 7
        %v4333 = vpop.permute.xlu0 %4332
        %4334 = vrot.lane.b32.xlu0 %v3870, 7
        %v4335 = vpop.permute.xlu0 %4334
        %4336 = vrot.lane.b32.xlu0 %v3872, 7
        %v4337 = vpop.permute.xlu0 %4336
        %4338 = vrot.lane.b32.xlu0 %v3874, 7
        %v4339 = vpop.permute.xlu0 %4338
        %4340 = vrot.lane.b32.xlu0 %v3876, 7
        %v4341 = vpop.permute.xlu0 %4340
        %v4342 = vsel %vm794, %v4327, %v4335
        %v4343 = vsel %vm794, %v4329, %v4337
        %v4344 = vsel %vm794, %v4331, %v4339
        %v4345 = vsel %vm794, %v4333, %v4341
        %v4346 = vsel %vm794, %v4335, %v4327
        %v4347 = vsel %vm794, %v4337, %v4329
        %v4348 = vsel %vm794, %v4339, %v4331
        %v4349 = vsel %vm794, %v4341, %v4333
        %v4350 = vmul.f32 %v4346, %v807
        %v4351 = vmul.f32 %v4342, %v811
        %v4352 = vmul.f32 %v4347, %v807
        %v4353 = vmul.f32 %v4343, %v811
        %v4354 = vmul.f32 %v4348, %v807
        %v4355 = vmul.f32 %v4344, %v811
        %v4356 = vmul.f32 %v4349, %v807
        %v4357 = vmul.f32 %v4345, %v811
        %v4358 = vpack.c.bf16 %v4352, %v4350
        %v4359 = vpack.c.bf16 %v4353, %v4351
        %v4360 = vpack.c.bf16 %v4356, %v4354
        %v4361 = vpack.c.bf16 %v4357, %v4355
        %4362 = vst [vmem:[#allocation6 + $0x280] sm:$0xff] %v4358
        %4363 = vst [vmem:[#allocation6 + $0x288] sm:$0xff] %v4359
        %4364 = vst [vmem:[#allocation6 + $0x290] sm:$0xff] %v4360
        %4365 = vst [vmem:[#allocation6 + $0x298] sm:$0xff] %v4361
        %4366 = vrot.lane.b32.xlu0 %v3869, 1
        %v4367 = vpop.permute.xlu0 %4366
        %4368 = vrot.lane.b32.xlu0 %v3871, 1
        %v4369 = vpop.permute.xlu0 %4368
        %4370 = vrot.lane.b32.xlu0 %v3873, 1
        %v4371 = vpop.permute.xlu0 %4370
        %4372 = vrot.lane.b32.xlu0 %v3875, 1
        %v4373 = vpop.permute.xlu0 %4372
        %4374 = vrot.lane.b32.xlu0 %v3870, 1
        %v4375 = vpop.permute.xlu0 %4374
        %4376 = vrot.lane.b32.xlu0 %v3872, 1
        %v4377 = vpop.permute.xlu0 %4376
        %4378 = vrot.lane.b32.xlu0 %v3874, 1
        %v4379 = vpop.permute.xlu0 %4378
        %4380 = vrot.lane.b32.xlu0 %v3876, 1
        %v4381 = vpop.permute.xlu0 %4380
        %v4382 = vsel %vm846, %v4367, %v4375
        %v4383 = vsel %vm846, %v4369, %v4377
        %v4384 = vsel %vm846, %v4371, %v4379
        %v4385 = vsel %vm846, %v4373, %v4381
        %v4386 = vsel %vm846, %v4375, %v4367
        %v4387 = vsel %vm846, %v4377, %v4369
        %v4388 = vsel %vm846, %v4379, %v4371
        %v4389 = vsel %vm846, %v4381, %v4373
        %v4390 = vmul.f32 %v4386, %v859
        %v4391 = vmul.f32 %v4382, %v863
        %v4392 = vmul.f32 %v4387, %v859
        %v4393 = vmul.f32 %v4383, %v863
        %v4394 = vmul.f32 %v4388, %v859
        %v4395 = vmul.f32 %v4384, %v863
        %v4396 = vmul.f32 %v4389, %v859
        %v4397 = vmul.f32 %v4385, %v863
        %v4398 = vpack.c.bf16 %v4392, %v4390
        %v4399 = vpack.c.bf16 %v4393, %v4391
        %v4400 = vpack.c.bf16 %v4396, %v4394
        %v4401 = vpack.c.bf16 %v4397, %v4395
        %4402 = vst [vmem:[#allocation6 + $0x2a0] sm:$0xff] %v4398
        %4403 = vst [vmem:[#allocation6 + $0x2a8] sm:$0xff] %v4399
        %4404 = vst [vmem:[#allocation6 + $0x2b0] sm:$0xff] %v4400
        %4405 = vst [vmem:[#allocation6 + $0x2b8] sm:$0xff] %v4401
        %4406 = vst [vmem:[#allocation6 + $0x2c0] sm:$0xff] %v3865
        %4407 = vst [vmem:[#allocation6 + $0x2c8] sm:$0xff] %v3866
        %4408 = vst [vmem:[#allocation6 + $0x2d0] sm:$0xff] %v3867
        %4409 = vst [vmem:[#allocation6 + $0x2d8] sm:$0xff] %v3868
        %4410 = vrot.lane.b32.xlu0 %v3869, 127
        %v4411 = vpop.permute.xlu0 %4410
        %4412 = vrot.lane.b32.xlu0 %v3871, 127
        %v4413 = vpop.permute.xlu0 %4412
        %4414 = vrot.lane.b32.xlu0 %v3873, 127
        %v4415 = vpop.permute.xlu0 %4414
        %4416 = vrot.lane.b32.xlu0 %v3875, 127
        %v4417 = vpop.permute.xlu0 %4416
        %4418 = vrot.lane.b32.xlu0 %v3870, 127
        %v4419 = vpop.permute.xlu0 %4418
        %4420 = vrot.lane.b32.xlu0 %v3872, 127
        %v4421 = vpop.permute.xlu0 %4420
        %4422 = vrot.lane.b32.xlu0 %v3874, 127
        %v4423 = vpop.permute.xlu0 %4422
        %4424 = vrot.lane.b32.xlu0 %v3876, 127
        %v4425 = vpop.permute.xlu0 %4424
        %v4426 = vsel %vm902, %v4411, %v4419
        %v4427 = vsel %vm902, %v4413, %v4421
        %v4428 = vsel %vm902, %v4415, %v4423
        %v4429 = vsel %vm902, %v4417, %v4425
        %v4430 = vsel %vm902, %v4419, %v4411
        %v4431 = vsel %vm902, %v4421, %v4413
        %v4432 = vsel %vm902, %v4423, %v4415
        %v4433 = vsel %vm902, %v4425, %v4417
        %v4434 = vmul.f32 %v4426, %v915
        %v4435 = vmul.f32 %v4430, %v919
        %v4436 = vmul.f32 %v4427, %v915
        %v4437 = vmul.f32 %v4431, %v919
        %v4438 = vmul.f32 %v4428, %v915
        %v4439 = vmul.f32 %v4432, %v919
        %v4440 = vmul.f32 %v4429, %v915
        %v4441 = vmul.f32 %v4433, %v919
        %v4442 = vpack.c.bf16 %v4436, %v4434
        %v4443 = vpack.c.bf16 %v4437, %v4435
        %v4444 = vpack.c.bf16 %v4440, %v4438
        %v4445 = vpack.c.bf16 %v4441, %v4439
        %4446 = vst [vmem:[#allocation6 + $0x2e0] sm:$0xff] %v4442
        %4447 = vst [vmem:[#allocation6 + $0x2e8] sm:$0xff] %v4443
        %4448 = vst [vmem:[#allocation6 + $0x2f0] sm:$0xff] %v4444
        %4449 = vst [vmem:[#allocation6 + $0x2f8] sm:$0xff] %v4445
        %4450 = vrot.lane.b32.xlu0 %v3869, 121
        %v4451 = vpop.permute.xlu0 %4450
        %4452 = vrot.lane.b32.xlu0 %v3871, 121
        %v4453 = vpop.permute.xlu0 %4452
        %4454 = vrot.lane.b32.xlu0 %v3873, 121
        %v4455 = vpop.permute.xlu0 %4454
        %4456 = vrot.lane.b32.xlu0 %v3875, 121
        %v4457 = vpop.permute.xlu0 %4456
        %4458 = vrot.lane.b32.xlu0 %v3870, 121
        %v4459 = vpop.permute.xlu0 %4458
        %4460 = vrot.lane.b32.xlu0 %v3872, 121
        %v4461 = vpop.permute.xlu0 %4460
        %4462 = vrot.lane.b32.xlu0 %v3874, 121
        %v4463 = vpop.permute.xlu0 %4462
        %4464 = vrot.lane.b32.xlu0 %v3876, 121
        %v4465 = vpop.permute.xlu0 %4464
        %v4466 = vsel %vm954, %v4451, %v4459
        %v4467 = vsel %vm954, %v4453, %v4461
        %v4468 = vsel %vm954, %v4455, %v4463
        %v4469 = vsel %vm954, %v4457, %v4465
        %v4470 = vsel %vm954, %v4459, %v4451
        %v4471 = vsel %vm954, %v4461, %v4453
        %v4472 = vsel %vm954, %v4463, %v4455
        %v4473 = vsel %vm954, %v4465, %v4457
        %v4474 = vmul.f32 %v4466, %v967
        %v4475 = vmul.f32 %v4470, %v971
        %v4476 = vmul.f32 %v4467, %v967
        %v4477 = vmul.f32 %v4471, %v971
        %v4478 = vmul.f32 %v4468, %v967
        %v4479 = vmul.f32 %v4472, %v971
        %v4480 = vmul.f32 %v4469, %v967
        %v4481 = vmul.f32 %v4473, %v971
        %v4482 = vpack.c.bf16 %v4476, %v4474
        %v4483 = vpack.c.bf16 %v4477, %v4475
        %v4484 = vpack.c.bf16 %v4480, %v4478
        %v4485 = vpack.c.bf16 %v4481, %v4479
        %4486 = vst [vmem:[#allocation6 + $0x300] sm:$0xff] %v4482
        %4487 = vst [vmem:[#allocation6 + $0x308] sm:$0xff] %v4483
        %4488 = vst [vmem:[#allocation6 + $0x310] sm:$0xff] %v4484
        %4489 = vst [vmem:[#allocation6 + $0x318] sm:$0xff] %v4485
        %4490 = vrot.lane.b32.xlu0 %v3869, 120
        %v4491 = vpop.permute.xlu0 %4490
        %4492 = vrot.lane.b32.xlu0 %v3871, 120
        %v4493 = vpop.permute.xlu0 %4492
        %4494 = vrot.lane.b32.xlu0 %v3873, 120
        %v4495 = vpop.permute.xlu0 %4494
        %4496 = vrot.lane.b32.xlu0 %v3875, 120
        %v4497 = vpop.permute.xlu0 %4496
        %4498 = vrot.lane.b32.xlu0 %v3870, 120
        %v4499 = vpop.permute.xlu0 %4498
        %4500 = vrot.lane.b32.xlu0 %v3872, 120
        %v4501 = vpop.permute.xlu0 %4500
        %4502 = vrot.lane.b32.xlu0 %v3874, 120
        %v4503 = vpop.permute.xlu0 %4502
        %4504 = vrot.lane.b32.xlu0 %v3876, 120
        %v4505 = vpop.permute.xlu0 %4504
        %v4506 = vsel %vm1006, %v4491, %v4499
        %v4507 = vsel %vm1006, %v4493, %v4501
        %v4508 = vsel %vm1006, %v4495, %v4503
        %v4509 = vsel %vm1006, %v4497, %v4505
        %v4510 = vsel %vm1006, %v4499, %v4491
        %v4511 = vsel %vm1006, %v4501, %v4493
        %v4512 = vsel %vm1006, %v4503, %v4495
        %v4513 = vsel %vm1006, %v4505, %v4497
        %v4514 = vmul.f32 %v4506, %v1019
        %v4515 = vmul.f32 %v4510, %v1023
        %v4516 = vmul.f32 %v4507, %v1019
        %v4517 = vmul.f32 %v4511, %v1023
        %v4518 = vmul.f32 %v4508, %v1019
        %v4519 = vmul.f32 %v4512, %v1023
        %v4520 = vmul.f32 %v4509, %v1019
        %v4521 = vmul.f32 %v4513, %v1023
        %v4522 = vpack.c.bf16 %v4516, %v4514
        %v4523 = vpack.c.bf16 %v4517, %v4515
        %v4524 = vpack.c.bf16 %v4520, %v4518
        %v4525 = vpack.c.bf16 %v4521, %v4519
        %4526 = vst [vmem:[#allocation6 + $0x320] sm:$0xff] %v4522
        %4527 = vst [vmem:[#allocation6 + $0x328] sm:$0xff] %v4523
        %4528 = vst [vmem:[#allocation6 + $0x330] sm:$0xff] %v4524
        %4529 = vst [vmem:[#allocation6 + $0x338] sm:$0xff] %v4525
        %4530 = vrot.lane.b32.xlu0 %v3869, 119
        %v4531 = vpop.permute.xlu0 %4530
        %4532 = vrot.lane.b32.xlu0 %v3871, 119
        %v4533 = vpop.permute.xlu0 %4532
        %4534 = vrot.lane.b32.xlu0 %v3873, 119
        %v4535 = vpop.permute.xlu0 %4534
        %4536 = vrot.lane.b32.xlu0 %v3875, 119
        %v4537 = vpop.permute.xlu0 %4536
        %4538 = vrot.lane.b32.xlu0 %v3870, 119
        %v4539 = vpop.permute.xlu0 %4538
        %4540 = vrot.lane.b32.xlu0 %v3872, 119
        %v4541 = vpop.permute.xlu0 %4540
        %4542 = vrot.lane.b32.xlu0 %v3874, 119
        %v4543 = vpop.permute.xlu0 %4542
        %4544 = vrot.lane.b32.xlu0 %v3876, 119
        %v4545 = vpop.permute.xlu0 %4544
        %v4546 = vsel %vm1058, %v4531, %v4539
        %v4547 = vsel %vm1058, %v4533, %v4541
        %v4548 = vsel %vm1058, %v4535, %v4543
        %v4549 = vsel %vm1058, %v4537, %v4545
        %v4550 = vsel %vm1058, %v4539, %v4531
        %v4551 = vsel %vm1058, %v4541, %v4533
        %v4552 = vsel %vm1058, %v4543, %v4535
        %v4553 = vsel %vm1058, %v4545, %v4537
        %v4554 = vmul.f32 %v4546, %v1071
        %v4555 = vmul.f32 %v4550, %v1075
        %v4556 = vmul.f32 %v4547, %v1071
        %v4557 = vmul.f32 %v4551, %v1075
        %v4558 = vmul.f32 %v4548, %v1071
        %v4559 = vmul.f32 %v4552, %v1075
        %v4560 = vmul.f32 %v4549, %v1071
        %v4561 = vmul.f32 %v4553, %v1075
        %v4562 = vpack.c.bf16 %v4556, %v4554
        %v4563 = vpack.c.bf16 %v4557, %v4555
        %v4564 = vpack.c.bf16 %v4560, %v4558
        %v4565 = vpack.c.bf16 %v4561, %v4559
        %4566 = vst [vmem:[#allocation6 + $0x340] sm:$0xff] %v4562
        %4567 = vst [vmem:[#allocation6 + $0x348] sm:$0xff] %v4563
        %4568 = vst [vmem:[#allocation6 + $0x350] sm:$0xff] %v4564
        %4569 = vst [vmem:[#allocation6 + $0x358] sm:$0xff] %v4565
        %v4570 = vld [vmem:[%s8] sm:$0xff]
        %v4571 = vld [vmem:[%s8 + $0x8] sm:$0xff]
        %v4572 = vld [vmem:[%s8 + $0x10] sm:$0xf]
        %v4573 = vld [vmem:[%s8 + $0x14] sm:$0xff]
        %v4574 = vld [vmem:[%s8 + $0x1c] sm:$0xff]
        %v4575 = vld [vmem:[%s8 + $0x24] sm:$0xf]
        %v4576 = vld [vmem:[%s8 + $0x28] sm:$0xff]
        %v4577 = vld [vmem:[%s8 + $0x30] sm:$0xff]
        %v4578 = vld [vmem:[%s8 + $0x38] sm:$0xf]
        %v4579 = vld [vmem:[%s8 + $0x3c] sm:$0xff]
        %v4580 = vld [vmem:[%s8 + $0x44] sm:$0xff]
        %v4581 = vld [vmem:[%s8 + $0x4c] sm:$0xf]
        %v4582 = vld [vmem:[%s8 + $0x50] sm:$0xff]
        %v4583 = vld [vmem:[%s8 + $0x58] sm:$0xff]
        %v4584 = vld [vmem:[%s8 + $0x60] sm:$0xf]
        %v4585 = vld [vmem:[%s8 + $0x64] sm:$0xff]
        %v4586 = vld [vmem:[%s8 + $0x6c] sm:$0xff]
        %v4587 = vld [vmem:[%s8 + $0x74] sm:$0xf]
        %v4588 = vld [vmem:[%s8 + $0x78] sm:$0xff]
        %v4589 = vld [vmem:[%s8 + $0x80] sm:$0xff]
        %v4590 = vld [vmem:[%s8 + $0x88] sm:$0xf]
        %v4591 = vld [vmem:[%s8 + $0x8c] sm:$0xff]
        %v4592 = vld [vmem:[%s8 + $0x94] sm:$0xff]
        %v4593 = vld [vmem:[%s8 + $0x9c] sm:$0xf]
        %v4594 = vld [vmem:[%s8 + $0xa0] sm:$0xff]
        %v4595 = vld [vmem:[%s8 + $0xa8] sm:$0xff]
        %v4596 = vld [vmem:[%s8 + $0xb0] sm:$0xf]
        %v4597 = vld [vmem:[%s8 + $0xb4] sm:$0xff]
        %v4598 = vld [vmem:[%s8 + $0xbc] sm:$0xff]
        %v4599 = vld [vmem:[%s8 + $0xc4] sm:$0xf]
        %v4600 = vld [vmem:[%s8 + $0xc8] sm:$0xff]
        %v4601 = vld [vmem:[%s8 + $0xd0] sm:$0xff]
        %v4602 = vld [vmem:[%s8 + $0xd8] sm:$0xf]
        %v4603 = vld [vmem:[%s8 + $0xdc] sm:$0xff]
        %v4604 = vld [vmem:[%s8 + $0xe4] sm:$0xff]
        %v4605 = vld [vmem:[%s8 + $0xec] sm:$0xf]
        %v4606 = vld [vmem:[%s8 + $0xf0] sm:$0xff]
        %v4607 = vld [vmem:[%s8 + $0xf8] sm:$0xff]
        %v4608 = vld [vmem:[%s8 + $0x100] sm:$0xf]
        %v4609 = vld [vmem:[%s8 + $0x104] sm:$0xff]
        %v4610 = vld [vmem:[%s8 + $0x10c] sm:$0xff]
        %v4611 = vld [vmem:[%s8 + $0x114] sm:$0xf]
        %v4612 = vld [vmem:[%s8 + $0x118] sm:$0xff]
        %v4613 = vld [vmem:[%s8 + $0x120] sm:$0xff]
        %v4614 = vld [vmem:[%s8 + $0x128] sm:$0xf]
        %v4615 = vld [vmem:[%s8 + $0x12c] sm:$0xff]
        %v4616 = vld [vmem:[%s8 + $0x134] sm:$0xff]
        %v4617 = vld [vmem:[%s8 + $0x13c] sm:$0xf]
        %v4618 = vld [vmem:[#allocation6 + $0x120] sm:$0xff]
        %v4619 = vld [vmem:[#allocation6 + $0x128] sm:$0xff]
        %v4620 = vld [vmem:[#allocation6 + $0x130] sm:$0xff]
        %v4621 = vld [vmem:[#allocation6 + $0x138] sm:$0xff]
        %v4622 = vld [vmem:[#allocation6 + $0x140] sm:$0xff]
        %v4623 = vld [vmem:[#allocation6 + $0x148] sm:$0xff]
        %v4624 = vld [vmem:[#allocation6 + $0x150] sm:$0xff]
        %v4625 = vld [vmem:[#allocation6 + $0x158] sm:$0xff]
        %v4626 = vld [vmem:[#allocation6 + $0x160] sm:$0xff]
        %v4627 = vld [vmem:[#allocation6 + $0x168] sm:$0xff]
        %v4628 = vld [vmem:[#allocation6 + $0x170] sm:$0xff]
        %v4629 = vld [vmem:[#allocation6 + $0x178] sm:$0xff]
        %v4630 = vld [vmem:[#allocation6 + $0x180] sm:$0xff]
        %v4631 = vld [vmem:[#allocation6 + $0x188] sm:$0xff]
        %v4632 = vld [vmem:[#allocation6 + $0x190] sm:$0xff]
        %v4633 = vld [vmem:[#allocation6 + $0x198] sm:$0xff]
        %v4634 = vld [vmem:[#allocation6 + $0x1a0] sm:$0xff]
        %v4635 = vld [vmem:[#allocation6 + $0x1a8] sm:$0xff]
        %v4636 = vld [vmem:[#allocation6 + $0x1b0] sm:$0xff]
        %v4637 = vld [vmem:[#allocation6 + $0x1b8] sm:$0xff]
        %v4638 = vld [vmem:[#allocation6 + $0x1c0] sm:$0xff]
        %v4639 = vld [vmem:[#allocation6 + $0x1c8] sm:$0xff]
        %v4640 = vld [vmem:[#allocation6 + $0x1d0] sm:$0xff]
        %v4641 = vld [vmem:[#allocation6 + $0x1d8] sm:$0xff]
        %v4642 = vld [vmem:[#allocation6 + $0x1e0] sm:$0xff]
        %v4643 = vld [vmem:[#allocation6 + $0x1e8] sm:$0xff]
        %v4644 = vld [vmem:[#allocation6 + $0x1f0] sm:$0xff]
        %v4645 = vld [vmem:[#allocation6 + $0x1f8] sm:$0xff]
        %v4646 = vld [vmem:[#allocation6 + $0x200] sm:$0xff]
        %v4647 = vld [vmem:[#allocation6 + $0x208] sm:$0xff]
        %v4648 = vld [vmem:[#allocation6 + $0x210] sm:$0xff]
        %v4649 = vld [vmem:[#allocation6 + $0x218] sm:$0xff]
        %v4650 = vld [vmem:[#allocation6 + $0x220] sm:$0xff]
        %v4651 = vld [vmem:[#allocation6 + $0x228] sm:$0xff]
        %v4652 = vld [vmem:[#allocation6 + $0x230] sm:$0xff]
        %v4653 = vld [vmem:[#allocation6 + $0x238] sm:$0xff]
        %v4654 = vld [vmem:[#allocation6 + $0x240] sm:$0xff]
        %v4655 = vld [vmem:[#allocation6 + $0x248] sm:$0xff]
        %v4656 = vld [vmem:[#allocation6 + $0x250] sm:$0xff]
        %v4657 = vld [vmem:[#allocation6 + $0x258] sm:$0xff]
        %v4658 = vld [vmem:[#allocation6 + $0x260] sm:$0xff]
        %v4659 = vld [vmem:[#allocation6 + $0x268] sm:$0xff]
        %v4660 = vld [vmem:[#allocation6 + $0x270] sm:$0xff]
        %v4661 = vld [vmem:[#allocation6 + $0x278] sm:$0xff]
        %v4662 = vld [vmem:[#allocation6 + $0x280] sm:$0xff]
        %v4663 = vld [vmem:[#allocation6 + $0x288] sm:$0xff]
        %v4664 = vld [vmem:[#allocation6 + $0x290] sm:$0xff]
        %v4665 = vld [vmem:[#allocation6 + $0x298] sm:$0xff]
        %v4666 = vld [vmem:[#allocation6 + $0x2a0] sm:$0xff]
        %v4667 = vld [vmem:[#allocation6 + $0x2a8] sm:$0xff]
        %v4668 = vld [vmem:[#allocation6 + $0x2b0] sm:$0xff]
        %v4669 = vld [vmem:[#allocation6 + $0x2b8] sm:$0xff]
        %v4670 = vld [vmem:[#allocation6 + $0x2c0] sm:$0xff]
        %v4671 = vld [vmem:[#allocation6 + $0x2c8] sm:$0xff]
        %v4672 = vld [vmem:[#allocation6 + $0x2d0] sm:$0xff]
        %v4673 = vld [vmem:[#allocation6 + $0x2d8] sm:$0xff]
        %v4674 = vld [vmem:[#allocation6 + $0x2e0] sm:$0xff]
        %v4675 = vld [vmem:[#allocation6 + $0x2e8] sm:$0xff]
        %v4676 = vld [vmem:[#allocation6 + $0x2f0] sm:$0xff]
        %v4677 = vld [vmem:[#allocation6 + $0x2f8] sm:$0xff]
        %v4678 = vld [vmem:[#allocation6 + $0x300] sm:$0xff]
        %v4679 = vld [vmem:[#allocation6 + $0x308] sm:$0xff]
        %v4680 = vld [vmem:[#allocation6 + $0x310] sm:$0xff]
        %v4681 = vld [vmem:[#allocation6 + $0x318] sm:$0xff]
        %v4682 = vld [vmem:[#allocation6 + $0x320] sm:$0xff]
        %v4683 = vld [vmem:[#allocation6 + $0x328] sm:$0xff]
        %v4684 = vld [vmem:[#allocation6 + $0x330] sm:$0xff]
        %v4685 = vld [vmem:[#allocation6 + $0x338] sm:$0xff]
        %v4686 = vld [vmem:[#allocation6 + $0x340] sm:$0xff]
        %v4687 = vld [vmem:[#allocation6 + $0x348] sm:$0xff]
        %v4688 = vld [vmem:[#allocation6 + $0x350] sm:$0xff]
        %v4689 = vld [vmem:[#allocation6 + $0x358] sm:$0xff]
        %v4738 = vunpack.c.l.b16 %v4570
        %v4739 = vunpack.c.h.b16 %v4570
        %v4740 = vunpack.c.l.b16 %v4571
        %v4741 = vunpack.c.h.b16 %v4571
        %v4742 = vunpack.c.l.b16 %v4572
        %v4743 = vunpack.c.l.b16 %v4573
        %v4744 = vunpack.c.h.b16 %v4573
        %v4745 = vunpack.c.l.b16 %v4574
        %v4746 = vunpack.c.h.b16 %v4574
        %v4747 = vunpack.c.l.b16 %v4575
        %v4748 = vunpack.c.l.b16 %v4576
        %v4749 = vunpack.c.h.b16 %v4576
        %v4750 = vunpack.c.l.b16 %v4577
        %v4751 = vunpack.c.h.b16 %v4577
        %v4752 = vunpack.c.l.b16 %v4578
        %v4753 = vunpack.c.l.b16 %v4579
        %v4754 = vunpack.c.h.b16 %v4579
        %v4755 = vunpack.c.l.b16 %v4580
        %v4756 = vunpack.c.h.b16 %v4580
        %v4757 = vunpack.c.l.b16 %v4581
        %v4758 = vunpack.c.l.b16 %v4582
        %v4759 = vunpack.c.h.b16 %v4582
        %v4760 = vunpack.c.l.b16 %v4583
        %v4761 = vunpack.c.h.b16 %v4583
        %v4762 = vunpack.c.l.b16 %v4584
        %v4763 = vunpack.c.l.b16 %v4585
        %v4764 = vunpack.c.h.b16 %v4585
        %v4765 = vunpack.c.l.b16 %v4586
        %v4766 = vunpack.c.h.b16 %v4586
        %v4767 = vunpack.c.l.b16 %v4587
        %v4768 = vunpack.c.l.b16 %v4588
        %v4769 = vunpack.c.h.b16 %v4588
        %v4770 = vunpack.c.l.b16 %v4589
        %v4771 = vunpack.c.h.b16 %v4589
        %v4772 = vunpack.c.l.b16 %v4590
        %v4773 = vunpack.c.l.b16 %v4591
        %v4774 = vunpack.c.h.b16 %v4591
        %v4775 = vunpack.c.l.b16 %v4592
        %v4776 = vunpack.c.h.b16 %v4592
        %v4777 = vunpack.c.l.b16 %v4593
        %v4778 = vunpack.c.l.b16 %v4594
        %v4779 = vunpack.c.h.b16 %v4594
        %v4780 = vunpack.c.l.b16 %v4595
        %v4781 = vunpack.c.h.b16 %v4595
        %v4782 = vunpack.c.l.b16 %v4596
        %v4783 = vunpack.c.l.b16 %v4597
        %v4784 = vunpack.c.h.b16 %v4597
        %v4785 = vunpack.c.l.b16 %v4598
        %v4786 = vunpack.c.h.b16 %v4598
        %v4787 = vunpack.c.l.b16 %v4599
        %v4788 = vunpack.c.l.b16 %v4600
        %v4789 = vunpack.c.h.b16 %v4600
        %v4790 = vunpack.c.l.b16 %v4601
        %v4791 = vunpack.c.h.b16 %v4601
        %v4792 = vunpack.c.l.b16 %v4602
        %v4793 = vunpack.c.l.b16 %v4603
        %v4794 = vunpack.c.h.b16 %v4603
        %v4795 = vunpack.c.l.b16 %v4604
        %v4796 = vunpack.c.h.b16 %v4604
        %v4797 = vunpack.c.l.b16 %v4605
        %v4798 = vunpack.c.l.b16 %v4606
        %v4799 = vunpack.c.h.b16 %v4606
        %v4800 = vunpack.c.l.b16 %v4607
        %v4801 = vunpack.c.h.b16 %v4607
        %v4802 = vunpack.c.l.b16 %v4608
        %v4803 = vunpack.c.l.b16 %v4609
        %v4804 = vunpack.c.h.b16 %v4609
        %v4805 = vunpack.c.l.b16 %v4610
        %v4806 = vunpack.c.h.b16 %v4610
        %v4807 = vunpack.c.l.b16 %v4611
        %v4808 = vunpack.c.l.b16 %v4612
        %v4809 = vunpack.c.h.b16 %v4612
        %v4810 = vunpack.c.l.b16 %v4613
        %v4811 = vunpack.c.h.b16 %v4613
        %v4812 = vunpack.c.l.b16 %v4614
        %v4813 = vunpack.c.l.b16 %v4615
        %v4814 = vunpack.c.h.b16 %v4615
        %v4815 = vunpack.c.l.b16 %v4616
        %v4816 = vunpack.c.h.b16 %v4616
        %v4817 = vunpack.c.l.b16 %v4617
        %v4818 = vpack.c.b16 %v4743, %v4738
        %v4819 = vpack.c.b16 %v4744, %v4739
        %v4820 = vpack.c.b16 %v4745, %v4740
        %v4821 = vpack.c.b16 %v4746, %v4741
        %v4822 = vpack.c.b16 %v4747, %v4742
        %v4823 = vpack.c.b16 %v4753, %v4748
        %v4824 = vpack.c.b16 %v4754, %v4749
        %v4825 = vpack.c.b16 %v4755, %v4750
        %v4826 = vpack.c.b16 %v4756, %v4751
        %v4827 = vpack.c.b16 %v4757, %v4752
        %v4828 = vpack.c.b16 %v4763, %v4758
        %v4829 = vpack.c.b16 %v4764, %v4759
        %v4830 = vpack.c.b16 %v4765, %v4760
        %v4831 = vpack.c.b16 %v4766, %v4761
        %v4832 = vpack.c.b16 %v4767, %v4762
        %v4833 = vpack.c.b16 %v4773, %v4768
        %v4834 = vpack.c.b16 %v4774, %v4769
        %v4835 = vpack.c.b16 %v4775, %v4770
        %v4836 = vpack.c.b16 %v4776, %v4771
        %v4837 = vpack.c.b16 %v4777, %v4772
        %v4838 = vpack.c.b16 %v4783, %v4778
        %v4839 = vpack.c.b16 %v4784, %v4779
        %v4840 = vpack.c.b16 %v4785, %v4780
        %v4841 = vpack.c.b16 %v4786, %v4781
        %v4842 = vpack.c.b16 %v4787, %v4782
        %v4843 = vpack.c.b16 %v4793, %v4788
        %v4844 = vpack.c.b16 %v4794, %v4789
        %v4845 = vpack.c.b16 %v4795, %v4790
        %v4846 = vpack.c.b16 %v4796, %v4791
        %v4847 = vpack.c.b16 %v4797, %v4792
        %v4848 = vpack.c.b16 %v4803, %v4798
        %v4849 = vpack.c.b16 %v4804, %v4799
        %v4850 = vpack.c.b16 %v4805, %v4800
        %v4851 = vpack.c.b16 %v4806, %v4801
        %v4852 = vpack.c.b16 %v4807, %v4802
        %v4853 = vpack.c.b16 %v4813, %v4808
        %v4854 = vpack.c.b16 %v4814, %v4809
        %v4855 = vpack.c.b16 %v4815, %v4810
        %v4856 = vpack.c.b16 %v4816, %v4811
        %v4857 = vpack.c.b16 %v4817, %v4812
        %v4891 = vsel %vm3529, %v4822, 0
        %v4894 = vsel %vm3529, %v4827, 0
        %v4897 = vsel %vm3529, %v4832, 0
        %v4900 = vsel %vm3529, %v4837, 0
        %v4903 = vsel %vm3529, %v4842, 0
        %v4906 = vsel %vm3529, %v4847, 0
        %v4909 = vsel %vm3529, %v4852, 0
        %v4912 = vsel %vm3529, %v4857, 0
        %4914 = vmatprep.subr.bf16.mxu0 %v4619
        %4915 = vmatpush1.bf16.msra.mxu0 %v4618
        %4916 = vmatprep.subr.bf16.mxu0 %v4621
        %4917 = vmatpush1.bf16.msra.mxu0 %v4620
        %4918 = vmatprep.subr.bf16.mxu0 %v4623
        %4919 = vmatpush1.bf16.msra.mxu0 %v4622
        %4920 = vmatprep.subr.bf16.mxu0 %v4625
        %4921 = vmatpush1.bf16.msra.mxu0 %v4624
        %4922 = vmatprep.subr.bf16.mxu0 %v4627
        %4923 = vmatpush1.bf16.msra.mxu0 %v4626
        %4924 = vmatprep.subr.bf16.mxu0 %v4629
        %4925 = vmatpush1.bf16.msra.mxu0 %v4628
        %4926 = vmatprep.subr.bf16.mxu0 %v4631
        %4927 = vmatpush1.bf16.msra.mxu0 %v4630
        %4928 = vmatprep.subr.bf16.mxu0 %v4633
        %4929 = vmatpush1.bf16.msra.mxu0 %v4632
        %4930 = vmatprep.subr.bf16.mxu0 %v4635
        %4931 = vmatpush1.bf16.msra.mxu0 %v4634
        %4932 = vmatprep.subr.bf16.mxu0 %v4637
        %4933 = vmatpush1.bf16.msra.mxu0 %v4636
        %4934 = vmatprep.subr.bf16.mxu0 %v4639
        %4935 = vmatpush1.bf16.msra.mxu0 %v4638
        %4936 = vmatprep.subr.bf16.mxu0 %v4641
        %4937 = vmatpush1.bf16.msra.mxu0 %v4640
        %4938 = vmatprep.subr.bf16.mxu0 %v4643
        %4939 = vmatpush1.bf16.msra.mxu0 %v4642
        %4940 = vmatprep.subr.bf16.mxu0 %v4645
        %4941 = vmatpush1.bf16.msra.mxu0 %v4644
        %4942 = vmatprep.subr.bf16.mxu0 %v4647
        %4943 = vmatpush1.bf16.msra.mxu0 %v4646
        %4944 = vmatprep.subr.bf16.mxu0 %v4649
        %4945 = vmatpush1.bf16.msra.mxu0 %v4648
        %4946 = vmatprep.mubr.bf16.mxu0 %v4819
        %4947 = vmatmul.mubr.bf16.gmra.mrb[0].mxu0 %v4818
        %v4948 = vpop.f32.mrb[0].mxu0
        %v4949 = vadd.f32 0.0, %v4948
        %v4950 = vpop.f32.mrb[0].mxu0
        %v4951 = vadd.f32 0.0, %v4950
        %v4952 = vpop.f32.mrb[0].mxu0
        %v4953 = vadd.f32 0.0, %v4952
        %v4954 = vpop.f32.mrb[0].mxu0
        %v4955 = vadd.f32 0.0, %v4954
        %4956 = vmatprep.mubr.bf16.mxu0 %v4824
        %4957 = vmatmul.mubr.bf16.gmra.mrb[0].mxu0 %v4823
        %v4958 = vpop.f32.mrb[0].mxu0
        %v4959 = vadd.f32 0.0, %v4958
        %v4960 = vpop.f32.mrb[0].mxu0
        %v4961 = vadd.f32 0.0, %v4960
        %v4962 = vpop.f32.mrb[0].mxu0
        %v4963 = vadd.f32 0.0, %v4962
        %v4964 = vpop.f32.mrb[0].mxu0
        %v4965 = vadd.f32 0.0, %v4964
        %4966 = vmatprep.mubr.bf16.mxu0 %v4829
        %4967 = vmatmul.mubr.bf16.gmra.mrb[0].mxu0 %v4828
        %v4968 = vpop.f32.mrb[0].mxu0
        %v4969 = vadd.f32 0.0, %v4968
        %v4970 = vpop.f32.mrb[0].mxu0
        %v4971 = vadd.f32 0.0, %v4970
        %v4972 = vpop.f32.mrb[0].mxu0
        %v4973 = vadd.f32 0.0, %v4972
        %v4974 = vpop.f32.mrb[0].mxu0
        %v4975 = vadd.f32 0.0, %v4974
        %4976 = vmatprep.mubr.bf16.mxu0 %v4834
        %4977 = vmatmul.mubr.bf16.gmra.mrb[0].mxu0 %v4833
        %v4978 = vpop.f32.mrb[0].mxu0
        %v4979 = vadd.f32 0.0, %v4978
        %v4980 = vpop.f32.mrb[0].mxu0
        %v4981 = vadd.f32 0.0, %v4980
        %v4982 = vpop.f32.mrb[0].mxu0
        %v4983 = vadd.f32 0.0, %v4982
        %v4984 = vpop.f32.mrb[0].mxu0
        %v4985 = vadd.f32 0.0, %v4984
        %4986 = vmatprep.mubr.bf16.mxu0 %v4839
        %4987 = vmatmul.mubr.bf16.gmra.mrb[0].mxu0 %v4838
        %v4988 = vpop.f32.mrb[0].mxu0
        %v4989 = vadd.f32 0.0, %v4988
        %v4990 = vpop.f32.mrb[0].mxu0
        %v4991 = vadd.f32 0.0, %v4990
        %v4992 = vpop.f32.mrb[0].mxu0
        %v4993 = vadd.f32 0.0, %v4992
        %v4994 = vpop.f32.mrb[0].mxu0
        %v4995 = vadd.f32 0.0, %v4994
        %4996 = vmatprep.mubr.bf16.mxu0 %v4844
        %4997 = vmatmul.mubr.bf16.gmra.mrb[0].mxu0 %v4843
        %v4998 = vpop.f32.mrb[0].mxu0
        %v4999 = vadd.f32 0.0, %v4998
        %v5000 = vpop.f32.mrb[0].mxu0
        %v5001 = vadd.f32 0.0, %v5000
        %v5002 = vpop.f32.mrb[0].mxu0
        %v5003 = vadd.f32 0.0, %v5002
        %v5004 = vpop.f32.mrb[0].mxu0
        %v5005 = vadd.f32 0.0, %v5004
        %5006 = vmatprep.mubr.bf16.mxu0 %v4849
        %5007 = vmatmul.mubr.bf16.gmra.mrb[0].mxu0 %v4848
        %v5008 = vpop.f32.mrb[0].mxu0
        %v5009 = vadd.f32 0.0, %v5008
        %v5010 = vpop.f32.mrb[0].mxu0
        %v5011 = vadd.f32 0.0, %v5010
        %v5012 = vpop.f32.mrb[0].mxu0
        %v5013 = vadd.f32 0.0, %v5012
        %v5014 = vpop.f32.mrb[0].mxu0
        %v5015 = vadd.f32 0.0, %v5014
        %5016 = vmatprep.mubr.bf16.mxu0 %v4854
        %5017 = vmatmul.mubr.bf16.gmra.mrb[0].mxu0 %v4853
        %v5018 = vpop.f32.mrb[0].mxu0
        %v5019 = vadd.f32 0.0, %v5018
        %v5020 = vpop.f32.mrb[0].mxu0
        %v5021 = vadd.f32 0.0, %v5020
        %v5022 = vpop.f32.mrb[0].mxu0
        %v5023 = vadd.f32 0.0, %v5022
        %v5024 = vpop.f32.mrb[0].mxu0
        %v5025 = vadd.f32 0.0, %v5024
        %5026 = vdwg.mxu0
        %5027 = vmatprep.subr.bf16.mxu0 %v4651
        %5028 = vmatpush1.bf16.msra.mxu0 %v4650
        %5029 = vmatprep.subr.bf16.mxu0 %v4653
        %5030 = vmatpush1.bf16.msra.mxu0 %v4652
        %5031 = vmatprep.subr.bf16.mxu0 %v4655
        %5032 = vmatpush1.bf16.msra.mxu0 %v4654
        %5033 = vmatprep.subr.bf16.mxu0 %v4657
        %5034 = vmatpush1.bf16.msra.mxu0 %v4656
        %5035 = vmatprep.subr.bf16.mxu0 %v4659
        %5036 = vmatpush1.bf16.msra.mxu0 %v4658
        %5037 = vmatprep.subr.bf16.mxu0 %v4661
        %5038 = vmatpush1.bf16.msra.mxu0 %v4660
        %5039 = vmatprep.subr.bf16.mxu0 %v4663
        %5040 = vmatpush1.bf16.msra.mxu0 %v4662
        %5041 = vmatprep.subr.bf16.mxu0 %v4665
        %5042 = vmatpush1.bf16.msra.mxu0 %v4664
        %5043 = vmatprep.subr.bf16.mxu0 %v4667
        %5044 = vmatpush1.bf16.msra.mxu0 %v4666
        %5045 = vmatprep.subr.bf16.mxu0 %v4669
        %5046 = vmatpush1.bf16.msra.mxu0 %v4668
        %5047 = vmatprep.subr.bf16.mxu0 %v4671
        %5048 = vmatpush1.bf16.msra.mxu0 %v4670
        %5049 = vmatprep.subr.bf16.mxu0 %v4673
        %5050 = vmatpush1.bf16.msra.mxu0 %v4672
        %5051 = vmatprep.subr.bf16.mxu0 %v4675
        %5052 = vmatpush1.bf16.msra.mxu0 %v4674
        %5053 = vmatprep.subr.bf16.mxu0 %v4677
        %5054 = vmatpush1.bf16.msra.mxu0 %v4676
        %5055 = vmatprep.subr.bf16.mxu0 %v4679
        %5056 = vmatpush1.bf16.msra.mxu0 %v4678
        %5057 = vmatprep.subr.bf16.mxu0 %v4681
        %5058 = vmatpush1.bf16.msra.mxu0 %v4680
        %5059 = vmatprep.mubr.bf16.mxu0 %v4821
        %5060 = vmatmul.mubr.bf16.gmra.mrb[0].mxu0 %v4820
        %v5061 = vpop.f32.mrb[0].mxu0
        %v5062 = vadd.f32 %v4949, %v5061
        %v5063 = vpop.f32.mrb[0].mxu0
        %v5064 = vadd.f32 %v4951, %v5063
        %v5065 = vpop.f32.mrb[0].mxu0
        %v5066 = vadd.f32 %v4953, %v5065
        %v5067 = vpop.f32.mrb[0].mxu0
        %v5068 = vadd.f32 %v4955, %v5067
        %5069 = vmatprep.mubr.bf16.mxu0 %v4826
        %5070 = vmatmul.mubr.bf16.gmra.mrb[0].mxu0 %v4825
        %v5071 = vpop.f32.mrb[0].mxu0
        %v5072 = vadd.f32 %v4959, %v5071
        %v5073 = vpop.f32.mrb[0].mxu0
        %v5074 = vadd.f32 %v4961, %v5073
        %v5075 = vpop.f32.mrb[0].mxu0
        %v5076 = vadd.f32 %v4963, %v5075
        %v5077 = vpop.f32.mrb[0].mxu0
        %v5078 = vadd.f32 %v4965, %v5077
        %5079 = vmatprep.mubr.bf16.mxu0 %v4831
        %5080 = vmatmul.mubr.bf16.gmra.mrb[0].mxu0 %v4830
        %v5081 = vpop.f32.mrb[0].mxu0
        %v5082 = vadd.f32 %v4969, %v5081
        %v5083 = vpop.f32.mrb[0].mxu0
        %v5084 = vadd.f32 %v4971, %v5083
        %v5085 = vpop.f32.mrb[0].mxu0
        %v5086 = vadd.f32 %v4973, %v5085
        %v5087 = vpop.f32.mrb[0].mxu0
        %v5088 = vadd.f32 %v4975, %v5087
        %5089 = vmatprep.mubr.bf16.mxu0 %v4836
        %5090 = vmatmul.mubr.bf16.gmra.mrb[0].mxu0 %v4835
        %v5091 = vpop.f32.mrb[0].mxu0
        %v5092 = vadd.f32 %v4979, %v5091
        %v5093 = vpop.f32.mrb[0].mxu0
        %v5094 = vadd.f32 %v4981, %v5093
        %v5095 = vpop.f32.mrb[0].mxu0
        %v5096 = vadd.f32 %v4983, %v5095
        %v5097 = vpop.f32.mrb[0].mxu0
        %v5098 = vadd.f32 %v4985, %v5097
        %5099 = vmatprep.mubr.bf16.mxu0 %v4841
        %5100 = vmatmul.mubr.bf16.gmra.mrb[0].mxu0 %v4840
        %v5101 = vpop.f32.mrb[0].mxu0
        %v5102 = vadd.f32 %v4989, %v5101
        %v5103 = vpop.f32.mrb[0].mxu0
        %v5104 = vadd.f32 %v4991, %v5103
        %v5105 = vpop.f32.mrb[0].mxu0
        %v5106 = vadd.f32 %v4993, %v5105
        %v5107 = vpop.f32.mrb[0].mxu0
        %v5108 = vadd.f32 %v4995, %v5107
        %5109 = vmatprep.mubr.bf16.mxu0 %v4846
        %5110 = vmatmul.mubr.bf16.gmra.mrb[0].mxu0 %v4845
        %v5111 = vpop.f32.mrb[0].mxu0
        %v5112 = vadd.f32 %v4999, %v5111
        %v5113 = vpop.f32.mrb[0].mxu0
        %v5114 = vadd.f32 %v5001, %v5113
        %v5115 = vpop.f32.mrb[0].mxu0
        %v5116 = vadd.f32 %v5003, %v5115
        %v5117 = vpop.f32.mrb[0].mxu0
        %v5118 = vadd.f32 %v5005, %v5117
        %5119 = vmatprep.mubr.bf16.mxu0 %v4851
        %5120 = vmatmul.mubr.bf16.gmra.mrb[0].mxu0 %v4850
        %v5121 = vpop.f32.mrb[0].mxu0
        %v5122 = vadd.f32 %v5009, %v5121
        %v5123 = vpop.f32.mrb[0].mxu0
        %v5124 = vadd.f32 %v5011, %v5123
        %v5125 = vpop.f32.mrb[0].mxu0
        %v5126 = vadd.f32 %v5013, %v5125
        %v5127 = vpop.f32.mrb[0].mxu0
        %v5128 = vadd.f32 %v5015, %v5127
        %5129 = vmatprep.mubr.bf16.mxu0 %v4856
        %5130 = vmatmul.mubr.bf16.gmra.mrb[0].mxu0 %v4855
        %v5131 = vpop.f32.mrb[0].mxu0
        %v5132 = vadd.f32 %v5019, %v5131
        %v5133 = vpop.f32.mrb[0].mxu0
        %v5134 = vadd.f32 %v5021, %v5133
        %v5135 = vpop.f32.mrb[0].mxu0
        %v5136 = vadd.f32 %v5023, %v5135
        %v5137 = vpop.f32.mrb[0].mxu0
        %v5138 = vadd.f32 %v5025, %v5137
        %5139 = vdwg.mxu0
        %5140 = vmatprep.subr.bf16.mxu0 %v4683
        %5141 = vmatpush1.bf16.msra.mxu0 %v4682
        %5142 = vmatprep.subr.bf16.mxu0 %v4685
        %5143 = vmatpush1.bf16.msra.mxu0 %v4684
        %5144 = vmatprep.subr.bf16.mxu0 %v4687
        %5145 = vmatpush1.bf16.msra.mxu0 %v4686
        %5146 = vmatprep.subr.bf16.mxu0 %v4689
        %5147 = vmatpush1.bf16.msra.mxu0 %v4688
        %5148 = vmatprep.subr.bf16.mxu0 0
        %5149 = vmatpush1.bf16.msra.mxu0 0
        %5150 = vmatprep.subr.bf16.mxu0 0
        %5151 = vmatpush1.bf16.msra.mxu0 0
        %5152 = vmatprep.subr.bf16.mxu0 0
        %5153 = vmatpush1.bf16.msra.mxu0 0
        %5154 = vmatprep.subr.bf16.mxu0 0
        %5155 = vmatpush1.bf16.msra.mxu0 0
        %5156 = vmatprep.subr.bf16.mxu0 0
        %5157 = vmatpush1.bf16.msra.mxu0 0
        %5158 = vmatprep.subr.bf16.mxu0 0
        %5159 = vmatpush1.bf16.msra.mxu0 0
        %5160 = vmatprep.subr.bf16.mxu0 0
        %5161 = vmatpush1.bf16.msra.mxu0 0
        %5162 = vmatprep.subr.bf16.mxu0 0
        %5163 = vmatpush1.bf16.msra.mxu0 0
        %5164 = vmatprep.subr.bf16.mxu0 0
        %5165 = vmatpush1.bf16.msra.mxu0 0
        %5166 = vmatprep.subr.bf16.mxu0 0
        %5167 = vmatpush1.bf16.msra.mxu0 0
        %5168 = vmatprep.subr.bf16.mxu0 0
        %5169 = vmatpush1.bf16.msra.mxu0 0
        %5170 = vmatprep.subr.bf16.mxu0 0
        %5171 = vmatpush1.bf16.msra.mxu0 0
        %5172 = vmatprep.mubr.bf16.mxu0 0
        %5173 = vmatmul.mubr.bf16.gmra.mrb[0].mxu0 %v4891
        %v5174 = vpop.f32.mrb[0].mxu0
        %v5175 = vadd.f32 %v5062, %v5174
        %v5176 = vpop.f32.mrb[0].mxu0
        %v5177 = vadd.f32 %v5064, %v5176
        %v5178 = vpop.f32.mrb[0].mxu0
        %v5179 = vadd.f32 %v5066, %v5178
        %v5180 = vpop.f32.mrb[0].mxu0
        %v5181 = vadd.f32 %v5068, %v5180
        %5182 = vmatprep.mubr.bf16.mxu0 0
        %5183 = vmatmul.mubr.bf16.gmra.mrb[0].mxu0 %v4894
        %v5184 = vpop.f32.mrb[0].mxu0
        %v5185 = vadd.f32 %v5072, %v5184
        %v5186 = vpop.f32.mrb[0].mxu0
        %v5187 = vadd.f32 %v5074, %v5186
        %v5188 = vpop.f32.mrb[0].mxu0
        %v5189 = vadd.f32 %v5076, %v5188
        %v5190 = vpop.f32.mrb[0].mxu0
        %v5191 = vadd.f32 %v5078, %v5190
        %5192 = vmatprep.mubr.bf16.mxu0 0
        %5193 = vmatmul.mubr.bf16.gmra.mrb[0].mxu0 %v4897
        %v5194 = vpop.f32.mrb[0].mxu0
        %v5195 = vadd.f32 %v5082, %v5194
        %v5196 = vpop.f32.mrb[0].mxu0
        %v5197 = vadd.f32 %v5084, %v5196
        %v5198 = vpop.f32.mrb[0].mxu0
        %v5199 = vadd.f32 %v5086, %v5198
        %v5200 = vpop.f32.mrb[0].mxu0
        %v5201 = vadd.f32 %v5088, %v5200
        %5202 = vmatprep.mubr.bf16.mxu0 0
        %5203 = vmatmul.mubr.bf16.gmra.mrb[0].mxu0 %v4900
        %v5204 = vpop.f32.mrb[0].mxu0
        %v5205 = vadd.f32 %v5092, %v5204
        %v5206 = vpop.f32.mrb[0].mxu0
        %v5207 = vadd.f32 %v5094, %v5206
        %v5208 = vpop.f32.mrb[0].mxu0
        %v5209 = vadd.f32 %v5096, %v5208
        %v5210 = vpop.f32.mrb[0].mxu0
        %v5211 = vadd.f32 %v5098, %v5210
        %5212 = vmatprep.mubr.bf16.mxu0 0
        %5213 = vmatmul.mubr.bf16.gmra.mrb[0].mxu0 %v4903
        %v5214 = vpop.f32.mrb[0].mxu0
        %v5215 = vadd.f32 %v5102, %v5214
        %v5216 = vpop.f32.mrb[0].mxu0
        %v5217 = vadd.f32 %v5104, %v5216
        %v5218 = vpop.f32.mrb[0].mxu0
        %v5219 = vadd.f32 %v5106, %v5218
        %v5220 = vpop.f32.mrb[0].mxu0
        %v5221 = vadd.f32 %v5108, %v5220
        %5222 = vmatprep.mubr.bf16.mxu0 0
        %5223 = vmatmul.mubr.bf16.gmra.mrb[0].mxu0 %v4906
        %v5224 = vpop.f32.mrb[0].mxu0
        %v5225 = vadd.f32 %v5112, %v5224
        %v5226 = vpop.f32.mrb[0].mxu0
        %v5227 = vadd.f32 %v5114, %v5226
        %v5228 = vpop.f32.mrb[0].mxu0
        %v5229 = vadd.f32 %v5116, %v5228
        %v5230 = vpop.f32.mrb[0].mxu0
        %v5231 = vadd.f32 %v5118, %v5230
        %5232 = vmatprep.mubr.bf16.mxu0 0
        %5233 = vmatmul.mubr.bf16.gmra.mrb[0].mxu0 %v4909
        %v5234 = vpop.f32.mrb[0].mxu0
        %v5235 = vadd.f32 %v5122, %v5234
        %v5236 = vpop.f32.mrb[0].mxu0
        %v5237 = vadd.f32 %v5124, %v5236
        %v5238 = vpop.f32.mrb[0].mxu0
        %v5239 = vadd.f32 %v5126, %v5238
        %v5240 = vpop.f32.mrb[0].mxu0
        %v5241 = vadd.f32 %v5128, %v5240
        %5242 = vmatprep.mubr.bf16.mxu0 0
        %5243 = vmatmul.mubr.bf16.gmra.mrb[0].mxu0 %v4912
        %v5244 = vpop.f32.mrb[0].mxu0
        %v5245 = vadd.f32 %v5132, %v5244
        %v5246 = vpop.f32.mrb[0].mxu0
        %v5247 = vadd.f32 %v5134, %v5246
        %v5248 = vpop.f32.mrb[0].mxu0
        %v5249 = vadd.f32 %v5136, %v5248
        %v5250 = vpop.f32.mrb[0].mxu0
        %v5251 = vadd.f32 %v5138, %v5250
        %5252 = vdwg.mxu0
        %v5253 = vld [vmem:[%s9] sm:$0xff]
        %v5254 = vld [vmem:[%s9 + $0x8] sm:$0xff]
        %v5255 = vld [vmem:[%s9 + $0x10] sm:$0xf]
        %v5256 = vld [vmem:[%s9 + $0x14] sm:$0xff]
        %v5257 = vld [vmem:[%s9 + $0x1c] sm:$0xff]
        %v5258 = vld [vmem:[%s9 + $0x24] sm:$0xf]
        %v5259 = vld [vmem:[%s9 + $0x28] sm:$0xff]
        %v5260 = vld [vmem:[%s9 + $0x30] sm:$0xff]
        %v5261 = vld [vmem:[%s9 + $0x38] sm:$0xf]
        %v5262 = vld [vmem:[%s9 + $0x3c] sm:$0xff]
        %v5263 = vld [vmem:[%s9 + $0x44] sm:$0xff]
        %v5264 = vld [vmem:[%s9 + $0x4c] sm:$0xf]
        %v5265 = vld [vmem:[%s9 + $0x50] sm:$0xff]
        %v5266 = vld [vmem:[%s9 + $0x58] sm:$0xff]
        %v5267 = vld [vmem:[%s9 + $0x60] sm:$0xf]
        %v5268 = vld [vmem:[%s9 + $0x64] sm:$0xff]
        %v5269 = vld [vmem:[%s9 + $0x6c] sm:$0xff]
        %v5270 = vld [vmem:[%s9 + $0x74] sm:$0xf]
        %v5271 = vld [vmem:[%s9 + $0x78] sm:$0xff]
        %v5272 = vld [vmem:[%s9 + $0x80] sm:$0xff]
        %v5273 = vld [vmem:[%s9 + $0x88] sm:$0xf]
        %v5274 = vld [vmem:[%s9 + $0x8c] sm:$0xff]
        %v5275 = vld [vmem:[%s9 + $0x94] sm:$0xff]
        %v5276 = vld [vmem:[%s9 + $0x9c] sm:$0xf]
        %v5277 = vld [vmem:[%s9 + $0xa0] sm:$0xff]
        %v5278 = vld [vmem:[%s9 + $0xa8] sm:$0xff]
        %v5279 = vld [vmem:[%s9 + $0xb0] sm:$0xf]
        %v5280 = vld [vmem:[%s9 + $0xb4] sm:$0xff]
        %v5281 = vld [vmem:[%s9 + $0xbc] sm:$0xff]
        %v5282 = vld [vmem:[%s9 + $0xc4] sm:$0xf]
        %v5283 = vld [vmem:[%s9 + $0xc8] sm:$0xff]
        %v5284 = vld [vmem:[%s9 + $0xd0] sm:$0xff]
        %v5285 = vld [vmem:[%s9 + $0xd8] sm:$0xf]
        %v5286 = vld [vmem:[%s9 + $0xdc] sm:$0xff]
        %v5287 = vld [vmem:[%s9 + $0xe4] sm:$0xff]
        %v5288 = vld [vmem:[%s9 + $0xec] sm:$0xf]
        %v5289 = vld [vmem:[#allocation6] sm:$0xff]
        %v5290 = vld [vmem:[#allocation6 + $0x8] sm:$0xff]
        %v5291 = vld [vmem:[#allocation6 + $0x10] sm:$0xff]
        %v5292 = vld [vmem:[#allocation6 + $0x18] sm:$0xff]
        %v5293 = vld [vmem:[#allocation6 + $0x20] sm:$0xff]
        %v5294 = vld [vmem:[#allocation6 + $0x28] sm:$0xff]
        %v5295 = vld [vmem:[#allocation6 + $0x30] sm:$0xff]
        %v5296 = vld [vmem:[#allocation6 + $0x38] sm:$0xff]
        %v5297 = vld [vmem:[#allocation6 + $0x40] sm:$0xff]
        %v5298 = vld [vmem:[#allocation6 + $0x48] sm:$0xff]
        %v5299 = vld [vmem:[#allocation6 + $0x50] sm:$0xff]
        %v5300 = vld [vmem:[#allocation6 + $0x58] sm:$0xff]
        %v5301 = vld [vmem:[#allocation6 + $0x60] sm:$0xff]
        %v5302 = vld [vmem:[#allocation6 + $0x68] sm:$0xff]
        %v5303 = vld [vmem:[#allocation6 + $0x70] sm:$0xff]
        %v5304 = vld [vmem:[#allocation6 + $0x78] sm:$0xff]
        %v5305 = vld [vmem:[#allocation6 + $0x80] sm:$0xff]
        %v5306 = vld [vmem:[#allocation6 + $0x88] sm:$0xff]
        %v5307 = vld [vmem:[#allocation6 + $0x90] sm:$0xff]
        %v5308 = vld [vmem:[#allocation6 + $0x98] sm:$0xff]
        %v5309 = vld [vmem:[#allocation6 + $0xa0] sm:$0xff]
        %v5310 = vld [vmem:[#allocation6 + $0xa8] sm:$0xff]
        %v5311 = vld [vmem:[#allocation6 + $0xb0] sm:$0xff]
        %v5312 = vld [vmem:[#allocation6 + $0xb8] sm:$0xff]
        %v5313 = vld [vmem:[#allocation6 + $0xc0] sm:$0xff]
        %v5314 = vld [vmem:[#allocation6 + $0xc8] sm:$0xff]
        %v5315 = vld [vmem:[#allocation6 + $0xd0] sm:$0xff]
        %v5316 = vld [vmem:[#allocation6 + $0xd8] sm:$0xff]
        %v5317 = vld [vmem:[#allocation6 + $0xe0] sm:$0xff]
        %v5318 = vld [vmem:[#allocation6 + $0xe8] sm:$0xff]
        %v5319 = vld [vmem:[#allocation6 + $0xf0] sm:$0xff]
        %v5320 = vld [vmem:[#allocation6 + $0xf8] sm:$0xff]
        %v5321 = vld [vmem:[#allocation6 + $0x100] sm:$0xff]
        %v5322 = vld [vmem:[#allocation6 + $0x108] sm:$0xff]
        %v5323 = vld [vmem:[#allocation6 + $0x110] sm:$0xff]
        %v5324 = vld [vmem:[#allocation6 + $0x118] sm:$0xff]
        %v5325 = vld [vmem:[#allocation6 + $0x120] sm:$0xff]
        %v5326 = vld [vmem:[#allocation6 + $0x128] sm:$0xff]
        %v5327 = vld [vmem:[#allocation6 + $0x130] sm:$0xff]
        %v5328 = vld [vmem:[#allocation6 + $0x138] sm:$0xff]
        %v5329 = vld [vmem:[#allocation6 + $0x140] sm:$0xff]
        %v5330 = vld [vmem:[#allocation6 + $0x148] sm:$0xff]
        %v5331 = vld [vmem:[#allocation6 + $0x150] sm:$0xff]
        %v5332 = vld [vmem:[#allocation6 + $0x158] sm:$0xff]
        %v5333 = vld [vmem:[#allocation6 + $0x160] sm:$0xff]
        %v5334 = vld [vmem:[#allocation6 + $0x168] sm:$0xff]
        %v5335 = vld [vmem:[#allocation6 + $0x170] sm:$0xff]
        %v5336 = vld [vmem:[#allocation6 + $0x178] sm:$0xff]
        %v5337 = vld [vmem:[#allocation6 + $0x180] sm:$0xff]
        %v5338 = vld [vmem:[#allocation6 + $0x188] sm:$0xff]
        %v5339 = vld [vmem:[#allocation6 + $0x190] sm:$0xff]
        %v5340 = vld [vmem:[#allocation6 + $0x198] sm:$0xff]
        %v5341 = vld [vmem:[#allocation6 + $0x1a0] sm:$0xff]
        %v5342 = vld [vmem:[#allocation6 + $0x1a8] sm:$0xff]
        %v5343 = vld [vmem:[#allocation6 + $0x1b0] sm:$0xff]
        %v5344 = vld [vmem:[#allocation6 + $0x1b8] sm:$0xff]
        %v5345 = vld [vmem:[#allocation6 + $0x1c0] sm:$0xff]
        %v5346 = vld [vmem:[#allocation6 + $0x1c8] sm:$0xff]
        %v5347 = vld [vmem:[#allocation6 + $0x1d0] sm:$0xff]
        %v5348 = vld [vmem:[#allocation6 + $0x1d8] sm:$0xff]
        %v5349 = vld [vmem:[#allocation6 + $0x1e0] sm:$0xff]
        %v5350 = vld [vmem:[#allocation6 + $0x1e8] sm:$0xff]
        %v5351 = vld [vmem:[#allocation6 + $0x1f0] sm:$0xff]
        %v5352 = vld [vmem:[#allocation6 + $0x1f8] sm:$0xff]
        %v5353 = vld [vmem:[#allocation6 + $0x200] sm:$0xff]
        %v5354 = vld [vmem:[#allocation6 + $0x208] sm:$0xff]
        %v5355 = vld [vmem:[#allocation6 + $0x210] sm:$0xff]
        %v5356 = vld [vmem:[#allocation6 + $0x218] sm:$0xff]
        %v5357 = vld [vmem:[#allocation6 + $0x220] sm:$0xff]
        %v5358 = vld [vmem:[#allocation6 + $0x228] sm:$0xff]
        %v5359 = vld [vmem:[#allocation6 + $0x230] sm:$0xff]
        %v5360 = vld [vmem:[#allocation6 + $0x238] sm:$0xff]
        %v5397 = vunpack.c.l.b16 %v5253
        %v5398 = vunpack.c.h.b16 %v5253
        %v5399 = vunpack.c.l.b16 %v5254
        %v5400 = vunpack.c.h.b16 %v5254
        %v5401 = vunpack.c.l.b16 %v5255
        %v5402 = vunpack.c.l.b16 %v5256
        %v5403 = vunpack.c.h.b16 %v5256
        %v5404 = vunpack.c.l.b16 %v5257
        %v5405 = vunpack.c.h.b16 %v5257
        %v5406 = vunpack.c.l.b16 %v5258
        %v5407 = vunpack.c.l.b16 %v5259
        %v5408 = vunpack.c.h.b16 %v5259
        %v5409 = vunpack.c.l.b16 %v5260
        %v5410 = vunpack.c.h.b16 %v5260
        %v5411 = vunpack.c.l.b16 %v5261
        %v5412 = vunpack.c.l.b16 %v5262
        %v5413 = vunpack.c.h.b16 %v5262
        %v5414 = vunpack.c.l.b16 %v5263
        %v5415 = vunpack.c.h.b16 %v5263
        %v5416 = vunpack.c.l.b16 %v5264
        %v5417 = vunpack.c.l.b16 %v5265
        %v5418 = vunpack.c.h.b16 %v5265
        %v5419 = vunpack.c.l.b16 %v5266
        %v5420 = vunpack.c.h.b16 %v5266
        %v5421 = vunpack.c.l.b16 %v5267
        %v5422 = vunpack.c.l.b16 %v5268
        %v5423 = vunpack.c.h.b16 %v5268
        %v5424 = vunpack.c.l.b16 %v5269
        %v5425 = vunpack.c.h.b16 %v5269
        %v5426 = vunpack.c.l.b16 %v5270
        %v5427 = vunpack.c.l.b16 %v5271
        %v5428 = vunpack.c.h.b16 %v5271
        %v5429 = vunpack.c.l.b16 %v5272
        %v5430 = vunpack.c.h.b16 %v5272
        %v5431 = vunpack.c.l.b16 %v5273
        %v5432 = vunpack.c.l.b16 %v5274
        %v5433 = vunpack.c.h.b16 %v5274
        %v5434 = vunpack.c.l.b16 %v5275
        %v5435 = vunpack.c.h.b16 %v5275
        %v5436 = vunpack.c.l.b16 %v5276
        %v5437 = vunpack.c.l.b16 %v5277
        %v5438 = vunpack.c.h.b16 %v5277
        %v5439 = vunpack.c.l.b16 %v5278
        %v5440 = vunpack.c.h.b16 %v5278
        %v5441 = vunpack.c.l.b16 %v5279
        %v5442 = vunpack.c.l.b16 %v5280
        %v5443 = vunpack.c.h.b16 %v5280
        %v5444 = vunpack.c.l.b16 %v5281
        %v5445 = vunpack.c.h.b16 %v5281
        %v5446 = vunpack.c.l.b16 %v5282
        %v5447 = vunpack.c.l.b16 %v5283
        %v5448 = vunpack.c.h.b16 %v5283
        %v5449 = vunpack.c.l.b16 %v5284
        %v5450 = vunpack.c.h.b16 %v5284
        %v5451 = vunpack.c.l.b16 %v5285
        %v5452 = vunpack.c.l.b16 %v5286
        %v5453 = vunpack.c.h.b16 %v5286
        %v5454 = vunpack.c.l.b16 %v5287
        %v5455 = vunpack.c.h.b16 %v5287
        %v5456 = vunpack.c.l.b16 %v5288
        %v5457 = vpack.c.b16 %v5402, %v5397
        %v5458 = vpack.c.b16 %v5403, %v5398
        %v5459 = vpack.c.b16 %v5404, %v5399
        %v5460 = vpack.c.b16 %v5405, %v5400
        %v5461 = vpack.c.b16 %v5406, %v5401
        %v5462 = vpack.c.b16 %v5412, %v5407
        %v5463 = vpack.c.b16 %v5413, %v5408
        %v5464 = vpack.c.b16 %v5414, %v5409
        %v5465 = vpack.c.b16 %v5415, %v5410
        %v5466 = vpack.c.b16 %v5416, %v5411
        %v5467 = vpack.c.b16 %v5422, %v5417
        %v5468 = vpack.c.b16 %v5423, %v5418
        %v5469 = vpack.c.b16 %v5424, %v5419
        %v5470 = vpack.c.b16 %v5425, %v5420
        %v5471 = vpack.c.b16 %v5426, %v5421
        %v5472 = vpack.c.b16 %v5432, %v5427
        %v5473 = vpack.c.b16 %v5433, %v5428
        %v5474 = vpack.c.b16 %v5434, %v5429
        %v5475 = vpack.c.b16 %v5435, %v5430
        %v5476 = vpack.c.b16 %v5436, %v5431
        %v5477 = vpack.c.b16 %v5442, %v5437
        %v5478 = vpack.c.b16 %v5443, %v5438
        %v5479 = vpack.c.b16 %v5444, %v5439
        %v5480 = vpack.c.b16 %v5445, %v5440
        %v5481 = vpack.c.b16 %v5446, %v5441
        %v5482 = vpack.c.b16 %v5452, %v5447
        %v5483 = vpack.c.b16 %v5453, %v5448
        %v5484 = vpack.c.b16 %v5454, %v5449
        %v5485 = vpack.c.b16 %v5455, %v5450
        %v5486 = vpack.c.b16 %v5456, %v5451
        %v5512 = vsel %vm3529, %v5461, 0
        %v5515 = vsel %vm3529, %v5466, 0
        %v5518 = vsel %vm3529, %v5471, 0
        %v5521 = vsel %vm3529, %v5476, 0
        %v5524 = vsel %vm3529, %v5481, 0
        %v5527 = vsel %vm3529, %v5486, 0
        %5529 = vmatprep.subr.bf16.mxu0 %v5290
        %5530 = vmatpush1.bf16.msra.mxu0 %v5289
        %5531 = vmatprep.subr.bf16.mxu0 %v5292
        %5532 = vmatpush1.bf16.msra.mxu0 %v5291
        %5533 = vmatprep.subr.bf16.mxu0 %v5294
        %5534 = vmatpush1.bf16.msra.mxu0 %v5293
        %5535 = vmatprep.subr.bf16.mxu0 %v5296
        %5536 = vmatpush1.bf16.msra.mxu0 %v5295
        %5537 = vmatprep.subr.bf16.mxu0 %v5298
        %5538 = vmatpush1.bf16.msra.mxu0 %v5297
        %5539 = vmatprep.subr.bf16.mxu0 %v5300
        %5540 = vmatpush1.bf16.msra.mxu0 %v5299
        %5541 = vmatprep.subr.bf16.mxu0 %v5302
        %5542 = vmatpush1.bf16.msra.mxu0 %v5301
        %5543 = vmatprep.subr.bf16.mxu0 %v5304
        %5544 = vmatpush1.bf16.msra.mxu0 %v5303
        %5545 = vmatprep.subr.bf16.mxu0 %v5306
        %5546 = vmatpush1.bf16.msra.mxu0 %v5305
        %5547 = vmatprep.subr.bf16.mxu0 %v5308
        %5548 = vmatpush1.bf16.msra.mxu0 %v5307
        %5549 = vmatprep.subr.bf16.mxu0 %v5310
        %5550 = vmatpush1.bf16.msra.mxu0 %v5309
        %5551 = vmatprep.subr.bf16.mxu0 %v5312
        %5552 = vmatpush1.bf16.msra.mxu0 %v5311
        %5553 = vmatprep.subr.bf16.mxu0 %v5314
        %5554 = vmatpush1.bf16.msra.mxu0 %v5313
        %5555 = vmatprep.subr.bf16.mxu0 %v5316
        %5556 = vmatpush1.bf16.msra.mxu0 %v5315
        %5557 = vmatprep.subr.bf16.mxu0 %v5318
        %5558 = vmatpush1.bf16.msra.mxu0 %v5317
        %5559 = vmatprep.subr.bf16.mxu0 %v5320
        %5560 = vmatpush1.bf16.msra.mxu0 %v5319
        %5561 = vmatprep.mubr.bf16.mxu0 %v5458
        %5562 = vmatmul.mubr.bf16.gmra.mrb[0].mxu0 %v5457
        %v5563 = vpop.f32.mrb[0].mxu0
        %v5564 = vadd.f32 0.0, %v5563
        %v5565 = vpop.f32.mrb[0].mxu0
        %v5566 = vadd.f32 0.0, %v5565
        %v5567 = vpop.f32.mrb[0].mxu0
        %v5568 = vadd.f32 0.0, %v5567
        %v5569 = vpop.f32.mrb[0].mxu0
        %v5570 = vadd.f32 0.0, %v5569
        %5571 = vmatprep.mubr.bf16.mxu0 %v5463
        %5572 = vmatmul.mubr.bf16.gmra.mrb[0].mxu0 %v5462
        %v5573 = vpop.f32.mrb[0].mxu0
        %v5574 = vadd.f32 0.0, %v5573
        %v5575 = vpop.f32.mrb[0].mxu0
        %v5576 = vadd.f32 0.0, %v5575
        %v5577 = vpop.f32.mrb[0].mxu0
        %v5578 = vadd.f32 0.0, %v5577
        %v5579 = vpop.f32.mrb[0].mxu0
        %v5580 = vadd.f32 0.0, %v5579
        %5581 = vmatprep.mubr.bf16.mxu0 %v5468
        %5582 = vmatmul.mubr.bf16.gmra.mrb[0].mxu0 %v5467
        %v5583 = vpop.f32.mrb[0].mxu0
        %v5584 = vadd.f32 0.0, %v5583
        %v5585 = vpop.f32.mrb[0].mxu0
        %v5586 = vadd.f32 0.0, %v5585
        %v5587 = vpop.f32.mrb[0].mxu0
        %v5588 = vadd.f32 0.0, %v5587
        %v5589 = vpop.f32.mrb[0].mxu0
        %v5590 = vadd.f32 0.0, %v5589
        %5591 = vmatprep.mubr.bf16.mxu0 %v5473
        %5592 = vmatmul.mubr.bf16.gmra.mrb[0].mxu0 %v5472
        %v5593 = vpop.f32.mrb[0].mxu0
        %v5594 = vadd.f32 0.0, %v5593
        %v5595 = vpop.f32.mrb[0].mxu0
        %v5596 = vadd.f32 0.0, %v5595
        %v5597 = vpop.f32.mrb[0].mxu0
        %v5598 = vadd.f32 0.0, %v5597
        %v5599 = vpop.f32.mrb[0].mxu0
        %v5600 = vadd.f32 0.0, %v5599
        %5601 = vmatprep.mubr.bf16.mxu0 %v5478
        %5602 = vmatmul.mubr.bf16.gmra.mrb[0].mxu0 %v5477
        %v5603 = vpop.f32.mrb[0].mxu0
        %v5604 = vadd.f32 0.0, %v5603
        %v5605 = vpop.f32.mrb[0].mxu0
        %v5606 = vadd.f32 0.0, %v5605
        %v5607 = vpop.f32.mrb[0].mxu0
        %v5608 = vadd.f32 0.0, %v5607
        %v5609 = vpop.f32.mrb[0].mxu0
        %v5610 = vadd.f32 0.0, %v5609
        %5611 = vmatprep.mubr.bf16.mxu0 %v5483
        %5612 = vmatmul.mubr.bf16.gmra.mrb[0].mxu0 %v5482
        %v5613 = vpop.f32.mrb[0].mxu0
        %v5614 = vadd.f32 0.0, %v5613
        %v5615 = vpop.f32.mrb[0].mxu0
        %v5616 = vadd.f32 0.0, %v5615
        %v5617 = vpop.f32.mrb[0].mxu0
        %v5618 = vadd.f32 0.0, %v5617
        %v5619 = vpop.f32.mrb[0].mxu0
        %v5620 = vadd.f32 0.0, %v5619
        %5621 = vdwg.mxu0
        %5622 = vmatprep.subr.bf16.mxu0 %v5322
        %5623 = vmatpush1.bf16.msra.mxu0 %v5321
        %5624 = vmatprep.subr.bf16.mxu0 %v5324
        %5625 = vmatpush1.bf16.msra.mxu0 %v5323
        %5626 = vmatprep.subr.bf16.mxu0 %v5326
        %5627 = vmatpush1.bf16.msra.mxu0 %v5325
        %5628 = vmatprep.subr.bf16.mxu0 %v5328
        %5629 = vmatpush1.bf16.msra.mxu0 %v5327
        %5630 = vmatprep.subr.bf16.mxu0 %v5330
        %5631 = vmatpush1.bf16.msra.mxu0 %v5329
        %5632 = vmatprep.subr.bf16.mxu0 %v5332
        %5633 = vmatpush1.bf16.msra.mxu0 %v5331
        %5634 = vmatprep.subr.bf16.mxu0 %v5334
        %5635 = vmatpush1.bf16.msra.mxu0 %v5333
        %5636 = vmatprep.subr.bf16.mxu0 %v5336
        %5637 = vmatpush1.bf16.msra.mxu0 %v5335
        %5638 = vmatprep.subr.bf16.mxu0 %v5338
        %5639 = vmatpush1.bf16.msra.mxu0 %v5337
        %5640 = vmatprep.subr.bf16.mxu0 %v5340
        %5641 = vmatpush1.bf16.msra.mxu0 %v5339
        %5642 = vmatprep.subr.bf16.mxu0 %v5342
        %5643 = vmatpush1.bf16.msra.mxu0 %v5341
        %5644 = vmatprep.subr.bf16.mxu0 %v5344
        %5645 = vmatpush1.bf16.msra.mxu0 %v5343
        %5646 = vmatprep.subr.bf16.mxu0 %v5346
        %5647 = vmatpush1.bf16.msra.mxu0 %v5345
        %5648 = vmatprep.subr.bf16.mxu0 %v5348
        %5649 = vmatpush1.bf16.msra.mxu0 %v5347
        %5650 = vmatprep.subr.bf16.mxu0 %v5350
        %5651 = vmatpush1.bf16.msra.mxu0 %v5349
        %5652 = vmatprep.subr.bf16.mxu0 %v5352
        %5653 = vmatpush1.bf16.msra.mxu0 %v5351
        %5654 = vmatprep.mubr.bf16.mxu0 %v5460
        %5655 = vmatmul.mubr.bf16.gmra.mrb[0].mxu0 %v5459
        %v5656 = vpop.f32.mrb[0].mxu0
        %v5657 = vadd.f32 %v5564, %v5656
        %v5658 = vpop.f32.mrb[0].mxu0
        %v5659 = vadd.f32 %v5566, %v5658
        %v5660 = vpop.f32.mrb[0].mxu0
        %v5661 = vadd.f32 %v5568, %v5660
        %v5662 = vpop.f32.mrb[0].mxu0
        %v5663 = vadd.f32 %v5570, %v5662
        %5664 = vmatprep.mubr.bf16.mxu0 %v5465
        %5665 = vmatmul.mubr.bf16.gmra.mrb[0].mxu0 %v5464
        %v5666 = vpop.f32.mrb[0].mxu0
        %v5667 = vadd.f32 %v5574, %v5666
        %v5668 = vpop.f32.mrb[0].mxu0
        %v5669 = vadd.f32 %v5576, %v5668
        %v5670 = vpop.f32.mrb[0].mxu0
        %v5671 = vadd.f32 %v5578, %v5670
        %v5672 = vpop.f32.mrb[0].mxu0
        %v5673 = vadd.f32 %v5580, %v5672
        %5674 = vmatprep.mubr.bf16.mxu0 %v5470
        %5675 = vmatmul.mubr.bf16.gmra.mrb[0].mxu0 %v5469
        %v5676 = vpop.f32.mrb[0].mxu0
        %v5677 = vadd.f32 %v5584, %v5676
        %v5678 = vpop.f32.mrb[0].mxu0
        %v5679 = vadd.f32 %v5586, %v5678
        %v5680 = vpop.f32.mrb[0].mxu0
        %v5681 = vadd.f32 %v5588, %v5680
        %v5682 = vpop.f32.mrb[0].mxu0
        %v5683 = vadd.f32 %v5590, %v5682
        %5684 = vmatprep.mubr.bf16.mxu0 %v5475
        %5685 = vmatmul.mubr.bf16.gmra.mrb[0].mxu0 %v5474
        %v5686 = vpop.f32.mrb[0].mxu0
        %v5687 = vadd.f32 %v5594, %v5686
        %v5688 = vpop.f32.mrb[0].mxu0
        %v5689 = vadd.f32 %v5596, %v5688
        %v5690 = vpop.f32.mrb[0].mxu0
        %v5691 = vadd.f32 %v5598, %v5690
        %v5692 = vpop.f32.mrb[0].mxu0
        %v5693 = vadd.f32 %v5600, %v5692
        %5694 = vmatprep.mubr.bf16.mxu0 %v5480
        %5695 = vmatmul.mubr.bf16.gmra.mrb[0].mxu0 %v5479
        %v5696 = vpop.f32.mrb[0].mxu0
        %v5697 = vadd.f32 %v5604, %v5696
        %v5698 = vpop.f32.mrb[0].mxu0
        %v5699 = vadd.f32 %v5606, %v5698
        %v5700 = vpop.f32.mrb[0].mxu0
        %v5701 = vadd.f32 %v5608, %v5700
        %v5702 = vpop.f32.mrb[0].mxu0
        %v5703 = vadd.f32 %v5610, %v5702
        %5704 = vmatprep.mubr.bf16.mxu0 %v5485
        %5705 = vmatmul.mubr.bf16.gmra.mrb[0].mxu0 %v5484
        %v5706 = vpop.f32.mrb[0].mxu0
        %v5707 = vadd.f32 %v5614, %v5706
        %v5708 = vpop.f32.mrb[0].mxu0
        %v5709 = vadd.f32 %v5616, %v5708
        %v5710 = vpop.f32.mrb[0].mxu0
        %v5711 = vadd.f32 %v5618, %v5710
        %v5712 = vpop.f32.mrb[0].mxu0
        %v5713 = vadd.f32 %v5620, %v5712
        %5714 = vdwg.mxu0
        %5715 = vmatprep.subr.bf16.mxu0 %v5354
        %5716 = vmatpush1.bf16.msra.mxu0 %v5353
        %5717 = vmatprep.subr.bf16.mxu0 %v5356
        %5718 = vmatpush1.bf16.msra.mxu0 %v5355
        %5719 = vmatprep.subr.bf16.mxu0 %v5358
        %5720 = vmatpush1.bf16.msra.mxu0 %v5357
        %5721 = vmatprep.subr.bf16.mxu0 %v5360
        %5722 = vmatpush1.bf16.msra.mxu0 %v5359
        %5723 = vmatprep.subr.bf16.mxu0 0
        %5724 = vmatpush1.bf16.msra.mxu0 0
        %5725 = vmatprep.subr.bf16.mxu0 0
        %5726 = vmatpush1.bf16.msra.mxu0 0
        %5727 = vmatprep.subr.bf16.mxu0 0
        %5728 = vmatpush1.bf16.msra.mxu0 0
        %5729 = vmatprep.subr.bf16.mxu0 0
        %5730 = vmatpush1.bf16.msra.mxu0 0
        %5731 = vmatprep.subr.bf16.mxu0 0
        %5732 = vmatpush1.bf16.msra.mxu0 0
        %5733 = vmatprep.subr.bf16.mxu0 0
        %5734 = vmatpush1.bf16.msra.mxu0 0
        %5735 = vmatprep.subr.bf16.mxu0 0
        %5736 = vmatpush1.bf16.msra.mxu0 0
        %5737 = vmatprep.subr.bf16.mxu0 0
        %5738 = vmatpush1.bf16.msra.mxu0 0
        %5739 = vmatprep.subr.bf16.mxu0 0
        %5740 = vmatpush1.bf16.msra.mxu0 0
        %5741 = vmatprep.subr.bf16.mxu0 0
        %5742 = vmatpush1.bf16.msra.mxu0 0
        %5743 = vmatprep.subr.bf16.mxu0 0
        %5744 = vmatpush1.bf16.msra.mxu0 0
        %5745 = vmatprep.subr.bf16.mxu0 0
        %5746 = vmatpush1.bf16.msra.mxu0 0
        %5747 = vmatprep.mubr.bf16.mxu0 0
        %5748 = vmatmul.mubr.bf16.gmra.mrb[0].mxu0 %v5512
        %v5749 = vpop.f32.mrb[0].mxu0
        %v5750 = vadd.f32 %v5657, %v5749
        %v5751 = vpop.f32.mrb[0].mxu0
        %v5752 = vadd.f32 %v5659, %v5751
        %v5753 = vpop.f32.mrb[0].mxu0
        %v5754 = vadd.f32 %v5661, %v5753
        %v5755 = vpop.f32.mrb[0].mxu0
        %v5756 = vadd.f32 %v5663, %v5755
        %5757 = vmatprep.mubr.bf16.mxu0 0
        %5758 = vmatmul.mubr.bf16.gmra.mrb[0].mxu0 %v5515
        %v5759 = vpop.f32.mrb[0].mxu0
        %v5760 = vadd.f32 %v5667, %v5759
        %v5761 = vpop.f32.mrb[0].mxu0
        %v5762 = vadd.f32 %v5669, %v5761
        %v5763 = vpop.f32.mrb[0].mxu0
        %v5764 = vadd.f32 %v5671, %v5763
        %v5765 = vpop.f32.mrb[0].mxu0
        %v5766 = vadd.f32 %v5673, %v5765
        %5767 = vmatprep.mubr.bf16.mxu0 0
        %5768 = vmatmul.mubr.bf16.gmra.mrb[0].mxu0 %v5518
        %v5769 = vpop.f32.mrb[0].mxu0
        %v5770 = vadd.f32 %v5677, %v5769
        %v5771 = vpop.f32.mrb[0].mxu0
        %v5772 = vadd.f32 %v5679, %v5771
        %v5773 = vpop.f32.mrb[0].mxu0
        %v5774 = vadd.f32 %v5681, %v5773
        %v5775 = vpop.f32.mrb[0].mxu0
        %v5776 = vadd.f32 %v5683, %v5775
        %5777 = vmatprep.mubr.bf16.mxu0 0
        %5778 = vmatmul.mubr.bf16.gmra.mrb[0].mxu0 %v5521
        %v5779 = vpop.f32.mrb[0].mxu0
        %v5780 = vadd.f32 %v5687, %v5779
        %v5781 = vpop.f32.mrb[0].mxu0
        %v5782 = vadd.f32 %v5689, %v5781
        %v5783 = vpop.f32.mrb[0].mxu0
        %v5784 = vadd.f32 %v5691, %v5783
        %v5785 = vpop.f32.mrb[0].mxu0
        %v5786 = vadd.f32 %v5693, %v5785
        %5787 = vmatprep.mubr.bf16.mxu0 0
        %5788 = vmatmul.mubr.bf16.gmra.mrb[0].mxu0 %v5524
        %v5789 = vpop.f32.mrb[0].mxu0
        %v5790 = vadd.f32 %v5697, %v5789
        %v5791 = vpop.f32.mrb[0].mxu0
        %v5792 = vadd.f32 %v5699, %v5791
        %v5793 = vpop.f32.mrb[0].mxu0
        %v5794 = vadd.f32 %v5701, %v5793
        %v5795 = vpop.f32.mrb[0].mxu0
        %v5796 = vadd.f32 %v5703, %v5795
        %5797 = vmatprep.mubr.bf16.mxu0 0
        %5798 = vmatmul.mubr.bf16.gmra.mrb[0].mxu0 %v5527
        %v5799 = vpop.f32.mrb[0].mxu0
        %v5800 = vadd.f32 %v5707, %v5799
        %v5801 = vpop.f32.mrb[0].mxu0
        %v5802 = vadd.f32 %v5709, %v5801
        %v5803 = vpop.f32.mrb[0].mxu0
        %v5804 = vadd.f32 %v5711, %v5803
        %v5805 = vpop.f32.mrb[0].mxu0
        %v5806 = vadd.f32 %v5713, %v5805
        %5807 = vdwg.mxu0
        %v5808 = vxor.u32 %v5175, 2147483648
        %v5809 = vxor.u32 %v5177, 2147483648
        %v5810 = vxor.u32 %v5179, 2147483648
        %v5811 = vxor.u32 %v5181, 2147483648
        %v5812 = vxor.u32 %v5185, 2147483648
        %v5813 = vxor.u32 %v5187, 2147483648
        %v5814 = vxor.u32 %v5189, 2147483648
        %v5815 = vxor.u32 %v5191, 2147483648
        %v5816 = vmul.f32 %v5808, 1.442695
        %v5817 = vpow.pop %v5816
        %v5818 = vmul.f32 %v5809, 1.442695
        %v5819 = vpow.pop %v5818
        %v5820 = vmul.f32 %v5810, 1.442695
        %v5821 = vpow.pop %v5820
        %v5822 = vmul.f32 %v5811, 1.442695
        %v5823 = vpow.pop %v5822
        %v5824 = vmul.f32 %v5812, 1.442695
        %v5825 = vpow.pop %v5824
        %v5826 = vmul.f32 %v5813, 1.442695
        %v5827 = vpow.pop %v5826
        %v5828 = vmul.f32 %v5814, 1.442695
        %v5829 = vpow.pop %v5828
        %v5830 = vmul.f32 %v5815, 1.442695
        %v5831 = vpow.pop %v5830
        %v5832 = vadd.f32 %v5817, 1.0
        %v5833 = vadd.f32 %v5819, 1.0
        %v5834 = vadd.f32 %v5821, 1.0
        %v5835 = vadd.f32 %v5823, 1.0
        %v5836 = vadd.f32 %v5825, 1.0
        %v5837 = vadd.f32 %v5827, 1.0
        %v5838 = vadd.f32 %v5829, 1.0
        %v5839 = vadd.f32 %v5831, 1.0
        %v5840 = vrcp.pop %v5832
        %v5841 = vmul.f32 1.0, %v5840
        %v5842 = vrcp.pop %v5833
        %v5843 = vmul.f32 1.0, %v5842
        %v5844 = vrcp.pop %v5834
        %v5845 = vmul.f32 1.0, %v5844
        %v5846 = vrcp.pop %v5835
        %v5847 = vmul.f32 1.0, %v5846
        %v5848 = vrcp.pop %v5836
        %v5849 = vmul.f32 1.0, %v5848
        %v5850 = vrcp.pop %v5837
        %v5851 = vmul.f32 1.0, %v5850
        %v5852 = vrcp.pop %v5838
        %v5853 = vmul.f32 1.0, %v5852
        %v5854 = vrcp.pop %v5839
        %v5855 = vmul.f32 1.0, %v5854
        %v5856 = vadd.f32 %v5195, 1.0
        %v5857 = vadd.f32 %v5197, 1.0
        %v5858 = vadd.f32 %v5199, 1.0
        %v5859 = vadd.f32 %v5201, 1.0
        %v5860 = vadd.f32 %v5205, 1.0
        %v5861 = vadd.f32 %v5207, 1.0
        %v5862 = vadd.f32 %v5209, 1.0
        %v5863 = vadd.f32 %v5211, 1.0
        %v5864 = vxor.u32 %v5856, 2147483648
        %v5865 = vxor.u32 %v5857, 2147483648
        %v5866 = vxor.u32 %v5858, 2147483648
        %v5867 = vxor.u32 %v5859, 2147483648
        %v5868 = vxor.u32 %v5860, 2147483648
        %v5869 = vxor.u32 %v5861, 2147483648
        %v5870 = vxor.u32 %v5862, 2147483648
        %v5871 = vxor.u32 %v5863, 2147483648
        %v5872 = vmul.f32 %v5864, 1.442695
        %v5873 = vpow.pop %v5872
        %v5874 = vmul.f32 %v5865, 1.442695
        %v5875 = vpow.pop %v5874
        %v5876 = vmul.f32 %v5866, 1.442695
        %v5877 = vpow.pop %v5876
        %v5878 = vmul.f32 %v5867, 1.442695
        %v5879 = vpow.pop %v5878
        %v5880 = vmul.f32 %v5868, 1.442695
        %v5881 = vpow.pop %v5880
        %v5882 = vmul.f32 %v5869, 1.442695
        %v5883 = vpow.pop %v5882
        %v5884 = vmul.f32 %v5870, 1.442695
        %v5885 = vpow.pop %v5884
        %v5886 = vmul.f32 %v5871, 1.442695
        %v5887 = vpow.pop %v5886
        %v5888 = vadd.f32 %v5873, 1.0
        %v5889 = vadd.f32 %v5875, 1.0
        %v5890 = vadd.f32 %v5877, 1.0
        %v5891 = vadd.f32 %v5879, 1.0
        %v5892 = vadd.f32 %v5881, 1.0
        %v5893 = vadd.f32 %v5883, 1.0
        %v5894 = vadd.f32 %v5885, 1.0
        %v5895 = vadd.f32 %v5887, 1.0
        %v5896 = vrcp.pop %v5888
        %v5897 = vmul.f32 1.0, %v5896
        %v5898 = vrcp.pop %v5889
        %v5899 = vmul.f32 1.0, %v5898
        %v5900 = vrcp.pop %v5890
        %v5901 = vmul.f32 1.0, %v5900
        %v5902 = vrcp.pop %v5891
        %v5903 = vmul.f32 1.0, %v5902
        %v5904 = vrcp.pop %v5892
        %v5905 = vmul.f32 1.0, %v5904
        %v5906 = vrcp.pop %v5893
        %v5907 = vmul.f32 1.0, %v5906
        %v5908 = vrcp.pop %v5894
        %v5909 = vmul.f32 1.0, %v5908
        %v5910 = vrcp.pop %v5895
        %v5911 = vmul.f32 1.0, %v5910
        %v5912 = vtanh.pop %v5215
        %v5913 = vtanh.pop %v5217
        %v5914 = vtanh.pop %v5219
        %v5915 = vtanh.pop %v5221
        %v5916 = vtanh.pop %v5225
        %v5917 = vtanh.pop %v5227
        %v5918 = vtanh.pop %v5229
        %v5919 = vtanh.pop %v5231
        %v5920 = vmul.f32 %v5897, %v3878
        %v5921 = vmul.f32 %v5899, %v3879
        %v5922 = vmul.f32 %v5901, %v3880
        %v5923 = vmul.f32 %v5903, %v3881
        %v5924 = vmul.f32 %v5905, %v3882
        %v5925 = vmul.f32 %v5907, %v3883
        %v5926 = vmul.f32 %v5909, %v3884
        %v5927 = vmul.f32 %v5911, %v3885
        %v5928 = vmul.f32 %v5841, %v5912
        %v5929 = vmul.f32 %v5843, %v5913
        %v5930 = vmul.f32 %v5845, %v5914
        %v5931 = vmul.f32 %v5847, %v5915
        %v5932 = vmul.f32 %v5849, %v5916
        %v5933 = vmul.f32 %v5851, %v5917
        %v5934 = vmul.f32 %v5853, %v5918
        %v5935 = vmul.f32 %v5855, %v5919
        %v5936 = vadd.f32 %v5920, %v5928
        %v5937 = vadd.f32 %v5921, %v5929
        %v5938 = vadd.f32 %v5922, %v5930
        %v5939 = vadd.f32 %v5923, %v5931
        %v5940 = vadd.f32 %v5924, %v5932
        %v5941 = vadd.f32 %v5925, %v5933
        %v5942 = vadd.f32 %v5926, %v5934
        %v5943 = vadd.f32 %v5927, %v5935
        %v5944 = vxor.u32 %v5750, 2147483648
        %v5945 = vxor.u32 %v5752, 2147483648
        %v5946 = vxor.u32 %v5754, 2147483648
        %v5947 = vxor.u32 %v5756, 2147483648
        %v5948 = vxor.u32 %v5760, 2147483648
        %v5949 = vxor.u32 %v5762, 2147483648
        %v5950 = vxor.u32 %v5764, 2147483648
        %v5951 = vxor.u32 %v5766, 2147483648
        %v5952 = vmul.f32 %v5944, 1.442695
        %v5953 = vpow.pop %v5952
        %v5954 = vmul.f32 %v5945, 1.442695
        %v5955 = vpow.pop %v5954
        %v5956 = vmul.f32 %v5946, 1.442695
        %v5957 = vpow.pop %v5956
        %v5958 = vmul.f32 %v5947, 1.442695
        %v5959 = vpow.pop %v5958
        %v5960 = vmul.f32 %v5948, 1.442695
        %v5961 = vpow.pop %v5960
        %v5962 = vmul.f32 %v5949, 1.442695
        %v5963 = vpow.pop %v5962
        %v5964 = vmul.f32 %v5950, 1.442695
        %v5965 = vpow.pop %v5964
        %v5966 = vmul.f32 %v5951, 1.442695
        %v5967 = vpow.pop %v5966
        %v5968 = vadd.f32 %v5953, 1.0
        %v5969 = vadd.f32 %v5955, 1.0
        %v5970 = vadd.f32 %v5957, 1.0
        %v5971 = vadd.f32 %v5959, 1.0
        %v5972 = vadd.f32 %v5961, 1.0
        %v5973 = vadd.f32 %v5963, 1.0
        %v5974 = vadd.f32 %v5965, 1.0
        %v5975 = vadd.f32 %v5967, 1.0
        %v5976 = vrcp.pop %v5968
        %v5977 = vmul.f32 1.0, %v5976
        %v5978 = vrcp.pop %v5969
        %v5979 = vmul.f32 1.0, %v5978
        %v5980 = vrcp.pop %v5970
        %v5981 = vmul.f32 1.0, %v5980
        %v5982 = vrcp.pop %v5971
        %v5983 = vmul.f32 1.0, %v5982
        %v5984 = vrcp.pop %v5972
        %v5985 = vmul.f32 1.0, %v5984
        %v5986 = vrcp.pop %v5973
        %v5987 = vmul.f32 1.0, %v5986
        %v5988 = vrcp.pop %v5974
        %v5989 = vmul.f32 1.0, %v5988
        %v5990 = vrcp.pop %v5975
        %v5991 = vmul.f32 1.0, %v5990
        %v5992 = vadd.f32 %v5770, 1.0
        %v5993 = vadd.f32 %v5772, 1.0
        %v5994 = vadd.f32 %v5774, 1.0
        %v5995 = vadd.f32 %v5776, 1.0
        %v5996 = vadd.f32 %v5780, 1.0
        %v5997 = vadd.f32 %v5782, 1.0
        %v5998 = vadd.f32 %v5784, 1.0
        %v5999 = vadd.f32 %v5786, 1.0
        %v6000 = vxor.u32 %v5992, 2147483648
        %v6001 = vxor.u32 %v5993, 2147483648
        %v6002 = vxor.u32 %v5994, 2147483648
        %v6003 = vxor.u32 %v5995, 2147483648
        %v6004 = vxor.u32 %v5996, 2147483648
        %v6005 = vxor.u32 %v5997, 2147483648
        %v6006 = vxor.u32 %v5998, 2147483648
        %v6007 = vxor.u32 %v5999, 2147483648
        %v6008 = vmul.f32 %v6000, 1.442695
        %v6009 = vpow.pop %v6008
        %v6010 = vmul.f32 %v6001, 1.442695
        %v6011 = vpow.pop %v6010
        %v6012 = vmul.f32 %v6002, 1.442695
        %v6013 = vpow.pop %v6012
        %v6014 = vmul.f32 %v6003, 1.442695
        %v6015 = vpow.pop %v6014
        %v6016 = vmul.f32 %v6004, 1.442695
        %v6017 = vpow.pop %v6016
        %v6018 = vmul.f32 %v6005, 1.442695
        %v6019 = vpow.pop %v6018
        %v6020 = vmul.f32 %v6006, 1.442695
        %v6021 = vpow.pop %v6020
        %v6022 = vmul.f32 %v6007, 1.442695
        %v6023 = vpow.pop %v6022
        %v6024 = vadd.f32 %v6009, 1.0
        %v6025 = vadd.f32 %v6011, 1.0
        %v6026 = vadd.f32 %v6013, 1.0
        %v6027 = vadd.f32 %v6015, 1.0
        %v6028 = vadd.f32 %v6017, 1.0
        %v6029 = vadd.f32 %v6019, 1.0
        %v6030 = vadd.f32 %v6021, 1.0
        %v6031 = vadd.f32 %v6023, 1.0
        %v6032 = vrcp.pop %v6024
        %v6033 = vmul.f32 1.0, %v6032
        %v6034 = vrcp.pop %v6025
        %v6035 = vmul.f32 1.0, %v6034
        %v6036 = vrcp.pop %v6026
        %v6037 = vmul.f32 1.0, %v6036
        %v6038 = vrcp.pop %v6027
        %v6039 = vmul.f32 1.0, %v6038
        %v6040 = vrcp.pop %v6028
        %v6041 = vmul.f32 1.0, %v6040
        %v6042 = vrcp.pop %v6029
        %v6043 = vmul.f32 1.0, %v6042
        %v6044 = vrcp.pop %v6030
        %v6045 = vmul.f32 1.0, %v6044
        %v6046 = vrcp.pop %v6031
        %v6047 = vmul.f32 1.0, %v6046
        %v6048 = vtanh.pop %v5790
        %v6049 = vtanh.pop %v5792
        %v6050 = vtanh.pop %v5794
        %v6051 = vtanh.pop %v5796
        %v6052 = vtanh.pop %v5800
        %v6053 = vtanh.pop %v5802
        %v6054 = vtanh.pop %v5804
        %v6055 = vtanh.pop %v5806
        %v6056 = vmul.f32 %v6033, %v2731
        %v6057 = vmul.f32 %v6035, %v2732
        %v6058 = vmul.f32 %v6037, %v2733
        %v6059 = vmul.f32 %v6039, %v2734
        %v6060 = vmul.f32 %v6041, %v2735
        %v6061 = vmul.f32 %v6043, %v2736
        %v6062 = vmul.f32 %v6045, %v2737
        %v6063 = vmul.f32 %v6047, %v2738
        %v6064 = vmul.f32 %v5977, %v6048
        %v6065 = vmul.f32 %v5979, %v6049
        %v6066 = vmul.f32 %v5981, %v6050
        %v6067 = vmul.f32 %v5983, %v6051
        %v6068 = vmul.f32 %v5985, %v6052
        %v6069 = vmul.f32 %v5987, %v6053
        %v6070 = vmul.f32 %v5989, %v6054
        %v6071 = vmul.f32 %v5991, %v6055
        %v6072 = vadd.f32 %v6056, %v6064
        %v6073 = vadd.f32 %v6057, %v6065
        %v6074 = vadd.f32 %v6058, %v6066
        %v6075 = vadd.f32 %v6059, %v6067
        %v6076 = vadd.f32 %v6060, %v6068
        %v6077 = vadd.f32 %v6061, %v6069
        %v6078 = vadd.f32 %v6062, %v6070
        %v6079 = vadd.f32 %v6063, %v6071
        %6080 = vrot.lane.b32.xlu0 %v5936, 9
        %v6081 = vpop.permute.xlu0 %6080
        %6082 = vrot.lane.b32.xlu0 %v5938, 9
        %v6083 = vpop.permute.xlu0 %6082
        %6084 = vrot.lane.b32.xlu0 %v5940, 9
        %v6085 = vpop.permute.xlu0 %6084
        %6086 = vrot.lane.b32.xlu0 %v5942, 9
        %v6087 = vpop.permute.xlu0 %6086
        %6088 = vrot.lane.b32.xlu0 %v5937, 9
        %v6089 = vpop.permute.xlu0 %6088
        %6090 = vrot.lane.b32.xlu0 %v5939, 9
        %v6091 = vpop.permute.xlu0 %6090
        %6092 = vrot.lane.b32.xlu0 %v5941, 9
        %v6093 = vpop.permute.xlu0 %6092
        %6094 = vrot.lane.b32.xlu0 %v5943, 9
        %v6095 = vpop.permute.xlu0 %6094
        %v6096 = vsel %vm690, %v6081, %v6089
        %v6097 = vsel %vm690, %v6083, %v6091
        %v6098 = vsel %vm690, %v6085, %v6093
        %v6099 = vsel %vm690, %v6087, %v6095
        %v6100 = vsel %vm690, %v6089, %v6081
        %v6101 = vsel %vm690, %v6091, %v6083
        %v6102 = vsel %vm690, %v6093, %v6085
        %v6103 = vsel %vm690, %v6095, %v6087
        %v6104 = vmul.f32 %v6100, %v703
        %v6105 = vmul.f32 %v6096, %v707
        %v6106 = vmul.f32 %v6101, %v703
        %v6107 = vmul.f32 %v6097, %v707
        %v6108 = vmul.f32 %v6102, %v703
        %v6109 = vmul.f32 %v6098, %v707
        %v6110 = vmul.f32 %v6103, %v703
        %v6111 = vmul.f32 %v6099, %v707
        %v6112 = vpack.c.bf16 %v6106, %v6104
        %v6113 = vpack.c.bf16 %v6107, %v6105
        %v6114 = vpack.c.bf16 %v6110, %v6108
        %v6115 = vpack.c.bf16 %v6111, %v6109
        %6116 = vst [vmem:[#allocation6 + $0x360] sm:$0xff] %v6112
        %6117 = vst [vmem:[#allocation6 + $0x368] sm:$0xff] %v6113
        %6118 = vst [vmem:[#allocation6 + $0x370] sm:$0xff] %v6114
        %6119 = vst [vmem:[#allocation6 + $0x378] sm:$0xff] %v6115
        %6120 = vrot.lane.b32.xlu0 %v6072, 9
        %v6121 = vpop.permute.xlu0 %6120
        %6122 = vrot.lane.b32.xlu0 %v6074, 9
        %v6123 = vpop.permute.xlu0 %6122
        %6124 = vrot.lane.b32.xlu0 %v6076, 9
        %v6125 = vpop.permute.xlu0 %6124
        %6126 = vrot.lane.b32.xlu0 %v6078, 9
        %v6127 = vpop.permute.xlu0 %6126
        %6128 = vrot.lane.b32.xlu0 %v6073, 9
        %v6129 = vpop.permute.xlu0 %6128
        %6130 = vrot.lane.b32.xlu0 %v6075, 9
        %v6131 = vpop.permute.xlu0 %6130
        %6132 = vrot.lane.b32.xlu0 %v6077, 9
        %v6133 = vpop.permute.xlu0 %6132
        %6134 = vrot.lane.b32.xlu0 %v6079, 9
        %v6135 = vpop.permute.xlu0 %6134
        %v6136 = vsel %vm690, %v6121, %v6129
        %v6137 = vsel %vm690, %v6123, %v6131
        %v6138 = vsel %vm690, %v6125, %v6133
        %v6139 = vsel %vm690, %v6127, %v6135
        %v6140 = vsel %vm690, %v6129, %v6121
        %v6141 = vsel %vm690, %v6131, %v6123
        %v6142 = vsel %vm690, %v6133, %v6125
        %v6143 = vsel %vm690, %v6135, %v6127
        %v6144 = vmul.f32 %v6140, %v703
        %v6145 = vmul.f32 %v6136, %v707
        %v6146 = vmul.f32 %v6141, %v703
        %v6147 = vmul.f32 %v6137, %v707
        %v6148 = vmul.f32 %v6142, %v703
        %v6149 = vmul.f32 %v6138, %v707
        %v6150 = vmul.f32 %v6143, %v703
        %v6151 = vmul.f32 %v6139, %v707
        %v6152 = vpack.c.bf16 %v6146, %v6144
        %v6153 = vpack.c.bf16 %v6147, %v6145
        %v6154 = vpack.c.bf16 %v6150, %v6148
        %v6155 = vpack.c.bf16 %v6151, %v6149
        %6156 = vst [vmem:[#allocation6 + $0x380] sm:$0xff] %v6152
        %6157 = vst [vmem:[#allocation6 + $0x388] sm:$0xff] %v6153
        %6158 = vst [vmem:[#allocation6 + $0x390] sm:$0xff] %v6154
        %6159 = vst [vmem:[#allocation6 + $0x398] sm:$0xff] %v6155
        %6160 = vrot.lane.b32.xlu0 %v5936, 8
        %v6161 = vpop.permute.xlu0 %6160
        %6162 = vrot.lane.b32.xlu0 %v5938, 8
        %v6163 = vpop.permute.xlu0 %6162
        %6164 = vrot.lane.b32.xlu0 %v5940, 8
        %v6165 = vpop.permute.xlu0 %6164
        %6166 = vrot.lane.b32.xlu0 %v5942, 8
        %v6167 = vpop.permute.xlu0 %6166
        %6168 = vrot.lane.b32.xlu0 %v5937, 8
        %v6169 = vpop.permute.xlu0 %6168
        %6170 = vrot.lane.b32.xlu0 %v5939, 8
        %v6171 = vpop.permute.xlu0 %6170
        %6172 = vrot.lane.b32.xlu0 %v5941, 8
        %v6173 = vpop.permute.xlu0 %6172
        %6174 = vrot.lane.b32.xlu0 %v5943, 8
        %v6175 = vpop.permute.xlu0 %6174
        %v6176 = vsel %vm742, %v6161, %v6169
        %v6177 = vsel %vm742, %v6163, %v6171
        %v6178 = vsel %vm742, %v6165, %v6173
        %v6179 = vsel %vm742, %v6167, %v6175
        %v6180 = vsel %vm742, %v6169, %v6161
        %v6181 = vsel %vm742, %v6171, %v6163
        %v6182 = vsel %vm742, %v6173, %v6165
        %v6183 = vsel %vm742, %v6175, %v6167
        %v6184 = vmul.f32 %v6180, %v755
        %v6185 = vmul.f32 %v6176, %v759
        %v6186 = vmul.f32 %v6181, %v755
        %v6187 = vmul.f32 %v6177, %v759
        %v6188 = vmul.f32 %v6182, %v755
        %v6189 = vmul.f32 %v6178, %v759
        %v6190 = vmul.f32 %v6183, %v755
        %v6191 = vmul.f32 %v6179, %v759
        %v6192 = vpack.c.bf16 %v6186, %v6184
        %v6193 = vpack.c.bf16 %v6187, %v6185
        %v6194 = vpack.c.bf16 %v6190, %v6188
        %v6195 = vpack.c.bf16 %v6191, %v6189
        %6196 = vst [vmem:[#allocation6 + $0x3a0] sm:$0xff] %v6192
        %6197 = vst [vmem:[#allocation6 + $0x3a8] sm:$0xff] %v6193
        %6198 = vst [vmem:[#allocation6 + $0x3b0] sm:$0xff] %v6194
        %6199 = vst [vmem:[#allocation6 + $0x3b8] sm:$0xff] %v6195
        %6200 = vrot.lane.b32.xlu0 %v6072, 8
        %v6201 = vpop.permute.xlu0 %6200
        %6202 = vrot.lane.b32.xlu0 %v6074, 8
        %v6203 = vpop.permute.xlu0 %6202
        %6204 = vrot.lane.b32.xlu0 %v6076, 8
        %v6205 = vpop.permute.xlu0 %6204
        %6206 = vrot.lane.b32.xlu0 %v6078, 8
        %v6207 = vpop.permute.xlu0 %6206
        %6208 = vrot.lane.b32.xlu0 %v6073, 8
        %v6209 = vpop.permute.xlu0 %6208
        %6210 = vrot.lane.b32.xlu0 %v6075, 8
        %v6211 = vpop.permute.xlu0 %6210
        %6212 = vrot.lane.b32.xlu0 %v6077, 8
        %v6213 = vpop.permute.xlu0 %6212
        %6214 = vrot.lane.b32.xlu0 %v6079, 8
        %v6215 = vpop.permute.xlu0 %6214
        %v6216 = vsel %vm742, %v6201, %v6209
        %v6217 = vsel %vm742, %v6203, %v6211
        %v6218 = vsel %vm742, %v6205, %v6213
        %v6219 = vsel %vm742, %v6207, %v6215
        %v6220 = vsel %vm742, %v6209, %v6201
        %v6221 = vsel %vm742, %v6211, %v6203
        %v6222 = vsel %vm742, %v6213, %v6205
        %v6223 = vsel %vm742, %v6215, %v6207
        %v6224 = vmul.f32 %v6220, %v755
        %v6225 = vmul.f32 %v6216, %v759
        %v6226 = vmul.f32 %v6221, %v755
        %v6227 = vmul.f32 %v6217, %v759
        %v6228 = vmul.f32 %v6222, %v755
        %v6229 = vmul.f32 %v6218, %v759
        %v6230 = vmul.f32 %v6223, %v755
        %v6231 = vmul.f32 %v6219, %v759
        %v6232 = vpack.c.bf16 %v6226, %v6224
        %v6233 = vpack.c.bf16 %v6227, %v6225
        %v6234 = vpack.c.bf16 %v6230, %v6228
        %v6235 = vpack.c.bf16 %v6231, %v6229
        %6236 = vst [vmem:[#allocation6 + $0x3c0] sm:$0xff] %v6232
        %6237 = vst [vmem:[#allocation6 + $0x3c8] sm:$0xff] %v6233
        %6238 = vst [vmem:[#allocation6 + $0x3d0] sm:$0xff] %v6234
        %6239 = vst [vmem:[#allocation6 + $0x3d8] sm:$0xff] %v6235
        %6240 = vrot.lane.b32.xlu0 %v5936, 7
        %v6241 = vpop.permute.xlu0 %6240
        %6242 = vrot.lane.b32.xlu0 %v5938, 7
        %v6243 = vpop.permute.xlu0 %6242
        %6244 = vrot.lane.b32.xlu0 %v5940, 7
        %v6245 = vpop.permute.xlu0 %6244
        %6246 = vrot.lane.b32.xlu0 %v5942, 7
        %v6247 = vpop.permute.xlu0 %6246
        %6248 = vrot.lane.b32.xlu0 %v5937, 7
        %v6249 = vpop.permute.xlu0 %6248
        %6250 = vrot.lane.b32.xlu0 %v5939, 7
        %v6251 = vpop.permute.xlu0 %6250
        %6252 = vrot.lane.b32.xlu0 %v5941, 7
        %v6253 = vpop.permute.xlu0 %6252
        %6254 = vrot.lane.b32.xlu0 %v5943, 7
        %v6255 = vpop.permute.xlu0 %6254
        %v6256 = vsel %vm794, %v6241, %v6249
        %v6257 = vsel %vm794, %v6243, %v6251
        %v6258 = vsel %vm794, %v6245, %v6253
        %v6259 = vsel %vm794, %v6247, %v6255
        %v6260 = vsel %vm794, %v6249, %v6241
        %v6261 = vsel %vm794, %v6251, %v6243
        %v6262 = vsel %vm794, %v6253, %v6245
        %v6263 = vsel %vm794, %v6255, %v6247
        %v6264 = vmul.f32 %v6260, %v807
        %v6265 = vmul.f32 %v6256, %v811
        %v6266 = vmul.f32 %v6261, %v807
        %v6267 = vmul.f32 %v6257, %v811
        %v6268 = vmul.f32 %v6262, %v807
        %v6269 = vmul.f32 %v6258, %v811
        %v6270 = vmul.f32 %v6263, %v807
        %v6271 = vmul.f32 %v6259, %v811
        %v6272 = vpack.c.bf16 %v6266, %v6264
        %v6273 = vpack.c.bf16 %v6267, %v6265
        %v6274 = vpack.c.bf16 %v6270, %v6268
        %v6275 = vpack.c.bf16 %v6271, %v6269
        %6276 = vst [vmem:[#allocation6 + $0x3e0] sm:$0xff] %v6272
        %6277 = vst [vmem:[#allocation6 + $0x3e8] sm:$0xff] %v6273
        %6278 = vst [vmem:[#allocation6 + $0x3f0] sm:$0xff] %v6274
        %6279 = vst [vmem:[#allocation6 + $0x3f8] sm:$0xff] %v6275
        %6280 = vrot.lane.b32.xlu0 %v6072, 7
        %v6281 = vpop.permute.xlu0 %6280
        %6282 = vrot.lane.b32.xlu0 %v6074, 7
        %v6283 = vpop.permute.xlu0 %6282
        %6284 = vrot.lane.b32.xlu0 %v6076, 7
        %v6285 = vpop.permute.xlu0 %6284
        %6286 = vrot.lane.b32.xlu0 %v6078, 7
        %v6287 = vpop.permute.xlu0 %6286
        %6288 = vrot.lane.b32.xlu0 %v6073, 7
        %v6289 = vpop.permute.xlu0 %6288
        %6290 = vrot.lane.b32.xlu0 %v6075, 7
        %v6291 = vpop.permute.xlu0 %6290
        %6292 = vrot.lane.b32.xlu0 %v6077, 7
        %v6293 = vpop.permute.xlu0 %6292
        %6294 = vrot.lane.b32.xlu0 %v6079, 7
        %v6295 = vpop.permute.xlu0 %6294
        %v6296 = vsel %vm794, %v6281, %v6289
        %v6297 = vsel %vm794, %v6283, %v6291
        %v6298 = vsel %vm794, %v6285, %v6293
        %v6299 = vsel %vm794, %v6287, %v6295
        %v6300 = vsel %vm794, %v6289, %v6281
        %v6301 = vsel %vm794, %v6291, %v6283
        %v6302 = vsel %vm794, %v6293, %v6285
        %v6303 = vsel %vm794, %v6295, %v6287
        %v6304 = vmul.f32 %v6300, %v807
        %v6305 = vmul.f32 %v6296, %v811
        %v6306 = vmul.f32 %v6301, %v807
        %v6307 = vmul.f32 %v6297, %v811
        %v6308 = vmul.f32 %v6302, %v807
        %v6309 = vmul.f32 %v6298, %v811
        %v6310 = vmul.f32 %v6303, %v807
        %v6311 = vmul.f32 %v6299, %v811
        %v6312 = vpack.c.bf16 %v6306, %v6304
        %v6313 = vpack.c.bf16 %v6307, %v6305
        %v6314 = vpack.c.bf16 %v6310, %v6308
        %v6315 = vpack.c.bf16 %v6311, %v6309
        %6316 = vst [vmem:[#allocation6 + $0x400] sm:$0xff] %v6312
        %6317 = vst [vmem:[#allocation6 + $0x408] sm:$0xff] %v6313
        %6318 = vst [vmem:[#allocation6 + $0x410] sm:$0xff] %v6314
        %6319 = vst [vmem:[#allocation6 + $0x418] sm:$0xff] %v6315
        %6320 = vrot.lane.b32.xlu0 %v5936, 1
        %v6321 = vpop.permute.xlu0 %6320
        %6322 = vrot.lane.b32.xlu0 %v5938, 1
        %v6323 = vpop.permute.xlu0 %6322
        %6324 = vrot.lane.b32.xlu0 %v5940, 1
        %v6325 = vpop.permute.xlu0 %6324
        %6326 = vrot.lane.b32.xlu0 %v5942, 1
        %v6327 = vpop.permute.xlu0 %6326
        %6328 = vrot.lane.b32.xlu0 %v5937, 1
        %v6329 = vpop.permute.xlu0 %6328
        %6330 = vrot.lane.b32.xlu0 %v5939, 1
        %v6331 = vpop.permute.xlu0 %6330
        %6332 = vrot.lane.b32.xlu0 %v5941, 1
        %v6333 = vpop.permute.xlu0 %6332
        %6334 = vrot.lane.b32.xlu0 %v5943, 1
        %v6335 = vpop.permute.xlu0 %6334
        %v6336 = vsel %vm846, %v6321, %v6329
        %v6337 = vsel %vm846, %v6323, %v6331
        %v6338 = vsel %vm846, %v6325, %v6333
        %v6339 = vsel %vm846, %v6327, %v6335
        %v6340 = vsel %vm846, %v6329, %v6321
        %v6341 = vsel %vm846, %v6331, %v6323
        %v6342 = vsel %vm846, %v6333, %v6325
        %v6343 = vsel %vm846, %v6335, %v6327
        %v6344 = vmul.f32 %v6340, %v859
        %v6345 = vmul.f32 %v6336, %v863
        %v6346 = vmul.f32 %v6341, %v859
        %v6347 = vmul.f32 %v6337, %v863
        %v6348 = vmul.f32 %v6342, %v859
        %v6349 = vmul.f32 %v6338, %v863
        %v6350 = vmul.f32 %v6343, %v859
        %v6351 = vmul.f32 %v6339, %v863
        %v6352 = vpack.c.bf16 %v6346, %v6344
        %v6353 = vpack.c.bf16 %v6347, %v6345
        %v6354 = vpack.c.bf16 %v6350, %v6348
        %v6355 = vpack.c.bf16 %v6351, %v6349
        %6356 = vst [vmem:[#allocation6 + $0x420] sm:$0xff] %v6352
        %6357 = vst [vmem:[#allocation6 + $0x428] sm:$0xff] %v6353
        %6358 = vst [vmem:[#allocation6 + $0x430] sm:$0xff] %v6354
        %6359 = vst [vmem:[#allocation6 + $0x438] sm:$0xff] %v6355
        %6360 = vrot.lane.b32.xlu0 %v6072, 1
        %v6361 = vpop.permute.xlu0 %6360
        %6362 = vrot.lane.b32.xlu0 %v6074, 1
        %v6363 = vpop.permute.xlu0 %6362
        %6364 = vrot.lane.b32.xlu0 %v6076, 1
        %v6365 = vpop.permute.xlu0 %6364
        %6366 = vrot.lane.b32.xlu0 %v6078, 1
        %v6367 = vpop.permute.xlu0 %6366
        %6368 = vrot.lane.b32.xlu0 %v6073, 1
        %v6369 = vpop.permute.xlu0 %6368
        %6370 = vrot.lane.b32.xlu0 %v6075, 1
        %v6371 = vpop.permute.xlu0 %6370
        %6372 = vrot.lane.b32.xlu0 %v6077, 1
        %v6373 = vpop.permute.xlu0 %6372
        %6374 = vrot.lane.b32.xlu0 %v6079, 1
        %v6375 = vpop.permute.xlu0 %6374
        %v6376 = vsel %vm846, %v6361, %v6369
        %v6377 = vsel %vm846, %v6363, %v6371
        %v6378 = vsel %vm846, %v6365, %v6373
        %v6379 = vsel %vm846, %v6367, %v6375
        %v6380 = vsel %vm846, %v6369, %v6361
        %v6381 = vsel %vm846, %v6371, %v6363
        %v6382 = vsel %vm846, %v6373, %v6365
        %v6383 = vsel %vm846, %v6375, %v6367
        %v6384 = vmul.f32 %v6380, %v859
        %v6385 = vmul.f32 %v6376, %v863
        %v6386 = vmul.f32 %v6381, %v859
        %v6387 = vmul.f32 %v6377, %v863
        %v6388 = vmul.f32 %v6382, %v859
        %v6389 = vmul.f32 %v6378, %v863
        %v6390 = vmul.f32 %v6383, %v859
        %v6391 = vmul.f32 %v6379, %v863
        %v6392 = vpack.c.bf16 %v6386, %v6384
        %v6393 = vpack.c.bf16 %v6387, %v6385
        %v6394 = vpack.c.bf16 %v6390, %v6388
        %v6395 = vpack.c.bf16 %v6391, %v6389
        %6396 = vst [vmem:[#allocation6 + $0x440] sm:$0xff] %v6392
        %6397 = vst [vmem:[#allocation6 + $0x448] sm:$0xff] %v6393
        %6398 = vst [vmem:[#allocation6 + $0x450] sm:$0xff] %v6394
        %6399 = vst [vmem:[#allocation6 + $0x458] sm:$0xff] %v6395
        %v6400 = vpack.c.bf16 %v5938, %v5936
        %v6401 = vpack.c.bf16 %v5939, %v5937
        %v6402 = vpack.c.bf16 %v5942, %v5940
        %v6403 = vpack.c.bf16 %v5943, %v5941
        %6404 = vst [vmem:[#allocation6 + $0x460] sm:$0xff] %v6400
        %6405 = vst [vmem:[#allocation6 + $0x468] sm:$0xff] %v6401
        %6406 = vst [vmem:[#allocation6 + $0x470] sm:$0xff] %v6402
        %6407 = vst [vmem:[#allocation6 + $0x478] sm:$0xff] %v6403
        %v6408 = vpack.c.bf16 %v6074, %v6072
        %v6409 = vpack.c.bf16 %v6075, %v6073
        %v6410 = vpack.c.bf16 %v6078, %v6076
        %v6411 = vpack.c.bf16 %v6079, %v6077
        %6412 = vst [vmem:[#allocation6 + $0x480] sm:$0xff] %v6408
        %6413 = vst [vmem:[#allocation6 + $0x488] sm:$0xff] %v6409
        %6414 = vst [vmem:[#allocation6 + $0x490] sm:$0xff] %v6410
        %6415 = vst [vmem:[#allocation6 + $0x498] sm:$0xff] %v6411
        %6416 = vrot.lane.b32.xlu0 %v5936, 127
        %v6417 = vpop.permute.xlu0 %6416
        %6418 = vrot.lane.b32.xlu0 %v5938, 127
        %v6419 = vpop.permute.xlu0 %6418
        %6420 = vrot.lane.b32.xlu0 %v5940, 127
        %v6421 = vpop.permute.xlu0 %6420
        %6422 = vrot.lane.b32.xlu0 %v5942, 127
        %v6423 = vpop.permute.xlu0 %6422
        %6424 = vrot.lane.b32.xlu0 %v5937, 127
        %v6425 = vpop.permute.xlu0 %6424
        %6426 = vrot.lane.b32.xlu0 %v5939, 127
        %v6427 = vpop.permute.xlu0 %6426
        %6428 = vrot.lane.b32.xlu0 %v5941, 127
        %v6429 = vpop.permute.xlu0 %6428
        %6430 = vrot.lane.b32.xlu0 %v5943, 127
        %v6431 = vpop.permute.xlu0 %6430
        %v6432 = vsel %vm902, %v6417, %v6425
        %v6433 = vsel %vm902, %v6419, %v6427
        %v6434 = vsel %vm902, %v6421, %v6429
        %v6435 = vsel %vm902, %v6423, %v6431
        %v6436 = vsel %vm902, %v6425, %v6417
        %v6437 = vsel %vm902, %v6427, %v6419
        %v6438 = vsel %vm902, %v6429, %v6421
        %v6439 = vsel %vm902, %v6431, %v6423
        %v6440 = vmul.f32 %v6432, %v915
        %v6441 = vmul.f32 %v6436, %v919
        %v6442 = vmul.f32 %v6433, %v915
        %v6443 = vmul.f32 %v6437, %v919
        %v6444 = vmul.f32 %v6434, %v915
        %v6445 = vmul.f32 %v6438, %v919
        %v6446 = vmul.f32 %v6435, %v915
        %v6447 = vmul.f32 %v6439, %v919
        %v6448 = vpack.c.bf16 %v6442, %v6440
        %v6449 = vpack.c.bf16 %v6443, %v6441
        %v6450 = vpack.c.bf16 %v6446, %v6444
        %v6451 = vpack.c.bf16 %v6447, %v6445
        %6452 = vst [vmem:[#allocation6 + $0x4a0] sm:$0xff] %v6448
        %6453 = vst [vmem:[#allocation6 + $0x4a8] sm:$0xff] %v6449
        %6454 = vst [vmem:[#allocation6 + $0x4b0] sm:$0xff] %v6450
        %6455 = vst [vmem:[#allocation6 + $0x4b8] sm:$0xff] %v6451
        %6456 = vrot.lane.b32.xlu0 %v6072, 127
        %v6457 = vpop.permute.xlu0 %6456
        %6458 = vrot.lane.b32.xlu0 %v6074, 127
        %v6459 = vpop.permute.xlu0 %6458
        %6460 = vrot.lane.b32.xlu0 %v6076, 127
        %v6461 = vpop.permute.xlu0 %6460
        %6462 = vrot.lane.b32.xlu0 %v6078, 127
        %v6463 = vpop.permute.xlu0 %6462
        %6464 = vrot.lane.b32.xlu0 %v6073, 127
        %v6465 = vpop.permute.xlu0 %6464
        %6466 = vrot.lane.b32.xlu0 %v6075, 127
        %v6467 = vpop.permute.xlu0 %6466
        %6468 = vrot.lane.b32.xlu0 %v6077, 127
        %v6469 = vpop.permute.xlu0 %6468
        %6470 = vrot.lane.b32.xlu0 %v6079, 127
        %v6471 = vpop.permute.xlu0 %6470
        %v6472 = vsel %vm902, %v6457, %v6465
        %v6473 = vsel %vm902, %v6459, %v6467
        %v6474 = vsel %vm902, %v6461, %v6469
        %v6475 = vsel %vm902, %v6463, %v6471
        %v6476 = vsel %vm902, %v6465, %v6457
        %v6477 = vsel %vm902, %v6467, %v6459
        %v6478 = vsel %vm902, %v6469, %v6461
        %v6479 = vsel %vm902, %v6471, %v6463
        %v6480 = vmul.f32 %v6472, %v915
        %v6481 = vmul.f32 %v6476, %v919
        %v6482 = vmul.f32 %v6473, %v915
        %v6483 = vmul.f32 %v6477, %v919
        %v6484 = vmul.f32 %v6474, %v915
        %v6485 = vmul.f32 %v6478, %v919
        %v6486 = vmul.f32 %v6475, %v915
        %v6487 = vmul.f32 %v6479, %v919
        %v6488 = vpack.c.bf16 %v6482, %v6480
        %v6489 = vpack.c.bf16 %v6483, %v6481
        %v6490 = vpack.c.bf16 %v6486, %v6484
        %v6491 = vpack.c.bf16 %v6487, %v6485
        %6492 = vst [vmem:[#allocation6 + $0x4c0] sm:$0xff] %v6488
        %6493 = vst [vmem:[#allocation6 + $0x4c8] sm:$0xff] %v6489
        %6494 = vst [vmem:[#allocation6 + $0x4d0] sm:$0xff] %v6490
        %6495 = vst [vmem:[#allocation6 + $0x4d8] sm:$0xff] %v6491
        %6496 = vrot.lane.b32.xlu0 %v5936, 121
        %v6497 = vpop.permute.xlu0 %6496
        %6498 = vrot.lane.b32.xlu0 %v5938, 121
        %v6499 = vpop.permute.xlu0 %6498
        %6500 = vrot.lane.b32.xlu0 %v5940, 121
        %v6501 = vpop.permute.xlu0 %6500
        %6502 = vrot.lane.b32.xlu0 %v5942, 121
        %v6503 = vpop.permute.xlu0 %6502
        %6504 = vrot.lane.b32.xlu0 %v5937, 121
        %v6505 = vpop.permute.xlu0 %6504
        %6506 = vrot.lane.b32.xlu0 %v5939, 121
        %v6507 = vpop.permute.xlu0 %6506
        %6508 = vrot.lane.b32.xlu0 %v5941, 121
        %v6509 = vpop.permute.xlu0 %6508
        %6510 = vrot.lane.b32.xlu0 %v5943, 121
        %v6511 = vpop.permute.xlu0 %6510
        %v6512 = vsel %vm954, %v6497, %v6505
        %v6513 = vsel %vm954, %v6499, %v6507
        %v6514 = vsel %vm954, %v6501, %v6509
        %v6515 = vsel %vm954, %v6503, %v6511
        %v6516 = vsel %vm954, %v6505, %v6497
        %v6517 = vsel %vm954, %v6507, %v6499
        %v6518 = vsel %vm954, %v6509, %v6501
        %v6519 = vsel %vm954, %v6511, %v6503
        %v6520 = vmul.f32 %v6512, %v967
        %v6521 = vmul.f32 %v6516, %v971
        %v6522 = vmul.f32 %v6513, %v967
        %v6523 = vmul.f32 %v6517, %v971
        %v6524 = vmul.f32 %v6514, %v967
        %v6525 = vmul.f32 %v6518, %v971
        %v6526 = vmul.f32 %v6515, %v967
        %v6527 = vmul.f32 %v6519, %v971
        %v6528 = vpack.c.bf16 %v6522, %v6520
        %v6529 = vpack.c.bf16 %v6523, %v6521
        %v6530 = vpack.c.bf16 %v6526, %v6524
        %v6531 = vpack.c.bf16 %v6527, %v6525
        %6532 = vst [vmem:[#allocation6 + $0x4e0] sm:$0xff] %v6528
        %6533 = vst [vmem:[#allocation6 + $0x4e8] sm:$0xff] %v6529
        %6534 = vst [vmem:[#allocation6 + $0x4f0] sm:$0xff] %v6530
        %6535 = vst [vmem:[#allocation6 + $0x4f8] sm:$0xff] %v6531
        %6536 = vrot.lane.b32.xlu0 %v6072, 121
        %v6537 = vpop.permute.xlu0 %6536
        %6538 = vrot.lane.b32.xlu0 %v6074, 121
        %v6539 = vpop.permute.xlu0 %6538
        %6540 = vrot.lane.b32.xlu0 %v6076, 121
        %v6541 = vpop.permute.xlu0 %6540
        %6542 = vrot.lane.b32.xlu0 %v6078, 121
        %v6543 = vpop.permute.xlu0 %6542
        %6544 = vrot.lane.b32.xlu0 %v6073, 121
        %v6545 = vpop.permute.xlu0 %6544
        %6546 = vrot.lane.b32.xlu0 %v6075, 121
        %v6547 = vpop.permute.xlu0 %6546
        %6548 = vrot.lane.b32.xlu0 %v6077, 121
        %v6549 = vpop.permute.xlu0 %6548
        %6550 = vrot.lane.b32.xlu0 %v6079, 121
        %v6551 = vpop.permute.xlu0 %6550
        %v6552 = vsel %vm954, %v6537, %v6545
        %v6553 = vsel %vm954, %v6539, %v6547
        %v6554 = vsel %vm954, %v6541, %v6549
        %v6555 = vsel %vm954, %v6543, %v6551
        %v6556 = vsel %vm954, %v6545, %v6537
        %v6557 = vsel %vm954, %v6547, %v6539
        %v6558 = vsel %vm954, %v6549, %v6541
        %v6559 = vsel %vm954, %v6551, %v6543
        %v6560 = vmul.f32 %v6552, %v967
        %v6561 = vmul.f32 %v6556, %v971
        %v6562 = vmul.f32 %v6553, %v967
        %v6563 = vmul.f32 %v6557, %v971
        %v6564 = vmul.f32 %v6554, %v967
        %v6565 = vmul.f32 %v6558, %v971
        %v6566 = vmul.f32 %v6555, %v967
        %v6567 = vmul.f32 %v6559, %v971
        %v6568 = vpack.c.bf16 %v6562, %v6560
        %v6569 = vpack.c.bf16 %v6563, %v6561
        %v6570 = vpack.c.bf16 %v6566, %v6564
        %v6571 = vpack.c.bf16 %v6567, %v6565
        %6572 = vst [vmem:[#allocation6 + $0x500] sm:$0xff] %v6568
        %6573 = vst [vmem:[#allocation6 + $0x508] sm:$0xff] %v6569
        %6574 = vst [vmem:[#allocation6 + $0x510] sm:$0xff] %v6570
        %6575 = vst [vmem:[#allocation6 + $0x518] sm:$0xff] %v6571
        %6576 = vrot.lane.b32.xlu0 %v5936, 120
        %v6577 = vpop.permute.xlu0 %6576
        %6578 = vrot.lane.b32.xlu0 %v5938, 120
        %v6579 = vpop.permute.xlu0 %6578
        %6580 = vrot.lane.b32.xlu0 %v5940, 120
        %v6581 = vpop.permute.xlu0 %6580
        %6582 = vrot.lane.b32.xlu0 %v5942, 120
        %v6583 = vpop.permute.xlu0 %6582
        %6584 = vrot.lane.b32.xlu0 %v5937, 120
        %v6585 = vpop.permute.xlu0 %6584
        %6586 = vrot.lane.b32.xlu0 %v5939, 120
        %v6587 = vpop.permute.xlu0 %6586
        %6588 = vrot.lane.b32.xlu0 %v5941, 120
        %v6589 = vpop.permute.xlu0 %6588
        %6590 = vrot.lane.b32.xlu0 %v5943, 120
        %v6591 = vpop.permute.xlu0 %6590
        %v6592 = vsel %vm1006, %v6577, %v6585
        %v6593 = vsel %vm1006, %v6579, %v6587
        %v6594 = vsel %vm1006, %v6581, %v6589
        %v6595 = vsel %vm1006, %v6583, %v6591
        %v6596 = vsel %vm1006, %v6585, %v6577
        %v6597 = vsel %vm1006, %v6587, %v6579
        %v6598 = vsel %vm1006, %v6589, %v6581
        %v6599 = vsel %vm1006, %v6591, %v6583
        %v6600 = vmul.f32 %v6592, %v1019
        %v6601 = vmul.f32 %v6596, %v1023
        %v6602 = vmul.f32 %v6593, %v1019
        %v6603 = vmul.f32 %v6597, %v1023
        %v6604 = vmul.f32 %v6594, %v1019
        %v6605 = vmul.f32 %v6598, %v1023
        %v6606 = vmul.f32 %v6595, %v1019
        %v6607 = vmul.f32 %v6599, %v1023
        %v6608 = vpack.c.bf16 %v6602, %v6600
        %v6609 = vpack.c.bf16 %v6603, %v6601
        %v6610 = vpack.c.bf16 %v6606, %v6604
        %v6611 = vpack.c.bf16 %v6607, %v6605
        %6612 = vst [vmem:[#allocation6 + $0x520] sm:$0xff] %v6608
        %6613 = vst [vmem:[#allocation6 + $0x528] sm:$0xff] %v6609
        %6614 = vst [vmem:[#allocation6 + $0x530] sm:$0xff] %v6610
        %6615 = vst [vmem:[#allocation6 + $0x538] sm:$0xff] %v6611
        %6616 = vrot.lane.b32.xlu0 %v6072, 120
        %v6617 = vpop.permute.xlu0 %6616
        %6618 = vrot.lane.b32.xlu0 %v6074, 120
        %v6619 = vpop.permute.xlu0 %6618
        %6620 = vrot.lane.b32.xlu0 %v6076, 120
        %v6621 = vpop.permute.xlu0 %6620
        %6622 = vrot.lane.b32.xlu0 %v6078, 120
        %v6623 = vpop.permute.xlu0 %6622
        %6624 = vrot.lane.b32.xlu0 %v6073, 120
        %v6625 = vpop.permute.xlu0 %6624
        %6626 = vrot.lane.b32.xlu0 %v6075, 120
        %v6627 = vpop.permute.xlu0 %6626
        %6628 = vrot.lane.b32.xlu0 %v6077, 120
        %v6629 = vpop.permute.xlu0 %6628
        %6630 = vrot.lane.b32.xlu0 %v6079, 120
        %v6631 = vpop.permute.xlu0 %6630
        %v6632 = vsel %vm1006, %v6617, %v6625
        %v6633 = vsel %vm1006, %v6619, %v6627
        %v6634 = vsel %vm1006, %v6621, %v6629
        %v6635 = vsel %vm1006, %v6623, %v6631
        %v6636 = vsel %vm1006, %v6625, %v6617
        %v6637 = vsel %vm1006, %v6627, %v6619
        %v6638 = vsel %vm1006, %v6629, %v6621
        %v6639 = vsel %vm1006, %v6631, %v6623
        %v6640 = vmul.f32 %v6632, %v1019
        %v6641 = vmul.f32 %v6636, %v1023
        %v6642 = vmul.f32 %v6633, %v1019
        %v6643 = vmul.f32 %v6637, %v1023
        %v6644 = vmul.f32 %v6634, %v1019
        %v6645 = vmul.f32 %v6638, %v1023
        %v6646 = vmul.f32 %v6635, %v1019
        %v6647 = vmul.f32 %v6639, %v1023
        %v6648 = vpack.c.bf16 %v6642, %v6640
        %v6649 = vpack.c.bf16 %v6643, %v6641
        %v6650 = vpack.c.bf16 %v6646, %v6644
        %v6651 = vpack.c.bf16 %v6647, %v6645
        %6652 = vst [vmem:[#allocation6 + $0x540] sm:$0xff] %v6648
        %6653 = vst [vmem:[#allocation6 + $0x548] sm:$0xff] %v6649
        %6654 = vst [vmem:[#allocation6 + $0x550] sm:$0xff] %v6650
        %6655 = vst [vmem:[#allocation6 + $0x558] sm:$0xff] %v6651
        %6656 = vrot.lane.b32.xlu0 %v5936, 119
        %v6657 = vpop.permute.xlu0 %6656
        %6658 = vrot.lane.b32.xlu0 %v5938, 119
        %v6659 = vpop.permute.xlu0 %6658
        %6660 = vrot.lane.b32.xlu0 %v5940, 119
        %v6661 = vpop.permute.xlu0 %6660
        %6662 = vrot.lane.b32.xlu0 %v5942, 119
        %v6663 = vpop.permute.xlu0 %6662
        %6664 = vrot.lane.b32.xlu0 %v5937, 119
        %v6665 = vpop.permute.xlu0 %6664
        %6666 = vrot.lane.b32.xlu0 %v5939, 119
        %v6667 = vpop.permute.xlu0 %6666
        %6668 = vrot.lane.b32.xlu0 %v5941, 119
        %v6669 = vpop.permute.xlu0 %6668
        %6670 = vrot.lane.b32.xlu0 %v5943, 119
        %v6671 = vpop.permute.xlu0 %6670
        %v6672 = vsel %vm1058, %v6657, %v6665
        %v6673 = vsel %vm1058, %v6659, %v6667
        %v6674 = vsel %vm1058, %v6661, %v6669
        %v6675 = vsel %vm1058, %v6663, %v6671
        %v6676 = vsel %vm1058, %v6665, %v6657
        %v6677 = vsel %vm1058, %v6667, %v6659
        %v6678 = vsel %vm1058, %v6669, %v6661
        %v6679 = vsel %vm1058, %v6671, %v6663
        %v6680 = vmul.f32 %v6672, %v1071
        %v6681 = vmul.f32 %v6676, %v1075
        %v6682 = vmul.f32 %v6673, %v1071
        %v6683 = vmul.f32 %v6677, %v1075
        %v6684 = vmul.f32 %v6674, %v1071
        %v6685 = vmul.f32 %v6678, %v1075
        %v6686 = vmul.f32 %v6675, %v1071
        %v6687 = vmul.f32 %v6679, %v1075
        %v6688 = vpack.c.bf16 %v6682, %v6680
        %v6689 = vpack.c.bf16 %v6683, %v6681
        %v6690 = vpack.c.bf16 %v6686, %v6684
        %v6691 = vpack.c.bf16 %v6687, %v6685
        %6692 = vst [vmem:[#allocation6 + $0x560] sm:$0xff] %v6688
        %6693 = vst [vmem:[#allocation6 + $0x568] sm:$0xff] %v6689
        %6694 = vst [vmem:[#allocation6 + $0x570] sm:$0xff] %v6690
        %6695 = vst [vmem:[#allocation6 + $0x578] sm:$0xff] %v6691
        %6696 = vrot.lane.b32.xlu0 %v6072, 119
        %v6697 = vpop.permute.xlu0 %6696
        %6698 = vrot.lane.b32.xlu0 %v6074, 119
        %v6699 = vpop.permute.xlu0 %6698
        %6700 = vrot.lane.b32.xlu0 %v6076, 119
        %v6701 = vpop.permute.xlu0 %6700
        %6702 = vrot.lane.b32.xlu0 %v6078, 119
        %v6703 = vpop.permute.xlu0 %6702
        %6704 = vrot.lane.b32.xlu0 %v6073, 119
        %v6705 = vpop.permute.xlu0 %6704
        %6706 = vrot.lane.b32.xlu0 %v6075, 119
        %v6707 = vpop.permute.xlu0 %6706
        %6708 = vrot.lane.b32.xlu0 %v6077, 119
        %v6709 = vpop.permute.xlu0 %6708
        %6710 = vrot.lane.b32.xlu0 %v6079, 119
        %v6711 = vpop.permute.xlu0 %6710
        %v6712 = vsel %vm1058, %v6697, %v6705
        %v6713 = vsel %vm1058, %v6699, %v6707
        %v6714 = vsel %vm1058, %v6701, %v6709
        %v6715 = vsel %vm1058, %v6703, %v6711
        %v6716 = vsel %vm1058, %v6705, %v6697
        %v6717 = vsel %vm1058, %v6707, %v6699
        %v6718 = vsel %vm1058, %v6709, %v6701
        %v6719 = vsel %vm1058, %v6711, %v6703
        %v6720 = vmul.f32 %v6712, %v1071
        %v6721 = vmul.f32 %v6716, %v1075
        %v6722 = vmul.f32 %v6713, %v1071
        %v6723 = vmul.f32 %v6717, %v1075
        %v6724 = vmul.f32 %v6714, %v1071
        %v6725 = vmul.f32 %v6718, %v1075
        %v6726 = vmul.f32 %v6715, %v1071
        %v6727 = vmul.f32 %v6719, %v1075
        %v6728 = vpack.c.bf16 %v6722, %v6720
        %v6729 = vpack.c.bf16 %v6723, %v6721
        %v6730 = vpack.c.bf16 %v6726, %v6724
        %v6731 = vpack.c.bf16 %v6727, %v6725
        %6732 = vst [vmem:[#allocation6 + $0x580] sm:$0xff] %v6728
        %6733 = vst [vmem:[#allocation6 + $0x588] sm:$0xff] %v6729
        %6734 = vst [vmem:[#allocation6 + $0x590] sm:$0xff] %v6730
        %6735 = vst [vmem:[#allocation6 + $0x598] sm:$0xff] %v6731
        %v6736 = vld [vmem:[%s10] sm:$0xff]
        %v6737 = vld [vmem:[%s10 + $0x8] sm:$0xff]
        %v6738 = vld [vmem:[%s10 + $0x10] sm:$0xf]
        %v6739 = vld [vmem:[%s10 + $0x14] sm:$0xff]
        %v6740 = vld [vmem:[%s10 + $0x1c] sm:$0xff]
        %v6741 = vld [vmem:[%s10 + $0x24] sm:$0xf]
        %v6742 = vld [vmem:[%s10 + $0x28] sm:$0xff]
        %v6743 = vld [vmem:[%s10 + $0x30] sm:$0xff]
        %v6744 = vld [vmem:[%s10 + $0x38] sm:$0xf]
        %v6745 = vld [vmem:[%s10 + $0x3c] sm:$0xff]
        %v6746 = vld [vmem:[%s10 + $0x44] sm:$0xff]
        %v6747 = vld [vmem:[%s10 + $0x4c] sm:$0xf]
        %v6748 = vld [vmem:[#allocation6 + $0x360] sm:$0xff]
        %v6749 = vld [vmem:[#allocation6 + $0x368] sm:$0xff]
        %v6750 = vld [vmem:[#allocation6 + $0x370] sm:$0xff]
        %v6751 = vld [vmem:[#allocation6 + $0x378] sm:$0xff]
        %v6752 = vld [vmem:[#allocation6 + $0x380] sm:$0xff]
        %v6753 = vld [vmem:[#allocation6 + $0x388] sm:$0xff]
        %v6754 = vld [vmem:[#allocation6 + $0x390] sm:$0xff]
        %v6755 = vld [vmem:[#allocation6 + $0x398] sm:$0xff]
        %v6756 = vld [vmem:[#allocation6 + $0x3a0] sm:$0xff]
        %v6757 = vld [vmem:[#allocation6 + $0x3a8] sm:$0xff]
        %v6758 = vld [vmem:[#allocation6 + $0x3b0] sm:$0xff]
        %v6759 = vld [vmem:[#allocation6 + $0x3b8] sm:$0xff]
        %v6760 = vld [vmem:[#allocation6 + $0x3c0] sm:$0xff]
        %v6761 = vld [vmem:[#allocation6 + $0x3c8] sm:$0xff]
        %v6762 = vld [vmem:[#allocation6 + $0x3d0] sm:$0xff]
        %v6763 = vld [vmem:[#allocation6 + $0x3d8] sm:$0xff]
        %v6764 = vld [vmem:[#allocation6 + $0x3e0] sm:$0xff]
        %v6765 = vld [vmem:[#allocation6 + $0x3e8] sm:$0xff]
        %v6766 = vld [vmem:[#allocation6 + $0x3f0] sm:$0xff]
        %v6767 = vld [vmem:[#allocation6 + $0x3f8] sm:$0xff]
        %v6768 = vld [vmem:[#allocation6 + $0x400] sm:$0xff]
        %v6769 = vld [vmem:[#allocation6 + $0x408] sm:$0xff]
        %v6770 = vld [vmem:[#allocation6 + $0x410] sm:$0xff]
        %v6771 = vld [vmem:[#allocation6 + $0x418] sm:$0xff]
        %v6772 = vld [vmem:[#allocation6 + $0x420] sm:$0xff]
        %v6773 = vld [vmem:[#allocation6 + $0x428] sm:$0xff]
        %v6774 = vld [vmem:[#allocation6 + $0x430] sm:$0xff]
        %v6775 = vld [vmem:[#allocation6 + $0x438] sm:$0xff]
        %v6776 = vld [vmem:[#allocation6 + $0x440] sm:$0xff]
        %v6777 = vld [vmem:[#allocation6 + $0x448] sm:$0xff]
        %v6778 = vld [vmem:[#allocation6 + $0x450] sm:$0xff]
        %v6779 = vld [vmem:[#allocation6 + $0x458] sm:$0xff]
        %v6780 = vld [vmem:[#allocation6 + $0x460] sm:$0xff]
        %v6781 = vld [vmem:[#allocation6 + $0x468] sm:$0xff]
        %v6782 = vld [vmem:[#allocation6 + $0x470] sm:$0xff]
        %v6783 = vld [vmem:[#allocation6 + $0x478] sm:$0xff]
        %v6784 = vld [vmem:[#allocation6 + $0x480] sm:$0xff]
        %v6785 = vld [vmem:[#allocation6 + $0x488] sm:$0xff]
        %v6786 = vld [vmem:[#allocation6 + $0x490] sm:$0xff]
        %v6787 = vld [vmem:[#allocation6 + $0x498] sm:$0xff]
        %v6788 = vld [vmem:[#allocation6 + $0x4a0] sm:$0xff]
        %v6789 = vld [vmem:[#allocation6 + $0x4a8] sm:$0xff]
        %v6790 = vld [vmem:[#allocation6 + $0x4b0] sm:$0xff]
        %v6791 = vld [vmem:[#allocation6 + $0x4b8] sm:$0xff]
        %v6792 = vld [vmem:[#allocation6 + $0x4c0] sm:$0xff]
        %v6793 = vld [vmem:[#allocation6 + $0x4c8] sm:$0xff]
        %v6794 = vld [vmem:[#allocation6 + $0x4d0] sm:$0xff]
        %v6795 = vld [vmem:[#allocation6 + $0x4d8] sm:$0xff]
        %v6796 = vld [vmem:[#allocation6 + $0x4e0] sm:$0xff]
        %v6797 = vld [vmem:[#allocation6 + $0x4e8] sm:$0xff]
        %v6798 = vld [vmem:[#allocation6 + $0x4f0] sm:$0xff]
        %v6799 = vld [vmem:[#allocation6 + $0x4f8] sm:$0xff]
        %v6800 = vld [vmem:[#allocation6 + $0x500] sm:$0xff]
        %v6801 = vld [vmem:[#allocation6 + $0x508] sm:$0xff]
        %v6802 = vld [vmem:[#allocation6 + $0x510] sm:$0xff]
        %v6803 = vld [vmem:[#allocation6 + $0x518] sm:$0xff]
        %v6804 = vld [vmem:[#allocation6 + $0x520] sm:$0xff]
        %v6805 = vld [vmem:[#allocation6 + $0x528] sm:$0xff]
        %v6806 = vld [vmem:[#allocation6 + $0x530] sm:$0xff]
        %v6807 = vld [vmem:[#allocation6 + $0x538] sm:$0xff]
        %v6808 = vld [vmem:[#allocation6 + $0x540] sm:$0xff]
        %v6809 = vld [vmem:[#allocation6 + $0x548] sm:$0xff]
        %v6810 = vld [vmem:[#allocation6 + $0x550] sm:$0xff]
        %v6811 = vld [vmem:[#allocation6 + $0x558] sm:$0xff]
        %v6812 = vld [vmem:[#allocation6 + $0x560] sm:$0xff]
        %v6813 = vld [vmem:[#allocation6 + $0x568] sm:$0xff]
        %v6814 = vld [vmem:[#allocation6 + $0x570] sm:$0xff]
        %v6815 = vld [vmem:[#allocation6 + $0x578] sm:$0xff]
        %v6816 = vld [vmem:[#allocation6 + $0x580] sm:$0xff]
        %v6817 = vld [vmem:[#allocation6 + $0x588] sm:$0xff]
        %v6818 = vld [vmem:[#allocation6 + $0x590] sm:$0xff]
        %v6819 = vld [vmem:[#allocation6 + $0x598] sm:$0xff]
        %v6832 = vunpack.c.l.b16 %v6736
        %v6833 = vunpack.c.h.b16 %v6736
        %v6834 = vunpack.c.l.b16 %v6737
        %v6835 = vunpack.c.h.b16 %v6737
        %v6836 = vunpack.c.l.b16 %v6738
        %v6837 = vunpack.c.l.b16 %v6739
        %v6838 = vunpack.c.h.b16 %v6739
        %v6839 = vunpack.c.l.b16 %v6740
        %v6840 = vunpack.c.h.b16 %v6740
        %v6841 = vunpack.c.l.b16 %v6741
        %v6842 = vunpack.c.l.b16 %v6742
        %v6843 = vunpack.c.h.b16 %v6742
        %v6844 = vunpack.c.l.b16 %v6743
        %v6845 = vunpack.c.h.b16 %v6743
        %v6846 = vunpack.c.l.b16 %v6744
        %v6847 = vunpack.c.l.b16 %v6745
        %v6848 = vunpack.c.h.b16 %v6745
        %v6849 = vunpack.c.l.b16 %v6746
        %v6850 = vunpack.c.h.b16 %v6746
        %v6851 = vunpack.c.l.b16 %v6747
        %v6852 = vpack.c.b16 %v6837, %v6832
        %v6853 = vpack.c.b16 %v6838, %v6833
        %v6854 = vpack.c.b16 %v6839, %v6834
        %v6855 = vpack.c.b16 %v6840, %v6835
        %v6856 = vpack.c.b16 %v6841, %v6836
        %v6857 = vpack.c.b16 %v6847, %v6842
        %v6858 = vpack.c.b16 %v6848, %v6843
        %v6859 = vpack.c.b16 %v6849, %v6844
        %v6860 = vpack.c.b16 %v6850, %v6845
        %v6861 = vpack.c.b16 %v6851, %v6846
        %v6871 = vsel %vm3529, %v6856, 0
        %v6874 = vsel %vm3529, %v6861, 0
        %6876 = vmatprep.subr.bf16.mxu0 %v6749
        %6877 = vmatpush1.bf16.msra.mxu0 %v6748
        %6878 = vmatprep.subr.bf16.mxu0 %v6751
        %6879 = vmatpush1.bf16.msra.mxu0 %v6750
        %6880 = vmatprep.subr.bf16.mxu0 %v6753
        %6881 = vmatpush1.bf16.msra.mxu0 %v6752
        %6882 = vmatprep.subr.bf16.mxu0 %v6755
        %6883 = vmatpush1.bf16.msra.mxu0 %v6754
        %6884 = vmatprep.subr.bf16.mxu0 %v6757
        %6885 = vmatpush1.bf16.msra.mxu0 %v6756
        %6886 = vmatprep.subr.bf16.mxu0 %v6759
        %6887 = vmatpush1.bf16.msra.mxu0 %v6758
        %6888 = vmatprep.subr.bf16.mxu0 %v6761
        %6889 = vmatpush1.bf16.msra.mxu0 %v6760
        %6890 = vmatprep.subr.bf16.mxu0 %v6763
        %6891 = vmatpush1.bf16.msra.mxu0 %v6762
        %6892 = vmatprep.subr.bf16.mxu0 %v6765
        %6893 = vmatpush1.bf16.msra.mxu0 %v6764
        %6894 = vmatprep.subr.bf16.mxu0 %v6767
        %6895 = vmatpush1.bf16.msra.mxu0 %v6766
        %6896 = vmatprep.subr.bf16.mxu0 %v6769
        %6897 = vmatpush1.bf16.msra.mxu0 %v6768
        %6898 = vmatprep.subr.bf16.mxu0 %v6771
        %6899 = vmatpush1.bf16.msra.mxu0 %v6770
        %6900 = vmatprep.subr.bf16.mxu0 %v6773
        %6901 = vmatpush1.bf16.msra.mxu0 %v6772
        %6902 = vmatprep.subr.bf16.mxu0 %v6775
        %6903 = vmatpush1.bf16.msra.mxu0 %v6774
        %6904 = vmatprep.subr.bf16.mxu0 %v6777
        %6905 = vmatpush1.bf16.msra.mxu0 %v6776
        %6906 = vmatprep.subr.bf16.mxu0 %v6779
        %6907 = vmatpush1.bf16.msra.mxu0 %v6778
        %6908 = vmatprep.mubr.bf16.mxu0 %v6853
        %6909 = vmatmul.mubr.bf16.gmra.mrb[0].mxu0 %v6852
        %v6910 = vpop.f32.mrb[0].mxu0
        %v6911 = vadd.f32 0.0, %v6910
        %v6912 = vpop.f32.mrb[0].mxu0
        %v6913 = vadd.f32 0.0, %v6912
        %v6914 = vpop.f32.mrb[0].mxu0
        %v6915 = vadd.f32 0.0, %v6914
        %v6916 = vpop.f32.mrb[0].mxu0
        %v6917 = vadd.f32 0.0, %v6916
        %6918 = vmatprep.mubr.bf16.mxu0 %v6858
        %6919 = vmatmul.mubr.bf16.gmra.mrb[0].mxu0 %v6857
        %v6920 = vpop.f32.mrb[0].mxu0
        %v6921 = vadd.f32 0.0, %v6920
        %v6922 = vpop.f32.mrb[0].mxu0
        %v6923 = vadd.f32 0.0, %v6922
        %v6924 = vpop.f32.mrb[0].mxu0
        %v6925 = vadd.f32 0.0, %v6924
        %v6926 = vpop.f32.mrb[0].mxu0
        %v6927 = vadd.f32 0.0, %v6926
        %6928 = vdwg.mxu0
        %6929 = vmatprep.subr.bf16.mxu0 %v6781
        %6930 = vmatpush1.bf16.msra.mxu0 %v6780
        %6931 = vmatprep.subr.bf16.mxu0 %v6783
        %6932 = vmatpush1.bf16.msra.mxu0 %v6782
        %6933 = vmatprep.subr.bf16.mxu0 %v6785
        %6934 = vmatpush1.bf16.msra.mxu0 %v6784
        %6935 = vmatprep.subr.bf16.mxu0 %v6787
        %6936 = vmatpush1.bf16.msra.mxu0 %v6786
        %6937 = vmatprep.subr.bf16.mxu0 %v6789
        %6938 = vmatpush1.bf16.msra.mxu0 %v6788
        %6939 = vmatprep.subr.bf16.mxu0 %v6791
        %6940 = vmatpush1.bf16.msra.mxu0 %v6790
        %6941 = vmatprep.subr.bf16.mxu0 %v6793
        %6942 = vmatpush1.bf16.msra.mxu0 %v6792
        %6943 = vmatprep.subr.bf16.mxu0 %v6795
        %6944 = vmatpush1.bf16.msra.mxu0 %v6794
        %6945 = vmatprep.subr.bf16.mxu0 %v6797
        %6946 = vmatpush1.bf16.msra.mxu0 %v6796
        %6947 = vmatprep.subr.bf16.mxu0 %v6799
        %6948 = vmatpush1.bf16.msra.mxu0 %v6798
        %6949 = vmatprep.subr.bf16.mxu0 %v6801
        %6950 = vmatpush1.bf16.msra.mxu0 %v6800
        %6951 = vmatprep.subr.bf16.mxu0 %v6803
        %6952 = vmatpush1.bf16.msra.mxu0 %v6802
        %6953 = vmatprep.subr.bf16.mxu0 %v6805
        %6954 = vmatpush1.bf16.msra.mxu0 %v6804
        %6955 = vmatprep.subr.bf16.mxu0 %v6807
        %6956 = vmatpush1.bf16.msra.mxu0 %v6806
        %6957 = vmatprep.subr.bf16.mxu0 %v6809
        %6958 = vmatpush1.bf16.msra.mxu0 %v6808
        %6959 = vmatprep.subr.bf16.mxu0 %v6811
        %6960 = vmatpush1.bf16.msra.mxu0 %v6810
        %6961 = vmatprep.mubr.bf16.mxu0 %v6855
        %6962 = vmatmul.mubr.bf16.gmra.mrb[0].mxu0 %v6854
        %v6963 = vpop.f32.mrb[0].mxu0
        %v6964 = vadd.f32 %v6911, %v6963
        %v6965 = vpop.f32.mrb[0].mxu0
        %v6966 = vadd.f32 %v6913, %v6965
        %v6967 = vpop.f32.mrb[0].mxu0
        %v6968 = vadd.f32 %v6915, %v6967
        %v6969 = vpop.f32.mrb[0].mxu0
        %v6970 = vadd.f32 %v6917, %v6969
        %6971 = vmatprep.mubr.bf16.mxu0 %v6860
        %6972 = vmatmul.mubr.bf16.gmra.mrb[0].mxu0 %v6859
        %v6973 = vpop.f32.mrb[0].mxu0
        %v6974 = vadd.f32 %v6921, %v6973
        %v6975 = vpop.f32.mrb[0].mxu0
        %v6976 = vadd.f32 %v6923, %v6975
        %v6977 = vpop.f32.mrb[0].mxu0
        %v6978 = vadd.f32 %v6925, %v6977
        %v6979 = vpop.f32.mrb[0].mxu0
        %v6980 = vadd.f32 %v6927, %v6979
        %6981 = vdwg.mxu0
        %6982 = vmatprep.subr.bf16.mxu0 %v6813
        %6983 = vmatpush1.bf16.msra.mxu0 %v6812
        %6984 = vmatprep.subr.bf16.mxu0 %v6815
        %6985 = vmatpush1.bf16.msra.mxu0 %v6814
        %6986 = vmatprep.subr.bf16.mxu0 %v6817
        %6987 = vmatpush1.bf16.msra.mxu0 %v6816
        %6988 = vmatprep.subr.bf16.mxu0 %v6819
        %6989 = vmatpush1.bf16.msra.mxu0 %v6818
        %6990 = vmatprep.subr.bf16.mxu0 0
        %6991 = vmatpush1.bf16.msra.mxu0 0
        %6992 = vmatprep.subr.bf16.mxu0 0
        %6993 = vmatpush1.bf16.msra.mxu0 0
        %6994 = vmatprep.subr.bf16.mxu0 0
        %6995 = vmatpush1.bf16.msra.mxu0 0
        %6996 = vmatprep.subr.bf16.mxu0 0
        %6997 = vmatpush1.bf16.msra.mxu0 0
        %6998 = vmatprep.subr.bf16.mxu0 0
        %6999 = vmatpush1.bf16.msra.mxu0 0
        %7000 = vmatprep.subr.bf16.mxu0 0
        %7001 = vmatpush1.bf16.msra.mxu0 0
        %7002 = vmatprep.subr.bf16.mxu0 0
        %7003 = vmatpush1.bf16.msra.mxu0 0
        %7004 = vmatprep.subr.bf16.mxu0 0
        %7005 = vmatpush1.bf16.msra.mxu0 0
        %7006 = vmatprep.subr.bf16.mxu0 0
        %7007 = vmatpush1.bf16.msra.mxu0 0
        %7008 = vmatprep.subr.bf16.mxu0 0
        %7009 = vmatpush1.bf16.msra.mxu0 0
        %7010 = vmatprep.subr.bf16.mxu0 0
        %7011 = vmatpush1.bf16.msra.mxu0 0
        %7012 = vmatprep.subr.bf16.mxu0 0
        %7013 = vmatpush1.bf16.msra.mxu0 0
        %7014 = vmatprep.mubr.bf16.mxu0 0
        %7015 = vmatmul.mubr.bf16.gmra.mrb[0].mxu0 %v6871
        %v7016 = vpop.f32.mrb[0].mxu0
        %v7017 = vadd.f32 %v6964, %v7016
        %v7018 = vpop.f32.mrb[0].mxu0
        %v7019 = vadd.f32 %v6966, %v7018
        %v7020 = vpop.f32.mrb[0].mxu0
        %v7021 = vadd.f32 %v6968, %v7020
        %v7022 = vpop.f32.mrb[0].mxu0
        %v7023 = vadd.f32 %v6970, %v7022
        %7024 = vmatprep.mubr.bf16.mxu0 0
        %7025 = vmatmul.mubr.bf16.gmra.mrb[0].mxu0 %v6874
        %v7026 = vpop.f32.mrb[0].mxu0
        %v7027 = vadd.f32 %v6974, %v7026
        %v7028 = vpop.f32.mrb[0].mxu0
        %v7029 = vadd.f32 %v6976, %v7028
        %v7030 = vpop.f32.mrb[0].mxu0
        %v7031 = vadd.f32 %v6978, %v7030
        %v7032 = vpop.f32.mrb[0].mxu0
        %v7033 = vadd.f32 %v6980, %v7032
        %7034 = vdwg.mxu0
        %v7035 = vadd.f32 %v5235, %v7017
        %v7036 = vadd.f32 %v5237, %v7019
        %v7037 = vadd.f32 %v5239, %v7021
        %v7038 = vadd.f32 %v5241, %v7023
        %v7039 = vadd.f32 %v5245, %v7027
        %v7040 = vadd.f32 %v5247, %v7029
        %v7041 = vadd.f32 %v5249, %v7031
        %v7042 = vadd.f32 %v5251, %v7033
        %v7043 = vxor.u32 %v7035, 2147483648
        %v7044 = vxor.u32 %v7036, 2147483648
        %v7045 = vxor.u32 %v7037, 2147483648
        %v7046 = vxor.u32 %v7038, 2147483648
        %v7047 = vxor.u32 %v7039, 2147483648
        %v7048 = vxor.u32 %v7040, 2147483648
        %v7049 = vxor.u32 %v7041, 2147483648
        %v7050 = vxor.u32 %v7042, 2147483648
        %v7051 = vmul.f32 %v7043, 1.442695
        %v7052 = vpow.pop %v7051
        %v7053 = vmul.f32 %v7044, 1.442695
        %v7054 = vpow.pop %v7053
        %v7055 = vmul.f32 %v7045, 1.442695
        %v7056 = vpow.pop %v7055
        %v7057 = vmul.f32 %v7046, 1.442695
        %v7058 = vpow.pop %v7057
        %v7059 = vmul.f32 %v7047, 1.442695
        %v7060 = vpow.pop %v7059
        %v7061 = vmul.f32 %v7048, 1.442695
        %v7062 = vpow.pop %v7061
        %v7063 = vmul.f32 %v7049, 1.442695
        %v7064 = vpow.pop %v7063
        %v7065 = vmul.f32 %v7050, 1.442695
        %v7066 = vpow.pop %v7065
        %v7067 = vadd.f32 %v7052, 1.0
        %v7068 = vadd.f32 %v7054, 1.0
        %v7069 = vadd.f32 %v7056, 1.0
        %v7070 = vadd.f32 %v7058, 1.0
        %v7071 = vadd.f32 %v7060, 1.0
        %v7072 = vadd.f32 %v7062, 1.0
        %v7073 = vadd.f32 %v7064, 1.0
        %v7074 = vadd.f32 %v7066, 1.0
        %v7075 = vrcp.pop %v7067
        %v7076 = vmul.f32 1.0, %v7075
        %v7077 = vrcp.pop %v7068
        %v7078 = vmul.f32 1.0, %v7077
        %v7079 = vrcp.pop %v7069
        %v7080 = vmul.f32 1.0, %v7079
        %v7081 = vrcp.pop %v7070
        %v7082 = vmul.f32 1.0, %v7081
        %v7083 = vrcp.pop %v7071
        %v7084 = vmul.f32 1.0, %v7083
        %v7085 = vrcp.pop %v7072
        %v7086 = vmul.f32 1.0, %v7085
        %v7087 = vrcp.pop %v7073
        %v7088 = vmul.f32 1.0, %v7087
        %v7089 = vrcp.pop %v7074
        %v7090 = vmul.f32 1.0, %v7089
        %v7091 = vld [vmem:[%s11] sm:$0xf]
        %v7092 = vld [vmem:[%s11 + $0x4] sm:$0xf]
        %v7093 = vld [vmem:[%s11 + $0x8] sm:$0xf]
        %v7094 = vld [vmem:[%s11 + $0xc] sm:$0xf]
        %v7095 = vld [vmem:[#allocation6 + $0x460] sm:$0xff]
        %v7096 = vld [vmem:[#allocation6 + $0x468] sm:$0xff]
        %v7097 = vld [vmem:[#allocation6 + $0x470] sm:$0xff]
        %v7098 = vld [vmem:[#allocation6 + $0x478] sm:$0xff]
        %v7099 = vld [vmem:[#allocation6 + $0x480] sm:$0xff]
        %v7100 = vld [vmem:[#allocation6 + $0x488] sm:$0xff]
        %v7101 = vld [vmem:[#allocation6 + $0x490] sm:$0xff]
        %v7102 = vld [vmem:[#allocation6 + $0x498] sm:$0xff]
        %v7107 = vunpack.c.l.b16 %v7091
        %v7108 = vunpack.c.l.b16 %v7092
        %v7109 = vunpack.c.l.b16 %v7093
        %v7110 = vunpack.c.l.b16 %v7094
        %v7111 = vpack.c.b16 %v7108, %v7107
        %v7112 = vpack.c.b16 %v7110, %v7109
        %v7114 = vsel %vm3529, %v7111, 0
        %v7117 = vsel %vm3529, %v7112, 0
        %7119 = vmatprep.subr.bf16.mxu0 %v7096
        %7120 = vmatpush1.bf16.msra.mxu0 %v7095
        %7121 = vmatprep.subr.bf16.mxu0 %v7098
        %7122 = vmatpush1.bf16.msra.mxu0 %v7097
        %7123 = vmatprep.subr.bf16.mxu0 %v7100
        %7124 = vmatpush1.bf16.msra.mxu0 %v7099
        %7125 = vmatprep.subr.bf16.mxu0 %v7102
        %7126 = vmatpush1.bf16.msra.mxu0 %v7101
        %7127 = vmatprep.subr.bf16.mxu0 0
        %7128 = vmatpush1.bf16.msra.mxu0 0
        %7129 = vmatprep.subr.bf16.mxu0 0
        %7130 = vmatpush1.bf16.msra.mxu0 0
        %7131 = vmatprep.subr.bf16.mxu0 0
        %7132 = vmatpush1.bf16.msra.mxu0 0
        %7133 = vmatprep.subr.bf16.mxu0 0
        %7134 = vmatpush1.bf16.msra.mxu0 0
        %7135 = vmatprep.subr.bf16.mxu0 0
        %7136 = vmatpush1.bf16.msra.mxu0 0
        %7137 = vmatprep.subr.bf16.mxu0 0
        %7138 = vmatpush1.bf16.msra.mxu0 0
        %7139 = vmatprep.subr.bf16.mxu0 0
        %7140 = vmatpush1.bf16.msra.mxu0 0
        %7141 = vmatprep.subr.bf16.mxu0 0
        %7142 = vmatpush1.bf16.msra.mxu0 0
        %7143 = vmatprep.subr.bf16.mxu0 0
        %7144 = vmatpush1.bf16.msra.mxu0 0
        %7145 = vmatprep.subr.bf16.mxu0 0
        %7146 = vmatpush1.bf16.msra.mxu0 0
        %7147 = vmatprep.subr.bf16.mxu0 0
        %7148 = vmatpush1.bf16.msra.mxu0 0
        %7149 = vmatprep.subr.bf16.mxu0 0
        %7150 = vmatpush1.bf16.msra.mxu0 0
        %7151 = vmatprep.mubr.bf16.mxu0 0
        %7152 = vmatmul.mubr.bf16.gmra.mrb[0].mxu0 %v7114
        %v7153 = vpop.f32.mrb[0].mxu0
        %v7154 = vadd.f32 0.0, %v7153
        %v7155 = vpop.f32.mrb[0].mxu0
        %v7156 = vadd.f32 0.0, %v7155
        %v7157 = vpop.f32.mrb[0].mxu0
        %v7158 = vadd.f32 0.0, %v7157
        %v7159 = vpop.f32.mrb[0].mxu0
        %v7160 = vadd.f32 0.0, %v7159
        %7161 = vmatprep.mubr.bf16.mxu0 0
        %7162 = vmatmul.mubr.bf16.gmra.mrb[0].mxu0 %v7117
        %v7163 = vpop.f32.mrb[0].mxu0
        %v7164 = vadd.f32 0.0, %v7163
        %v7165 = vpop.f32.mrb[0].mxu0
        %v7166 = vadd.f32 0.0, %v7165
        %v7167 = vpop.f32.mrb[0].mxu0
        %v7168 = vadd.f32 0.0, %v7167
        %v7169 = vpop.f32.mrb[0].mxu0
        %v7170 = vadd.f32 0.0, %v7169
        %7171 = vdwg.mxu0
        %v7172 = vtanh.pop %v7154
        %v7173 = vtanh.pop %v7156
        %v7174 = vtanh.pop %v7158
        %v7175 = vtanh.pop %v7160
        %v7176 = vtanh.pop %v7164
        %v7177 = vtanh.pop %v7166
        %v7178 = vtanh.pop %v7168
        %v7179 = vtanh.pop %v7170
        %v7180 = vmul.f32 %v7076, %v7172
        %v7181 = vmul.f32 %v7078, %v7173
        %v7182 = vmul.f32 %v7080, %v7174
        %v7183 = vmul.f32 %v7082, %v7175
        %v7184 = vmul.f32 %v7084, %v7176
        %v7185 = vmul.f32 %v7086, %v7177
        %v7186 = vmul.f32 %v7088, %v7178
        %v7187 = vmul.f32 %v7090, %v7179
        %v7188 = vpack.c.bf16 %v7182, %v7180
        %v7189 = vpack.c.bf16 %v7183, %v7181
        %v7190 = vpack.c.bf16 %v7186, %v7184
        %v7191 = vpack.c.bf16 %v7187, %v7185
        %7192 = vst [vmem:[%s3864] sm:$0xff] %v7188
        %7193 = vst [vmem:[%s3864 + $0x8] sm:$0xff] %v7189
        %7194 = vst [vmem:[%s3864 + $0x10] sm:$0xff] %v7190
        %7195 = vst [vmem:[%s3864 + $0x18] sm:$0xff] %v7191
        %7196 = vst [vmem:[%s3877] sm:$0xff] %v5936
        %7197 = vst [vmem:[%s3877 + $0x8] sm:$0xff] %v5937
        %7198 = vst [vmem:[%s3877 + $0x10] sm:$0xff] %v5938
        %7199 = vst [vmem:[%s3877 + $0x18] sm:$0xff] %v5939
        %7200 = vst [vmem:[%s3877 + $0x20] sm:$0xff] %v5940
        %7201 = vst [vmem:[%s3877 + $0x28] sm:$0xff] %v5941
        %7202 = vst [vmem:[%s3877 + $0x30] sm:$0xff] %v5942
        %7203 = vst [vmem:[%s3877 + $0x38] sm:$0xff] %v5943
        %7204 = vst [vmem:[#allocation4] sm:$0xff] %v6408
        %7205 = vst [vmem:[#allocation4 + $0x8] sm:$0xff] %v6409
        %7206 = vst [vmem:[#allocation4 + $0x10] sm:$0xff] %v6410
        %7207 = vst [vmem:[#allocation4 + $0x18] sm:$0xff] %v6411
        %v7208 = vld [vmem:[%s12] sm:$0xf]
        %v7209 = vld [vmem:[%s12 + $0x4] sm:$0xf]
        %v7212 = vunpack.c.l.b16 %v7208
        %v7213 = vunpack.c.l.b16 %v7209
        %v7214 = vpack.c.b16 %v7213, %v7212
        %vm7215 = vcmask 261120
        %v7217 = vsel %vm7215, %v7214, 0
        %7219 = vmatprep.subr.bf16.mxu0 %v7189
        %7220 = vmatpush1.bf16.msra.mxu0 %v7188
        %7221 = vmatprep.subr.bf16.mxu0 %v7191
        %7222 = vmatpush1.bf16.msra.mxu0 %v7190
        %7223 = vmatprep.subr.bf16.mxu0 0
        %7224 = vmatpush1.bf16.msra.mxu0 0
        %7225 = vmatprep.subr.bf16.mxu0 0
        %7226 = vmatpush1.bf16.msra.mxu0 0
        %7227 = vmatprep.subr.bf16.mxu0 0
        %7228 = vmatpush1.bf16.msra.mxu0 0
        %7229 = vmatprep.subr.bf16.mxu0 0
        %7230 = vmatpush1.bf16.msra.mxu0 0
        %7231 = vmatprep.subr.bf16.mxu0 0
        %7232 = vmatpush1.bf16.msra.mxu0 0
        %7233 = vmatprep.subr.bf16.mxu0 0
        %7234 = vmatpush1.bf16.msra.mxu0 0
        %7235 = vmatprep.subr.bf16.mxu0 0
        %7236 = vmatpush1.bf16.msra.mxu0 0
        %7237 = vmatprep.subr.bf16.mxu0 0
        %7238 = vmatpush1.bf16.msra.mxu0 0
        %7239 = vmatprep.subr.bf16.mxu0 0
        %7240 = vmatpush1.bf16.msra.mxu0 0
        %7241 = vmatprep.subr.bf16.mxu0 0
        %7242 = vmatpush1.bf16.msra.mxu0 0
        %7243 = vmatprep.subr.bf16.mxu0 0
        %7244 = vmatpush1.bf16.msra.mxu0 0
        %7245 = vmatprep.subr.bf16.mxu0 0
        %7246 = vmatpush1.bf16.msra.mxu0 0
        %7247 = vmatprep.subr.bf16.mxu0 0
        %7248 = vmatpush1.bf16.msra.mxu0 0
        %7249 = vmatprep.subr.bf16.mxu0 0
        %7250 = vmatpush1.bf16.msra.mxu0 0
        %7251 = vmatprep.mubr.bf16.mxu0 0
        %7252 = vmatmul.mubr.bf16.gmra.mrb[0].mxu0 %v7217
        %v7253 = vpop.f32.mrb[0].mxu0
        %v7254 = vadd.f32 0.0, %v7253
        %v7255 = vpop.f32.mrb[0].mxu0
        %v7256 = vadd.f32 0.0, %v7255
        %v7257 = vpop.f32.mrb[0].mxu0
        %v7258 = vadd.f32 0.0, %v7257
        %v7259 = vpop.f32.mrb[0].mxu0
        %v7260 = vadd.f32 0.0, %v7259
        %7261 = vdwg.mxu0
        %7262 = vst [vmem:[%s507] sm:$0xff] %v7254
        %7263 = vst [vmem:[%s507 + $0x8] sm:$0xff] %v7256
        %7264 = vst [vmem:[%s507 + $0x10] sm:$0xff] %v7258
        %7265 = vst [vmem:[%s507 + $0x18] sm:$0xff] %v7260
        %7266 = vst [vmem:[#allocation5] sm:$0xff] %v7254
        %7267 = vst [vmem:[#allocation5 + $0x8] sm:$0xff] %v7256
        %7268 = vst [vmem:[#allocation5 + $0x10] sm:$0xff] %v7258
        %7269 = vst [vmem:[#allocation5 + $0x18] sm:$0xff] %v7260
        %p7270 = scmp.eq.s32.totalorder %s27, 4
        // Predicated region
        $region81: #{rnn_forward.1} parent=71 // pred_check
          %p7271 = pneg %p7270
        $region82: #{rnn_forward.1} parent=71 // pred_check_branch
          %7273 = sbr.rel (%p7271) target = $region84
        $region83: #{rnn_forward.1} parent=71 // pred_region
          %v7274 = vld [vmem:[%s1] sm:$0xff]
          %v7275 = vld [vmem:[%s1 + $0x8] sm:$0xff]
          %v7276 = vld [vmem:[%s1 + $0x10] sm:$0xff]
          %v7277 = vld [vmem:[%s1 + $0x18] sm:$0xff]
          %v7278 = vsub.f32 %v7254, %v7274
          %v7279 = vsub.f32 %v7256, %v7275
          %v7280 = vsub.f32 %v7258, %v7276
          %v7281 = vsub.f32 %v7260, %v7277
          %v7282 = vld [vmem:[#allocation7] sm:$0xff]
          %v7283 = vld [vmem:[#allocation7 + $0x8] sm:$0xff]
          %v7284 = vld [vmem:[#allocation7 + $0x10] sm:$0xff]
          %v7285 = vld [vmem:[#allocation7 + $0x18] sm:$0xff]
          %v7286 = vmul.f32 %v7278, %v7278
          %v7287 = vmul.f32 %v7279, %v7279
          %v7288 = vmul.f32 %v7280, %v7280
          %v7289 = vmul.f32 %v7281, %v7281
          %v7290 = vadd.f32 %v7282, %v7286
          %v7291 = vadd.f32 %v7283, %v7287
          %v7292 = vadd.f32 %v7284, %v7288
          %v7293 = vadd.f32 %v7285, %v7289
          %v7294 = vadd.f32 %v7290, %v7291
          %v7295 = vadd.f32 %v7294, %v7292
          %v7296 = vadd.f32 %v7295, %v7293
          %7297 = vadd.xlane.f32.xlu0 %v7296
          %v7298 = vpop.xlane.xlu0 %7297
          %v7299 = vrot.slane %v7298, 4
          %v7300 = vadd.f32 %v7298, %v7299
          %v7301 = vrot.slane %v7300, 2
          %v7302 = vadd.f32 %v7300, %v7301
          %v7303 = vrot.slane %v7302, 1
          %v7304 = vadd.f32 %v7302, %v7303
          %s7305 = vtos %v7304
          %v7306 = vstv %s7305
          %vm7307 = vcmask 0
          %7308 = vst.msk [vmem:[#allocation8] sm:$0x1] %vm7307, %v7306
        $region84: #{rnn_forward.1} parent=71 // pred_fallthru
          _
        %p7309 = scmp.lt.s32.totalorder %s27, 4
        %s7310 = scalar_select %p7309, %s27, 4
        %s7311 = smul.addr %s7310, 4
        %s7312 = smul.addr %s7311, 8
        %s7313 = scalar_lea.vmem %s13, %s7312
        // Predicated region
        $region85: #{rnn_forward.1} parent=71 // pred_check
          %p7314 = pneg %p334
        $region86: #{rnn_forward.1} parent=71 // pred_check_branch
          %7316 = sbr.rel (%p7314) target = $region88
        $region87: #{rnn_forward.1} parent=71 // pred_region
          _
        $region88: #{rnn_forward.1} parent=71 // pred_fallthru
          _
        // Predicated region
        $region89: #{rnn_forward.1} parent=71 // pred_check
          %p7317 = pneg %p355
        $region90: #{rnn_forward.1} parent=71 // pred_check_branch
          %7319 = sbr.rel (%p7317) target = $region92
        $region91: #{rnn_forward.1} parent=71 // pred_region
          %s7321 = ssub.s32 16, 16
          %7322 = vsyncadd [#allocation9], %s7321
          %s7324 = sshll.u32 [#allocation8], 4
          %s7325 = int_to_ptr.vmem [resolvable:$true] %s7324
          %7327 = dma.vmem_to_hbm [thread:$0]  %s7325, 16, %s14, [#allocation9]
        $region92: #{rnn_forward.1} parent=71 // pred_fallthru
          _
        // Predicated region
        $region93: #{rnn_forward.1} parent=71 // pred_check
          %p7328 = pneg %p355
        $region94: #{rnn_forward.1} parent=71 // pred_check_branch
          %7330 = sbr.rel (%p7328) target = $region96
        $region95: #{rnn_forward.1} parent=71 // pred_region
          %7331 = dma.done [#allocation9], 16
        $region96: #{rnn_forward.1} parent=71 // pred_fallthru
          _
      $region72: #{rnn_forward.1} parent=5 // pred_fallthru
        _
      %p7332 = scmp.le.s32.totalorder 2, %s22
      // Predicated region
      $region97: #{rnn_forward.1} parent=5 // pred_check
        %p7333 = pneg %p7332
      $region98: #{rnn_forward.1} parent=5 // pred_check_branch
        %7335 = sbr.rel (%p7333) target = $region100
      $region99: #{rnn_forward.1} parent=5 // pred_region
        %s7336 = ssub.s32 %s22, 2
        // Predicated region
        $region101: #{rnn_forward.1} parent=99 // pred_check
          %p7337 = pneg %p340
        $region102: #{rnn_forward.1} parent=99 // pred_check_branch
          %7339 = sbr.rel (%p7337) target = $region104
        $region103: #{rnn_forward.1} parent=99 // pred_region
          %p7340 = scmp.lt.s32.totalorder %s28, 4
          %s7341 = scalar_select %p7340, %s28, 4
          %s7342 = smul.addr %s7341, 4
          %s7343 = smul.addr %s7342, 8
          %s7344 = scalar_lea.vmem %s13, %s7343
        $region104: #{rnn_forward.1} parent=99 // pred_fallthru
          _
      $region100: #{rnn_forward.1} parent=5 // pred_fallthru
        _
    $region6: #{rnn_forward.1} parent=1 // loop_footer
      %s26 = sadd.s32 1, %s22
    $region7: #{rnn_forward.1} parent=1 // loop_footer_branch
      %21 = sbr.rel target = $region3
    $region8: #{rnn_forward.1} parent=1 // loop_exit
      _
    %7345 = vsyncpa [#allocation9], 1
    %s7346 = scalar_lea.sflag [#allocation9], 1
    %7347 = vsyncpa %s7346, 1

</llo_original>
